<compile_context>
chip_gen: v7x
topology: tpu7x:2x2x1
jax: 0.10.0
libtpu: 0.0.40
codegen_flags: <defaults>
</compile_context>

<pallas_src>
import jax
import jax.numpy as jnp
from jax.experimental import pallas as pl
from jax.experimental.pallas import tpu as pltpu


# MXU operand dtype (f32 accumulation is always used). bf16 gives ~2-3x MXU
# throughput on v5e/v6e; loosen the correctness tolerance accordingly.
_MXU_DTYPE = jnp.bfloat16


# --------------------------------------------------------------------------
# Fused Pallas kernel (whole BasicBlock, one batch element per grid step)
# --------------------------------------------------------------------------

def _basic_block_kernel(x_ref, w1_ref, b1_ref, w2_ref, b2_ref, o_ref,
                        xp_ref, mp_ref):
    """x_ref/o_ref: (1,H,W,C)   w*_ref: (9,C,C) bf16   b*_ref: (1,C) f32
    xp_ref/mp_ref: (H+2,W+2,C) bf16 zero-halo padded scratch."""
    _, H, W, C = o_ref.shape

    def zero_halo(ref):
        # Only the 1-pixel border; the interior is fully overwritten below.
        ref[pl.ds(0, 1), :, :] = jnp.zeros((1, W + 2, C), ref.dtype)
        ref[pl.ds(H + 1, 1), :, :] = jnp.zeros((1, W + 2, C), ref.dtype)
        ref[pl.ds(1, H), pl.ds(0, 1), :] = jnp.zeros((H, 1, C), ref.dtype)
        ref[pl.ds(1, H), pl.ds(W + 1, 1), :] = jnp.zeros((H, 1, C), ref.dtype)

    zero_halo(xp_ref)
    zero_halo(mp_ref)

    x = x_ref[0]                                             # (H, W, C)
    xp_ref[pl.ds(1, H), pl.ds(1, W), :] = x.astype(xp_ref.dtype)

    def conv3x3(src_ref, w_ref):
        # 9 accumulated matmuls over shifted views of the padded scratch.
        acc = jnp.zeros((H * W, C), jnp.float32)
        for kh in range(3):
            for kw in range(3):
                t = kh * 3 + kw
                view = src_ref[pl.ds(kh, H), pl.ds(kw, W), :]  # (H, W, C)
                acc = acc + jnp.dot(view.reshape(H * W, C), w_ref[t],
                                    preferred_element_type=jnp.float32)
        return acc                                           # (H*W, C) f32

    # ---- conv1 (BN1 scale folded into w1) + bias + ReLU --------------------
    h1 = jnp.maximum(conv3x3(xp_ref, w1_ref) + b1_ref[0], 0.0)   # f32
    # Intermediate stays in VMEM (no HBM round-trip); bf16 only at the store.
    mp_ref[pl.ds(1, H), pl.ds(1, W), :] = h1.reshape(H, W, C).astype(mp_ref.dtype)

    # ---- conv2 (BN2 scale folded into w2) + bias + residual + ReLU ---------
    h2 = conv3x3(mp_ref, w2_ref) + b2_ref[0] \
        + x.reshape(H * W, C).astype(jnp.float32)            # f32 epilogue
    o_ref[0] = jnp.maximum(h2, 0.0).reshape(H, W, C).astype(o_ref.dtype)


# --------------------------------------------------------------------------
# Wrappers
# --------------------------------------------------------------------------

def _fold_bn_into_conv(w_hwio, gamma, beta, mean, var, eps=1e-5):
    """Fold inference-mode BatchNorm into the conv: y = conv(x, w*s) + b."""
    scale = gamma / jnp.sqrt(var + eps)                      # (Cout,)
    w_folded = w_hwio * scale[None, None, None, :]
    bias = beta - mean * scale
    return w_folded, bias


def _pick_vmem_limit_bytes():
    """~75% of physical VMEM, capped at 100 MiB (v5e/v6e -> 96 MiB,
    v7x 64 MiB -> 48 MiB, leaving headroom for compiler double buffers)."""
    cap = 128 * 1024 * 1024
    try:
        cap = int(pltpu.get_tpu_info().vmem_capacity_bytes)
    except Exception:
        pass
    return max(32 * 1024 * 1024, min((cap * 3) // 4, 100 * 1024 * 1024))


def basic_block_forward_nhwc(x_nhwc, params):
    """Fused BasicBlock forward, NHWC activations (preferred layout).
    Accepts f32 or bf16 activations; cast to bf16 once at the ResNet
    boundary to halve HBM DMA bytes (the in-kernel epilogue stays f32)."""
    N, H, W, C = x_nhwc.shape
    w1 = params["w1"]
    w2 = params["w2"]
    if w1.shape != (3, 3, C, C) or w2.shape != (3, 3, C, C):
        raise ValueError(
            "Only stride=1 / downsample=None BasicBlock (inplanes == planes) "
            f"is supported; got input C={C}, w1 {w1.shape}, w2 {w2.shape}.")

    w1f, b1 = _fold_bn_into_conv(w1, *params["bn1"])
    w2f, b2 = _fold_bn_into_conv(w2, *params["bn2"])

    # Per-tap weights (9, Cin, Cout): tap t = kh*3 + kw matches the kernel loop.
    w1m = w1f.reshape(9, C, C).astype(_MXU_DTYPE)
    w2m = w2f.reshape(9, C, C).astype(_MXU_DTYPE)
    b1 = b1.reshape(1, C).astype(jnp.float32)
    b2 = b2.reshape(1, C).astype(jnp.float32)

    return pl.pallas_call(
        _basic_block_kernel,
        out_shape=jax.ShapeDtypeStruct((N, H, W, C), x_nhwc.dtype),
        grid_spec=pltpu.PrefetchScalarGridSpec(
            num_scalar_prefetch=0,
            grid=(N,),
            in_specs=[
                pl.BlockSpec((1, H, W, C), lambda n: (n, 0, 0, 0)),
                pl.BlockSpec((9, C, C), lambda n: (0, 0, 0)),
                pl.BlockSpec((1, C), lambda n: (0, 0)),
                pl.BlockSpec((9, C, C), lambda n: (0, 0, 0)),
                pl.BlockSpec((1, C), lambda n: (0, 0)),
            ],
            out_specs=pl.BlockSpec((1, H, W, C), lambda n: (n, 0, 0, 0)),
            scratch_shapes=[
                pltpu.VMEM((H + 2, W + 2, C), _MXU_DTYPE),   # padded input
                pltpu.VMEM((H + 2, W + 2, C), _MXU_DTYPE),   # padded conv1 out
            ],
        ),
        compiler_params=pltpu.CompilerParams(
            dimension_semantics=("parallel",),
            vmem_limit_bytes=_pick_vmem_limit_bytes(),
        ),
    )(x_nhwc, w1m, b1, w2m, b2)


@jax.jit
def basic_block_forward(x_nchw, params):
    """BasicBlock forward, NCHW in/out (PyTorch convention). The transposes
    are at the jit boundary only; use basic_block_forward_nhwc to keep
    activations channels-last across a ResNet stack."""
    x = jnp.transpose(x_nchw, (0, 2, 3, 1))                  # NCHW -> NHWC
    out = basic_block_forward_nhwc(x, params)
    return jnp.transpose(out, (0, 3, 1, 2))                  # NHWC -> NCHW


# --------------------------------------------------------------------------
# Pure-JAX reference (for correctness check)
# --------------------------------------------------------------------------

def _fold_bn(gamma, beta, mean, var, eps=1e-5):
    scale = gamma / jnp.sqrt(var + eps)
    return scale, beta - mean * scale


def _reference_forward(x_nchw, params):
    x = jnp.transpose(x_nchw, (0, 2, 3, 1))
    dn = ("NHWC", "HWIO", "NHWC")

    def conv(h, w):
        return jax.lax.conv_general_dilated(h, w, (1, 1), "SAME",
                                            dimension_numbers=dn)

    s1, b1 = _fold_bn(*params["bn1"])
    s2, b2 = _fold_bn(*params["bn2"])
    out = jnp.maximum(conv(x, params["w1"]) * s1 + b1, 0.0)
    out = jnp.maximum(conv(out, params["w2"]) * s2 + b2 + x, 0.0)
    return jnp.transpose(out, (0, 3, 1, 2))


# --------------------------------------------------------------------------
# Main
# --------------------------------------------------------------------------

if __name__ == "__main__":
    N, C, H, W = 2, 4, 16, 16   # inplanes = planes = 4, stride = 1
    key = jax.random.PRNGKey(0)
    kx, kw1, kw2, kg1, kb1, km1, kv1, kg2, kb2, km2, kv2 = jax.random.split(key, 11)

    x = jax.random.normal(kx, (N, C, H, W), jnp.float32)

    params = {
        # conv weights directly in HWIO layout (3, 3, Cin, Cout)
        "w1": jax.random.normal(kw1, (3, 3, C, C), jnp.float32) * 0.1,
        "w2": jax.random.normal(kw2, (3, 3, C, C), jnp.float32) * 0.1,
        # BatchNorm params: (gamma, beta, running_mean, running_var)
        "bn1": (
            jax.random.uniform(kg1, (C,), jnp.float32, 0.5, 1.5),
            jax.random.normal(kb1, (C,), jnp.float32) * 0.1,
            jax.random.normal(km1, (C,), jnp.float32) * 0.1,
            jax.random.uniform(kv1, (C,), jnp.float32, 0.5, 1.5),
        ),
        "bn2": (
            jax.random.uniform(kg2, (C,), jnp.float32, 0.5, 1.5),
            jax.random.normal(kb2, (C,), jnp.float32) * 0.1,
            jax.random.normal(km2, (C,), jnp.float32) * 0.1,
            jax.random.uniform(kv2, (C,), jnp.float32, 0.5, 1.5),
        ),
    }

    out = jax.block_until_ready(basic_block_forward(x, params))
    ref = jax.block_until_ready(_reference_forward(x, params))

    assert out.shape == (N, C, H, W), out.shape
    # Looser tolerance: MXU operands and the conv1->conv2 intermediate are
    # bf16 (f32 accumulation) vs the all-f32 lax.conv reference.
    assert jnp.allclose(out, ref, rtol=5e-2, atol=5e-2), \
        float(jnp.max(jnp.abs(out - ref)))

    print("KERNEL_OK")
</pallas_src>

<mosaic_0001>
module attributes {stable_mosaic.version = 11 : i64} {
  func.func @_basic_block_kernel(%arg0: i32, %arg1: memref<1x16x16x4xf32, #tpu.memory_space<vmem>>, %arg2: memref<9x4x4xbf16, #tpu.memory_space<vmem>>, %arg3: memref<1x4xf32, #tpu.memory_space<vmem>>, %arg4: memref<9x4x4xbf16, #tpu.memory_space<vmem>>, %arg5: memref<1x4xf32, #tpu.memory_space<vmem>>, %arg6: memref<1x16x16x4xf32, #tpu.memory_space<vmem>>, %arg7: memref<18x18x4xbf16, #tpu.memory_space<vmem>>, %arg8: memref<18x18x4xbf16, #tpu.memory_space<vmem>>) attributes {dimension_semantics = [#tpu.dimension_semantics<parallel>], iteration_bounds = array<i64: 2>, scalar_prefetch = 0 : i64, scratch_operands = 2 : i64, tpu.core_type = #tpu.core_type<tc>, window_params = [{transform_indices = @transform_0, window_bounds = array<i64: 1, 16, 16, 4>}, {pipeline_mode = #tpu.pipeline_mode<synchronous>, transform_indices = @transform_1, window_bounds = array<i64: 9, 4, 4>}, {pipeline_mode = #tpu.pipeline_mode<synchronous>, transform_indices = @transform_2, window_bounds = array<i64: 1, 4>}, {pipeline_mode = #tpu.pipeline_mode<synchronous>, transform_indices = @transform_3, window_bounds = array<i64: 9, 4, 4>}, {pipeline_mode = #tpu.pipeline_mode<synchronous>, transform_indices = @transform_4, window_bounds = array<i64: 1, 4>}, {transform_indices = @transform_5, window_bounds = array<i64: 1, 16, 16, 4>}]} {
    %cst = arith.constant 0.000000e+00 : bf16
    %0 = vector.broadcast %cst : bf16 to vector<1x18x4xbf16>
    %c0 = arith.constant 0 : index
    %c0_0 = arith.constant 0 : index
    %c0_1 = arith.constant 0 : index
    %1 = vector.load %arg7[%c0, %c0_0, %c0_1] : memref<18x18x4xbf16, #tpu.memory_space<vmem>>, vector<1x18x4xbf16>
    tpu.vector_store %arg7[%c0, %c0_0, %c0_1], %0 {strides = array<i32>} : memref<18x18x4xbf16, #tpu.memory_space<vmem>>, vector<1x18x4xbf16>,
    %cst_2 = arith.constant 0.000000e+00 : bf16
    %2 = vector.broadcast %cst_2 : bf16 to vector<1x18x4xbf16>
    %c17 = arith.constant 17 : index
    %c0_3 = arith.constant 0 : index
    %c0_4 = arith.constant 0 : index
    %3 = vector.load %arg7[%c17, %c0_3, %c0_4] : memref<18x18x4xbf16, #tpu.memory_space<vmem>>, vector<1x18x4xbf16>
    tpu.vector_store %arg7[%c17, %c0_3, %c0_4], %2 {strides = array<i32>} : memref<18x18x4xbf16, #tpu.memory_space<vmem>>, vector<1x18x4xbf16>,
    %cst_5 = arith.constant 0.000000e+00 : bf16
    %4 = vector.broadcast %cst_5 : bf16 to vector<16x1x4xbf16>
    %c1 = arith.constant 1 : index
    %c0_6 = arith.constant 0 : index
    %c0_7 = arith.constant 0 : index
    %5 = vector.load %arg7[%c1, %c0_6, %c0_7] : memref<18x18x4xbf16, #tpu.memory_space<vmem>>, vector<16x1x4xbf16>
    tpu.vector_store %arg7[%c1, %c0_6, %c0_7], %4 {strides = array<i32>} : memref<18x18x4xbf16, #tpu.memory_space<vmem>>, vector<16x1x4xbf16>,
    %cst_8 = arith.constant 0.000000e+00 : bf16
    %6 = vector.broadcast %cst_8 : bf16 to vector<16x1x4xbf16>
    %c1_9 = arith.constant 1 : index
    %c17_10 = arith.constant 17 : index
    %c0_11 = arith.constant 0 : index
    %7 = vector.load %arg7[%c1_9, %c17_10, %c0_11] : memref<18x18x4xbf16, #tpu.memory_space<vmem>>, vector<16x1x4xbf16>
    tpu.vector_store %arg7[%c1_9, %c17_10, %c0_11], %6 {strides = array<i32>} : memref<18x18x4xbf16, #tpu.memory_space<vmem>>, vector<16x1x4xbf16>,
    %cst_12 = arith.constant 0.000000e+00 : bf16
    %8 = vector.broadcast %cst_12 : bf16 to vector<1x18x4xbf16>
    %c0_13 = arith.constant 0 : index
    %c0_14 = arith.constant 0 : index
    %c0_15 = arith.constant 0 : index
    %9 = vector.load %arg8[%c0_13, %c0_14, %c0_15] : memref<18x18x4xbf16, #tpu.memory_space<vmem>>, vector<1x18x4xbf16>
    tpu.vector_store %arg8[%c0_13, %c0_14, %c0_15], %8 {strides = array<i32>} : memref<18x18x4xbf16, #tpu.memory_space<vmem>>, vector<1x18x4xbf16>,
    %cst_16 = arith.constant 0.000000e+00 : bf16
    %10 = vector.broadcast %cst_16 : bf16 to vector<1x18x4xbf16>
    %c17_17 = arith.constant 17 : index
    %c0_18 = arith.constant 0 : index
    %c0_19 = arith.constant 0 : index
    %11 = vector.load %arg8[%c17_17, %c0_18, %c0_19] : memref<18x18x4xbf16, #tpu.memory_space<vmem>>, vector<1x18x4xbf16>
    tpu.vector_store %arg8[%c17_17, %c0_18, %c0_19], %10 {strides = array<i32>} : memref<18x18x4xbf16, #tpu.memory_space<vmem>>, vector<1x18x4xbf16>,
    %cst_20 = arith.constant 0.000000e+00 : bf16
    %12 = vector.broadcast %cst_20 : bf16 to vector<16x1x4xbf16>
    %c1_21 = arith.constant 1 : index
    %c0_22 = arith.constant 0 : index
    %c0_23 = arith.constant 0 : index
    %13 = vector.load %arg8[%c1_21, %c0_22, %c0_23] : memref<18x18x4xbf16, #tpu.memory_space<vmem>>, vector<16x1x4xbf16>
    tpu.vector_store %arg8[%c1_21, %c0_22, %c0_23], %12 {strides = array<i32>} : memref<18x18x4xbf16, #tpu.memory_space<vmem>>, vector<16x1x4xbf16>,
    %cst_24 = arith.constant 0.000000e+00 : bf16
    %14 = vector.broadcast %cst_24 : bf16 to vector<16x1x4xbf16>
    %c1_25 = arith.constant 1 : index
    %c17_26 = arith.constant 17 : index
    %c0_27 = arith.constant 0 : index
    %15 = vector.load %arg8[%c1_25, %c17_26, %c0_27] : memref<18x18x4xbf16, #tpu.memory_space<vmem>>, vector<16x1x4xbf16>
    tpu.vector_store %arg8[%c1_25, %c17_26, %c0_27], %14 {strides = array<i32>} : memref<18x18x4xbf16, #tpu.memory_space<vmem>>, vector<16x1x4xbf16>,
    %c0_28 = arith.constant 0 : index
    %c0_29 = arith.constant 0 : index
    %c0_30 = arith.constant 0 : index
    %c0_31 = arith.constant 0 : index
    %16 = vector.load %arg1[%c0_28, %c0_29, %c0_30, %c0_31] : memref<1x16x16x4xf32, #tpu.memory_space<vmem>>, vector<1x16x16x4xf32>
    %17 = vector.shape_cast %16 : vector<1x16x16x4xf32> to vector<16x16x4xf32>
    %18 = arith.truncf %17 : vector<16x16x4xf32> to vector<16x16x4xbf16>
    %c1_32 = arith.constant 1 : index
    %c1_33 = arith.constant 1 : index
    %c0_34 = arith.constant 0 : index
    %19 = vector.load %arg7[%c1_32, %c1_33, %c0_34] : memref<18x18x4xbf16, #tpu.memory_space<vmem>>, vector<16x16x4xbf16>
    tpu.vector_store %arg7[%c1_32, %c1_33, %c0_34], %18 {strides = array<i32>} : memref<18x18x4xbf16, #tpu.memory_space<vmem>>, vector<16x16x4xbf16>,
    %cst_35 = arith.constant 0.000000e+00 : f32
    %20 = vector.broadcast %cst_35 : f32 to vector<256x4xf32>
    %c0_36 = arith.constant 0 : index
    %c0_37 = arith.constant 0 : index
    %c0_38 = arith.constant 0 : index
    %21 = vector.load %arg7[%c0_36, %c0_37, %c0_38] : memref<18x18x4xbf16, #tpu.memory_space<vmem>>, vector<16x16x4xbf16>
    %22 = vector.shape_cast %21 : vector<16x16x4xbf16> to vector<256x4xbf16>
    %c0_39 = arith.constant 0 : index
    %c0_40 = arith.constant 0 : index
    %c0_41 = arith.constant 0 : index
    %23 = vector.load %arg2[%c0_39, %c0_40, %c0_41] : memref<9x4x4xbf16, #tpu.memory_space<vmem>>, vector<1x4x4xbf16>
    %24 = vector.shape_cast %23 : vector<1x4x4xbf16> to vector<4x4xbf16>
    %cst_42 = arith.constant dense<0.000000e+00> : vector<256x4xf32>
    %25 = tpu.matmul %22, %24, %cst_42 {dimension_numbers = #tpu.dot_dimension_numbers<[1], [0], [0], [1], [0, 0, 1, 1], [], []>} : vector<256x4xbf16>, vector<4x4xbf16>, vector<256x4xf32> -> vector<256x4xf32>
    %26 = arith.addf %20, %25 : vector<256x4xf32>
    %c0_43 = arith.constant 0 : index
    %c1_44 = arith.constant 1 : index
    %c0_45 = arith.constant 0 : index
    %27 = vector.load %arg7[%c0_43, %c1_44, %c0_45] : memref<18x18x4xbf16, #tpu.memory_space<vmem>>, vector<16x16x4xbf16>
    %28 = vector.shape_cast %27 : vector<16x16x4xbf16> to vector<256x4xbf16>
    %c1_46 = arith.constant 1 : index
    %c0_47 = arith.constant 0 : index
    %c0_48 = arith.constant 0 : index
    %29 = vector.load %arg2[%c1_46, %c0_47, %c0_48] : memref<9x4x4xbf16, #tpu.memory_space<vmem>>, vector<1x4x4xbf16>
    %30 = vector.shape_cast %29 : vector<1x4x4xbf16> to vector<4x4xbf16>
    %cst_49 = arith.constant dense<0.000000e+00> : vector<256x4xf32>
    %31 = tpu.matmul %28, %30, %cst_49 {dimension_numbers = #tpu.dot_dimension_numbers<[1], [0], [0], [1], [0, 0, 1, 1], [], []>} : vector<256x4xbf16>, vector<4x4xbf16>, vector<256x4xf32> -> vector<256x4xf32>
    %32 = arith.addf %26, %31 : vector<256x4xf32>
    %c0_50 = arith.constant 0 : index
    %c2 = arith.constant 2 : index
    %c0_51 = arith.constant 0 : index
    %33 = vector.load %arg7[%c0_50, %c2, %c0_51] : memref<18x18x4xbf16, #tpu.memory_space<vmem>>, vector<16x16x4xbf16>
    %34 = vector.shape_cast %33 : vector<16x16x4xbf16> to vector<256x4xbf16>
    %c2_52 = arith.constant 2 : index
    %c0_53 = arith.constant 0 : index
    %c0_54 = arith.constant 0 : index
    %35 = vector.load %arg2[%c2_52, %c0_53, %c0_54] : memref<9x4x4xbf16, #tpu.memory_space<vmem>>, vector<1x4x4xbf16>
    %36 = vector.shape_cast %35 : vector<1x4x4xbf16> to vector<4x4xbf16>
    %cst_55 = arith.constant dense<0.000000e+00> : vector<256x4xf32>
    %37 = tpu.matmul %34, %36, %cst_55 {dimension_numbers = #tpu.dot_dimension_numbers<[1], [0], [0], [1], [0, 0, 1, 1], [], []>} : vector<256x4xbf16>, vector<4x4xbf16>, vector<256x4xf32> -> vector<256x4xf32>
    %38 = arith.addf %32, %37 : vector<256x4xf32>
    %c1_56 = arith.constant 1 : index
    %c0_57 = arith.constant 0 : index
    %c0_58 = arith.constant 0 : index
    %39 = vector.load %arg7[%c1_56, %c0_57, %c0_58] : memref<18x18x4xbf16, #tpu.memory_space<vmem>>, vector<16x16x4xbf16>
    %40 = vector.shape_cast %39 : vector<16x16x4xbf16> to vector<256x4xbf16>
    %c3 = arith.constant 3 : index
    %c0_59 = arith.constant 0 : index
    %c0_60 = arith.constant 0 : index
    %41 = vector.load %arg2[%c3, %c0_59, %c0_60] : memref<9x4x4xbf16, #tpu.memory_space<vmem>>, vector<1x4x4xbf16>
    %42 = vector.shape_cast %41 : vector<1x4x4xbf16> to vector<4x4xbf16>
    %cst_61 = arith.constant dense<0.000000e+00> : vector<256x4xf32>
    %43 = tpu.matmul %40, %42, %cst_61 {dimension_numbers = #tpu.dot_dimension_numbers<[1], [0], [0], [1], [0, 0, 1, 1], [], []>} : vector<256x4xbf16>, vector<4x4xbf16>, vector<256x4xf32> -> vector<256x4xf32>
    %44 = arith.addf %38, %43 : vector<256x4xf32>
    %c1_62 = arith.constant 1 : index
    %c1_63 = arith.constant 1 : index
    %c0_64 = arith.constant 0 : index
    %45 = vector.load %arg7[%c1_62, %c1_63, %c0_64] : memref<18x18x4xbf16, #tpu.memory_space<vmem>>, vector<16x16x4xbf16>
    %46 = vector.shape_cast %45 : vector<16x16x4xbf16> to vector<256x4xbf16>
    %c4 = arith.constant 4 : index
    %c0_65 = arith.constant 0 : index
    %c0_66 = arith.constant 0 : index
    %47 = vector.load %arg2[%c4, %c0_65, %c0_66] : memref<9x4x4xbf16, #tpu.memory_space<vmem>>, vector<1x4x4xbf16>
    %48 = vector.shape_cast %47 : vector<1x4x4xbf16> to vector<4x4xbf16>
    %cst_67 = arith.constant dense<0.000000e+00> : vector<256x4xf32>
    %49 = tpu.matmul %46, %48, %cst_67 {dimension_numbers = #tpu.dot_dimension_numbers<[1], [0], [0], [1], [0, 0, 1, 1], [], []>} : vector<256x4xbf16>, vector<4x4xbf16>, vector<256x4xf32> -> vector<256x4xf32>
    %50 = arith.addf %44, %49 : vector<256x4xf32>
    %c1_68 = arith.constant 1 : index
    %c2_69 = arith.constant 2 : index
    %c0_70 = arith.constant 0 : index
    %51 = vector.load %arg7[%c1_68, %c2_69, %c0_70] : memref<18x18x4xbf16, #tpu.memory_space<vmem>>, vector<16x16x4xbf16>
    %52 = vector.shape_cast %51 : vector<16x16x4xbf16> to vector<256x4xbf16>
    %c5 = arith.constant 5 : index
    %c0_71 = arith.constant 0 : index
    %c0_72 = arith.constant 0 : index
    %53 = vector.load %arg2[%c5, %c0_71, %c0_72] : memref<9x4x4xbf16, #tpu.memory_space<vmem>>, vector<1x4x4xbf16>
    %54 = vector.shape_cast %53 : vector<1x4x4xbf16> to vector<4x4xbf16>
    %cst_73 = arith.constant dense<0.000000e+00> : vector<256x4xf32>
    %55 = tpu.matmul %52, %54, %cst_73 {dimension_numbers = #tpu.dot_dimension_numbers<[1], [0], [0], [1], [0, 0, 1, 1], [], []>} : vector<256x4xbf16>, vector<4x4xbf16>, vector<256x4xf32> -> vector<256x4xf32>
    %56 = arith.addf %50, %55 : vector<256x4xf32>
    %c2_74 = arith.constant 2 : index
    %c0_75 = arith.constant 0 : index
    %c0_76 = arith.constant 0 : index
    %57 = vector.load %arg7[%c2_74, %c0_75, %c0_76] : memref<18x18x4xbf16, #tpu.memory_space<vmem>>, vector<16x16x4xbf16>
    %58 = vector.shape_cast %57 : vector<16x16x4xbf16> to vector<256x4xbf16>
    %c6 = arith.constant 6 : index
    %c0_77 = arith.constant 0 : index
    %c0_78 = arith.constant 0 : index
    %59 = vector.load %arg2[%c6, %c0_77, %c0_78] : memref<9x4x4xbf16, #tpu.memory_space<vmem>>, vector<1x4x4xbf16>
    %60 = vector.shape_cast %59 : vector<1x4x4xbf16> to vector<4x4xbf16>
    %cst_79 = arith.constant dense<0.000000e+00> : vector<256x4xf32>
    %61 = tpu.matmul %58, %60, %cst_79 {dimension_numbers = #tpu.dot_dimension_numbers<[1], [0], [0], [1], [0, 0, 1, 1], [], []>} : vector<256x4xbf16>, vector<4x4xbf16>, vector<256x4xf32> -> vector<256x4xf32>
    %62 = arith.addf %56, %61 : vector<256x4xf32>
    %c2_80 = arith.constant 2 : index
    %c1_81 = arith.constant 1 : index
    %c0_82 = arith.constant 0 : index
    %63 = vector.load %arg7[%c2_80, %c1_81, %c0_82] : memref<18x18x4xbf16, #tpu.memory_space<vmem>>, vector<16x16x4xbf16>
    %64 = vector.shape_cast %63 : vector<16x16x4xbf16> to vector<256x4xbf16>
    %c7 = arith.constant 7 : index
    %c0_83 = arith.constant 0 : index
    %c0_84 = arith.constant 0 : index
    %65 = vector.load %arg2[%c7, %c0_83, %c0_84] : memref<9x4x4xbf16, #tpu.memory_space<vmem>>, vector<1x4x4xbf16>
    %66 = vector.shape_cast %65 : vector<1x4x4xbf16> to vector<4x4xbf16>
    %cst_85 = arith.constant dense<0.000000e+00> : vector<256x4xf32>
    %67 = tpu.matmul %64, %66, %cst_85 {dimension_numbers = #tpu.dot_dimension_numbers<[1], [0], [0], [1], [0, 0, 1, 1], [], []>} : vector<256x4xbf16>, vector<4x4xbf16>, vector<256x4xf32> -> vector<256x4xf32>
    %68 = arith.addf %62, %67 : vector<256x4xf32>
    %c2_86 = arith.constant 2 : index
    %c2_87 = arith.constant 2 : index
    %c0_88 = arith.constant 0 : index
    %69 = vector.load %arg7[%c2_86, %c2_87, %c0_88] : memref<18x18x4xbf16, #tpu.memory_space<vmem>>, vector<16x16x4xbf16>
    %70 = vector.shape_cast %69 : vector<16x16x4xbf16> to vector<256x4xbf16>
    %c8 = arith.constant 8 : index
    %c0_89 = arith.constant 0 : index
    %c0_90 = arith.constant 0 : index
    %71 = vector.load %arg2[%c8, %c0_89, %c0_90] : memref<9x4x4xbf16, #tpu.memory_space<vmem>>, vector<1x4x4xbf16>
    %72 = vector.shape_cast %71 : vector<1x4x4xbf16> to vector<4x4xbf16>
    %cst_91 = arith.constant dense<0.000000e+00> : vector<256x4xf32>
    %73 = tpu.matmul %70, %72, %cst_91 {dimension_numbers = #tpu.dot_dimension_numbers<[1], [0], [0], [1], [0, 0, 1, 1], [], []>} : vector<256x4xbf16>, vector<4x4xbf16>, vector<256x4xf32> -> vector<256x4xf32>
    %74 = arith.addf %68, %73 : vector<256x4xf32>
    %c0_92 = arith.constant 0 : index
    %c0_93 = arith.constant 0 : index
    %75 = vector.load %arg3[%c0_92, %c0_93] : memref<1x4xf32, #tpu.memory_space<vmem>>, vector<1x4xf32>
    %76 = vector.shape_cast %75 : vector<1x4xf32> to vector<4xf32>
    %77 = vector.shape_cast %76 : vector<4xf32> to vector<1x4xf32>
    %78 = vector.broadcast %77 : vector<1x4xf32> to vector<256x4xf32>
    %79 = arith.addf %74, %78 : vector<256x4xf32>
    %cst_94 = arith.constant 0.000000e+00 : f32
    %80 = vector.broadcast %cst_94 : f32 to vector<256x4xf32>
    %81 = arith.maximumf %79, %80 : vector<256x4xf32>
    %82 = vector.shape_cast %81 : vector<256x4xf32> to vector<16x16x4xf32>
    %83 = arith.truncf %82 : vector<16x16x4xf32> to vector<16x16x4xbf16>
    %c1_95 = arith.constant 1 : index
    %c1_96 = arith.constant 1 : index
    %c0_97 = arith.constant 0 : index
    %84 = vector.load %arg8[%c1_95, %c1_96, %c0_97] : memref<18x18x4xbf16, #tpu.memory_space<vmem>>, vector<16x16x4xbf16>
    tpu.vector_store %arg8[%c1_95, %c1_96, %c0_97], %83 {strides = array<i32>} : memref<18x18x4xbf16, #tpu.memory_space<vmem>>, vector<16x16x4xbf16>,
    %cst_98 = arith.constant 0.000000e+00 : f32
    %85 = vector.broadcast %cst_98 : f32 to vector<256x4xf32>
    %c0_99 = arith.constant 0 : index
    %c0_100 = arith.constant 0 : index
    %c0_101 = arith.constant 0 : index
    %86 = vector.load %arg8[%c0_99, %c0_100, %c0_101] : memref<18x18x4xbf16, #tpu.memory_space<vmem>>, vector<16x16x4xbf16>
    %87 = vector.shape_cast %86 : vector<16x16x4xbf16> to vector<256x4xbf16>
    %c0_102 = arith.constant 0 : index
    %c0_103 = arith.constant 0 : index
    %c0_104 = arith.constant 0 : index
    %88 = vector.load %arg4[%c0_102, %c0_103, %c0_104] : memref<9x4x4xbf16, #tpu.memory_space<vmem>>, vector<1x4x4xbf16>
    %89 = vector.shape_cast %88 : vector<1x4x4xbf16> to vector<4x4xbf16>
    %cst_105 = arith.constant dense<0.000000e+00> : vector<256x4xf32>
    %90 = tpu.matmul %87, %89, %cst_105 {dimension_numbers = #tpu.dot_dimension_numbers<[1], [0], [0], [1], [0, 0, 1, 1], [], []>} : vector<256x4xbf16>, vector<4x4xbf16>, vector<256x4xf32> -> vector<256x4xf32>
    %91 = arith.addf %85, %90 : vector<256x4xf32>
    %c0_106 = arith.constant 0 : index
    %c1_107 = arith.constant 1 : index
    %c0_108 = arith.constant 0 : index
    %92 = vector.load %arg8[%c0_106, %c1_107, %c0_108] : memref<18x18x4xbf16, #tpu.memory_space<vmem>>, vector<16x16x4xbf16>
    %93 = vector.shape_cast %92 : vector<16x16x4xbf16> to vector<256x4xbf16>
    %c1_109 = arith.constant 1 : index
    %c0_110 = arith.constant 0 : index
    %c0_111 = arith.constant 0 : index
    %94 = vector.load %arg4[%c1_109, %c0_110, %c0_111] : memref<9x4x4xbf16, #tpu.memory_space<vmem>>, vector<1x4x4xbf16>
    %95 = vector.shape_cast %94 : vector<1x4x4xbf16> to vector<4x4xbf16>
    %cst_112 = arith.constant dense<0.000000e+00> : vector<256x4xf32>
    %96 = tpu.matmul %93, %95, %cst_112 {dimension_numbers = #tpu.dot_dimension_numbers<[1], [0], [0], [1], [0, 0, 1, 1], [], []>} : vector<256x4xbf16>, vector<4x4xbf16>, vector<256x4xf32> -> vector<256x4xf32>
    %97 = arith.addf %91, %96 : vector<256x4xf32>
    %c0_113 = arith.constant 0 : index
    %c2_114 = arith.constant 2 : index
    %c0_115 = arith.constant 0 : index
    %98 = vector.load %arg8[%c0_113, %c2_114, %c0_115] : memref<18x18x4xbf16, #tpu.memory_space<vmem>>, vector<16x16x4xbf16>
    %99 = vector.shape_cast %98 : vector<16x16x4xbf16> to vector<256x4xbf16>
    %c2_116 = arith.constant 2 : index
    %c0_117 = arith.constant 0 : index
    %c0_118 = arith.constant 0 : index
    %100 = vector.load %arg4[%c2_116, %c0_117, %c0_118] : memref<9x4x4xbf16, #tpu.memory_space<vmem>>, vector<1x4x4xbf16>
    %101 = vector.shape_cast %100 : vector<1x4x4xbf16> to vector<4x4xbf16>
    %cst_119 = arith.constant dense<0.000000e+00> : vector<256x4xf32>
    %102 = tpu.matmul %99, %101, %cst_119 {dimension_numbers = #tpu.dot_dimension_numbers<[1], [0], [0], [1], [0, 0, 1, 1], [], []>} : vector<256x4xbf16>, vector<4x4xbf16>, vector<256x4xf32> -> vector<256x4xf32>
    %103 = arith.addf %97, %102 : vector<256x4xf32>
    %c1_120 = arith.constant 1 : index
    %c0_121 = arith.constant 0 : index
    %c0_122 = arith.constant 0 : index
    %104 = vector.load %arg8[%c1_120, %c0_121, %c0_122] : memref<18x18x4xbf16, #tpu.memory_space<vmem>>, vector<16x16x4xbf16>
    %105 = vector.shape_cast %104 : vector<16x16x4xbf16> to vector<256x4xbf16>
    %c3_123 = arith.constant 3 : index
    %c0_124 = arith.constant 0 : index
    %c0_125 = arith.constant 0 : index
    %106 = vector.load %arg4[%c3_123, %c0_124, %c0_125] : memref<9x4x4xbf16, #tpu.memory_space<vmem>>, vector<1x4x4xbf16>
    %107 = vector.shape_cast %106 : vector<1x4x4xbf16> to vector<4x4xbf16>
    %cst_126 = arith.constant dense<0.000000e+00> : vector<256x4xf32>
    %108 = tpu.matmul %105, %107, %cst_126 {dimension_numbers = #tpu.dot_dimension_numbers<[1], [0], [0], [1], [0, 0, 1, 1], [], []>} : vector<256x4xbf16>, vector<4x4xbf16>, vector<256x4xf32> -> vector<256x4xf32>
    %109 = arith.addf %103, %108 : vector<256x4xf32>
    %c1_127 = arith.constant 1 : index
    %c1_128 = arith.constant 1 : index
    %c0_129 = arith.constant 0 : index
    %110 = vector.load %arg8[%c1_127, %c1_128, %c0_129] : memref<18x18x4xbf16, #tpu.memory_space<vmem>>, vector<16x16x4xbf16>
    %111 = vector.shape_cast %110 : vector<16x16x4xbf16> to vector<256x4xbf16>
    %c4_130 = arith.constant 4 : index
    %c0_131 = arith.constant 0 : index
    %c0_132 = arith.constant 0 : index
    %112 = vector.load %arg4[%c4_130, %c0_131, %c0_132] : memref<9x4x4xbf16, #tpu.memory_space<vmem>>, vector<1x4x4xbf16>
    %113 = vector.shape_cast %112 : vector<1x4x4xbf16> to vector<4x4xbf16>
    %cst_133 = arith.constant dense<0.000000e+00> : vector<256x4xf32>
    %114 = tpu.matmul %111, %113, %cst_133 {dimension_numbers = #tpu.dot_dimension_numbers<[1], [0], [0], [1], [0, 0, 1, 1], [], []>} : vector<256x4xbf16>, vector<4x4xbf16>, vector<256x4xf32> -> vector<256x4xf32>
    %115 = arith.addf %109, %114 : vector<256x4xf32>
    %c1_134 = arith.constant 1 : index
    %c2_135 = arith.constant 2 : index
    %c0_136 = arith.constant 0 : index
    %116 = vector.load %arg8[%c1_134, %c2_135, %c0_136] : memref<18x18x4xbf16, #tpu.memory_space<vmem>>, vector<16x16x4xbf16>
    %117 = vector.shape_cast %116 : vector<16x16x4xbf16> to vector<256x4xbf16>
    %c5_137 = arith.constant 5 : index
    %c0_138 = arith.constant 0 : index
    %c0_139 = arith.constant 0 : index
    %118 = vector.load %arg4[%c5_137, %c0_138, %c0_139] : memref<9x4x4xbf16, #tpu.memory_space<vmem>>, vector<1x4x4xbf16>
    %119 = vector.shape_cast %118 : vector<1x4x4xbf16> to vector<4x4xbf16>
    %cst_140 = arith.constant dense<0.000000e+00> : vector<256x4xf32>
    %120 = tpu.matmul %117, %119, %cst_140 {dimension_numbers = #tpu.dot_dimension_numbers<[1], [0], [0], [1], [0, 0, 1, 1], [], []>} : vector<256x4xbf16>, vector<4x4xbf16>, vector<256x4xf32> -> vector<256x4xf32>
    %121 = arith.addf %115, %120 : vector<256x4xf32>
    %c2_141 = arith.constant 2 : index
    %c0_142 = arith.constant 0 : index
    %c0_143 = arith.constant 0 : index
    %122 = vector.load %arg8[%c2_141, %c0_142, %c0_143] : memref<18x18x4xbf16, #tpu.memory_space<vmem>>, vector<16x16x4xbf16>
    %123 = vector.shape_cast %122 : vector<16x16x4xbf16> to vector<256x4xbf16>
    %c6_144 = arith.constant 6 : index
    %c0_145 = arith.constant 0 : index
    %c0_146 = arith.constant 0 : index
    %124 = vector.load %arg4[%c6_144, %c0_145, %c0_146] : memref<9x4x4xbf16, #tpu.memory_space<vmem>>, vector<1x4x4xbf16>
    %125 = vector.shape_cast %124 : vector<1x4x4xbf16> to vector<4x4xbf16>
    %cst_147 = arith.constant dense<0.000000e+00> : vector<256x4xf32>
    %126 = tpu.matmul %123, %125, %cst_147 {dimension_numbers = #tpu.dot_dimension_numbers<[1], [0], [0], [1], [0, 0, 1, 1], [], []>} : vector<256x4xbf16>, vector<4x4xbf16>, vector<256x4xf32> -> vector<256x4xf32>
    %127 = arith.addf %121, %126 : vector<256x4xf32>
    %c2_148 = arith.constant 2 : index
    %c1_149 = arith.constant 1 : index
    %c0_150 = arith.constant 0 : index
    %128 = vector.load %arg8[%c2_148, %c1_149, %c0_150] : memref<18x18x4xbf16, #tpu.memory_space<vmem>>, vector<16x16x4xbf16>
    %129 = vector.shape_cast %128 : vector<16x16x4xbf16> to vector<256x4xbf16>
    %c7_151 = arith.constant 7 : index
    %c0_152 = arith.constant 0 : index
    %c0_153 = arith.constant 0 : index
    %130 = vector.load %arg4[%c7_151, %c0_152, %c0_153] : memref<9x4x4xbf16, #tpu.memory_space<vmem>>, vector<1x4x4xbf16>
    %131 = vector.shape_cast %130 : vector<1x4x4xbf16> to vector<4x4xbf16>
    %cst_154 = arith.constant dense<0.000000e+00> : vector<256x4xf32>
    %132 = tpu.matmul %129, %131, %cst_154 {dimension_numbers = #tpu.dot_dimension_numbers<[1], [0], [0], [1], [0, 0, 1, 1], [], []>} : vector<256x4xbf16>, vector<4x4xbf16>, vector<256x4xf32> -> vector<256x4xf32>
    %133 = arith.addf %127, %132 : vector<256x4xf32>
    %c2_155 = arith.constant 2 : index
    %c2_156 = arith.constant 2 : index
    %c0_157 = arith.constant 0 : index
    %134 = vector.load %arg8[%c2_155, %c2_156, %c0_157] : memref<18x18x4xbf16, #tpu.memory_space<vmem>>, vector<16x16x4xbf16>
    %135 = vector.shape_cast %134 : vector<16x16x4xbf16> to vector<256x4xbf16>
    %c8_158 = arith.constant 8 : index
    %c0_159 = arith.constant 0 : index
    %c0_160 = arith.constant 0 : index
    %136 = vector.load %arg4[%c8_158, %c0_159, %c0_160] : memref<9x4x4xbf16, #tpu.memory_space<vmem>>, vector<1x4x4xbf16>
    %137 = vector.shape_cast %136 : vector<1x4x4xbf16> to vector<4x4xbf16>
    %cst_161 = arith.constant dense<0.000000e+00> : vector<256x4xf32>
    %138 = tpu.matmul %135, %137, %cst_161 {dimension_numbers = #tpu.dot_dimension_numbers<[1], [0], [0], [1], [0, 0, 1, 1], [], []>} : vector<256x4xbf16>, vector<4x4xbf16>, vector<256x4xf32> -> vector<256x4xf32>
    %139 = arith.addf %133, %138 : vector<256x4xf32>
    %c0_162 = arith.constant 0 : index
    %c0_163 = arith.constant 0 : index
    %140 = vector.load %arg5[%c0_162, %c0_163] : memref<1x4xf32, #tpu.memory_space<vmem>>, vector<1x4xf32>
    %141 = vector.shape_cast %140 : vector<1x4xf32> to vector<4xf32>
    %142 = vector.shape_cast %141 : vector<4xf32> to vector<1x4xf32>
    %143 = vector.broadcast %142 : vector<1x4xf32> to vector<256x4xf32>
    %144 = arith.addf %139, %143 : vector<256x4xf32>
    %145 = vector.shape_cast %17 : vector<16x16x4xf32> to vector<256x4xf32>
    %146 = arith.addf %144, %145 : vector<256x4xf32>
    %cst_164 = arith.constant 0.000000e+00 : f32
    %147 = vector.broadcast %cst_164 : f32 to vector<256x4xf32>
    %148 = arith.maximumf %146, %147 : vector<256x4xf32>
    %149 = vector.shape_cast %148 : vector<256x4xf32> to vector<16x16x4xf32>
    %c0_165 = arith.constant 0 : index
    %c0_166 = arith.constant 0 : index
    %c0_167 = arith.constant 0 : index
    %c0_168 = arith.constant 0 : index
    %150 = vector.load %arg6[%c0_165, %c0_166, %c0_167, %c0_168] : memref<1x16x16x4xf32, #tpu.memory_space<vmem>>, vector<1x16x16x4xf32>
    %151 = vector.shape_cast %150 : vector<1x16x16x4xf32> to vector<16x16x4xf32>
    %152 = vector.shape_cast %149 : vector<16x16x4xf32> to vector<1x16x16x4xf32>
    tpu.vector_store %arg6[%c0_165, %c0_166, %c0_167, %c0_168], %152 {strides = array<i32>} : memref<1x16x16x4xf32, #tpu.memory_space<vmem>>, vector<1x16x16x4xf32>,
    return
  }
  func.func @transform_0(%arg0: i32) -> (i32, i32, i32, i32) {
    %c0_i32 = arith.constant 0 : i32
    %c0_i32_0 = arith.constant 0 : i32
    %c0_i32_1 = arith.constant 0 : i32
    %c0_i32_2 = arith.constant 0 : i32
    return %arg0, %c0_i32, %c0_i32_0, %c0_i32_1 : i32, i32, i32, i32
  }
  func.func @transform_1(%arg0: i32) -> (i32, i32, i32) {
    %c0_i32 = arith.constant 0 : i32
    %c0_i32_0 = arith.constant 0 : i32
    %c0_i32_1 = arith.constant 0 : i32
    %c0_i32_2 = arith.constant 0 : i32
    return %c0_i32, %c0_i32_0, %c0_i32_1 : i32, i32, i32
  }
  func.func @transform_2(%arg0: i32) -> (i32, i32) {
    %c0_i32 = arith.constant 0 : i32
    %c0_i32_0 = arith.constant 0 : i32
    %c0_i32_1 = arith.constant 0 : i32
    return %c0_i32, %c0_i32_0 : i32, i32
  }
  func.func @transform_3(%arg0: i32) -> (i32, i32, i32) {
    %c0_i32 = arith.constant 0 : i32
    %c0_i32_0 = arith.constant 0 : i32
    %c0_i32_1 = arith.constant 0 : i32
    %c0_i32_2 = arith.constant 0 : i32
    return %c0_i32, %c0_i32_0, %c0_i32_1 : i32, i32, i32
  }
  func.func @transform_4(%arg0: i32) -> (i32, i32) {
    %c0_i32 = arith.constant 0 : i32
    %c0_i32_0 = arith.constant 0 : i32
    %c0_i32_1 = arith.constant 0 : i32
    return %c0_i32, %c0_i32_0 : i32, i32
  }
  func.func @transform_5(%arg0: i32) -> (i32, i32, i32, i32) {
    %c0_i32 = arith.constant 0 : i32
    %c0_i32_0 = arith.constant 0 : i32
    %c0_i32_1 = arith.constant 0 : i32
    %c0_i32_2 = arith.constant 0 : i32
    return %arg0, %c0_i32, %c0_i32_0, %c0_i32_1 : i32, i32, i32, i32
  }
}

</mosaic_0001>

<llo_original>
// kernel: basic_block_forward.1
$region0: #{basic_block_forward.1}
  #allocation0 [shape = 'u32[]', space=smem, size = 0x4, offset = 0x4, fixed_abs, tag = 'smem constant byte address 0x4 - core index']
  #allocation1 [shape = 'u32[144,128]{1,0:T(1,128)}', space=vmem, size = 0x12000, scoped, tag = 'internal scratch']
  #allocation2 [shape = 'bf16[18,18,4]{2,1,0:T(8,128)(2,1)}', space=vmem, size = 0x1b000, scoped, tag = 'scratch operand']
  #allocation3 [shape = 'bf16[18,18,4]{2,1,0:T(8,128)(2,1)}', space=vmem, size = 0x1b000, scoped, tag = 'scratch operand']
  %s0 = inlined_call_operand.hbm [shape: f32[2,16,16,4], index: 0, kind: input, shape index: {}]
  %s1 = inlined_call_operand.hbm [shape: bf16[9,4,4], index: 1, kind: input, shape index: {}]
  %s2 = inlined_call_operand.hbm [shape: f32[1,4], index: 2, kind: input, shape index: {}]
  %s3 = inlined_call_operand.hbm [shape: bf16[9,4,4], index: 3, kind: input, shape index: {}]
  %s4 = inlined_call_operand.hbm [shape: f32[1,4], index: 4, kind: input, shape index: {}]
  %s5 = inlined_call_operand.hbm [shape: f32[2,16,16,4], index: 5, kind: output, shape index: {}]
  %s6 = sld [smem:[#allocation0]]
  $region73: #{basic_block_forward.1} parent=0
    _
  %s8 = ssub.s32 1, %s6
  %s9 = scalar_select 0, %s8, %s6
  $region1: #{basic_block_forward.1} parent=0
    #allocation4 [shape = 'u8[262144]{0}', space=vmem, size = 0x40000, scoped, tag = 'input window, operand 0']
    #allocation5 [shape = 's32[2]{0}', space=sflag, size = 0x8, scoped, tag = 'scoped memory for basic_block_forward.1']
    #allocation6 [shape = 's32[2]{0}', space=sflag, size = 0x8, scoped, tag = 'scoped memory for basic_block_forward.1']
    #allocation7 [shape = 'u8[9216]{0}', space=vmem, size = 0x2400, scoped, tag = 'input window, operand 1, single buffered']
    #allocation8 [shape = 's32[1]{0}', space=sflag, size = 0x4, scoped, tag = 'scoped memory for basic_block_forward.1']
    #allocation9 [shape = 'u8[512]{0}', space=vmem, size = 0x400, scoped, tag = 'input window, operand 2, single buffered']
    #allocation10 [shape = 'u8[9216]{0}', space=vmem, size = 0x2400, scoped, tag = 'input window, operand 3, single buffered']
    #allocation11 [shape = 's32[1]{0}', space=sflag, size = 0x4, scoped, tag = 'scoped memory for basic_block_forward.1']
    #allocation12 [shape = 'u8[512]{0}', space=vmem, size = 0x400, scoped, tag = 'input window, operand 4, single buffered']
    #allocation13 [shape = 'u8[262144]{0}', space=vmem, size = 0x40000, scoped, tag = 'output window, operand 0']
    %10 = vsyncpa [#allocation5], 0
    %s11 = scalar_lea.sflag [#allocation5], 1
    %12 = vsyncpa %s11, 0
    %13 = vsyncpa [#allocation8], 0
    %14 = vsyncpa [#allocation11], 0
    %15 = vsyncpa [#allocation6], 0
    %s16 = scalar_lea.sflag [#allocation6], 1
    %17 = vsyncpa %s16, 0
    loop: start=0, step=1, limit=4
    $region2: #{basic_block_forward.1} parent=1 // loop_pre_header
      _
    $region3: #{basic_block_forward.1} parent=1 // loop_header
      %s19 = sphi 0, %s23
      %p20 = scmp.ge.s32.totalorder %s19, 4
      %s29 = sphi 0, %s31
      %s32 = sphi 0, %s29
      %s33 = sphi 0, %s32
      %s49 = sphi 0, %s33
      %s53 = sphi 0, %s53
      %s55 = sphi 0, %s53
      %s56 = sphi 0, %s55
      %s70 = sphi 0, %s56
      %s74 = sphi 0, %s74
      %s76 = sphi 0, %s74
      %s77 = sphi 0, %s76
      %s91 = sphi 0, %s77
      %s95 = sphi 0, %s95
      %s97 = sphi 0, %s95
      %s98 = sphi 0, %s97
      %s112 = sphi 0, %s98
      %s116 = sphi 0, %s116
      %s118 = sphi 0, %s116
      %s119 = sphi 0, %s118
      %s133 = sphi 0, %s119
      %s139 = sphi 0, %s141
      %s142 = sphi 0, %s139
      %s143 = sphi 0, %s142
      %s159 = sphi 0, %s143
    $region4: #{basic_block_forward.1} parent=1 // loop_header_branch
      %22 = sbr.rel (%p20) target = $region8
    $region5: #{basic_block_forward.1} parent=1 // loop_body
      %s24 = ssub.s32 %s19, 1
      %s25 = ssub.s32 %s19, 2
      %s26 = sadd.s32 %s19, 1
      %s27 = ssub.s32 %s19, %s26
      %p28 = scmp.eq.s32.totalorder %s27, 0
      %s30 = sadd.s32 %s29, 1
      %s31 = scalar_select %p28, %s29, %s30
      %p34 = pneg %p28
      %p35 = scmp.eq.s32.totalorder %s19, 1
      %p36 = por %p34, %p35
      %p37 = scmp.ne.s32.totalorder %s29, %s32
      %p38 = scmp.eq.s32.totalorder %s19, 0
      %p39 = por %p37, %p38
      %p40 = scmp.ne.s32.totalorder %s29, %s32
      %p41 = scmp.eq.s32.totalorder %s24, 1
      %p42 = por %p40, %p41
      %p43 = scmp.ne.s32.totalorder %s32, %s33
      %p44 = scmp.eq.s32.totalorder %s24, 0
      %p45 = por %p43, %p44
      %p46 = scmp.ne.s32.totalorder %s32, %s33
      %p47 = scmp.eq.s32.totalorder %s25, 1
      %p48 = por %p46, %p47
      %p50 = scmp.ne.s32.totalorder %s33, %s49
      %p51 = scmp.eq.s32.totalorder %s25, 0
      %p52 = por %p50, %p51
      %s54 = sadd.s32 %s53, 1
      %p57 = scmp.eq.s32.totalorder %s19, 1
      %p58 = scmp.ne.s32.totalorder %s53, %s55
      %p59 = scmp.eq.s32.totalorder %s19, 0
      %p60 = por %p58, %p59
      %p61 = scmp.ne.s32.totalorder %s53, %s55
      %p62 = scmp.eq.s32.totalorder %s24, 1
      %p63 = por %p61, %p62
      %p64 = scmp.ne.s32.totalorder %s55, %s56
      %p65 = scmp.eq.s32.totalorder %s24, 0
      %p66 = por %p64, %p65
      %p67 = scmp.ne.s32.totalorder %s55, %s56
      %p68 = scmp.eq.s32.totalorder %s25, 1
      %p69 = por %p67, %p68
      %p71 = scmp.ne.s32.totalorder %s56, %s70
      %p72 = scmp.eq.s32.totalorder %s25, 0
      %p73 = por %p71, %p72
      %s75 = sadd.s32 %s74, 1
      %p78 = scmp.eq.s32.totalorder %s19, 1
      %p79 = scmp.ne.s32.totalorder %s74, %s76
      %p80 = scmp.eq.s32.totalorder %s19, 0
      %p81 = por %p79, %p80
      %p82 = scmp.ne.s32.totalorder %s74, %s76
      %p83 = scmp.eq.s32.totalorder %s24, 1
      %p84 = por %p82, %p83
      %p85 = scmp.ne.s32.totalorder %s76, %s77
      %p86 = scmp.eq.s32.totalorder %s24, 0
      %p87 = por %p85, %p86
      %p88 = scmp.ne.s32.totalorder %s76, %s77
      %p89 = scmp.eq.s32.totalorder %s25, 1
      %p90 = por %p88, %p89
      %p92 = scmp.ne.s32.totalorder %s77, %s91
      %p93 = scmp.eq.s32.totalorder %s25, 0
      %p94 = por %p92, %p93
      %s96 = sadd.s32 %s95, 1
      %p99 = scmp.eq.s32.totalorder %s19, 1
      %p100 = scmp.ne.s32.totalorder %s95, %s97
      %p101 = scmp.eq.s32.totalorder %s19, 0
      %p102 = por %p100, %p101
      %p103 = scmp.ne.s32.totalorder %s95, %s97
      %p104 = scmp.eq.s32.totalorder %s24, 1
      %p105 = por %p103, %p104
      %p106 = scmp.ne.s32.totalorder %s97, %s98
      %p107 = scmp.eq.s32.totalorder %s24, 0
      %p108 = por %p106, %p107
      %p109 = scmp.ne.s32.totalorder %s97, %s98
      %p110 = scmp.eq.s32.totalorder %s25, 1
      %p111 = por %p109, %p110
      %p113 = scmp.ne.s32.totalorder %s98, %s112
      %p114 = scmp.eq.s32.totalorder %s25, 0
      %p115 = por %p113, %p114
      %s117 = sadd.s32 %s116, 1
      %p120 = scmp.eq.s32.totalorder %s19, 1
      %p121 = scmp.ne.s32.totalorder %s116, %s118
      %p122 = scmp.eq.s32.totalorder %s19, 0
      %p123 = por %p121, %p122
      %p124 = scmp.ne.s32.totalorder %s116, %s118
      %p125 = scmp.eq.s32.totalorder %s24, 1
      %p126 = por %p124, %p125
      %p127 = scmp.ne.s32.totalorder %s118, %s119
      %p128 = scmp.eq.s32.totalorder %s24, 0
      %p129 = por %p127, %p128
      %p130 = scmp.ne.s32.totalorder %s118, %s119
      %p131 = scmp.eq.s32.totalorder %s25, 1
      %p132 = por %p130, %p131
      %p134 = scmp.ne.s32.totalorder %s119, %s133
      %p135 = scmp.eq.s32.totalorder %s25, 0
      %p136 = por %p134, %p135
      %s137 = ssub.s32 %s19, %s26
      %p138 = scmp.eq.s32.totalorder %s137, 0
      %s140 = sadd.s32 %s139, 1
      %s141 = scalar_select %p138, %s139, %s140
      %p144 = pneg %p138
      %p145 = scmp.eq.s32.totalorder %s19, 1
      %p146 = por %p144, %p145
      %p147 = scmp.ne.s32.totalorder %s139, %s142
      %p148 = scmp.eq.s32.totalorder %s19, 0
      %p149 = por %p147, %p148
      %p150 = scmp.ne.s32.totalorder %s139, %s142
      %p151 = scmp.eq.s32.totalorder %s24, 1
      %p152 = por %p150, %p151
      %p153 = scmp.ne.s32.totalorder %s142, %s143
      %p154 = scmp.eq.s32.totalorder %s24, 0
      %p155 = por %p153, %p154
      %p156 = scmp.ne.s32.totalorder %s142, %s143
      %p157 = scmp.eq.s32.totalorder %s25, 1
      %p158 = por %p156, %p157
      %p160 = scmp.ne.s32.totalorder %s143, %s159
      %p161 = scmp.eq.s32.totalorder %s25, 0
      %p162 = por %p160, %p161
      %p163 = scmp.le.s32.totalorder 1, %s19
      %p164 = scmp.lt.s32.totalorder %s19, 3
      %p165 = pnand %p163, %p164
      %p166 = pneg %p165
      // Predicated region
      $region9: #{basic_block_forward.1} parent=5 // pred_check
        _
      $region10: #{basic_block_forward.1} parent=5 // pred_check_branch
        %168 = sbr.rel (%p165) target = $region12
      $region11: #{basic_block_forward.1} parent=5 // pred_region
        %s169 = ssub.s32 %s19, 1
        // Predicated region
        $region13: #{basic_block_forward.1} parent=11 // pred_check
          %p170 = pneg %p66
        $region14: #{basic_block_forward.1} parent=11 // pred_check_branch
          %172 = sbr.rel (%p170) target = $region16
        $region15: #{basic_block_forward.1} parent=11 // pred_region
          %s174 = ssub.s32 288, 288
          %175 = vsyncadd [#allocation8], %s174
          %s176 = sshll.u32 [#allocation7], 4
          %s177 = int_to_ptr.vmem [resolvable:$true] %s176
          %182 = dma.hbm_to_vmem [thread:$0]  %s1, 288, %s177, [#allocation8], 32, 32, 2
        $region16: #{basic_block_forward.1} parent=11 // pred_fallthru
          _
        // Predicated region
        $region17: #{basic_block_forward.1} parent=11 // pred_check
          %p183 = pneg %p87
        $region18: #{basic_block_forward.1} parent=11 // pred_check_branch
          %185 = sbr.rel (%p183) target = $region20
        $region19: #{basic_block_forward.1} parent=11 // pred_region
          %s187 = ssub.s32 16, 16
          %188 = vsyncadd [#allocation8], %s187
          %s190 = sshll.u32 [#allocation9], 4
          %s191 = int_to_ptr.vmem [resolvable:$true] %s190
          %193 = dma.hbm_to_vmem [thread:$0]  %s2, 16, %s191, [#allocation8]
        $region20: #{basic_block_forward.1} parent=11 // pred_fallthru
          _
        // Predicated region
        $region21: #{basic_block_forward.1} parent=11 // pred_check
          %p194 = pneg %p108
        $region22: #{basic_block_forward.1} parent=11 // pred_check_branch
          %196 = sbr.rel (%p194) target = $region24
        $region23: #{basic_block_forward.1} parent=11 // pred_region
          %s198 = ssub.s32 288, 288
          %199 = vsyncadd [#allocation11], %s198
          %s200 = sshll.u32 [#allocation10], 4
          %s201 = int_to_ptr.vmem [resolvable:$true] %s200
          %206 = dma.hbm_to_vmem [thread:$0]  %s3, 288, %s201, [#allocation11], 32, 32, 2
        $region24: #{basic_block_forward.1} parent=11 // pred_fallthru
          _
        // Predicated region
        $region25: #{basic_block_forward.1} parent=11 // pred_check
          %p207 = pneg %p129
        $region26: #{basic_block_forward.1} parent=11 // pred_check_branch
          %209 = sbr.rel (%p207) target = $region28
        $region27: #{basic_block_forward.1} parent=11 // pred_region
          %s211 = ssub.s32 16, 16
          %212 = vsyncadd [#allocation11], %s211
          %s214 = sshll.u32 [#allocation12], 4
          %s215 = int_to_ptr.vmem [resolvable:$true] %s214
          %217 = dma.hbm_to_vmem [thread:$0]  %s4, 16, %s215, [#allocation11]
        $region28: #{basic_block_forward.1} parent=11 // pred_fallthru
          _
      $region12: #{basic_block_forward.1} parent=5 // pred_fallthru
        _
      %p218 = scmp.lt.s32.totalorder %s19, 2
      // Predicated region
      $region29: #{basic_block_forward.1} parent=5 // pred_check
        %p219 = pneg %p218
      $region30: #{basic_block_forward.1} parent=5 // pred_check_branch
        %221 = sbr.rel (%p219) target = $region32
      $region31: #{basic_block_forward.1} parent=5 // pred_region
        // Predicated region
        $region33: #{basic_block_forward.1} parent=31 // pred_check
          %p222 = pneg %p39
        $region34: #{basic_block_forward.1} parent=31 // pred_check_branch
          %224 = sbr.rel (%p222) target = $region36
        $region35: #{basic_block_forward.1} parent=31 // pred_region
          %s225 = sand.u32 %s29, 1
          %s226 = scalar_lea.sflag [#allocation5], %s225
          %s227 = sand.u32 %s29, 1
          %s228 = smul.addr %s227, 256
          %s229 = scalar_lea.vmem [#allocation4], %s228
          %s231 = ssub.s32 4096, 4096
          %232 = vsyncadd %s226, %s231
          %s233 = smul.addr %s19, 32
          %s234 = smul.addr %s233, 128
          %s235 = scalar_lea.hbm %s0, %s234
          %s236 = sshll.u32 %s229, 4
          %s237 = int_to_ptr.vmem [resolvable:$true] %s236
          %242 = dma.hbm_to_vmem [thread:$0]  %s235, 4096, %s237, %s226, 128, 128, 8
        $region36: #{basic_block_forward.1} parent=31 // pred_fallthru
          _
      $region32: #{basic_block_forward.1} parent=5 // pred_fallthru
        _
      %p243 = scmp.le.s32.totalorder 1, %s19
      %p244 = scmp.lt.s32.totalorder %s19, 3
      %p245 = pnand %p243, %p244
      %p246 = pneg %p245
      // Predicated region
      $region37: #{basic_block_forward.1} parent=5 // pred_check
        _
      $region38: #{basic_block_forward.1} parent=5 // pred_check_branch
        %248 = sbr.rel (%p245) target = $region40
      $region39: #{basic_block_forward.1} parent=5 // pred_region
        %s249 = ssub.s32 %s19, 1
        %s250 = sand.u32 %s32, 1
        %s251 = scalar_lea.sflag [#allocation5], %s250
        %s252 = sand.u32 %s32, 1
        %s253 = smul.addr %s252, 256
        %s254 = scalar_lea.vmem [#allocation4], %s253
        // Predicated region
        $region41: #{basic_block_forward.1} parent=39 // pred_check
          %p255 = pneg %p45
        $region42: #{basic_block_forward.1} parent=39 // pred_check_branch
          %257 = sbr.rel (%p255) target = $region44
        $region43: #{basic_block_forward.1} parent=39 // pred_region
          %258 = dma.done %s251, 4096
        $region44: #{basic_block_forward.1} parent=39 // pred_fallthru
          _
        // Predicated region
        $region45: #{basic_block_forward.1} parent=39 // pred_check
          %p259 = pneg %p66
        $region46: #{basic_block_forward.1} parent=39 // pred_check_branch
          %261 = sbr.rel (%p259) target = $region48
        $region47: #{basic_block_forward.1} parent=39 // pred_region
          %262 = dma.done [#allocation8], 288
        $region48: #{basic_block_forward.1} parent=39 // pred_fallthru
          _
        // Predicated region
        $region49: #{basic_block_forward.1} parent=39 // pred_check
          %p263 = pneg %p87
        $region50: #{basic_block_forward.1} parent=39 // pred_check_branch
          %265 = sbr.rel (%p263) target = $region52
        $region51: #{basic_block_forward.1} parent=39 // pred_region
          %266 = dma.done [#allocation8], 16
        $region52: #{basic_block_forward.1} parent=39 // pred_fallthru
          _
        // Predicated region
        $region53: #{basic_block_forward.1} parent=39 // pred_check
          %p267 = pneg %p108
        $region54: #{basic_block_forward.1} parent=39 // pred_check_branch
          %269 = sbr.rel (%p267) target = $region56
        $region55: #{basic_block_forward.1} parent=39 // pred_region
          %270 = dma.done [#allocation11], 288
        $region56: #{basic_block_forward.1} parent=39 // pred_fallthru
          _
        // Predicated region
        $region57: #{basic_block_forward.1} parent=39 // pred_check
          %p271 = pneg %p129
        $region58: #{basic_block_forward.1} parent=39 // pred_check_branch
          %273 = sbr.rel (%p271) target = $region60
        $region59: #{basic_block_forward.1} parent=39 // pred_region
          %274 = dma.done [#allocation11], 16
        $region60: #{basic_block_forward.1} parent=39 // pred_fallthru
          _
        %s275 = sand.u32 %s32, 1
        %s276 = scalar_lea.sflag [#allocation5], %s275
        %s277 = sand.u32 %s32, 1
        %s278 = smul.addr %s277, 256
        %s279 = scalar_lea.vmem [#allocation4], %s278
        %p280 = pneg %p45
        %p281 = pneg %p42
        %p282 = pneg %p66
        %p283 = pneg %p63
        %p284 = pneg %p87
        %p285 = pneg %p84
        %p286 = pneg %p108
        %p287 = pneg %p105
        %p288 = pneg %p129
        %p289 = pneg %p126
        %p290 = pneg %p155
        %p291 = pneg %p152
        %s292 = sand.u32 %s142, 1
        %s293 = scalar_lea.sflag [#allocation6], %s292
        %s294 = sand.u32 %s142, 1
        %s295 = smul.addr %s294, 256
        %s296 = scalar_lea.vmem [#allocation13], %s295
        %vm298 = vcmask 27648
        %299 = vst.msk [vmem:[#allocation2] sm:$0xf] %vm298, 0
        %300 = vst.msk [vmem:[#allocation2 + $0x4] sm:$0xf] %vm298, 0
        %vm301 = vcmask 24576
        %302 = vst.msk [vmem:[#allocation2 + $0x8] sm:$0x1] %vm301, 0
        %s303 = scalar_lea.vmem [#allocation2], 204
        %304 = vst.msk [vmem:[%s303] sm:$0xf] %vm298, 0
        %305 = vst.msk [vmem:[%s303 + $0x4] sm:$0xf] %vm298, 0
        %306 = vst.msk [vmem:[%s303 + $0x8] sm:$0x1] %vm301, 0
        %s307 = scalar_lea.vmem [#allocation2], 12
        %vm308 = vcmask 24576
        %vm309 = vsmask.f32 256
        %vm310 = vmand %vm308, %vm309
        %v311 = vld [vmem:[%s307] sm:$0x1]
        %v312 = vsel %vm310, 0, %v311
        %313 = vst [vmem:[%s307] sm:$0x1] %v312
        %v314 = vld [vmem:[%s307 + $0xc] sm:$0x1]
        %v315 = vsel %vm310, 0, %v314
        %316 = vst [vmem:[%s307 + $0xc] sm:$0x1] %v315
        %v317 = vld [vmem:[%s307 + $0x18] sm:$0x1]
        %v318 = vsel %vm310, 0, %v317
        %319 = vst [vmem:[%s307 + $0x18] sm:$0x1] %v318
        %v320 = vld [vmem:[%s307 + $0x24] sm:$0x1]
        %v321 = vsel %vm310, 0, %v320
        %322 = vst [vmem:[%s307 + $0x24] sm:$0x1] %v321
        %v323 = vld [vmem:[%s307 + $0x30] sm:$0x1]
        %v324 = vsel %vm310, 0, %v323
        %325 = vst [vmem:[%s307 + $0x30] sm:$0x1] %v324
        %v326 = vld [vmem:[%s307 + $0x3c] sm:$0x1]
        %v327 = vsel %vm310, 0, %v326
        %328 = vst [vmem:[%s307 + $0x3c] sm:$0x1] %v327
        %v329 = vld [vmem:[%s307 + $0x48] sm:$0x1]
        %v330 = vsel %vm310, 0, %v329
        %331 = vst [vmem:[%s307 + $0x48] sm:$0x1] %v330
        %v332 = vld [vmem:[%s307 + $0x54] sm:$0x1]
        %v333 = vsel %vm310, 0, %v332
        %334 = vst [vmem:[%s307 + $0x54] sm:$0x1] %v333
        %v335 = vld [vmem:[%s307 + $0x60] sm:$0x1]
        %v336 = vsel %vm310, 0, %v335
        %337 = vst [vmem:[%s307 + $0x60] sm:$0x1] %v336
        %v338 = vld [vmem:[%s307 + $0x6c] sm:$0x1]
        %v339 = vsel %vm310, 0, %v338
        %340 = vst [vmem:[%s307 + $0x6c] sm:$0x1] %v339
        %v341 = vld [vmem:[%s307 + $0x78] sm:$0x1]
        %v342 = vsel %vm310, 0, %v341
        %343 = vst [vmem:[%s307 + $0x78] sm:$0x1] %v342
        %v344 = vld [vmem:[%s307 + $0x84] sm:$0x1]
        %v345 = vsel %vm310, 0, %v344
        %346 = vst [vmem:[%s307 + $0x84] sm:$0x1] %v345
        %v347 = vld [vmem:[%s307 + $0x90] sm:$0x1]
        %v348 = vsel %vm310, 0, %v347
        %349 = vst [vmem:[%s307 + $0x90] sm:$0x1] %v348
        %v350 = vld [vmem:[%s307 + $0x9c] sm:$0x1]
        %v351 = vsel %vm310, 0, %v350
        %352 = vst [vmem:[%s307 + $0x9c] sm:$0x1] %v351
        %v353 = vld [vmem:[%s307 + $0xa8] sm:$0x1]
        %v354 = vsel %vm310, 0, %v353
        %355 = vst [vmem:[%s307 + $0xa8] sm:$0x1] %v354
        %v356 = vld [vmem:[%s307 + $0xb4] sm:$0x1]
        %v357 = vsel %vm310, 0, %v356
        %358 = vst [vmem:[%s307 + $0xb4] sm:$0x1] %v357
        %vm359 = vsmask.f32 7938
        %vm360 = vmand %vm308, %vm359
        %v361 = vld [vmem:[%s307 + $0x8] sm:$0x1]
        %v362 = vsel %vm360, 0, %v361
        %363 = vst [vmem:[%s307 + $0x8] sm:$0x1] %v362
        %v364 = vld [vmem:[%s307 + $0x14] sm:$0x1]
        %v365 = vsel %vm360, 0, %v364
        %366 = vst [vmem:[%s307 + $0x14] sm:$0x1] %v365
        %v367 = vld [vmem:[%s307 + $0x20] sm:$0x1]
        %v368 = vsel %vm360, 0, %v367
        %369 = vst [vmem:[%s307 + $0x20] sm:$0x1] %v368
        %v370 = vld [vmem:[%s307 + $0x2c] sm:$0x1]
        %v371 = vsel %vm360, 0, %v370
        %372 = vst [vmem:[%s307 + $0x2c] sm:$0x1] %v371
        %v373 = vld [vmem:[%s307 + $0x38] sm:$0x1]
        %v374 = vsel %vm360, 0, %v373
        %375 = vst [vmem:[%s307 + $0x38] sm:$0x1] %v374
        %v376 = vld [vmem:[%s307 + $0x44] sm:$0x1]
        %v377 = vsel %vm360, 0, %v376
        %378 = vst [vmem:[%s307 + $0x44] sm:$0x1] %v377
        %v379 = vld [vmem:[%s307 + $0x50] sm:$0x1]
        %v380 = vsel %vm360, 0, %v379
        %381 = vst [vmem:[%s307 + $0x50] sm:$0x1] %v380
        %v382 = vld [vmem:[%s307 + $0x5c] sm:$0x1]
        %v383 = vsel %vm360, 0, %v382
        %384 = vst [vmem:[%s307 + $0x5c] sm:$0x1] %v383
        %v385 = vld [vmem:[%s307 + $0x68] sm:$0x1]
        %v386 = vsel %vm360, 0, %v385
        %387 = vst [vmem:[%s307 + $0x68] sm:$0x1] %v386
        %v388 = vld [vmem:[%s307 + $0x74] sm:$0x1]
        %v389 = vsel %vm360, 0, %v388
        %390 = vst [vmem:[%s307 + $0x74] sm:$0x1] %v389
        %v391 = vld [vmem:[%s307 + $0x80] sm:$0x1]
        %v392 = vsel %vm360, 0, %v391
        %393 = vst [vmem:[%s307 + $0x80] sm:$0x1] %v392
        %v394 = vld [vmem:[%s307 + $0x8c] sm:$0x1]
        %v395 = vsel %vm360, 0, %v394
        %396 = vst [vmem:[%s307 + $0x8c] sm:$0x1] %v395
        %v397 = vld [vmem:[%s307 + $0x98] sm:$0x1]
        %v398 = vsel %vm360, 0, %v397
        %399 = vst [vmem:[%s307 + $0x98] sm:$0x1] %v398
        %v400 = vld [vmem:[%s307 + $0xa4] sm:$0x1]
        %v401 = vsel %vm360, 0, %v400
        %402 = vst [vmem:[%s307 + $0xa4] sm:$0x1] %v401
        %v403 = vld [vmem:[%s307 + $0xb0] sm:$0x1]
        %v404 = vsel %vm360, 0, %v403
        %405 = vst [vmem:[%s307 + $0xb0] sm:$0x1] %v404
        %v406 = vld [vmem:[%s307 + $0xbc] sm:$0x1]
        %v407 = vsel %vm360, 0, %v406
        %408 = vst [vmem:[%s307 + $0xbc] sm:$0x1] %v407
        %409 = vst.msk [vmem:[#allocation3] sm:$0xf] %vm298, 0
        %410 = vst.msk [vmem:[#allocation3 + $0x4] sm:$0xf] %vm298, 0
        %411 = vst.msk [vmem:[#allocation3 + $0x8] sm:$0x1] %vm301, 0
        %s412 = scalar_lea.vmem [#allocation3], 204
        %413 = vst.msk [vmem:[%s412] sm:$0xf] %vm298, 0
        %414 = vst.msk [vmem:[%s412 + $0x4] sm:$0xf] %vm298, 0
        %415 = vst.msk [vmem:[%s412 + $0x8] sm:$0x1] %vm301, 0
        %s416 = scalar_lea.vmem [#allocation3], 12
        %v417 = vld [vmem:[%s416] sm:$0x1]
        %v418 = vsel %vm310, 0, %v417
        %419 = vst [vmem:[%s416] sm:$0x1] %v418
        %v420 = vld [vmem:[%s416 + $0xc] sm:$0x1]
        %v421 = vsel %vm310, 0, %v420
        %422 = vst [vmem:[%s416 + $0xc] sm:$0x1] %v421
        %v423 = vld [vmem:[%s416 + $0x18] sm:$0x1]
        %v424 = vsel %vm310, 0, %v423
        %425 = vst [vmem:[%s416 + $0x18] sm:$0x1] %v424
        %v426 = vld [vmem:[%s416 + $0x24] sm:$0x1]
        %v427 = vsel %vm310, 0, %v426
        %428 = vst [vmem:[%s416 + $0x24] sm:$0x1] %v427
        %v429 = vld [vmem:[%s416 + $0x30] sm:$0x1]
        %v430 = vsel %vm310, 0, %v429
        %431 = vst [vmem:[%s416 + $0x30] sm:$0x1] %v430
        %v432 = vld [vmem:[%s416 + $0x3c] sm:$0x1]
        %v433 = vsel %vm310, 0, %v432
        %434 = vst [vmem:[%s416 + $0x3c] sm:$0x1] %v433
        %v435 = vld [vmem:[%s416 + $0x48] sm:$0x1]
        %v436 = vsel %vm310, 0, %v435
        %437 = vst [vmem:[%s416 + $0x48] sm:$0x1] %v436
        %v438 = vld [vmem:[%s416 + $0x54] sm:$0x1]
        %v439 = vsel %vm310, 0, %v438
        %440 = vst [vmem:[%s416 + $0x54] sm:$0x1] %v439
        %v441 = vld [vmem:[%s416 + $0x60] sm:$0x1]
        %v442 = vsel %vm310, 0, %v441
        %443 = vst [vmem:[%s416 + $0x60] sm:$0x1] %v442
        %v444 = vld [vmem:[%s416 + $0x6c] sm:$0x1]
        %v445 = vsel %vm310, 0, %v444
        %446 = vst [vmem:[%s416 + $0x6c] sm:$0x1] %v445
        %v447 = vld [vmem:[%s416 + $0x78] sm:$0x1]
        %v448 = vsel %vm310, 0, %v447
        %449 = vst [vmem:[%s416 + $0x78] sm:$0x1] %v448
        %v450 = vld [vmem:[%s416 + $0x84] sm:$0x1]
        %v451 = vsel %vm310, 0, %v450
        %452 = vst [vmem:[%s416 + $0x84] sm:$0x1] %v451
        %v453 = vld [vmem:[%s416 + $0x90] sm:$0x1]
        %v454 = vsel %vm310, 0, %v453
        %455 = vst [vmem:[%s416 + $0x90] sm:$0x1] %v454
        %v456 = vld [vmem:[%s416 + $0x9c] sm:$0x1]
        %v457 = vsel %vm310, 0, %v456
        %458 = vst [vmem:[%s416 + $0x9c] sm:$0x1] %v457
        %v459 = vld [vmem:[%s416 + $0xa8] sm:$0x1]
        %v460 = vsel %vm310, 0, %v459
        %461 = vst [vmem:[%s416 + $0xa8] sm:$0x1] %v460
        %v462 = vld [vmem:[%s416 + $0xb4] sm:$0x1]
        %v463 = vsel %vm310, 0, %v462
        %464 = vst [vmem:[%s416 + $0xb4] sm:$0x1] %v463
        %v465 = vld [vmem:[%s416 + $0x8] sm:$0x1]
        %v466 = vsel %vm360, 0, %v465
        %467 = vst [vmem:[%s416 + $0x8] sm:$0x1] %v466
        %v468 = vld [vmem:[%s416 + $0x14] sm:$0x1]
        %v469 = vsel %vm360, 0, %v468
        %470 = vst [vmem:[%s416 + $0x14] sm:$0x1] %v469
        %v471 = vld [vmem:[%s416 + $0x20] sm:$0x1]
        %v472 = vsel %vm360, 0, %v471
        %473 = vst [vmem:[%s416 + $0x20] sm:$0x1] %v472
        %v474 = vld [vmem:[%s416 + $0x2c] sm:$0x1]
        %v475 = vsel %vm360, 0, %v474
        %476 = vst [vmem:[%s416 + $0x2c] sm:$0x1] %v475
        %v477 = vld [vmem:[%s416 + $0x38] sm:$0x1]
        %v478 = vsel %vm360, 0, %v477
        %479 = vst [vmem:[%s416 + $0x38] sm:$0x1] %v478
        %v480 = vld [vmem:[%s416 + $0x44] sm:$0x1]
        %v481 = vsel %vm360, 0, %v480
        %482 = vst [vmem:[%s416 + $0x44] sm:$0x1] %v481
        %v483 = vld [vmem:[%s416 + $0x50] sm:$0x1]
        %v484 = vsel %vm360, 0, %v483
        %485 = vst [vmem:[%s416 + $0x50] sm:$0x1] %v484
        %v486 = vld [vmem:[%s416 + $0x5c] sm:$0x1]
        %v487 = vsel %vm360, 0, %v486
        %488 = vst [vmem:[%s416 + $0x5c] sm:$0x1] %v487
        %v489 = vld [vmem:[%s416 + $0x68] sm:$0x1]
        %v490 = vsel %vm360, 0, %v489
        %491 = vst [vmem:[%s416 + $0x68] sm:$0x1] %v490
        %v492 = vld [vmem:[%s416 + $0x74] sm:$0x1]
        %v493 = vsel %vm360, 0, %v492
        %494 = vst [vmem:[%s416 + $0x74] sm:$0x1] %v493
        %v495 = vld [vmem:[%s416 + $0x80] sm:$0x1]
        %v496 = vsel %vm360, 0, %v495
        %497 = vst [vmem:[%s416 + $0x80] sm:$0x1] %v496
        %v498 = vld [vmem:[%s416 + $0x8c] sm:$0x1]
        %v499 = vsel %vm360, 0, %v498
        %500 = vst [vmem:[%s416 + $0x8c] sm:$0x1] %v499
        %v501 = vld [vmem:[%s416 + $0x98] sm:$0x1]
        %v502 = vsel %vm360, 0, %v501
        %503 = vst [vmem:[%s416 + $0x98] sm:$0x1] %v502
        %v504 = vld [vmem:[%s416 + $0xa4] sm:$0x1]
        %v505 = vsel %vm360, 0, %v504
        %506 = vst [vmem:[%s416 + $0xa4] sm:$0x1] %v505
        %v507 = vld [vmem:[%s416 + $0xb0] sm:$0x1]
        %v508 = vsel %vm360, 0, %v507
        %509 = vst [vmem:[%s416 + $0xb0] sm:$0x1] %v508
        %v510 = vld [vmem:[%s416 + $0xbc] sm:$0x1]
        %v511 = vsel %vm360, 0, %v510
        %512 = vst [vmem:[%s416 + $0xbc] sm:$0x1] %v511
        %v513 = vld [vmem:[%s254] sm:$0xff]
        %v514 = vld [vmem:[%s254 + $0x8] sm:$0xff]
        %v515 = vld [vmem:[%s254 + $0x10] sm:$0xff]
        %v516 = vld [vmem:[%s254 + $0x18] sm:$0xff]
        %v517 = vld [vmem:[%s254 + $0x20] sm:$0xff]
        %v518 = vld [vmem:[%s254 + $0x28] sm:$0xff]
        %v519 = vld [vmem:[%s254 + $0x30] sm:$0xff]
        %v520 = vld [vmem:[%s254 + $0x38] sm:$0xff]
        %v521 = vld [vmem:[%s254 + $0x40] sm:$0xff]
        %v522 = vld [vmem:[%s254 + $0x48] sm:$0xff]
        %v523 = vld [vmem:[%s254 + $0x50] sm:$0xff]
        %v524 = vld [vmem:[%s254 + $0x58] sm:$0xff]
        %v525 = vld [vmem:[%s254 + $0x60] sm:$0xff]
        %v526 = vld [vmem:[%s254 + $0x68] sm:$0xff]
        %v527 = vld [vmem:[%s254 + $0x70] sm:$0xff]
        %v528 = vld [vmem:[%s254 + $0x78] sm:$0xff]
        %v529 = vld [vmem:[%s254 + $0x80] sm:$0xff]
        %v530 = vld [vmem:[%s254 + $0x88] sm:$0xff]
        %v531 = vld [vmem:[%s254 + $0x90] sm:$0xff]
        %v532 = vld [vmem:[%s254 + $0x98] sm:$0xff]
        %v533 = vld [vmem:[%s254 + $0xa0] sm:$0xff]
        %v534 = vld [vmem:[%s254 + $0xa8] sm:$0xff]
        %v535 = vld [vmem:[%s254 + $0xb0] sm:$0xff]
        %v536 = vld [vmem:[%s254 + $0xb8] sm:$0xff]
        %v537 = vld [vmem:[%s254 + $0xc0] sm:$0xff]
        %v538 = vld [vmem:[%s254 + $0xc8] sm:$0xff]
        %v539 = vld [vmem:[%s254 + $0xd0] sm:$0xff]
        %v540 = vld [vmem:[%s254 + $0xd8] sm:$0xff]
        %v541 = vld [vmem:[%s254 + $0xe0] sm:$0xff]
        %v542 = vld [vmem:[%s254 + $0xe8] sm:$0xff]
        %v543 = vld [vmem:[%s254 + $0xf0] sm:$0xff]
        %v544 = vld [vmem:[%s254 + $0xf8] sm:$0xff]
        %v545 = vpack.c.bf16 %v514, %v513
        %v546 = vpack.c.bf16 %v516, %v515
        %v547 = vpack.c.bf16 %v518, %v517
        %v548 = vpack.c.bf16 %v520, %v519
        %v549 = vpack.c.bf16 %v522, %v521
        %v550 = vpack.c.bf16 %v524, %v523
        %v551 = vpack.c.bf16 %v526, %v525
        %v552 = vpack.c.bf16 %v528, %v527
        %v553 = vpack.c.bf16 %v530, %v529
        %v554 = vpack.c.bf16 %v532, %v531
        %v555 = vpack.c.bf16 %v534, %v533
        %v556 = vpack.c.bf16 %v536, %v535
        %v557 = vpack.c.bf16 %v538, %v537
        %v558 = vpack.c.bf16 %v540, %v539
        %v559 = vpack.c.bf16 %v542, %v541
        %v560 = vpack.c.bf16 %v544, %v543
        %v577 = vunpack.c.l.b16 %v545
        %v578 = vunpack.c.h.b16 %v545
        %v579 = vunpack.c.l.b16 %v546
        %v580 = vunpack.c.h.b16 %v546
        %v581 = vunpack.c.l.b16 %v547
        %v582 = vunpack.c.h.b16 %v547
        %v583 = vunpack.c.l.b16 %v548
        %v584 = vunpack.c.h.b16 %v548
        %v585 = vunpack.c.l.b16 %v549
        %v586 = vunpack.c.h.b16 %v549
        %v587 = vunpack.c.l.b16 %v550
        %v588 = vunpack.c.h.b16 %v550
        %v589 = vunpack.c.l.b16 %v551
        %v590 = vunpack.c.h.b16 %v551
        %v591 = vunpack.c.l.b16 %v552
        %v592 = vunpack.c.h.b16 %v552
        %v593 = vunpack.c.l.b16 %v553
        %v594 = vunpack.c.h.b16 %v553
        %v595 = vunpack.c.l.b16 %v554
        %v596 = vunpack.c.h.b16 %v554
        %v597 = vunpack.c.l.b16 %v555
        %v598 = vunpack.c.h.b16 %v555
        %v599 = vunpack.c.l.b16 %v556
        %v600 = vunpack.c.h.b16 %v556
        %v601 = vunpack.c.l.b16 %v557
        %v602 = vunpack.c.h.b16 %v557
        %v603 = vunpack.c.l.b16 %v558
        %v604 = vunpack.c.h.b16 %v558
        %v605 = vunpack.c.l.b16 %v559
        %v606 = vunpack.c.h.b16 %v559
        %v607 = vunpack.c.l.b16 %v560
        %v608 = vunpack.c.h.b16 %v560
        %v609 = vpack.c.b16 %v577, %v577
        %v610 = vpack.c.b16 %v578, %v578
        %v611 = vpack.c.b16 %v579, %v579
        %v612 = vpack.c.b16 %v580, %v580
        %v613 = vpack.c.b16 %v581, %v581
        %v614 = vpack.c.b16 %v582, %v582
        %v615 = vpack.c.b16 %v583, %v583
        %v616 = vpack.c.b16 %v584, %v584
        %v617 = vpack.c.b16 %v585, %v585
        %v618 = vpack.c.b16 %v586, %v586
        %v619 = vpack.c.b16 %v587, %v587
        %v620 = vpack.c.b16 %v588, %v588
        %v621 = vpack.c.b16 %v589, %v589
        %v622 = vpack.c.b16 %v590, %v590
        %v623 = vpack.c.b16 %v591, %v591
        %v624 = vpack.c.b16 %v592, %v592
        %v625 = vpack.c.b16 %v593, %v593
        %v626 = vpack.c.b16 %v594, %v594
        %v627 = vpack.c.b16 %v595, %v595
        %v628 = vpack.c.b16 %v596, %v596
        %v629 = vpack.c.b16 %v597, %v597
        %v630 = vpack.c.b16 %v598, %v598
        %v631 = vpack.c.b16 %v599, %v599
        %v632 = vpack.c.b16 %v600, %v600
        %v633 = vpack.c.b16 %v601, %v601
        %v634 = vpack.c.b16 %v602, %v602
        %v635 = vpack.c.b16 %v603, %v603
        %v636 = vpack.c.b16 %v604, %v604
        %v637 = vpack.c.b16 %v605, %v605
        %v638 = vpack.c.b16 %v606, %v606
        %v639 = vpack.c.b16 %v607, %v607
        %v640 = vpack.c.b16 %v608, %v608
        %vm641 = vsmask.f32 4368
        %vm642 = vmor %vm309, %vm641
        %v644 = vshrl.u32 %v609, 16
        %v646 = vrot.slane %v644, 7
        %v647 = vshll.u32 %v609, 16
        %v649 = vor.u32 %v646, %v647
        %v650 = vrot.slane %v646, 4
        %v652 = vshrl.u32 %v610, 16
        %v654 = vrot.slane %v652, 7
        %v655 = vshll.u32 %v610, 16
        %v657 = vor.u32 %v654, %v655
        %v658 = vsel %vm642, %v650, %v657
        %v659 = vrot.slane %v654, 4
        %v661 = vshrl.u32 %v611, 16
        %v663 = vrot.slane %v661, 7
        %v664 = vshll.u32 %v611, 16
        %v666 = vor.u32 %v663, %v664
        %v667 = vrot.slane %v663, 4
        %v669 = vshrl.u32 %v612, 16
        %v671 = vrot.slane %v669, 7
        %v672 = vshll.u32 %v612, 16
        %v674 = vor.u32 %v671, %v672
        %v675 = vsel %vm642, %v667, %v674
        %v676 = vrot.slane %v671, 4
        %v678 = vshrl.u32 %v613, 16
        %v680 = vrot.slane %v678, 7
        %v681 = vshll.u32 %v613, 16
        %v683 = vor.u32 %v680, %v681
        %v684 = vrot.slane %v680, 4
        %v686 = vshrl.u32 %v614, 16
        %v688 = vrot.slane %v686, 7
        %v689 = vshll.u32 %v614, 16
        %v691 = vor.u32 %v688, %v689
        %v692 = vsel %vm642, %v684, %v691
        %v693 = vrot.slane %v688, 4
        %v695 = vshrl.u32 %v615, 16
        %v697 = vrot.slane %v695, 7
        %v698 = vshll.u32 %v615, 16
        %v700 = vor.u32 %v697, %v698
        %v701 = vrot.slane %v697, 4
        %v703 = vshrl.u32 %v616, 16
        %v705 = vrot.slane %v703, 7
        %v706 = vshll.u32 %v616, 16
        %v708 = vor.u32 %v705, %v706
        %v709 = vsel %vm642, %v701, %v708
        %v710 = vrot.slane %v705, 4
        %v712 = vshrl.u32 %v617, 16
        %v714 = vrot.slane %v712, 7
        %v715 = vshll.u32 %v617, 16
        %v717 = vor.u32 %v714, %v715
        %v718 = vrot.slane %v714, 4
        %v720 = vshrl.u32 %v618, 16
        %v722 = vrot.slane %v720, 7
        %v723 = vshll.u32 %v618, 16
        %v725 = vor.u32 %v722, %v723
        %v726 = vsel %vm642, %v718, %v725
        %v727 = vrot.slane %v722, 4
        %v729 = vshrl.u32 %v619, 16
        %v731 = vrot.slane %v729, 7
        %v732 = vshll.u32 %v619, 16
        %v734 = vor.u32 %v731, %v732
        %v735 = vrot.slane %v731, 4
        %v737 = vshrl.u32 %v620, 16
        %v739 = vrot.slane %v737, 7
        %v740 = vshll.u32 %v620, 16
        %v742 = vor.u32 %v739, %v740
        %v743 = vsel %vm642, %v735, %v742
        %v744 = vrot.slane %v739, 4
        %v746 = vshrl.u32 %v621, 16
        %v748 = vrot.slane %v746, 7
        %v749 = vshll.u32 %v621, 16
        %v751 = vor.u32 %v748, %v749
        %v752 = vrot.slane %v748, 4
        %v754 = vshrl.u32 %v622, 16
        %v756 = vrot.slane %v754, 7
        %v757 = vshll.u32 %v622, 16
        %v759 = vor.u32 %v756, %v757
        %v760 = vsel %vm642, %v752, %v759
        %v761 = vrot.slane %v756, 4
        %v763 = vshrl.u32 %v623, 16
        %v765 = vrot.slane %v763, 7
        %v766 = vshll.u32 %v623, 16
        %v768 = vor.u32 %v765, %v766
        %v769 = vrot.slane %v765, 4
        %v771 = vshrl.u32 %v624, 16
        %v773 = vrot.slane %v771, 7
        %v774 = vshll.u32 %v624, 16
        %v776 = vor.u32 %v773, %v774
        %v777 = vsel %vm642, %v769, %v776
        %v778 = vrot.slane %v773, 4
        %v780 = vshrl.u32 %v625, 16
        %v782 = vrot.slane %v780, 7
        %v783 = vshll.u32 %v625, 16
        %v785 = vor.u32 %v782, %v783
        %v786 = vrot.slane %v782, 4
        %v788 = vshrl.u32 %v626, 16
        %v790 = vrot.slane %v788, 7
        %v791 = vshll.u32 %v626, 16
        %v793 = vor.u32 %v790, %v791
        %v794 = vsel %vm642, %v786, %v793
        %v795 = vrot.slane %v790, 4
        %v797 = vshrl.u32 %v627, 16
        %v799 = vrot.slane %v797, 7
        %v800 = vshll.u32 %v627, 16
        %v802 = vor.u32 %v799, %v800
        %v803 = vrot.slane %v799, 4
        %v805 = vshrl.u32 %v628, 16
        %v807 = vrot.slane %v805, 7
        %v808 = vshll.u32 %v628, 16
        %v810 = vor.u32 %v807, %v808
        %v811 = vsel %vm642, %v803, %v810
        %v812 = vrot.slane %v807, 4
        %v814 = vshrl.u32 %v629, 16
        %v816 = vrot.slane %v814, 7
        %v817 = vshll.u32 %v629, 16
        %v819 = vor.u32 %v816, %v817
        %v820 = vrot.slane %v816, 4
        %v822 = vshrl.u32 %v630, 16
        %v824 = vrot.slane %v822, 7
        %v825 = vshll.u32 %v630, 16
        %v827 = vor.u32 %v824, %v825
        %v828 = vsel %vm642, %v820, %v827
        %v829 = vrot.slane %v824, 4
        %v831 = vshrl.u32 %v631, 16
        %v833 = vrot.slane %v831, 7
        %v834 = vshll.u32 %v631, 16
        %v836 = vor.u32 %v833, %v834
        %v837 = vrot.slane %v833, 4
        %v839 = vshrl.u32 %v632, 16
        %v841 = vrot.slane %v839, 7
        %v842 = vshll.u32 %v632, 16
        %v844 = vor.u32 %v841, %v842
        %v845 = vsel %vm642, %v837, %v844
        %v846 = vrot.slane %v841, 4
        %v848 = vshrl.u32 %v633, 16
        %v850 = vrot.slane %v848, 7
        %v851 = vshll.u32 %v633, 16
        %v853 = vor.u32 %v850, %v851
        %v854 = vrot.slane %v850, 4
        %v856 = vshrl.u32 %v634, 16
        %v858 = vrot.slane %v856, 7
        %v859 = vshll.u32 %v634, 16
        %v861 = vor.u32 %v858, %v859
        %v862 = vsel %vm642, %v854, %v861
        %v863 = vrot.slane %v858, 4
        %v865 = vshrl.u32 %v635, 16
        %v867 = vrot.slane %v865, 7
        %v868 = vshll.u32 %v635, 16
        %v870 = vor.u32 %v867, %v868
        %v871 = vrot.slane %v867, 4
        %v873 = vshrl.u32 %v636, 16
        %v875 = vrot.slane %v873, 7
        %v876 = vshll.u32 %v636, 16
        %v878 = vor.u32 %v875, %v876
        %v879 = vsel %vm642, %v871, %v878
        %v880 = vrot.slane %v875, 4
        %v882 = vshrl.u32 %v637, 16
        %v884 = vrot.slane %v882, 7
        %v885 = vshll.u32 %v637, 16
        %v887 = vor.u32 %v884, %v885
        %v888 = vrot.slane %v884, 4
        %v890 = vshrl.u32 %v638, 16
        %v892 = vrot.slane %v890, 7
        %v893 = vshll.u32 %v638, 16
        %v895 = vor.u32 %v892, %v893
        %v896 = vsel %vm642, %v888, %v895
        %v897 = vrot.slane %v892, 4
        %v899 = vshrl.u32 %v639, 16
        %v901 = vrot.slane %v899, 7
        %v902 = vshll.u32 %v639, 16
        %v904 = vor.u32 %v901, %v902
        %v905 = vrot.slane %v901, 4
        %v907 = vshrl.u32 %v640, 16
        %v909 = vrot.slane %v907, 7
        %v910 = vshll.u32 %v640, 16
        %v912 = vor.u32 %v909, %v910
        %v913 = vsel %vm642, %v905, %v912
        %v914 = vrot.slane %v909, 4
        %vm963 = vcmask 27648
        %vm964 = vmand %vm963, %vm359
        %v965 = vld [vmem:[%s307] sm:$0xf]
        %v966 = vsel %vm964, %v649, %v965
        %967 = vst [vmem:[%s307] sm:$0xf] %v966
        %968 = vst.msk [vmem:[%s307 + $0x4] sm:$0xf] %vm298, %v658
        %v969 = vld [vmem:[%s307 + $0x8] sm:$0x1]
        %v970 = vsel %vm310, %v659, %v969
        %971 = vst [vmem:[%s307 + $0x8] sm:$0x1] %v970
        %v972 = vld [vmem:[%s307 + $0xc] sm:$0xf]
        %v973 = vsel %vm964, %v666, %v972
        %974 = vst [vmem:[%s307 + $0xc] sm:$0xf] %v973
        %975 = vst.msk [vmem:[%s307 + $0x10] sm:$0xf] %vm298, %v675
        %v976 = vld [vmem:[%s307 + $0x14] sm:$0x1]
        %v977 = vsel %vm310, %v676, %v976
        %978 = vst [vmem:[%s307 + $0x14] sm:$0x1] %v977
        %v979 = vld [vmem:[%s307 + $0x18] sm:$0xf]
        %v980 = vsel %vm964, %v683, %v979
        %981 = vst [vmem:[%s307 + $0x18] sm:$0xf] %v980
        %982 = vst.msk [vmem:[%s307 + $0x1c] sm:$0xf] %vm298, %v692
        %v983 = vld [vmem:[%s307 + $0x20] sm:$0x1]
        %v984 = vsel %vm310, %v693, %v983
        %985 = vst [vmem:[%s307 + $0x20] sm:$0x1] %v984
        %v986 = vld [vmem:[%s307 + $0x24] sm:$0xf]
        %v987 = vsel %vm964, %v700, %v986
        %988 = vst [vmem:[%s307 + $0x24] sm:$0xf] %v987
        %989 = vst.msk [vmem:[%s307 + $0x28] sm:$0xf] %vm298, %v709
        %v990 = vld [vmem:[%s307 + $0x2c] sm:$0x1]
        %v991 = vsel %vm310, %v710, %v990
        %992 = vst [vmem:[%s307 + $0x2c] sm:$0x1] %v991
        %v993 = vld [vmem:[%s307 + $0x30] sm:$0xf]
        %v994 = vsel %vm964, %v717, %v993
        %995 = vst [vmem:[%s307 + $0x30] sm:$0xf] %v994
        %996 = vst.msk [vmem:[%s307 + $0x34] sm:$0xf] %vm298, %v726
        %v997 = vld [vmem:[%s307 + $0x38] sm:$0x1]
        %v998 = vsel %vm310, %v727, %v997
        %999 = vst [vmem:[%s307 + $0x38] sm:$0x1] %v998
        %v1000 = vld [vmem:[%s307 + $0x3c] sm:$0xf]
        %v1001 = vsel %vm964, %v734, %v1000
        %1002 = vst [vmem:[%s307 + $0x3c] sm:$0xf] %v1001
        %1003 = vst.msk [vmem:[%s307 + $0x40] sm:$0xf] %vm298, %v743
        %v1004 = vld [vmem:[%s307 + $0x44] sm:$0x1]
        %v1005 = vsel %vm310, %v744, %v1004
        %1006 = vst [vmem:[%s307 + $0x44] sm:$0x1] %v1005
        %v1007 = vld [vmem:[%s307 + $0x48] sm:$0xf]
        %v1008 = vsel %vm964, %v751, %v1007
        %1009 = vst [vmem:[%s307 + $0x48] sm:$0xf] %v1008
        %1010 = vst.msk [vmem:[%s307 + $0x4c] sm:$0xf] %vm298, %v760
        %v1011 = vld [vmem:[%s307 + $0x50] sm:$0x1]
        %v1012 = vsel %vm310, %v761, %v1011
        %1013 = vst [vmem:[%s307 + $0x50] sm:$0x1] %v1012
        %v1014 = vld [vmem:[%s307 + $0x54] sm:$0xf]
        %v1015 = vsel %vm964, %v768, %v1014
        %1016 = vst [vmem:[%s307 + $0x54] sm:$0xf] %v1015
        %1017 = vst.msk [vmem:[%s307 + $0x58] sm:$0xf] %vm298, %v777
        %v1018 = vld [vmem:[%s307 + $0x5c] sm:$0x1]
        %v1019 = vsel %vm310, %v778, %v1018
        %1020 = vst [vmem:[%s307 + $0x5c] sm:$0x1] %v1019
        %v1021 = vld [vmem:[%s307 + $0x60] sm:$0xf]
        %v1022 = vsel %vm964, %v785, %v1021
        %1023 = vst [vmem:[%s307 + $0x60] sm:$0xf] %v1022
        %1024 = vst.msk [vmem:[%s307 + $0x64] sm:$0xf] %vm298, %v794
        %v1025 = vld [vmem:[%s307 + $0x68] sm:$0x1]
        %v1026 = vsel %vm310, %v795, %v1025
        %1027 = vst [vmem:[%s307 + $0x68] sm:$0x1] %v1026
        %v1028 = vld [vmem:[%s307 + $0x6c] sm:$0xf]
        %v1029 = vsel %vm964, %v802, %v1028
        %1030 = vst [vmem:[%s307 + $0x6c] sm:$0xf] %v1029
        %1031 = vst.msk [vmem:[%s307 + $0x70] sm:$0xf] %vm298, %v811
        %v1032 = vld [vmem:[%s307 + $0x74] sm:$0x1]
        %v1033 = vsel %vm310, %v812, %v1032
        %1034 = vst [vmem:[%s307 + $0x74] sm:$0x1] %v1033
        %v1035 = vld [vmem:[%s307 + $0x78] sm:$0xf]
        %v1036 = vsel %vm964, %v819, %v1035
        %1037 = vst [vmem:[%s307 + $0x78] sm:$0xf] %v1036
        %1038 = vst.msk [vmem:[%s307 + $0x7c] sm:$0xf] %vm298, %v828
        %v1039 = vld [vmem:[%s307 + $0x80] sm:$0x1]
        %v1040 = vsel %vm310, %v829, %v1039
        %1041 = vst [vmem:[%s307 + $0x80] sm:$0x1] %v1040
        %v1042 = vld [vmem:[%s307 + $0x84] sm:$0xf]
        %v1043 = vsel %vm964, %v836, %v1042
        %1044 = vst [vmem:[%s307 + $0x84] sm:$0xf] %v1043
        %1045 = vst.msk [vmem:[%s307 + $0x88] sm:$0xf] %vm298, %v845
        %v1046 = vld [vmem:[%s307 + $0x8c] sm:$0x1]
        %v1047 = vsel %vm310, %v846, %v1046
        %1048 = vst [vmem:[%s307 + $0x8c] sm:$0x1] %v1047
        %v1049 = vld [vmem:[%s307 + $0x90] sm:$0xf]
        %v1050 = vsel %vm964, %v853, %v1049
        %1051 = vst [vmem:[%s307 + $0x90] sm:$0xf] %v1050
        %1052 = vst.msk [vmem:[%s307 + $0x94] sm:$0xf] %vm298, %v862
        %v1053 = vld [vmem:[%s307 + $0x98] sm:$0x1]
        %v1054 = vsel %vm310, %v863, %v1053
        %1055 = vst [vmem:[%s307 + $0x98] sm:$0x1] %v1054
        %v1056 = vld [vmem:[%s307 + $0x9c] sm:$0xf]
        %v1057 = vsel %vm964, %v870, %v1056
        %1058 = vst [vmem:[%s307 + $0x9c] sm:$0xf] %v1057
        %1059 = vst.msk [vmem:[%s307 + $0xa0] sm:$0xf] %vm298, %v879
        %v1060 = vld [vmem:[%s307 + $0xa4] sm:$0x1]
        %v1061 = vsel %vm310, %v880, %v1060
        %1062 = vst [vmem:[%s307 + $0xa4] sm:$0x1] %v1061
        %v1063 = vld [vmem:[%s307 + $0xa8] sm:$0xf]
        %v1064 = vsel %vm964, %v887, %v1063
        %1065 = vst [vmem:[%s307 + $0xa8] sm:$0xf] %v1064
        %1066 = vst.msk [vmem:[%s307 + $0xac] sm:$0xf] %vm298, %v896
        %v1067 = vld [vmem:[%s307 + $0xb0] sm:$0x1]
        %v1068 = vsel %vm310, %v897, %v1067
        %1069 = vst [vmem:[%s307 + $0xb0] sm:$0x1] %v1068
        %v1070 = vld [vmem:[%s307 + $0xb4] sm:$0xf]
        %v1071 = vsel %vm964, %v904, %v1070
        %1072 = vst [vmem:[%s307 + $0xb4] sm:$0xf] %v1071
        %1073 = vst.msk [vmem:[%s307 + $0xb8] sm:$0xf] %vm298, %v913
        %v1074 = vld [vmem:[%s307 + $0xbc] sm:$0x1]
        %v1075 = vsel %vm310, %v914, %v1074
        %1076 = vst [vmem:[%s307 + $0xbc] sm:$0x1] %v1075
        %v1077 = vld [vmem:[#allocation2] sm:$0xf]
        %v1078 = vld [vmem:[#allocation2 + $0x4] sm:$0xf]
        %v1079 = vld [vmem:[#allocation2 + $0xc] sm:$0xf]
        %v1080 = vld [vmem:[#allocation2 + $0x10] sm:$0xf]
        %v1081 = vld [vmem:[#allocation2 + $0x18] sm:$0xf]
        %v1082 = vld [vmem:[#allocation2 + $0x1c] sm:$0xf]
        %v1083 = vld [vmem:[#allocation2 + $0x24] sm:$0xf]
        %v1084 = vld [vmem:[#allocation2 + $0x28] sm:$0xf]
        %v1085 = vld [vmem:[#allocation2 + $0x30] sm:$0xf]
        %v1086 = vld [vmem:[#allocation2 + $0x34] sm:$0xf]
        %v1087 = vld [vmem:[#allocation2 + $0x3c] sm:$0xf]
        %v1088 = vld [vmem:[#allocation2 + $0x40] sm:$0xf]
        %v1089 = vld [vmem:[#allocation2 + $0x48] sm:$0xf]
        %v1090 = vld [vmem:[#allocation2 + $0x4c] sm:$0xf]
        %v1091 = vld [vmem:[#allocation2 + $0x54] sm:$0xf]
        %v1092 = vld [vmem:[#allocation2 + $0x58] sm:$0xf]
        %v1093 = vld [vmem:[#allocation2 + $0x60] sm:$0xf]
        %v1094 = vld [vmem:[#allocation2 + $0x64] sm:$0xf]
        %v1095 = vld [vmem:[#allocation2 + $0x6c] sm:$0xf]
        %v1096 = vld [vmem:[#allocation2 + $0x70] sm:$0xf]
        %v1097 = vld [vmem:[#allocation2 + $0x78] sm:$0xf]
        %v1098 = vld [vmem:[#allocation2 + $0x7c] sm:$0xf]
        %v1099 = vld [vmem:[#allocation2 + $0x84] sm:$0xf]
        %v1100 = vld [vmem:[#allocation2 + $0x88] sm:$0xf]
        %v1101 = vld [vmem:[#allocation2 + $0x90] sm:$0xf]
        %v1102 = vld [vmem:[#allocation2 + $0x94] sm:$0xf]
        %v1103 = vld [vmem:[#allocation2 + $0x9c] sm:$0xf]
        %v1104 = vld [vmem:[#allocation2 + $0xa0] sm:$0xf]
        %v1105 = vld [vmem:[#allocation2 + $0xa8] sm:$0xf]
        %v1106 = vld [vmem:[#allocation2 + $0xac] sm:$0xf]
        %v1107 = vld [vmem:[#allocation2 + $0xb4] sm:$0xf]
        %v1108 = vld [vmem:[#allocation2 + $0xb8] sm:$0xf]
        %v1109 = vld [vmem:[#allocation7] sm:$0x3]
        %v1110 = vld [vmem:[#allocation2 + $0x8] sm:$0x1]
        %v1111 = vld [vmem:[#allocation2 + $0x14] sm:$0x1]
        %v1112 = vld [vmem:[#allocation2 + $0x20] sm:$0x1]
        %v1113 = vld [vmem:[#allocation2 + $0x2c] sm:$0x1]
        %v1114 = vld [vmem:[#allocation2 + $0x38] sm:$0x1]
        %v1115 = vld [vmem:[#allocation2 + $0x44] sm:$0x1]
        %v1116 = vld [vmem:[#allocation2 + $0x50] sm:$0x1]
        %v1117 = vld [vmem:[#allocation2 + $0x5c] sm:$0x1]
        %v1118 = vld [vmem:[#allocation2 + $0x68] sm:$0x1]
        %v1119 = vld [vmem:[#allocation2 + $0x74] sm:$0x1]
        %v1120 = vld [vmem:[#allocation2 + $0x80] sm:$0x1]
        %v1121 = vld [vmem:[#allocation2 + $0x8c] sm:$0x1]
        %v1122 = vld [vmem:[#allocation2 + $0x98] sm:$0x1]
        %v1123 = vld [vmem:[#allocation2 + $0xa4] sm:$0x1]
        %v1124 = vld [vmem:[#allocation2 + $0xb0] sm:$0x1]
        %v1125 = vld [vmem:[#allocation2 + $0xbc] sm:$0x1]
        %vm1126 = vsmask.f32 3328
        %vm1127 = vsmask.f32 7440
        %vm1128 = vmor %vm1126, %vm1127
        %v1130 = vshrl.u32 %v1077, 16
        %v1132 = vrot.slane %v1130, 4
        %v1133 = vshll.u32 %v1077, 16
        %v1135 = vrot.slane %v1133, 5
        %v1136 = vor.u32 %v1132, %v1135
        %v1137 = vrot.slane %v1136, 4
        %v1139 = vshll.u32 %v1078, 16
        %v1141 = vrot.slane %v1139, 5
        %v1142 = vsel %vm1128, %v1137, %v1141
        %v1143 = vshrl.u32 %v1078, 16
        %v1145 = vrot.slane %v1143, 4
        %v1146 = vor.u32 %v1145, %v1141
        %v1147 = vrot.slane %v1146, 4
        %v1149 = vshll.u32 %v1110, 16
        %v1151 = vrot.slane %v1149, 5
        %v1152 = vsel %vm1128, %v1147, %v1151
        %v1154 = vshrl.u32 %v1079, 16
        %v1156 = vrot.slane %v1154, 4
        %v1157 = vshll.u32 %v1079, 16
        %v1159 = vrot.slane %v1157, 5
        %v1160 = vor.u32 %v1156, %v1159
        %v1161 = vrot.slane %v1160, 4
        %v1163 = vshll.u32 %v1080, 16
        %v1165 = vrot.slane %v1163, 5
        %v1166 = vsel %vm1128, %v1161, %v1165
        %v1167 = vshrl.u32 %v1080, 16
        %v1169 = vrot.slane %v1167, 4
        %v1170 = vor.u32 %v1169, %v1165
        %v1171 = vrot.slane %v1170, 4
        %v1173 = vshll.u32 %v1111, 16
        %v1175 = vrot.slane %v1173, 5
        %v1176 = vsel %vm1128, %v1171, %v1175
        %v1178 = vshrl.u32 %v1081, 16
        %v1180 = vrot.slane %v1178, 4
        %v1181 = vshll.u32 %v1081, 16
        %v1183 = vrot.slane %v1181, 5
        %v1184 = vor.u32 %v1180, %v1183
        %v1185 = vrot.slane %v1184, 4
        %v1187 = vshll.u32 %v1082, 16
        %v1189 = vrot.slane %v1187, 5
        %v1190 = vsel %vm1128, %v1185, %v1189
        %v1191 = vshrl.u32 %v1082, 16
        %v1193 = vrot.slane %v1191, 4
        %v1194 = vor.u32 %v1193, %v1189
        %v1195 = vrot.slane %v1194, 4
        %v1197 = vshll.u32 %v1112, 16
        %v1199 = vrot.slane %v1197, 5
        %v1200 = vsel %vm1128, %v1195, %v1199
        %v1202 = vshrl.u32 %v1083, 16
        %v1204 = vrot.slane %v1202, 4
        %v1205 = vshll.u32 %v1083, 16
        %v1207 = vrot.slane %v1205, 5
        %v1208 = vor.u32 %v1204, %v1207
        %v1209 = vrot.slane %v1208, 4
        %v1211 = vshll.u32 %v1084, 16
        %v1213 = vrot.slane %v1211, 5
        %v1214 = vsel %vm1128, %v1209, %v1213
        %v1215 = vshrl.u32 %v1084, 16
        %v1217 = vrot.slane %v1215, 4
        %v1218 = vor.u32 %v1217, %v1213
        %v1219 = vrot.slane %v1218, 4
        %v1221 = vshll.u32 %v1113, 16
        %v1223 = vrot.slane %v1221, 5
        %v1224 = vsel %vm1128, %v1219, %v1223
        %v1226 = vshrl.u32 %v1085, 16
        %v1228 = vrot.slane %v1226, 4
        %v1229 = vshll.u32 %v1085, 16
        %v1231 = vrot.slane %v1229, 5
        %v1232 = vor.u32 %v1228, %v1231
        %v1233 = vrot.slane %v1232, 4
        %v1235 = vshll.u32 %v1086, 16
        %v1237 = vrot.slane %v1235, 5
        %v1238 = vsel %vm1128, %v1233, %v1237
        %v1239 = vshrl.u32 %v1086, 16
        %v1241 = vrot.slane %v1239, 4
        %v1242 = vor.u32 %v1241, %v1237
        %v1243 = vrot.slane %v1242, 4
        %v1245 = vshll.u32 %v1114, 16
        %v1247 = vrot.slane %v1245, 5
        %v1248 = vsel %vm1128, %v1243, %v1247
        %v1250 = vshrl.u32 %v1087, 16
        %v1252 = vrot.slane %v1250, 4
        %v1253 = vshll.u32 %v1087, 16
        %v1255 = vrot.slane %v1253, 5
        %v1256 = vor.u32 %v1252, %v1255
        %v1257 = vrot.slane %v1256, 4
        %v1259 = vshll.u32 %v1088, 16
        %v1261 = vrot.slane %v1259, 5
        %v1262 = vsel %vm1128, %v1257, %v1261
        %v1263 = vshrl.u32 %v1088, 16
        %v1265 = vrot.slane %v1263, 4
        %v1266 = vor.u32 %v1265, %v1261
        %v1267 = vrot.slane %v1266, 4
        %v1269 = vshll.u32 %v1115, 16
        %v1271 = vrot.slane %v1269, 5
        %v1272 = vsel %vm1128, %v1267, %v1271
        %v1274 = vshrl.u32 %v1089, 16
        %v1276 = vrot.slane %v1274, 4
        %v1277 = vshll.u32 %v1089, 16
        %v1279 = vrot.slane %v1277, 5
        %v1280 = vor.u32 %v1276, %v1279
        %v1281 = vrot.slane %v1280, 4
        %v1283 = vshll.u32 %v1090, 16
        %v1285 = vrot.slane %v1283, 5
        %v1286 = vsel %vm1128, %v1281, %v1285
        %v1287 = vshrl.u32 %v1090, 16
        %v1289 = vrot.slane %v1287, 4
        %v1290 = vor.u32 %v1289, %v1285
        %v1291 = vrot.slane %v1290, 4
        %v1293 = vshll.u32 %v1116, 16
        %v1295 = vrot.slane %v1293, 5
        %v1296 = vsel %vm1128, %v1291, %v1295
        %v1298 = vshrl.u32 %v1091, 16
        %v1300 = vrot.slane %v1298, 4
        %v1301 = vshll.u32 %v1091, 16
        %v1303 = vrot.slane %v1301, 5
        %v1304 = vor.u32 %v1300, %v1303
        %v1305 = vrot.slane %v1304, 4
        %v1307 = vshll.u32 %v1092, 16
        %v1309 = vrot.slane %v1307, 5
        %v1310 = vsel %vm1128, %v1305, %v1309
        %v1311 = vshrl.u32 %v1092, 16
        %v1313 = vrot.slane %v1311, 4
        %v1314 = vor.u32 %v1313, %v1309
        %v1315 = vrot.slane %v1314, 4
        %v1317 = vshll.u32 %v1117, 16
        %v1319 = vrot.slane %v1317, 5
        %v1320 = vsel %vm1128, %v1315, %v1319
        %v1322 = vshrl.u32 %v1093, 16
        %v1324 = vrot.slane %v1322, 4
        %v1325 = vshll.u32 %v1093, 16
        %v1327 = vrot.slane %v1325, 5
        %v1328 = vor.u32 %v1324, %v1327
        %v1329 = vrot.slane %v1328, 4
        %v1331 = vshll.u32 %v1094, 16
        %v1333 = vrot.slane %v1331, 5
        %v1334 = vsel %vm1128, %v1329, %v1333
        %v1335 = vshrl.u32 %v1094, 16
        %v1337 = vrot.slane %v1335, 4
        %v1338 = vor.u32 %v1337, %v1333
        %v1339 = vrot.slane %v1338, 4
        %v1341 = vshll.u32 %v1118, 16
        %v1343 = vrot.slane %v1341, 5
        %v1344 = vsel %vm1128, %v1339, %v1343
        %v1346 = vshrl.u32 %v1095, 16
        %v1348 = vrot.slane %v1346, 4
        %v1349 = vshll.u32 %v1095, 16
        %v1351 = vrot.slane %v1349, 5
        %v1352 = vor.u32 %v1348, %v1351
        %v1353 = vrot.slane %v1352, 4
        %v1355 = vshll.u32 %v1096, 16
        %v1357 = vrot.slane %v1355, 5
        %v1358 = vsel %vm1128, %v1353, %v1357
        %v1359 = vshrl.u32 %v1096, 16
        %v1361 = vrot.slane %v1359, 4
        %v1362 = vor.u32 %v1361, %v1357
        %v1363 = vrot.slane %v1362, 4
        %v1365 = vshll.u32 %v1119, 16
        %v1367 = vrot.slane %v1365, 5
        %v1368 = vsel %vm1128, %v1363, %v1367
        %v1370 = vshrl.u32 %v1097, 16
        %v1372 = vrot.slane %v1370, 4
        %v1373 = vshll.u32 %v1097, 16
        %v1375 = vrot.slane %v1373, 5
        %v1376 = vor.u32 %v1372, %v1375
        %v1377 = vrot.slane %v1376, 4
        %v1379 = vshll.u32 %v1098, 16
        %v1381 = vrot.slane %v1379, 5
        %v1382 = vsel %vm1128, %v1377, %v1381
        %v1383 = vshrl.u32 %v1098, 16
        %v1385 = vrot.slane %v1383, 4
        %v1386 = vor.u32 %v1385, %v1381
        %v1387 = vrot.slane %v1386, 4
        %v1389 = vshll.u32 %v1120, 16
        %v1391 = vrot.slane %v1389, 5
        %v1392 = vsel %vm1128, %v1387, %v1391
        %v1394 = vshrl.u32 %v1099, 16
        %v1396 = vrot.slane %v1394, 4
        %v1397 = vshll.u32 %v1099, 16
        %v1399 = vrot.slane %v1397, 5
        %v1400 = vor.u32 %v1396, %v1399
        %v1401 = vrot.slane %v1400, 4
        %v1403 = vshll.u32 %v1100, 16
        %v1405 = vrot.slane %v1403, 5
        %v1406 = vsel %vm1128, %v1401, %v1405
        %v1407 = vshrl.u32 %v1100, 16
        %v1409 = vrot.slane %v1407, 4
        %v1410 = vor.u32 %v1409, %v1405
        %v1411 = vrot.slane %v1410, 4
        %v1413 = vshll.u32 %v1121, 16
        %v1415 = vrot.slane %v1413, 5
        %v1416 = vsel %vm1128, %v1411, %v1415
        %v1418 = vshrl.u32 %v1101, 16
        %v1420 = vrot.slane %v1418, 4
        %v1421 = vshll.u32 %v1101, 16
        %v1423 = vrot.slane %v1421, 5
        %v1424 = vor.u32 %v1420, %v1423
        %v1425 = vrot.slane %v1424, 4
        %v1427 = vshll.u32 %v1102, 16
        %v1429 = vrot.slane %v1427, 5
        %v1430 = vsel %vm1128, %v1425, %v1429
        %v1431 = vshrl.u32 %v1102, 16
        %v1433 = vrot.slane %v1431, 4
        %v1434 = vor.u32 %v1433, %v1429
        %v1435 = vrot.slane %v1434, 4
        %v1437 = vshll.u32 %v1122, 16
        %v1439 = vrot.slane %v1437, 5
        %v1440 = vsel %vm1128, %v1435, %v1439
        %v1442 = vshrl.u32 %v1103, 16
        %v1444 = vrot.slane %v1442, 4
        %v1445 = vshll.u32 %v1103, 16
        %v1447 = vrot.slane %v1445, 5
        %v1448 = vor.u32 %v1444, %v1447
        %v1449 = vrot.slane %v1448, 4
        %v1451 = vshll.u32 %v1104, 16
        %v1453 = vrot.slane %v1451, 5
        %v1454 = vsel %vm1128, %v1449, %v1453
        %v1455 = vshrl.u32 %v1104, 16
        %v1457 = vrot.slane %v1455, 4
        %v1458 = vor.u32 %v1457, %v1453
        %v1459 = vrot.slane %v1458, 4
        %v1461 = vshll.u32 %v1123, 16
        %v1463 = vrot.slane %v1461, 5
        %v1464 = vsel %vm1128, %v1459, %v1463
        %v1466 = vshrl.u32 %v1105, 16
        %v1468 = vrot.slane %v1466, 4
        %v1469 = vshll.u32 %v1105, 16
        %v1471 = vrot.slane %v1469, 5
        %v1472 = vor.u32 %v1468, %v1471
        %v1473 = vrot.slane %v1472, 4
        %v1475 = vshll.u32 %v1106, 16
        %v1477 = vrot.slane %v1475, 5
        %v1478 = vsel %vm1128, %v1473, %v1477
        %v1479 = vshrl.u32 %v1106, 16
        %v1481 = vrot.slane %v1479, 4
        %v1482 = vor.u32 %v1481, %v1477
        %v1483 = vrot.slane %v1482, 4
        %v1485 = vshll.u32 %v1124, 16
        %v1487 = vrot.slane %v1485, 5
        %v1488 = vsel %vm1128, %v1483, %v1487
        %v1490 = vshrl.u32 %v1107, 16
        %v1492 = vrot.slane %v1490, 4
        %v1493 = vshll.u32 %v1107, 16
        %v1495 = vrot.slane %v1493, 5
        %v1496 = vor.u32 %v1492, %v1495
        %v1497 = vrot.slane %v1496, 4
        %v1499 = vshll.u32 %v1108, 16
        %v1501 = vrot.slane %v1499, 5
        %v1502 = vsel %vm1128, %v1497, %v1501
        %v1503 = vshrl.u32 %v1108, 16
        %v1505 = vrot.slane %v1503, 4
        %v1506 = vor.u32 %v1505, %v1501
        %v1507 = vrot.slane %v1506, 4
        %v1509 = vshll.u32 %v1125, 16
        %v1511 = vrot.slane %v1509, 5
        %v1512 = vsel %vm1128, %v1507, %v1511
        %s1513 = scalar_lea.vmem [#allocation7], 2
        %v1514 = vld [vmem:[%s1513] sm:$0x3]
        %v1515 = vunpack.c.l.b16 %v1142
        %v1516 = vunpack.c.l.b16 %v1152
        %v1517 = vunpack.c.l.b16 %v1166
        %v1518 = vunpack.c.l.b16 %v1176
        %v1519 = vunpack.c.l.b16 %v1190
        %v1520 = vunpack.c.l.b16 %v1200
        %v1521 = vunpack.c.l.b16 %v1214
        %v1522 = vunpack.c.l.b16 %v1224
        %v1523 = vunpack.c.l.b16 %v1238
        %v1524 = vunpack.c.l.b16 %v1248
        %v1525 = vunpack.c.l.b16 %v1262
        %v1526 = vunpack.c.l.b16 %v1272
        %v1527 = vunpack.c.l.b16 %v1286
        %v1528 = vunpack.c.l.b16 %v1296
        %v1529 = vunpack.c.l.b16 %v1310
        %v1530 = vunpack.c.l.b16 %v1320
        %v1531 = vunpack.c.l.b16 %v1334
        %v1532 = vunpack.c.l.b16 %v1344
        %v1533 = vunpack.c.l.b16 %v1358
        %v1534 = vunpack.c.l.b16 %v1368
        %v1535 = vunpack.c.l.b16 %v1382
        %v1536 = vunpack.c.l.b16 %v1392
        %v1537 = vunpack.c.l.b16 %v1406
        %v1538 = vunpack.c.l.b16 %v1416
        %v1539 = vunpack.c.l.b16 %v1430
        %v1540 = vunpack.c.l.b16 %v1440
        %v1541 = vunpack.c.l.b16 %v1454
        %v1542 = vunpack.c.l.b16 %v1464
        %v1543 = vunpack.c.l.b16 %v1478
        %v1544 = vunpack.c.l.b16 %v1488
        %v1545 = vunpack.c.l.b16 %v1502
        %v1546 = vunpack.c.l.b16 %v1512
        %v1547 = vpack.c.b16 %v1516, %v1515
        %v1548 = vpack.c.b16 %v1518, %v1517
        %v1549 = vpack.c.b16 %v1520, %v1519
        %v1550 = vpack.c.b16 %v1522, %v1521
        %v1551 = vpack.c.b16 %v1524, %v1523
        %v1552 = vpack.c.b16 %v1526, %v1525
        %v1553 = vpack.c.b16 %v1528, %v1527
        %v1554 = vpack.c.b16 %v1530, %v1529
        %v1555 = vpack.c.b16 %v1532, %v1531
        %v1556 = vpack.c.b16 %v1534, %v1533
        %v1557 = vpack.c.b16 %v1536, %v1535
        %v1558 = vpack.c.b16 %v1538, %v1537
        %v1559 = vpack.c.b16 %v1540, %v1539
        %v1560 = vpack.c.b16 %v1542, %v1541
        %v1561 = vpack.c.b16 %v1544, %v1543
        %v1562 = vpack.c.b16 %v1546, %v1545
        %vm1563 = vcmask 31744
        %v1565 = vsel %vm1563, %v1547, 0
        %v1568 = vsel %vm1563, %v1548, 0
        %v1571 = vsel %vm1563, %v1549, 0
        %v1574 = vsel %vm1563, %v1550, 0
        %v1577 = vsel %vm1563, %v1551, 0
        %v1580 = vsel %vm1563, %v1552, 0
        %v1583 = vsel %vm1563, %v1553, 0
        %v1586 = vsel %vm1563, %v1554, 0
        %v1589 = vsel %vm1563, %v1555, 0
        %v1592 = vsel %vm1563, %v1556, 0
        %v1595 = vsel %vm1563, %v1557, 0
        %v1598 = vsel %vm1563, %v1558, 0
        %v1601 = vsel %vm1563, %v1559, 0
        %v1604 = vsel %vm1563, %v1560, 0
        %v1607 = vsel %vm1563, %v1561, 0
        %v1610 = vsel %vm1563, %v1562, 0
        %vm1612 = vcmask 1041408
        %v1614 = vsel %vm1612, %v1514, 0
        %1616 = vmatprep.subr.bf16.mxu0 0
        %1617 = vmatpush1.bf16.msra.mxu0 %v1614
        %1618 = vmatprep.subr.bf16.mxu0 0
        %1619 = vmatpush1.bf16.msra.mxu0 0
        %1620 = vmatprep.subr.bf16.mxu0 0
        %1621 = vmatpush1.bf16.msra.mxu0 0
        %1622 = vmatprep.subr.bf16.mxu0 0
        %1623 = vmatpush1.bf16.msra.mxu0 0
        %1624 = vmatprep.subr.bf16.mxu0 0
        %1625 = vmatpush1.bf16.msra.mxu0 0
        %1626 = vmatprep.subr.bf16.mxu0 0
        %1627 = vmatpush1.bf16.msra.mxu0 0
        %1628 = vmatprep.subr.bf16.mxu0 0
        %1629 = vmatpush1.bf16.msra.mxu0 0
        %1630 = vmatprep.subr.bf16.mxu0 0
        %1631 = vmatpush1.bf16.msra.mxu0 0
        %1632 = vmatprep.subr.bf16.mxu0 0
        %1633 = vmatpush1.bf16.msra.mxu0 0
        %1634 = vmatprep.subr.bf16.mxu0 0
        %1635 = vmatpush1.bf16.msra.mxu0 0
        %1636 = vmatprep.subr.bf16.mxu0 0
        %1637 = vmatpush1.bf16.msra.mxu0 0
        %1638 = vmatprep.subr.bf16.mxu0 0
        %1639 = vmatpush1.bf16.msra.mxu0 0
        %1640 = vmatprep.subr.bf16.mxu0 0
        %1641 = vmatpush1.bf16.msra.mxu0 0
        %1642 = vmatprep.subr.bf16.mxu0 0
        %1643 = vmatpush1.bf16.msra.mxu0 0
        %1644 = vmatprep.subr.bf16.mxu0 0
        %1645 = vmatpush1.bf16.msra.mxu0 0
        %1646 = vmatprep.subr.bf16.mxu0 0
        %1647 = vmatpush1.bf16.msra.mxu0 0
        %1648 = vmatprep.mubr.bf16.mxu0 0
        %1649 = vmatmul.mubr.bf16.gmra.mrb[0].mxu0 %v1565
        %v1650 = vpop.f32.mrb[0].mxu0
        %v1651 = vadd.f32 0.0, %v1650
        %v1652 = vpop.f32.mrb[0].mxu0
        %v1653 = vpop.f32.mrb[0].mxu0
        %v1654 = vadd.f32 0.0, %v1653
        %v1655 = vpop.f32.mrb[0].mxu0
        %1656 = vmatprep.mubr.bf16.mxu0 0
        %1657 = vmatmul.mubr.bf16.gmra.mrb[0].mxu0 %v1568
        %v1658 = vpop.f32.mrb[0].mxu0
        %v1659 = vadd.f32 0.0, %v1658
        %v1660 = vpop.f32.mrb[0].mxu0
        %v1661 = vpop.f32.mrb[0].mxu0
        %v1662 = vadd.f32 0.0, %v1661
        %v1663 = vpop.f32.mrb[0].mxu0
        %1664 = vmatprep.mubr.bf16.mxu0 0
        %1665 = vmatmul.mubr.bf16.gmra.mrb[0].mxu0 %v1571
        %v1666 = vpop.f32.mrb[0].mxu0
        %v1667 = vadd.f32 0.0, %v1666
        %v1668 = vpop.f32.mrb[0].mxu0
        %v1669 = vpop.f32.mrb[0].mxu0
        %v1670 = vadd.f32 0.0, %v1669
        %v1671 = vpop.f32.mrb[0].mxu0
        %1672 = vmatprep.mubr.bf16.mxu0 0
        %1673 = vmatmul.mubr.bf16.gmra.mrb[0].mxu0 %v1574
        %v1674 = vpop.f32.mrb[0].mxu0
        %v1675 = vadd.f32 0.0, %v1674
        %v1676 = vpop.f32.mrb[0].mxu0
        %v1677 = vpop.f32.mrb[0].mxu0
        %v1678 = vadd.f32 0.0, %v1677
        %v1679 = vpop.f32.mrb[0].mxu0
        %1680 = vmatprep.mubr.bf16.mxu0 0
        %1681 = vmatmul.mubr.bf16.gmra.mrb[0].mxu0 %v1577
        %v1682 = vpop.f32.mrb[0].mxu0
        %v1683 = vadd.f32 0.0, %v1682
        %v1684 = vpop.f32.mrb[0].mxu0
        %v1685 = vpop.f32.mrb[0].mxu0
        %v1686 = vadd.f32 0.0, %v1685
        %v1687 = vpop.f32.mrb[0].mxu0
        %1688 = vmatprep.mubr.bf16.mxu0 0
        %1689 = vmatmul.mubr.bf16.gmra.mrb[0].mxu0 %v1580
        %v1690 = vpop.f32.mrb[0].mxu0
        %v1691 = vadd.f32 0.0, %v1690
        %v1692 = vpop.f32.mrb[0].mxu0
        %v1693 = vpop.f32.mrb[0].mxu0
        %v1694 = vadd.f32 0.0, %v1693
        %v1695 = vpop.f32.mrb[0].mxu0
        %1696 = vmatprep.mubr.bf16.mxu0 0
        %1697 = vmatmul.mubr.bf16.gmra.mrb[0].mxu0 %v1583
        %v1698 = vpop.f32.mrb[0].mxu0
        %v1699 = vadd.f32 0.0, %v1698
        %v1700 = vpop.f32.mrb[0].mxu0
        %v1701 = vpop.f32.mrb[0].mxu0
        %v1702 = vadd.f32 0.0, %v1701
        %v1703 = vpop.f32.mrb[0].mxu0
        %1704 = vmatprep.mubr.bf16.mxu0 0
        %1705 = vmatmul.mubr.bf16.gmra.mrb[0].mxu0 %v1586
        %v1706 = vpop.f32.mrb[0].mxu0
        %v1707 = vadd.f32 0.0, %v1706
        %v1708 = vpop.f32.mrb[0].mxu0
        %v1709 = vpop.f32.mrb[0].mxu0
        %v1710 = vadd.f32 0.0, %v1709
        %v1711 = vpop.f32.mrb[0].mxu0
        %1712 = vmatprep.mubr.bf16.mxu0 0
        %1713 = vmatmul.mubr.bf16.gmra.mrb[0].mxu0 %v1589
        %v1714 = vpop.f32.mrb[0].mxu0
        %v1715 = vadd.f32 0.0, %v1714
        %v1716 = vpop.f32.mrb[0].mxu0
        %v1717 = vpop.f32.mrb[0].mxu0
        %v1718 = vadd.f32 0.0, %v1717
        %v1719 = vpop.f32.mrb[0].mxu0
        %1720 = vmatprep.mubr.bf16.mxu0 0
        %1721 = vmatmul.mubr.bf16.gmra.mrb[0].mxu0 %v1592
        %v1722 = vpop.f32.mrb[0].mxu0
        %v1723 = vadd.f32 0.0, %v1722
        %v1724 = vpop.f32.mrb[0].mxu0
        %v1725 = vpop.f32.mrb[0].mxu0
        %v1726 = vadd.f32 0.0, %v1725
        %v1727 = vpop.f32.mrb[0].mxu0
        %1728 = vmatprep.mubr.bf16.mxu0 0
        %1729 = vmatmul.mubr.bf16.gmra.mrb[0].mxu0 %v1595
        %v1730 = vpop.f32.mrb[0].mxu0
        %v1731 = vadd.f32 0.0, %v1730
        %v1732 = vpop.f32.mrb[0].mxu0
        %v1733 = vpop.f32.mrb[0].mxu0
        %v1734 = vadd.f32 0.0, %v1733
        %v1735 = vpop.f32.mrb[0].mxu0
        %1736 = vmatprep.mubr.bf16.mxu0 0
        %1737 = vmatmul.mubr.bf16.gmra.mrb[0].mxu0 %v1598
        %v1738 = vpop.f32.mrb[0].mxu0
        %v1739 = vadd.f32 0.0, %v1738
        %v1740 = vpop.f32.mrb[0].mxu0
        %v1741 = vpop.f32.mrb[0].mxu0
        %v1742 = vadd.f32 0.0, %v1741
        %v1743 = vpop.f32.mrb[0].mxu0
        %1744 = vmatprep.mubr.bf16.mxu0 0
        %1745 = vmatmul.mubr.bf16.gmra.mrb[0].mxu0 %v1601
        %v1746 = vpop.f32.mrb[0].mxu0
        %v1747 = vadd.f32 0.0, %v1746
        %v1748 = vpop.f32.mrb[0].mxu0
        %v1749 = vpop.f32.mrb[0].mxu0
        %v1750 = vadd.f32 0.0, %v1749
        %v1751 = vpop.f32.mrb[0].mxu0
        %1752 = vmatprep.mubr.bf16.mxu0 0
        %1753 = vmatmul.mubr.bf16.gmra.mrb[0].mxu0 %v1604
        %v1754 = vpop.f32.mrb[0].mxu0
        %v1755 = vadd.f32 0.0, %v1754
        %v1756 = vpop.f32.mrb[0].mxu0
        %v1757 = vpop.f32.mrb[0].mxu0
        %v1758 = vadd.f32 0.0, %v1757
        %v1759 = vpop.f32.mrb[0].mxu0
        %1760 = vmatprep.mubr.bf16.mxu0 0
        %1761 = vmatmul.mubr.bf16.gmra.mrb[0].mxu0 %v1607
        %v1762 = vpop.f32.mrb[0].mxu0
        %v1763 = vadd.f32 0.0, %v1762
        %v1764 = vpop.f32.mrb[0].mxu0
        %v1765 = vpop.f32.mrb[0].mxu0
        %v1766 = vadd.f32 0.0, %v1765
        %v1767 = vpop.f32.mrb[0].mxu0
        %1768 = vmatprep.mubr.bf16.mxu0 0
        %1769 = vmatmul.mubr.bf16.gmra.mrb[0].mxu0 %v1610
        %v1770 = vpop.f32.mrb[0].mxu0
        %v1771 = vadd.f32 0.0, %v1770
        %v1772 = vpop.f32.mrb[0].mxu0
        %v1773 = vpop.f32.mrb[0].mxu0
        %v1774 = vadd.f32 0.0, %v1773
        %v1775 = vpop.f32.mrb[0].mxu0
        %1776 = vdwg.mxu0
        %v1809 = vunpack.c.l.b16 %v1077
        %v1810 = vunpack.c.l.b16 %v1078
        %v1811 = vunpack.c.l.b16 %v1079
        %v1812 = vunpack.c.l.b16 %v1080
        %v1813 = vunpack.c.l.b16 %v1081
        %v1814 = vunpack.c.l.b16 %v1082
        %v1815 = vunpack.c.l.b16 %v1083
        %v1816 = vunpack.c.l.b16 %v1084
        %v1817 = vunpack.c.l.b16 %v1085
        %v1818 = vunpack.c.l.b16 %v1086
        %v1819 = vunpack.c.l.b16 %v1087
        %v1820 = vunpack.c.l.b16 %v1088
        %v1821 = vunpack.c.l.b16 %v1089
        %v1822 = vunpack.c.l.b16 %v1090
        %v1823 = vunpack.c.l.b16 %v1091
        %v1824 = vunpack.c.l.b16 %v1092
        %v1825 = vunpack.c.l.b16 %v1093
        %v1826 = vunpack.c.l.b16 %v1094
        %v1827 = vunpack.c.l.b16 %v1095
        %v1828 = vunpack.c.l.b16 %v1096
        %v1829 = vunpack.c.l.b16 %v1097
        %v1830 = vunpack.c.l.b16 %v1098
        %v1831 = vunpack.c.l.b16 %v1099
        %v1832 = vunpack.c.l.b16 %v1100
        %v1833 = vunpack.c.l.b16 %v1101
        %v1834 = vunpack.c.l.b16 %v1102
        %v1835 = vunpack.c.l.b16 %v1103
        %v1836 = vunpack.c.l.b16 %v1104
        %v1837 = vunpack.c.l.b16 %v1105
        %v1838 = vunpack.c.l.b16 %v1106
        %v1839 = vunpack.c.l.b16 %v1107
        %v1840 = vunpack.c.l.b16 %v1108
        %v1841 = vpack.c.b16 %v1810, %v1809
        %v1842 = vpack.c.b16 %v1812, %v1811
        %v1843 = vpack.c.b16 %v1814, %v1813
        %v1844 = vpack.c.b16 %v1816, %v1815
        %v1845 = vpack.c.b16 %v1818, %v1817
        %v1846 = vpack.c.b16 %v1820, %v1819
        %v1847 = vpack.c.b16 %v1822, %v1821
        %v1848 = vpack.c.b16 %v1824, %v1823
        %v1849 = vpack.c.b16 %v1826, %v1825
        %v1850 = vpack.c.b16 %v1828, %v1827
        %v1851 = vpack.c.b16 %v1830, %v1829
        %v1852 = vpack.c.b16 %v1832, %v1831
        %v1853 = vpack.c.b16 %v1834, %v1833
        %v1854 = vpack.c.b16 %v1836, %v1835
        %v1855 = vpack.c.b16 %v1838, %v1837
        %v1856 = vpack.c.b16 %v1840, %v1839
        %v1858 = vsel %vm1563, %v1841, 0
        %v1861 = vsel %vm1563, %v1842, 0
        %v1864 = vsel %vm1563, %v1843, 0
        %v1867 = vsel %vm1563, %v1844, 0
        %v1870 = vsel %vm1563, %v1845, 0
        %v1873 = vsel %vm1563, %v1846, 0
        %v1876 = vsel %vm1563, %v1847, 0
        %v1879 = vsel %vm1563, %v1848, 0
        %v1882 = vsel %vm1563, %v1849, 0
        %v1885 = vsel %vm1563, %v1850, 0
        %v1888 = vsel %vm1563, %v1851, 0
        %v1891 = vsel %vm1563, %v1852, 0
        %v1894 = vsel %vm1563, %v1853, 0
        %v1897 = vsel %vm1563, %v1854, 0
        %v1900 = vsel %vm1563, %v1855, 0
        %v1903 = vsel %vm1563, %v1856, 0
        %v1906 = vsel %vm1612, %v1109, 0
        %1908 = vmatprep.subr.bf16.mxu0 0
        %1909 = vmatpush1.bf16.msra.mxu0 %v1906
        %1910 = vmatprep.subr.bf16.mxu0 0
        %1911 = vmatpush1.bf16.msra.mxu0 0
        %1912 = vmatprep.subr.bf16.mxu0 0
        %1913 = vmatpush1.bf16.msra.mxu0 0
        %1914 = vmatprep.subr.bf16.mxu0 0
        %1915 = vmatpush1.bf16.msra.mxu0 0
        %1916 = vmatprep.subr.bf16.mxu0 0
        %1917 = vmatpush1.bf16.msra.mxu0 0
        %1918 = vmatprep.subr.bf16.mxu0 0
        %1919 = vmatpush1.bf16.msra.mxu0 0
        %1920 = vmatprep.subr.bf16.mxu0 0
        %1921 = vmatpush1.bf16.msra.mxu0 0
        %1922 = vmatprep.subr.bf16.mxu0 0
        %1923 = vmatpush1.bf16.msra.mxu0 0
        %1924 = vmatprep.subr.bf16.mxu0 0
        %1925 = vmatpush1.bf16.msra.mxu0 0
        %1926 = vmatprep.subr.bf16.mxu0 0
        %1927 = vmatpush1.bf16.msra.mxu0 0
        %1928 = vmatprep.subr.bf16.mxu0 0
        %1929 = vmatpush1.bf16.msra.mxu0 0
        %1930 = vmatprep.subr.bf16.mxu0 0
        %1931 = vmatpush1.bf16.msra.mxu0 0
        %1932 = vmatprep.subr.bf16.mxu0 0
        %1933 = vmatpush1.bf16.msra.mxu0 0
        %1934 = vmatprep.subr.bf16.mxu0 0
        %1935 = vmatpush1.bf16.msra.mxu0 0
        %1936 = vmatprep.subr.bf16.mxu0 0
        %1937 = vmatpush1.bf16.msra.mxu0 0
        %1938 = vmatprep.subr.bf16.mxu0 0
        %1939 = vmatpush1.bf16.msra.mxu0 0
        %1940 = vmatprep.mubr.bf16.mxu0 0
        %1941 = vmatmul.mubr.bf16.gmra.mrb[0].mxu0 %v1858
        %v1942 = vpop.f32.mrb[0].mxu0
        %v1943 = vadd.f32 %v1651, %v1942
        %v1944 = vpop.f32.mrb[0].mxu0
        %v1945 = vpop.f32.mrb[0].mxu0
        %v1946 = vadd.f32 %v1654, %v1945
        %v1947 = vpop.f32.mrb[0].mxu0
        %1948 = vmatprep.mubr.bf16.mxu0 0
        %1949 = vmatmul.mubr.bf16.gmra.mrb[0].mxu0 %v1861
        %v1950 = vpop.f32.mrb[0].mxu0
        %v1951 = vadd.f32 %v1659, %v1950
        %v1952 = vpop.f32.mrb[0].mxu0
        %v1953 = vpop.f32.mrb[0].mxu0
        %v1954 = vadd.f32 %v1662, %v1953
        %v1955 = vpop.f32.mrb[0].mxu0
        %1956 = vmatprep.mubr.bf16.mxu0 0
        %1957 = vmatmul.mubr.bf16.gmra.mrb[0].mxu0 %v1864
        %v1958 = vpop.f32.mrb[0].mxu0
        %v1959 = vadd.f32 %v1667, %v1958
        %v1960 = vpop.f32.mrb[0].mxu0
        %v1961 = vpop.f32.mrb[0].mxu0
        %v1962 = vadd.f32 %v1670, %v1961
        %v1963 = vpop.f32.mrb[0].mxu0
        %1964 = vmatprep.mubr.bf16.mxu0 0
        %1965 = vmatmul.mubr.bf16.gmra.mrb[0].mxu0 %v1867
        %v1966 = vpop.f32.mrb[0].mxu0
        %v1967 = vadd.f32 %v1675, %v1966
        %v1968 = vpop.f32.mrb[0].mxu0
        %v1969 = vpop.f32.mrb[0].mxu0
        %v1970 = vadd.f32 %v1678, %v1969
        %v1971 = vpop.f32.mrb[0].mxu0
        %1972 = vmatprep.mubr.bf16.mxu0 0
        %1973 = vmatmul.mubr.bf16.gmra.mrb[0].mxu0 %v1870
        %v1974 = vpop.f32.mrb[0].mxu0
        %v1975 = vadd.f32 %v1683, %v1974
        %v1976 = vpop.f32.mrb[0].mxu0
        %v1977 = vpop.f32.mrb[0].mxu0
        %v1978 = vadd.f32 %v1686, %v1977
        %v1979 = vpop.f32.mrb[0].mxu0
        %1980 = vmatprep.mubr.bf16.mxu0 0
        %1981 = vmatmul.mubr.bf16.gmra.mrb[0].mxu0 %v1873
        %v1982 = vpop.f32.mrb[0].mxu0
        %v1983 = vadd.f32 %v1691, %v1982
        %v1984 = vpop.f32.mrb[0].mxu0
        %v1985 = vpop.f32.mrb[0].mxu0
        %v1986 = vadd.f32 %v1694, %v1985
        %v1987 = vpop.f32.mrb[0].mxu0
        %1988 = vmatprep.mubr.bf16.mxu0 0
        %1989 = vmatmul.mubr.bf16.gmra.mrb[0].mxu0 %v1876
        %v1990 = vpop.f32.mrb[0].mxu0
        %v1991 = vadd.f32 %v1699, %v1990
        %v1992 = vpop.f32.mrb[0].mxu0
        %v1993 = vpop.f32.mrb[0].mxu0
        %v1994 = vadd.f32 %v1702, %v1993
        %v1995 = vpop.f32.mrb[0].mxu0
        %1996 = vmatprep.mubr.bf16.mxu0 0
        %1997 = vmatmul.mubr.bf16.gmra.mrb[0].mxu0 %v1879
        %v1998 = vpop.f32.mrb[0].mxu0
        %v1999 = vadd.f32 %v1707, %v1998
        %v2000 = vpop.f32.mrb[0].mxu0
        %v2001 = vpop.f32.mrb[0].mxu0
        %v2002 = vadd.f32 %v1710, %v2001
        %v2003 = vpop.f32.mrb[0].mxu0
        %2004 = vmatprep.mubr.bf16.mxu0 0
        %2005 = vmatmul.mubr.bf16.gmra.mrb[0].mxu0 %v1882
        %v2006 = vpop.f32.mrb[0].mxu0
        %v2007 = vadd.f32 %v1715, %v2006
        %v2008 = vpop.f32.mrb[0].mxu0
        %v2009 = vpop.f32.mrb[0].mxu0
        %v2010 = vadd.f32 %v1718, %v2009
        %v2011 = vpop.f32.mrb[0].mxu0
        %2012 = vmatprep.mubr.bf16.mxu0 0
        %2013 = vmatmul.mubr.bf16.gmra.mrb[0].mxu0 %v1885
        %v2014 = vpop.f32.mrb[0].mxu0
        %v2015 = vadd.f32 %v1723, %v2014
        %v2016 = vpop.f32.mrb[0].mxu0
        %v2017 = vpop.f32.mrb[0].mxu0
        %v2018 = vadd.f32 %v1726, %v2017
        %v2019 = vpop.f32.mrb[0].mxu0
        %2020 = vmatprep.mubr.bf16.mxu0 0
        %2021 = vmatmul.mubr.bf16.gmra.mrb[0].mxu0 %v1888
        %v2022 = vpop.f32.mrb[0].mxu0
        %v2023 = vadd.f32 %v1731, %v2022
        %v2024 = vpop.f32.mrb[0].mxu0
        %v2025 = vpop.f32.mrb[0].mxu0
        %v2026 = vadd.f32 %v1734, %v2025
        %v2027 = vpop.f32.mrb[0].mxu0
        %2028 = vmatprep.mubr.bf16.mxu0 0
        %2029 = vmatmul.mubr.bf16.gmra.mrb[0].mxu0 %v1891
        %v2030 = vpop.f32.mrb[0].mxu0
        %v2031 = vadd.f32 %v1739, %v2030
        %v2032 = vpop.f32.mrb[0].mxu0
        %v2033 = vpop.f32.mrb[0].mxu0
        %v2034 = vadd.f32 %v1742, %v2033
        %v2035 = vpop.f32.mrb[0].mxu0
        %2036 = vmatprep.mubr.bf16.mxu0 0
        %2037 = vmatmul.mubr.bf16.gmra.mrb[0].mxu0 %v1894
        %v2038 = vpop.f32.mrb[0].mxu0
        %v2039 = vadd.f32 %v1747, %v2038
        %v2040 = vpop.f32.mrb[0].mxu0
        %v2041 = vpop.f32.mrb[0].mxu0
        %v2042 = vadd.f32 %v1750, %v2041
        %v2043 = vpop.f32.mrb[0].mxu0
        %2044 = vmatprep.mubr.bf16.mxu0 0
        %2045 = vmatmul.mubr.bf16.gmra.mrb[0].mxu0 %v1897
        %v2046 = vpop.f32.mrb[0].mxu0
        %v2047 = vadd.f32 %v1755, %v2046
        %v2048 = vpop.f32.mrb[0].mxu0
        %v2049 = vpop.f32.mrb[0].mxu0
        %v2050 = vadd.f32 %v1758, %v2049
        %v2051 = vpop.f32.mrb[0].mxu0
        %2052 = vmatprep.mubr.bf16.mxu0 0
        %2053 = vmatmul.mubr.bf16.gmra.mrb[0].mxu0 %v1900
        %v2054 = vpop.f32.mrb[0].mxu0
        %v2055 = vadd.f32 %v1763, %v2054
        %v2056 = vpop.f32.mrb[0].mxu0
        %v2057 = vpop.f32.mrb[0].mxu0
        %v2058 = vadd.f32 %v1766, %v2057
        %v2059 = vpop.f32.mrb[0].mxu0
        %2060 = vmatprep.mubr.bf16.mxu0 0
        %2061 = vmatmul.mubr.bf16.gmra.mrb[0].mxu0 %v1903
        %v2062 = vpop.f32.mrb[0].mxu0
        %v2063 = vadd.f32 %v1771, %v2062
        %v2064 = vpop.f32.mrb[0].mxu0
        %v2065 = vpop.f32.mrb[0].mxu0
        %v2066 = vadd.f32 %v1774, %v2065
        %v2067 = vpop.f32.mrb[0].mxu0
        %2068 = vdwg.mxu0
        %v2069 = vld [vmem:[#allocation2] sm:$0xe]
        %v2070 = vld [vmem:[#allocation2 + $0xc] sm:$0xe]
        %v2071 = vld [vmem:[#allocation2 + $0x18] sm:$0xe]
        %v2072 = vld [vmem:[#allocation2 + $0x24] sm:$0xe]
        %v2073 = vld [vmem:[#allocation2 + $0x30] sm:$0xe]
        %v2074 = vld [vmem:[#allocation2 + $0x3c] sm:$0xe]
        %v2075 = vld [vmem:[#allocation2 + $0x48] sm:$0xe]
        %v2076 = vld [vmem:[#allocation2 + $0x54] sm:$0xe]
        %v2077 = vld [vmem:[#allocation2 + $0x60] sm:$0xe]
        %v2078 = vld [vmem:[#allocation2 + $0x6c] sm:$0xe]
        %v2079 = vld [vmem:[#allocation2 + $0x78] sm:$0xe]
        %v2080 = vld [vmem:[#allocation2 + $0x84] sm:$0xe]
        %v2081 = vld [vmem:[#allocation2 + $0x90] sm:$0xe]
        %v2082 = vld [vmem:[#allocation2 + $0x9c] sm:$0xe]
        %v2083 = vld [vmem:[#allocation2 + $0xa8] sm:$0xe]
        %v2084 = vld [vmem:[#allocation2 + $0xb4] sm:$0xe]
        %vm2117 = vcmask 1042432
        %vm2118 = vcmask 1046532
        %vm2119 = vmor %vm2117, %vm2118
        %v2120 = vrot.slane %v2069, 5
        %v2121 = vrot.slane %v2120, 4
        %v2122 = vrot.slane %v1078, 5
        %v2123 = vsel %vm2119, %v2121, %v2122
        %v2124 = vrot.slane %v2122, 4
        %v2125 = vrot.slane %v1110, 5
        %v2126 = vsel %vm2119, %v2124, %v2125
        %v2127 = vrot.slane %v2070, 5
        %v2128 = vrot.slane %v2127, 4
        %v2129 = vrot.slane %v1080, 5
        %v2130 = vsel %vm2119, %v2128, %v2129
        %v2131 = vrot.slane %v2129, 4
        %v2132 = vrot.slane %v1111, 5
        %v2133 = vsel %vm2119, %v2131, %v2132
        %v2134 = vrot.slane %v2071, 5
        %v2135 = vrot.slane %v2134, 4
        %v2136 = vrot.slane %v1082, 5
        %v2137 = vsel %vm2119, %v2135, %v2136
        %v2138 = vrot.slane %v2136, 4
        %v2139 = vrot.slane %v1112, 5
        %v2140 = vsel %vm2119, %v2138, %v2139
        %v2141 = vrot.slane %v2072, 5
        %v2142 = vrot.slane %v2141, 4
        %v2143 = vrot.slane %v1084, 5
        %v2144 = vsel %vm2119, %v2142, %v2143
        %v2145 = vrot.slane %v2143, 4
        %v2146 = vrot.slane %v1113, 5
        %v2147 = vsel %vm2119, %v2145, %v2146
        %v2148 = vrot.slane %v2073, 5
        %v2149 = vrot.slane %v2148, 4
        %v2150 = vrot.slane %v1086, 5
        %v2151 = vsel %vm2119, %v2149, %v2150
        %v2152 = vrot.slane %v2150, 4
        %v2153 = vrot.slane %v1114, 5
        %v2154 = vsel %vm2119, %v2152, %v2153
        %v2155 = vrot.slane %v2074, 5
        %v2156 = vrot.slane %v2155, 4
        %v2157 = vrot.slane %v1088, 5
        %v2158 = vsel %vm2119, %v2156, %v2157
        %v2159 = vrot.slane %v2157, 4
        %v2160 = vrot.slane %v1115, 5
        %v2161 = vsel %vm2119, %v2159, %v2160
        %v2162 = vrot.slane %v2075, 5
        %v2163 = vrot.slane %v2162, 4
        %v2164 = vrot.slane %v1090, 5
        %v2165 = vsel %vm2119, %v2163, %v2164
        %v2166 = vrot.slane %v2164, 4
        %v2167 = vrot.slane %v1116, 5
        %v2168 = vsel %vm2119, %v2166, %v2167
        %v2169 = vrot.slane %v2076, 5
        %v2170 = vrot.slane %v2169, 4
        %v2171 = vrot.slane %v1092, 5
        %v2172 = vsel %vm2119, %v2170, %v2171
        %v2173 = vrot.slane %v2171, 4
        %v2174 = vrot.slane %v1117, 5
        %v2175 = vsel %vm2119, %v2173, %v2174
        %v2176 = vrot.slane %v2077, 5
        %v2177 = vrot.slane %v2176, 4
        %v2178 = vrot.slane %v1094, 5
        %v2179 = vsel %vm2119, %v2177, %v2178
        %v2180 = vrot.slane %v2178, 4
        %v2181 = vrot.slane %v1118, 5
        %v2182 = vsel %vm2119, %v2180, %v2181
        %v2183 = vrot.slane %v2078, 5
        %v2184 = vrot.slane %v2183, 4
        %v2185 = vrot.slane %v1096, 5
        %v2186 = vsel %vm2119, %v2184, %v2185
        %v2187 = vrot.slane %v2185, 4
        %v2188 = vrot.slane %v1119, 5
        %v2189 = vsel %vm2119, %v2187, %v2188
        %v2190 = vrot.slane %v2079, 5
        %v2191 = vrot.slane %v2190, 4
        %v2192 = vrot.slane %v1098, 5
        %v2193 = vsel %vm2119, %v2191, %v2192
        %v2194 = vrot.slane %v2192, 4
        %v2195 = vrot.slane %v1120, 5
        %v2196 = vsel %vm2119, %v2194, %v2195
        %v2197 = vrot.slane %v2080, 5
        %v2198 = vrot.slane %v2197, 4
        %v2199 = vrot.slane %v1100, 5
        %v2200 = vsel %vm2119, %v2198, %v2199
        %v2201 = vrot.slane %v2199, 4
        %v2202 = vrot.slane %v1121, 5
        %v2203 = vsel %vm2119, %v2201, %v2202
        %v2204 = vrot.slane %v2081, 5
        %v2205 = vrot.slane %v2204, 4
        %v2206 = vrot.slane %v1102, 5
        %v2207 = vsel %vm2119, %v2205, %v2206
        %v2208 = vrot.slane %v2206, 4
        %v2209 = vrot.slane %v1122, 5
        %v2210 = vsel %vm2119, %v2208, %v2209
        %v2211 = vrot.slane %v2082, 5
        %v2212 = vrot.slane %v2211, 4
        %v2213 = vrot.slane %v1104, 5
        %v2214 = vsel %vm2119, %v2212, %v2213
        %v2215 = vrot.slane %v2213, 4
        %v2216 = vrot.slane %v1123, 5
        %v2217 = vsel %vm2119, %v2215, %v2216
        %v2218 = vrot.slane %v2083, 5
        %v2219 = vrot.slane %v2218, 4
        %v2220 = vrot.slane %v1106, 5
        %v2221 = vsel %vm2119, %v2219, %v2220
        %v2222 = vrot.slane %v2220, 4
        %v2223 = vrot.slane %v1124, 5
        %v2224 = vsel %vm2119, %v2222, %v2223
        %v2225 = vrot.slane %v2084, 5
        %v2226 = vrot.slane %v2225, 4
        %v2227 = vrot.slane %v1108, 5
        %v2228 = vsel %vm2119, %v2226, %v2227
        %v2229 = vrot.slane %v2227, 4
        %v2230 = vrot.slane %v1125, 5
        %v2231 = vsel %vm2119, %v2229, %v2230
        %s2232 = scalar_lea.vmem [#allocation7], 4
        %v2233 = vld [vmem:[%s2232] sm:$0x3]
        %v2234 = vunpack.c.l.b16 %v2123
        %v2235 = vunpack.c.l.b16 %v2126
        %v2236 = vunpack.c.l.b16 %v2130
        %v2237 = vunpack.c.l.b16 %v2133
        %v2238 = vunpack.c.l.b16 %v2137
        %v2239 = vunpack.c.l.b16 %v2140
        %v2240 = vunpack.c.l.b16 %v2144
        %v2241 = vunpack.c.l.b16 %v2147
        %v2242 = vunpack.c.l.b16 %v2151
        %v2243 = vunpack.c.l.b16 %v2154
        %v2244 = vunpack.c.l.b16 %v2158
        %v2245 = vunpack.c.l.b16 %v2161
        %v2246 = vunpack.c.l.b16 %v2165
        %v2247 = vunpack.c.l.b16 %v2168
        %v2248 = vunpack.c.l.b16 %v2172
        %v2249 = vunpack.c.l.b16 %v2175
        %v2250 = vunpack.c.l.b16 %v2179
        %v2251 = vunpack.c.l.b16 %v2182
        %v2252 = vunpack.c.l.b16 %v2186
        %v2253 = vunpack.c.l.b16 %v2189
        %v2254 = vunpack.c.l.b16 %v2193
        %v2255 = vunpack.c.l.b16 %v2196
        %v2256 = vunpack.c.l.b16 %v2200
        %v2257 = vunpack.c.l.b16 %v2203
        %v2258 = vunpack.c.l.b16 %v2207
        %v2259 = vunpack.c.l.b16 %v2210
        %v2260 = vunpack.c.l.b16 %v2214
        %v2261 = vunpack.c.l.b16 %v2217
        %v2262 = vunpack.c.l.b16 %v2221
        %v2263 = vunpack.c.l.b16 %v2224
        %v2264 = vunpack.c.l.b16 %v2228
        %v2265 = vunpack.c.l.b16 %v2231
        %v2266 = vpack.c.b16 %v2235, %v2234
        %v2267 = vpack.c.b16 %v2237, %v2236
        %v2268 = vpack.c.b16 %v2239, %v2238
        %v2269 = vpack.c.b16 %v2241, %v2240
        %v2270 = vpack.c.b16 %v2243, %v2242
        %v2271 = vpack.c.b16 %v2245, %v2244
        %v2272 = vpack.c.b16 %v2247, %v2246
        %v2273 = vpack.c.b16 %v2249, %v2248
        %v2274 = vpack.c.b16 %v2251, %v2250
        %v2275 = vpack.c.b16 %v2253, %v2252
        %v2276 = vpack.c.b16 %v2255, %v2254
        %v2277 = vpack.c.b16 %v2257, %v2256
        %v2278 = vpack.c.b16 %v2259, %v2258
        %v2279 = vpack.c.b16 %v2261, %v2260
        %v2280 = vpack.c.b16 %v2263, %v2262
        %v2281 = vpack.c.b16 %v2265, %v2264
        %v2283 = vsel %vm1563, %v2266, 0
        %v2286 = vsel %vm1563, %v2267, 0
        %v2289 = vsel %vm1563, %v2268, 0
        %v2292 = vsel %vm1563, %v2269, 0
        %v2295 = vsel %vm1563, %v2270, 0
        %v2298 = vsel %vm1563, %v2271, 0
        %v2301 = vsel %vm1563, %v2272, 0
        %v2304 = vsel %vm1563, %v2273, 0
        %v2307 = vsel %vm1563, %v2274, 0
        %v2310 = vsel %vm1563, %v2275, 0
        %v2313 = vsel %vm1563, %v2276, 0
        %v2316 = vsel %vm1563, %v2277, 0
        %v2319 = vsel %vm1563, %v2278, 0
        %v2322 = vsel %vm1563, %v2279, 0
        %v2325 = vsel %vm1563, %v2280, 0
        %v2328 = vsel %vm1563, %v2281, 0
        %v2331 = vsel %vm1612, %v2233, 0
        %2333 = vmatprep.subr.bf16.mxu0 0
        %2334 = vmatpush1.bf16.msra.mxu0 %v2331
        %2335 = vmatprep.subr.bf16.mxu0 0
        %2336 = vmatpush1.bf16.msra.mxu0 0
        %2337 = vmatprep.subr.bf16.mxu0 0
        %2338 = vmatpush1.bf16.msra.mxu0 0
        %2339 = vmatprep.subr.bf16.mxu0 0
        %2340 = vmatpush1.bf16.msra.mxu0 0
        %2341 = vmatprep.subr.bf16.mxu0 0
        %2342 = vmatpush1.bf16.msra.mxu0 0
        %2343 = vmatprep.subr.bf16.mxu0 0
        %2344 = vmatpush1.bf16.msra.mxu0 0
        %2345 = vmatprep.subr.bf16.mxu0 0
        %2346 = vmatpush1.bf16.msra.mxu0 0
        %2347 = vmatprep.subr.bf16.mxu0 0
        %2348 = vmatpush1.bf16.msra.mxu0 0
        %2349 = vmatprep.subr.bf16.mxu0 0
        %2350 = vmatpush1.bf16.msra.mxu0 0
        %2351 = vmatprep.subr.bf16.mxu0 0
        %2352 = vmatpush1.bf16.msra.mxu0 0
        %2353 = vmatprep.subr.bf16.mxu0 0
        %2354 = vmatpush1.bf16.msra.mxu0 0
        %2355 = vmatprep.subr.bf16.mxu0 0
        %2356 = vmatpush1.bf16.msra.mxu0 0
        %2357 = vmatprep.subr.bf16.mxu0 0
        %2358 = vmatpush1.bf16.msra.mxu0 0
        %2359 = vmatprep.subr.bf16.mxu0 0
        %2360 = vmatpush1.bf16.msra.mxu0 0
        %2361 = vmatprep.subr.bf16.mxu0 0
        %2362 = vmatpush1.bf16.msra.mxu0 0
        %2363 = vmatprep.subr.bf16.mxu0 0
        %2364 = vmatpush1.bf16.msra.mxu0 0
        %2365 = vmatprep.mubr.bf16.mxu0 0
        %2366 = vmatmul.mubr.bf16.gmra.mrb[0].mxu0 %v2283
        %v2367 = vpop.f32.mrb[0].mxu0
        %v2368 = vadd.f32 0.0, %v2367
        %v2369 = vpop.f32.mrb[0].mxu0
        %v2370 = vpop.f32.mrb[0].mxu0
        %v2371 = vadd.f32 0.0, %v2370
        %v2372 = vpop.f32.mrb[0].mxu0
        %2373 = vmatprep.mubr.bf16.mxu0 0
        %2374 = vmatmul.mubr.bf16.gmra.mrb[0].mxu0 %v2286
        %v2375 = vpop.f32.mrb[0].mxu0
        %v2376 = vadd.f32 0.0, %v2375
        %v2377 = vpop.f32.mrb[0].mxu0
        %v2378 = vpop.f32.mrb[0].mxu0
        %v2379 = vadd.f32 0.0, %v2378
        %v2380 = vpop.f32.mrb[0].mxu0
        %2381 = vmatprep.mubr.bf16.mxu0 0
        %2382 = vmatmul.mubr.bf16.gmra.mrb[0].mxu0 %v2289
        %v2383 = vpop.f32.mrb[0].mxu0
        %v2384 = vadd.f32 0.0, %v2383
        %v2385 = vpop.f32.mrb[0].mxu0
        %v2386 = vpop.f32.mrb[0].mxu0
        %v2387 = vadd.f32 0.0, %v2386
        %v2388 = vpop.f32.mrb[0].mxu0
        %2389 = vmatprep.mubr.bf16.mxu0 0
        %2390 = vmatmul.mubr.bf16.gmra.mrb[0].mxu0 %v2292
        %v2391 = vpop.f32.mrb[0].mxu0
        %v2392 = vadd.f32 0.0, %v2391
        %v2393 = vpop.f32.mrb[0].mxu0
        %v2394 = vpop.f32.mrb[0].mxu0
        %v2395 = vadd.f32 0.0, %v2394
        %v2396 = vpop.f32.mrb[0].mxu0
        %2397 = vmatprep.mubr.bf16.mxu0 0
        %2398 = vmatmul.mubr.bf16.gmra.mrb[0].mxu0 %v2295
        %v2399 = vpop.f32.mrb[0].mxu0
        %v2400 = vadd.f32 0.0, %v2399
        %v2401 = vpop.f32.mrb[0].mxu0
        %v2402 = vpop.f32.mrb[0].mxu0
        %v2403 = vadd.f32 0.0, %v2402
        %v2404 = vpop.f32.mrb[0].mxu0
        %2405 = vmatprep.mubr.bf16.mxu0 0
        %2406 = vmatmul.mubr.bf16.gmra.mrb[0].mxu0 %v2298
        %v2407 = vpop.f32.mrb[0].mxu0
        %v2408 = vadd.f32 0.0, %v2407
        %v2409 = vpop.f32.mrb[0].mxu0
        %v2410 = vpop.f32.mrb[0].mxu0
        %v2411 = vadd.f32 0.0, %v2410
        %v2412 = vpop.f32.mrb[0].mxu0
        %2413 = vmatprep.mubr.bf16.mxu0 0
        %2414 = vmatmul.mubr.bf16.gmra.mrb[0].mxu0 %v2301
        %v2415 = vpop.f32.mrb[0].mxu0
        %v2416 = vadd.f32 0.0, %v2415
        %v2417 = vpop.f32.mrb[0].mxu0
        %v2418 = vpop.f32.mrb[0].mxu0
        %v2419 = vadd.f32 0.0, %v2418
        %v2420 = vpop.f32.mrb[0].mxu0
        %2421 = vmatprep.mubr.bf16.mxu0 0
        %2422 = vmatmul.mubr.bf16.gmra.mrb[0].mxu0 %v2304
        %v2423 = vpop.f32.mrb[0].mxu0
        %v2424 = vadd.f32 0.0, %v2423
        %v2425 = vpop.f32.mrb[0].mxu0
        %v2426 = vpop.f32.mrb[0].mxu0
        %v2427 = vadd.f32 0.0, %v2426
        %v2428 = vpop.f32.mrb[0].mxu0
        %2429 = vmatprep.mubr.bf16.mxu0 0
        %2430 = vmatmul.mubr.bf16.gmra.mrb[0].mxu0 %v2307
        %v2431 = vpop.f32.mrb[0].mxu0
        %v2432 = vadd.f32 0.0, %v2431
        %v2433 = vpop.f32.mrb[0].mxu0
        %v2434 = vpop.f32.mrb[0].mxu0
        %v2435 = vadd.f32 0.0, %v2434
        %v2436 = vpop.f32.mrb[0].mxu0
        %2437 = vmatprep.mubr.bf16.mxu0 0
        %2438 = vmatmul.mubr.bf16.gmra.mrb[0].mxu0 %v2310
        %v2439 = vpop.f32.mrb[0].mxu0
        %v2440 = vadd.f32 0.0, %v2439
        %v2441 = vpop.f32.mrb[0].mxu0
        %v2442 = vpop.f32.mrb[0].mxu0
        %v2443 = vadd.f32 0.0, %v2442
        %v2444 = vpop.f32.mrb[0].mxu0
        %2445 = vmatprep.mubr.bf16.mxu0 0
        %2446 = vmatmul.mubr.bf16.gmra.mrb[0].mxu0 %v2313
        %v2447 = vpop.f32.mrb[0].mxu0
        %v2448 = vadd.f32 0.0, %v2447
        %v2449 = vpop.f32.mrb[0].mxu0
        %v2450 = vpop.f32.mrb[0].mxu0
        %v2451 = vadd.f32 0.0, %v2450
        %v2452 = vpop.f32.mrb[0].mxu0
        %2453 = vmatprep.mubr.bf16.mxu0 0
        %2454 = vmatmul.mubr.bf16.gmra.mrb[0].mxu0 %v2316
        %v2455 = vpop.f32.mrb[0].mxu0
        %v2456 = vadd.f32 0.0, %v2455
        %v2457 = vpop.f32.mrb[0].mxu0
        %v2458 = vpop.f32.mrb[0].mxu0
        %v2459 = vadd.f32 0.0, %v2458
        %v2460 = vpop.f32.mrb[0].mxu0
        %2461 = vmatprep.mubr.bf16.mxu0 0
        %2462 = vmatmul.mubr.bf16.gmra.mrb[0].mxu0 %v2319
        %v2463 = vpop.f32.mrb[0].mxu0
        %v2464 = vadd.f32 0.0, %v2463
        %v2465 = vpop.f32.mrb[0].mxu0
        %v2466 = vpop.f32.mrb[0].mxu0
        %v2467 = vadd.f32 0.0, %v2466
        %v2468 = vpop.f32.mrb[0].mxu0
        %2469 = vmatprep.mubr.bf16.mxu0 0
        %2470 = vmatmul.mubr.bf16.gmra.mrb[0].mxu0 %v2322
        %v2471 = vpop.f32.mrb[0].mxu0
        %v2472 = vadd.f32 0.0, %v2471
        %v2473 = vpop.f32.mrb[0].mxu0
        %v2474 = vpop.f32.mrb[0].mxu0
        %v2475 = vadd.f32 0.0, %v2474
        %v2476 = vpop.f32.mrb[0].mxu0
        %2477 = vmatprep.mubr.bf16.mxu0 0
        %2478 = vmatmul.mubr.bf16.gmra.mrb[0].mxu0 %v2325
        %v2479 = vpop.f32.mrb[0].mxu0
        %v2480 = vadd.f32 0.0, %v2479
        %v2481 = vpop.f32.mrb[0].mxu0
        %v2482 = vpop.f32.mrb[0].mxu0
        %v2483 = vadd.f32 0.0, %v2482
        %v2484 = vpop.f32.mrb[0].mxu0
        %2485 = vmatprep.mubr.bf16.mxu0 0
        %2486 = vmatmul.mubr.bf16.gmra.mrb[0].mxu0 %v2328
        %v2487 = vpop.f32.mrb[0].mxu0
        %v2488 = vadd.f32 0.0, %v2487
        %v2489 = vpop.f32.mrb[0].mxu0
        %v2490 = vpop.f32.mrb[0].mxu0
        %v2491 = vadd.f32 0.0, %v2490
        %v2492 = vpop.f32.mrb[0].mxu0
        %2493 = vdwg.mxu0
        %v2494 = vadd.f32 %v1943, %v2368
        %v2495 = vadd.f32 %v1946, %v2371
        %v2496 = vadd.f32 %v1951, %v2376
        %v2497 = vadd.f32 %v1954, %v2379
        %v2498 = vadd.f32 %v1959, %v2384
        %v2499 = vadd.f32 %v1962, %v2387
        %v2500 = vadd.f32 %v1967, %v2392
        %v2501 = vadd.f32 %v1970, %v2395
        %v2502 = vadd.f32 %v1975, %v2400
        %v2503 = vadd.f32 %v1978, %v2403
        %v2504 = vadd.f32 %v1983, %v2408
        %v2505 = vadd.f32 %v1986, %v2411
        %v2506 = vadd.f32 %v1991, %v2416
        %v2507 = vadd.f32 %v1994, %v2419
        %v2508 = vadd.f32 %v1999, %v2424
        %v2509 = vadd.f32 %v2002, %v2427
        %v2510 = vadd.f32 %v2007, %v2432
        %v2511 = vadd.f32 %v2010, %v2435
        %v2512 = vadd.f32 %v2015, %v2440
        %v2513 = vadd.f32 %v2018, %v2443
        %v2514 = vadd.f32 %v2023, %v2448
        %v2515 = vadd.f32 %v2026, %v2451
        %v2516 = vadd.f32 %v2031, %v2456
        %v2517 = vadd.f32 %v2034, %v2459
        %v2518 = vadd.f32 %v2039, %v2464
        %v2519 = vadd.f32 %v2042, %v2467
        %v2520 = vadd.f32 %v2047, %v2472
        %v2521 = vadd.f32 %v2050, %v2475
        %v2522 = vadd.f32 %v2055, %v2480
        %v2523 = vadd.f32 %v2058, %v2483
        %v2524 = vadd.f32 %v2063, %v2488
        %v2525 = vadd.f32 %v2066, %v2491
        %v2526 = vld [vmem:[%s307] sm:$0xf]
        %v2527 = vld [vmem:[%s307 + $0x4] sm:$0xf]
        %v2528 = vld [vmem:[%s307 + $0xc] sm:$0xf]
        %v2529 = vld [vmem:[%s307 + $0x10] sm:$0xf]
        %v2530 = vld [vmem:[%s307 + $0x18] sm:$0xf]
        %v2531 = vld [vmem:[%s307 + $0x1c] sm:$0xf]
        %v2532 = vld [vmem:[%s307 + $0x24] sm:$0xf]
        %v2533 = vld [vmem:[%s307 + $0x28] sm:$0xf]
        %v2534 = vld [vmem:[%s307 + $0x30] sm:$0xf]
        %v2535 = vld [vmem:[%s307 + $0x34] sm:$0xf]
        %v2536 = vld [vmem:[%s307 + $0x3c] sm:$0xf]
        %v2537 = vld [vmem:[%s307 + $0x40] sm:$0xf]
        %v2538 = vld [vmem:[%s307 + $0x48] sm:$0xf]
        %v2539 = vld [vmem:[%s307 + $0x4c] sm:$0xf]
        %v2540 = vld [vmem:[%s307 + $0x54] sm:$0xf]
        %v2541 = vld [vmem:[%s307 + $0x58] sm:$0xf]
        %v2542 = vld [vmem:[%s307 + $0x60] sm:$0xf]
        %v2543 = vld [vmem:[%s307 + $0x64] sm:$0xf]
        %v2544 = vld [vmem:[%s307 + $0x6c] sm:$0xf]
        %v2545 = vld [vmem:[%s307 + $0x70] sm:$0xf]
        %v2546 = vld [vmem:[%s307 + $0x78] sm:$0xf]
        %v2547 = vld [vmem:[%s307 + $0x7c] sm:$0xf]
        %v2548 = vld [vmem:[%s307 + $0x84] sm:$0xf]
        %v2549 = vld [vmem:[%s307 + $0x88] sm:$0xf]
        %v2550 = vld [vmem:[%s307 + $0x90] sm:$0xf]
        %v2551 = vld [vmem:[%s307 + $0x94] sm:$0xf]
        %v2552 = vld [vmem:[%s307 + $0x9c] sm:$0xf]
        %v2553 = vld [vmem:[%s307 + $0xa0] sm:$0xf]
        %v2554 = vld [vmem:[%s307 + $0xa8] sm:$0xf]
        %v2555 = vld [vmem:[%s307 + $0xac] sm:$0xf]
        %v2556 = vld [vmem:[%s307 + $0xb4] sm:$0xf]
        %v2557 = vld [vmem:[%s307 + $0xb8] sm:$0xf]
        %s2558 = scalar_lea.vmem [#allocation7], 6
        %v2559 = vld [vmem:[%s2558] sm:$0x3]
        %v2592 = vunpack.c.l.b16 %v2526
        %v2593 = vunpack.c.l.b16 %v2527
        %v2594 = vunpack.c.l.b16 %v2528
        %v2595 = vunpack.c.l.b16 %v2529
        %v2596 = vunpack.c.l.b16 %v2530
        %v2597 = vunpack.c.l.b16 %v2531
        %v2598 = vunpack.c.l.b16 %v2532
        %v2599 = vunpack.c.l.b16 %v2533
        %v2600 = vunpack.c.l.b16 %v2534
        %v2601 = vunpack.c.l.b16 %v2535
        %v2602 = vunpack.c.l.b16 %v2536
        %v2603 = vunpack.c.l.b16 %v2537
        %v2604 = vunpack.c.l.b16 %v2538
        %v2605 = vunpack.c.l.b16 %v2539
        %v2606 = vunpack.c.l.b16 %v2540
        %v2607 = vunpack.c.l.b16 %v2541
        %v2608 = vunpack.c.l.b16 %v2542
        %v2609 = vunpack.c.l.b16 %v2543
        %v2610 = vunpack.c.l.b16 %v2544
        %v2611 = vunpack.c.l.b16 %v2545
        %v2612 = vunpack.c.l.b16 %v2546
        %v2613 = vunpack.c.l.b16 %v2547
        %v2614 = vunpack.c.l.b16 %v2548
        %v2615 = vunpack.c.l.b16 %v2549
        %v2616 = vunpack.c.l.b16 %v2550
        %v2617 = vunpack.c.l.b16 %v2551
        %v2618 = vunpack.c.l.b16 %v2552
        %v2619 = vunpack.c.l.b16 %v2553
        %v2620 = vunpack.c.l.b16 %v2554
        %v2621 = vunpack.c.l.b16 %v2555
        %v2622 = vunpack.c.l.b16 %v2556
        %v2623 = vunpack.c.l.b16 %v2557
        %v2624 = vpack.c.b16 %v2593, %v2592
        %v2625 = vpack.c.b16 %v2595, %v2594
        %v2626 = vpack.c.b16 %v2597, %v2596
        %v2627 = vpack.c.b16 %v2599, %v2598
        %v2628 = vpack.c.b16 %v2601, %v2600
        %v2629 = vpack.c.b16 %v2603, %v2602
        %v2630 = vpack.c.b16 %v2605, %v2604
        %v2631 = vpack.c.b16 %v2607, %v2606
        %v2632 = vpack.c.b16 %v2609, %v2608
        %v2633 = vpack.c.b16 %v2611, %v2610
        %v2634 = vpack.c.b16 %v2613, %v2612
        %v2635 = vpack.c.b16 %v2615, %v2614
        %v2636 = vpack.c.b16 %v2617, %v2616
        %v2637 = vpack.c.b16 %v2619, %v2618
        %v2638 = vpack.c.b16 %v2621, %v2620
        %v2639 = vpack.c.b16 %v2623, %v2622
        %v2641 = vsel %vm1563, %v2624, 0
        %v2644 = vsel %vm1563, %v2625, 0
        %v2647 = vsel %vm1563, %v2626, 0
        %v2650 = vsel %vm1563, %v2627, 0
        %v2653 = vsel %vm1563, %v2628, 0
        %v2656 = vsel %vm1563, %v2629, 0
        %v2659 = vsel %vm1563, %v2630, 0
        %v2662 = vsel %vm1563, %v2631, 0
        %v2665 = vsel %vm1563, %v2632, 0
        %v2668 = vsel %vm1563, %v2633, 0
        %v2671 = vsel %vm1563, %v2634, 0
        %v2674 = vsel %vm1563, %v2635, 0
        %v2677 = vsel %vm1563, %v2636, 0
        %v2680 = vsel %vm1563, %v2637, 0
        %v2683 = vsel %vm1563, %v2638, 0
        %v2686 = vsel %vm1563, %v2639, 0
        %v2689 = vsel %vm1612, %v2559, 0
        %2691 = vmatprep.subr.bf16.mxu0 0
        %2692 = vmatpush1.bf16.msra.mxu0 %v2689
        %2693 = vmatprep.subr.bf16.mxu0 0
        %2694 = vmatpush1.bf16.msra.mxu0 0
        %2695 = vmatprep.subr.bf16.mxu0 0
        %2696 = vmatpush1.bf16.msra.mxu0 0
        %2697 = vmatprep.subr.bf16.mxu0 0
        %2698 = vmatpush1.bf16.msra.mxu0 0
        %2699 = vmatprep.subr.bf16.mxu0 0
        %2700 = vmatpush1.bf16.msra.mxu0 0
        %2701 = vmatprep.subr.bf16.mxu0 0
        %2702 = vmatpush1.bf16.msra.mxu0 0
        %2703 = vmatprep.subr.bf16.mxu0 0
        %2704 = vmatpush1.bf16.msra.mxu0 0
        %2705 = vmatprep.subr.bf16.mxu0 0
        %2706 = vmatpush1.bf16.msra.mxu0 0
        %2707 = vmatprep.subr.bf16.mxu0 0
        %2708 = vmatpush1.bf16.msra.mxu0 0
        %2709 = vmatprep.subr.bf16.mxu0 0
        %2710 = vmatpush1.bf16.msra.mxu0 0
        %2711 = vmatprep.subr.bf16.mxu0 0
        %2712 = vmatpush1.bf16.msra.mxu0 0
        %2713 = vmatprep.subr.bf16.mxu0 0
        %2714 = vmatpush1.bf16.msra.mxu0 0
        %2715 = vmatprep.subr.bf16.mxu0 0
        %2716 = vmatpush1.bf16.msra.mxu0 0
        %2717 = vmatprep.subr.bf16.mxu0 0
        %2718 = vmatpush1.bf16.msra.mxu0 0
        %2719 = vmatprep.subr.bf16.mxu0 0
        %2720 = vmatpush1.bf16.msra.mxu0 0
        %2721 = vmatprep.subr.bf16.mxu0 0
        %2722 = vmatpush1.bf16.msra.mxu0 0
        %2723 = vmatprep.mubr.bf16.mxu0 0
        %2724 = vmatmul.mubr.bf16.gmra.mrb[0].mxu0 %v2641
        %v2725 = vpop.f32.mrb[0].mxu0
        %v2726 = vadd.f32 0.0, %v2725
        %v2727 = vpop.f32.mrb[0].mxu0
        %v2728 = vpop.f32.mrb[0].mxu0
        %v2729 = vadd.f32 0.0, %v2728
        %v2730 = vpop.f32.mrb[0].mxu0
        %2731 = vmatprep.mubr.bf16.mxu0 0
        %2732 = vmatmul.mubr.bf16.gmra.mrb[0].mxu0 %v2644
        %v2733 = vpop.f32.mrb[0].mxu0
        %v2734 = vadd.f32 0.0, %v2733
        %v2735 = vpop.f32.mrb[0].mxu0
        %v2736 = vpop.f32.mrb[0].mxu0
        %v2737 = vadd.f32 0.0, %v2736
        %v2738 = vpop.f32.mrb[0].mxu0
        %2739 = vmatprep.mubr.bf16.mxu0 0
        %2740 = vmatmul.mubr.bf16.gmra.mrb[0].mxu0 %v2647
        %v2741 = vpop.f32.mrb[0].mxu0
        %v2742 = vadd.f32 0.0, %v2741
        %v2743 = vpop.f32.mrb[0].mxu0
        %v2744 = vpop.f32.mrb[0].mxu0
        %v2745 = vadd.f32 0.0, %v2744
        %v2746 = vpop.f32.mrb[0].mxu0
        %2747 = vmatprep.mubr.bf16.mxu0 0
        %2748 = vmatmul.mubr.bf16.gmra.mrb[0].mxu0 %v2650
        %v2749 = vpop.f32.mrb[0].mxu0
        %v2750 = vadd.f32 0.0, %v2749
        %v2751 = vpop.f32.mrb[0].mxu0
        %v2752 = vpop.f32.mrb[0].mxu0
        %v2753 = vadd.f32 0.0, %v2752
        %v2754 = vpop.f32.mrb[0].mxu0
        %2755 = vmatprep.mubr.bf16.mxu0 0
        %2756 = vmatmul.mubr.bf16.gmra.mrb[0].mxu0 %v2653
        %v2757 = vpop.f32.mrb[0].mxu0
        %v2758 = vadd.f32 0.0, %v2757
        %v2759 = vpop.f32.mrb[0].mxu0
        %v2760 = vpop.f32.mrb[0].mxu0
        %v2761 = vadd.f32 0.0, %v2760
        %v2762 = vpop.f32.mrb[0].mxu0
        %2763 = vmatprep.mubr.bf16.mxu0 0
        %2764 = vmatmul.mubr.bf16.gmra.mrb[0].mxu0 %v2656
        %v2765 = vpop.f32.mrb[0].mxu0
        %v2766 = vadd.f32 0.0, %v2765
        %v2767 = vpop.f32.mrb[0].mxu0
        %v2768 = vpop.f32.mrb[0].mxu0
        %v2769 = vadd.f32 0.0, %v2768
        %v2770 = vpop.f32.mrb[0].mxu0
        %2771 = vmatprep.mubr.bf16.mxu0 0
        %2772 = vmatmul.mubr.bf16.gmra.mrb[0].mxu0 %v2659
        %v2773 = vpop.f32.mrb[0].mxu0
        %v2774 = vadd.f32 0.0, %v2773
        %v2775 = vpop.f32.mrb[0].mxu0
        %v2776 = vpop.f32.mrb[0].mxu0
        %v2777 = vadd.f32 0.0, %v2776
        %v2778 = vpop.f32.mrb[0].mxu0
        %2779 = vmatprep.mubr.bf16.mxu0 0
        %2780 = vmatmul.mubr.bf16.gmra.mrb[0].mxu0 %v2662
        %v2781 = vpop.f32.mrb[0].mxu0
        %v2782 = vadd.f32 0.0, %v2781
        %v2783 = vpop.f32.mrb[0].mxu0
        %v2784 = vpop.f32.mrb[0].mxu0
        %v2785 = vadd.f32 0.0, %v2784
        %v2786 = vpop.f32.mrb[0].mxu0
        %2787 = vmatprep.mubr.bf16.mxu0 0
        %2788 = vmatmul.mubr.bf16.gmra.mrb[0].mxu0 %v2665
        %v2789 = vpop.f32.mrb[0].mxu0
        %v2790 = vadd.f32 0.0, %v2789
        %v2791 = vpop.f32.mrb[0].mxu0
        %v2792 = vpop.f32.mrb[0].mxu0
        %v2793 = vadd.f32 0.0, %v2792
        %v2794 = vpop.f32.mrb[0].mxu0
        %2795 = vmatprep.mubr.bf16.mxu0 0
        %2796 = vmatmul.mubr.bf16.gmra.mrb[0].mxu0 %v2668
        %v2797 = vpop.f32.mrb[0].mxu0
        %v2798 = vadd.f32 0.0, %v2797
        %v2799 = vpop.f32.mrb[0].mxu0
        %v2800 = vpop.f32.mrb[0].mxu0
        %v2801 = vadd.f32 0.0, %v2800
        %v2802 = vpop.f32.mrb[0].mxu0
        %2803 = vmatprep.mubr.bf16.mxu0 0
        %2804 = vmatmul.mubr.bf16.gmra.mrb[0].mxu0 %v2671
        %v2805 = vpop.f32.mrb[0].mxu0
        %v2806 = vadd.f32 0.0, %v2805
        %v2807 = vpop.f32.mrb[0].mxu0
        %v2808 = vpop.f32.mrb[0].mxu0
        %v2809 = vadd.f32 0.0, %v2808
        %v2810 = vpop.f32.mrb[0].mxu0
        %2811 = vmatprep.mubr.bf16.mxu0 0
        %2812 = vmatmul.mubr.bf16.gmra.mrb[0].mxu0 %v2674
        %v2813 = vpop.f32.mrb[0].mxu0
        %v2814 = vadd.f32 0.0, %v2813
        %v2815 = vpop.f32.mrb[0].mxu0
        %v2816 = vpop.f32.mrb[0].mxu0
        %v2817 = vadd.f32 0.0, %v2816
        %v2818 = vpop.f32.mrb[0].mxu0
        %2819 = vmatprep.mubr.bf16.mxu0 0
        %2820 = vmatmul.mubr.bf16.gmra.mrb[0].mxu0 %v2677
        %v2821 = vpop.f32.mrb[0].mxu0
        %v2822 = vadd.f32 0.0, %v2821
        %v2823 = vpop.f32.mrb[0].mxu0
        %v2824 = vpop.f32.mrb[0].mxu0
        %v2825 = vadd.f32 0.0, %v2824
        %v2826 = vpop.f32.mrb[0].mxu0
        %2827 = vmatprep.mubr.bf16.mxu0 0
        %2828 = vmatmul.mubr.bf16.gmra.mrb[0].mxu0 %v2680
        %v2829 = vpop.f32.mrb[0].mxu0
        %v2830 = vadd.f32 0.0, %v2829
        %v2831 = vpop.f32.mrb[0].mxu0
        %v2832 = vpop.f32.mrb[0].mxu0
        %v2833 = vadd.f32 0.0, %v2832
        %v2834 = vpop.f32.mrb[0].mxu0
        %2835 = vmatprep.mubr.bf16.mxu0 0
        %2836 = vmatmul.mubr.bf16.gmra.mrb[0].mxu0 %v2683
        %v2837 = vpop.f32.mrb[0].mxu0
        %v2838 = vadd.f32 0.0, %v2837
        %v2839 = vpop.f32.mrb[0].mxu0
        %v2840 = vpop.f32.mrb[0].mxu0
        %v2841 = vadd.f32 0.0, %v2840
        %v2842 = vpop.f32.mrb[0].mxu0
        %2843 = vmatprep.mubr.bf16.mxu0 0
        %2844 = vmatmul.mubr.bf16.gmra.mrb[0].mxu0 %v2686
        %v2845 = vpop.f32.mrb[0].mxu0
        %v2846 = vadd.f32 0.0, %v2845
        %v2847 = vpop.f32.mrb[0].mxu0
        %v2848 = vpop.f32.mrb[0].mxu0
        %v2849 = vadd.f32 0.0, %v2848
        %v2850 = vpop.f32.mrb[0].mxu0
        %2851 = vdwg.mxu0
        %v2852 = vadd.f32 %v2494, %v2726
        %v2853 = vadd.f32 %v2495, %v2729
        %v2854 = vadd.f32 %v2496, %v2734
        %v2855 = vadd.f32 %v2497, %v2737
        %v2856 = vadd.f32 %v2498, %v2742
        %v2857 = vadd.f32 %v2499, %v2745
        %v2858 = vadd.f32 %v2500, %v2750
        %v2859 = vadd.f32 %v2501, %v2753
        %v2860 = vadd.f32 %v2502, %v2758
        %v2861 = vadd.f32 %v2503, %v2761
        %v2862 = vadd.f32 %v2504, %v2766
        %v2863 = vadd.f32 %v2505, %v2769
        %v2864 = vadd.f32 %v2506, %v2774
        %v2865 = vadd.f32 %v2507, %v2777
        %v2866 = vadd.f32 %v2508, %v2782
        %v2867 = vadd.f32 %v2509, %v2785
        %v2868 = vadd.f32 %v2510, %v2790
        %v2869 = vadd.f32 %v2511, %v2793
        %v2870 = vadd.f32 %v2512, %v2798
        %v2871 = vadd.f32 %v2513, %v2801
        %v2872 = vadd.f32 %v2514, %v2806
        %v2873 = vadd.f32 %v2515, %v2809
        %v2874 = vadd.f32 %v2516, %v2814
        %v2875 = vadd.f32 %v2517, %v2817
        %v2876 = vadd.f32 %v2518, %v2822
        %v2877 = vadd.f32 %v2519, %v2825
        %v2878 = vadd.f32 %v2520, %v2830
        %v2879 = vadd.f32 %v2521, %v2833
        %v2880 = vadd.f32 %v2522, %v2838
        %v2881 = vadd.f32 %v2523, %v2841
        %v2882 = vadd.f32 %v2524, %v2846
        %v2883 = vadd.f32 %v2525, %v2849
        %v2884 = vld [vmem:[%s307] sm:$0xf]
        %v2885 = vld [vmem:[%s307 + $0x4] sm:$0xf]
        %v2886 = vld [vmem:[%s307 + $0x8] sm:$0x1]
        %v2887 = vld [vmem:[%s307 + $0xc] sm:$0xf]
        %v2888 = vld [vmem:[%s307 + $0x10] sm:$0xf]
        %v2889 = vld [vmem:[%s307 + $0x14] sm:$0x1]
        %v2890 = vld [vmem:[%s307 + $0x18] sm:$0xf]
        %v2891 = vld [vmem:[%s307 + $0x1c] sm:$0xf]
        %v2892 = vld [vmem:[%s307 + $0x20] sm:$0x1]
        %v2893 = vld [vmem:[%s307 + $0x24] sm:$0xf]
        %v2894 = vld [vmem:[%s307 + $0x28] sm:$0xf]
        %v2895 = vld [vmem:[%s307 + $0x2c] sm:$0x1]
        %v2896 = vld [vmem:[%s307 + $0x30] sm:$0xf]
        %v2897 = vld [vmem:[%s307 + $0x34] sm:$0xf]
        %v2898 = vld [vmem:[%s307 + $0x38] sm:$0x1]
        %v2899 = vld [vmem:[%s307 + $0x3c] sm:$0xf]
        %v2900 = vld [vmem:[%s307 + $0x40] sm:$0xf]
        %v2901 = vld [vmem:[%s307 + $0x44] sm:$0x1]
        %v2902 = vld [vmem:[%s307 + $0x48] sm:$0xf]
        %v2903 = vld [vmem:[%s307 + $0x4c] sm:$0xf]
        %v2904 = vld [vmem:[%s307 + $0x50] sm:$0x1]
        %v2905 = vld [vmem:[%s307 + $0x54] sm:$0xf]
        %v2906 = vld [vmem:[%s307 + $0x58] sm:$0xf]
        %v2907 = vld [vmem:[%s307 + $0x5c] sm:$0x1]
        %v2908 = vld [vmem:[%s307 + $0x60] sm:$0xf]
        %v2909 = vld [vmem:[%s307 + $0x64] sm:$0xf]
        %v2910 = vld [vmem:[%s307 + $0x68] sm:$0x1]
        %v2911 = vld [vmem:[%s307 + $0x6c] sm:$0xf]
        %v2912 = vld [vmem:[%s307 + $0x70] sm:$0xf]
        %v2913 = vld [vmem:[%s307 + $0x74] sm:$0x1]
        %v2914 = vld [vmem:[%s307 + $0x78] sm:$0xf]
        %v2915 = vld [vmem:[%s307 + $0x7c] sm:$0xf]
        %v2916 = vld [vmem:[%s307 + $0x80] sm:$0x1]
        %v2917 = vld [vmem:[%s307 + $0x84] sm:$0xf]
        %v2918 = vld [vmem:[%s307 + $0x88] sm:$0xf]
        %v2919 = vld [vmem:[%s307 + $0x8c] sm:$0x1]
        %v2920 = vld [vmem:[%s307 + $0x90] sm:$0xf]
        %v2921 = vld [vmem:[%s307 + $0x94] sm:$0xf]
        %v2922 = vld [vmem:[%s307 + $0x98] sm:$0x1]
        %v2923 = vld [vmem:[%s307 + $0x9c] sm:$0xf]
        %v2924 = vld [vmem:[%s307 + $0xa0] sm:$0xf]
        %v2925 = vld [vmem:[%s307 + $0xa4] sm:$0x1]
        %v2926 = vld [vmem:[%s307 + $0xa8] sm:$0xf]
        %v2927 = vld [vmem:[%s307 + $0xac] sm:$0xf]
        %v2928 = vld [vmem:[%s307 + $0xb0] sm:$0x1]
        %v2929 = vld [vmem:[%s307 + $0xb4] sm:$0xf]
        %v2930 = vld [vmem:[%s307 + $0xb8] sm:$0xf]
        %v2931 = vld [vmem:[%s307 + $0xbc] sm:$0x1]
        %v2933 = vshrl.u32 %v2884, 16
        %v2935 = vrot.slane %v2933, 4
        %v2936 = vshll.u32 %v2884, 16
        %v2938 = vrot.slane %v2936, 5
        %v2939 = vor.u32 %v2935, %v2938
        %v2940 = vrot.slane %v2939, 4
        %v2942 = vshll.u32 %v2885, 16
        %v2944 = vrot.slane %v2942, 5
        %v2945 = vsel %vm1128, %v2940, %v2944
        %v2946 = vshrl.u32 %v2885, 16
        %v2948 = vrot.slane %v2946, 4
        %v2949 = vor.u32 %v2948, %v2944
        %v2950 = vrot.slane %v2949, 4
        %v2952 = vshll.u32 %v2886, 16
        %v2954 = vrot.slane %v2952, 5
        %v2955 = vsel %vm1128, %v2950, %v2954
        %v2957 = vshrl.u32 %v2887, 16
        %v2959 = vrot.slane %v2957, 4
        %v2960 = vshll.u32 %v2887, 16
        %v2962 = vrot.slane %v2960, 5
        %v2963 = vor.u32 %v2959, %v2962
        %v2964 = vrot.slane %v2963, 4
        %v2966 = vshll.u32 %v2888, 16
        %v2968 = vrot.slane %v2966, 5
        %v2969 = vsel %vm1128, %v2964, %v2968
        %v2970 = vshrl.u32 %v2888, 16
        %v2972 = vrot.slane %v2970, 4
        %v2973 = vor.u32 %v2972, %v2968
        %v2974 = vrot.slane %v2973, 4
        %v2976 = vshll.u32 %v2889, 16
        %v2978 = vrot.slane %v2976, 5
        %v2979 = vsel %vm1128, %v2974, %v2978
        %v2981 = vshrl.u32 %v2890, 16
        %v2983 = vrot.slane %v2981, 4
        %v2984 = vshll.u32 %v2890, 16
        %v2986 = vrot.slane %v2984, 5
        %v2987 = vor.u32 %v2983, %v2986
        %v2988 = vrot.slane %v2987, 4
        %v2990 = vshll.u32 %v2891, 16
        %v2992 = vrot.slane %v2990, 5
        %v2993 = vsel %vm1128, %v2988, %v2992
        %v2994 = vshrl.u32 %v2891, 16
        %v2996 = vrot.slane %v2994, 4
        %v2997 = vor.u32 %v2996, %v2992
        %v2998 = vrot.slane %v2997, 4
        %v3000 = vshll.u32 %v2892, 16
        %v3002 = vrot.slane %v3000, 5
        %v3003 = vsel %vm1128, %v2998, %v3002
        %v3005 = vshrl.u32 %v2893, 16
        %v3007 = vrot.slane %v3005, 4
        %v3008 = vshll.u32 %v2893, 16
        %v3010 = vrot.slane %v3008, 5
        %v3011 = vor.u32 %v3007, %v3010
        %v3012 = vrot.slane %v3011, 4
        %v3014 = vshll.u32 %v2894, 16
        %v3016 = vrot.slane %v3014, 5
        %v3017 = vsel %vm1128, %v3012, %v3016
        %v3018 = vshrl.u32 %v2894, 16
        %v3020 = vrot.slane %v3018, 4
        %v3021 = vor.u32 %v3020, %v3016
        %v3022 = vrot.slane %v3021, 4
        %v3024 = vshll.u32 %v2895, 16
        %v3026 = vrot.slane %v3024, 5
        %v3027 = vsel %vm1128, %v3022, %v3026
        %v3029 = vshrl.u32 %v2896, 16
        %v3031 = vrot.slane %v3029, 4
        %v3032 = vshll.u32 %v2896, 16
        %v3034 = vrot.slane %v3032, 5
        %v3035 = vor.u32 %v3031, %v3034
        %v3036 = vrot.slane %v3035, 4
        %v3038 = vshll.u32 %v2897, 16
        %v3040 = vrot.slane %v3038, 5
        %v3041 = vsel %vm1128, %v3036, %v3040
        %v3042 = vshrl.u32 %v2897, 16
        %v3044 = vrot.slane %v3042, 4
        %v3045 = vor.u32 %v3044, %v3040
        %v3046 = vrot.slane %v3045, 4
        %v3048 = vshll.u32 %v2898, 16
        %v3050 = vrot.slane %v3048, 5
        %v3051 = vsel %vm1128, %v3046, %v3050
        %v3053 = vshrl.u32 %v2899, 16
        %v3055 = vrot.slane %v3053, 4
        %v3056 = vshll.u32 %v2899, 16
        %v3058 = vrot.slane %v3056, 5
        %v3059 = vor.u32 %v3055, %v3058
        %v3060 = vrot.slane %v3059, 4
        %v3062 = vshll.u32 %v2900, 16
        %v3064 = vrot.slane %v3062, 5
        %v3065 = vsel %vm1128, %v3060, %v3064
        %v3066 = vshrl.u32 %v2900, 16
        %v3068 = vrot.slane %v3066, 4
        %v3069 = vor.u32 %v3068, %v3064
        %v3070 = vrot.slane %v3069, 4
        %v3072 = vshll.u32 %v2901, 16
        %v3074 = vrot.slane %v3072, 5
        %v3075 = vsel %vm1128, %v3070, %v3074
        %v3077 = vshrl.u32 %v2902, 16
        %v3079 = vrot.slane %v3077, 4
        %v3080 = vshll.u32 %v2902, 16
        %v3082 = vrot.slane %v3080, 5
        %v3083 = vor.u32 %v3079, %v3082
        %v3084 = vrot.slane %v3083, 4
        %v3086 = vshll.u32 %v2903, 16
        %v3088 = vrot.slane %v3086, 5
        %v3089 = vsel %vm1128, %v3084, %v3088
        %v3090 = vshrl.u32 %v2903, 16
        %v3092 = vrot.slane %v3090, 4
        %v3093 = vor.u32 %v3092, %v3088
        %v3094 = vrot.slane %v3093, 4
        %v3096 = vshll.u32 %v2904, 16
        %v3098 = vrot.slane %v3096, 5
        %v3099 = vsel %vm1128, %v3094, %v3098
        %v3101 = vshrl.u32 %v2905, 16
        %v3103 = vrot.slane %v3101, 4
        %v3104 = vshll.u32 %v2905, 16
        %v3106 = vrot.slane %v3104, 5
        %v3107 = vor.u32 %v3103, %v3106
        %v3108 = vrot.slane %v3107, 4
        %v3110 = vshll.u32 %v2906, 16
        %v3112 = vrot.slane %v3110, 5
        %v3113 = vsel %vm1128, %v3108, %v3112
        %v3114 = vshrl.u32 %v2906, 16
        %v3116 = vrot.slane %v3114, 4
        %v3117 = vor.u32 %v3116, %v3112
        %v3118 = vrot.slane %v3117, 4
        %v3120 = vshll.u32 %v2907, 16
        %v3122 = vrot.slane %v3120, 5
        %v3123 = vsel %vm1128, %v3118, %v3122
        %v3125 = vshrl.u32 %v2908, 16
        %v3127 = vrot.slane %v3125, 4
        %v3128 = vshll.u32 %v2908, 16
        %v3130 = vrot.slane %v3128, 5
        %v3131 = vor.u32 %v3127, %v3130
        %v3132 = vrot.slane %v3131, 4
        %v3134 = vshll.u32 %v2909, 16
        %v3136 = vrot.slane %v3134, 5
        %v3137 = vsel %vm1128, %v3132, %v3136
        %v3138 = vshrl.u32 %v2909, 16
        %v3140 = vrot.slane %v3138, 4
        %v3141 = vor.u32 %v3140, %v3136
        %v3142 = vrot.slane %v3141, 4
        %v3144 = vshll.u32 %v2910, 16
        %v3146 = vrot.slane %v3144, 5
        %v3147 = vsel %vm1128, %v3142, %v3146
        %v3149 = vshrl.u32 %v2911, 16
        %v3151 = vrot.slane %v3149, 4
        %v3152 = vshll.u32 %v2911, 16
        %v3154 = vrot.slane %v3152, 5
        %v3155 = vor.u32 %v3151, %v3154
        %v3156 = vrot.slane %v3155, 4
        %v3158 = vshll.u32 %v2912, 16
        %v3160 = vrot.slane %v3158, 5
        %v3161 = vsel %vm1128, %v3156, %v3160
        %v3162 = vshrl.u32 %v2912, 16
        %v3164 = vrot.slane %v3162, 4
        %v3165 = vor.u32 %v3164, %v3160
        %v3166 = vrot.slane %v3165, 4
        %v3168 = vshll.u32 %v2913, 16
        %v3170 = vrot.slane %v3168, 5
        %v3171 = vsel %vm1128, %v3166, %v3170
        %v3173 = vshrl.u32 %v2914, 16
        %v3175 = vrot.slane %v3173, 4
        %v3176 = vshll.u32 %v2914, 16
        %v3178 = vrot.slane %v3176, 5
        %v3179 = vor.u32 %v3175, %v3178
        %v3180 = vrot.slane %v3179, 4
        %v3182 = vshll.u32 %v2915, 16
        %v3184 = vrot.slane %v3182, 5
        %v3185 = vsel %vm1128, %v3180, %v3184
        %v3186 = vshrl.u32 %v2915, 16
        %v3188 = vrot.slane %v3186, 4
        %v3189 = vor.u32 %v3188, %v3184
        %v3190 = vrot.slane %v3189, 4
        %v3192 = vshll.u32 %v2916, 16
        %v3194 = vrot.slane %v3192, 5
        %v3195 = vsel %vm1128, %v3190, %v3194
        %v3197 = vshrl.u32 %v2917, 16
        %v3199 = vrot.slane %v3197, 4
        %v3200 = vshll.u32 %v2917, 16
        %v3202 = vrot.slane %v3200, 5
        %v3203 = vor.u32 %v3199, %v3202
        %v3204 = vrot.slane %v3203, 4
        %v3206 = vshll.u32 %v2918, 16
        %v3208 = vrot.slane %v3206, 5
        %v3209 = vsel %vm1128, %v3204, %v3208
        %v3210 = vshrl.u32 %v2918, 16
        %v3212 = vrot.slane %v3210, 4
        %v3213 = vor.u32 %v3212, %v3208
        %v3214 = vrot.slane %v3213, 4
        %v3216 = vshll.u32 %v2919, 16
        %v3218 = vrot.slane %v3216, 5
        %v3219 = vsel %vm1128, %v3214, %v3218
        %v3221 = vshrl.u32 %v2920, 16
        %v3223 = vrot.slane %v3221, 4
        %v3224 = vshll.u32 %v2920, 16
        %v3226 = vrot.slane %v3224, 5
        %v3227 = vor.u32 %v3223, %v3226
        %v3228 = vrot.slane %v3227, 4
        %v3230 = vshll.u32 %v2921, 16
        %v3232 = vrot.slane %v3230, 5
        %v3233 = vsel %vm1128, %v3228, %v3232
        %v3234 = vshrl.u32 %v2921, 16
        %v3236 = vrot.slane %v3234, 4
        %v3237 = vor.u32 %v3236, %v3232
        %v3238 = vrot.slane %v3237, 4
        %v3240 = vshll.u32 %v2922, 16
        %v3242 = vrot.slane %v3240, 5
        %v3243 = vsel %vm1128, %v3238, %v3242
        %v3245 = vshrl.u32 %v2923, 16
        %v3247 = vrot.slane %v3245, 4
        %v3248 = vshll.u32 %v2923, 16
        %v3250 = vrot.slane %v3248, 5
        %v3251 = vor.u32 %v3247, %v3250
        %v3252 = vrot.slane %v3251, 4
        %v3254 = vshll.u32 %v2924, 16
        %v3256 = vrot.slane %v3254, 5
        %v3257 = vsel %vm1128, %v3252, %v3256
        %v3258 = vshrl.u32 %v2924, 16
        %v3260 = vrot.slane %v3258, 4
        %v3261 = vor.u32 %v3260, %v3256
        %v3262 = vrot.slane %v3261, 4
        %v3264 = vshll.u32 %v2925, 16
        %v3266 = vrot.slane %v3264, 5
        %v3267 = vsel %vm1128, %v3262, %v3266
        %v3269 = vshrl.u32 %v2926, 16
        %v3271 = vrot.slane %v3269, 4
        %v3272 = vshll.u32 %v2926, 16
        %v3274 = vrot.slane %v3272, 5
        %v3275 = vor.u32 %v3271, %v3274
        %v3276 = vrot.slane %v3275, 4
        %v3278 = vshll.u32 %v2927, 16
        %v3280 = vrot.slane %v3278, 5
        %v3281 = vsel %vm1128, %v3276, %v3280
        %v3282 = vshrl.u32 %v2927, 16
        %v3284 = vrot.slane %v3282, 4
        %v3285 = vor.u32 %v3284, %v3280
        %v3286 = vrot.slane %v3285, 4
        %v3288 = vshll.u32 %v2928, 16
        %v3290 = vrot.slane %v3288, 5
        %v3291 = vsel %vm1128, %v3286, %v3290
        %v3293 = vshrl.u32 %v2929, 16
        %v3295 = vrot.slane %v3293, 4
        %v3296 = vshll.u32 %v2929, 16
        %v3298 = vrot.slane %v3296, 5
        %v3299 = vor.u32 %v3295, %v3298
        %v3300 = vrot.slane %v3299, 4
        %v3302 = vshll.u32 %v2930, 16
        %v3304 = vrot.slane %v3302, 5
        %v3305 = vsel %vm1128, %v3300, %v3304
        %v3306 = vshrl.u32 %v2930, 16
        %v3308 = vrot.slane %v3306, 4
        %v3309 = vor.u32 %v3308, %v3304
        %v3310 = vrot.slane %v3309, 4
        %v3312 = vshll.u32 %v2931, 16
        %v3314 = vrot.slane %v3312, 5
        %v3315 = vsel %vm1128, %v3310, %v3314
        %s3316 = scalar_lea.vmem [#allocation7], 8
        %v3317 = vld [vmem:[%s3316] sm:$0x3]
        %v3318 = vunpack.c.l.b16 %v2945
        %v3319 = vunpack.c.l.b16 %v2955
        %v3320 = vunpack.c.l.b16 %v2969
        %v3321 = vunpack.c.l.b16 %v2979
        %v3322 = vunpack.c.l.b16 %v2993
        %v3323 = vunpack.c.l.b16 %v3003
        %v3324 = vunpack.c.l.b16 %v3017
        %v3325 = vunpack.c.l.b16 %v3027
        %v3326 = vunpack.c.l.b16 %v3041
        %v3327 = vunpack.c.l.b16 %v3051
        %v3328 = vunpack.c.l.b16 %v3065
        %v3329 = vunpack.c.l.b16 %v3075
        %v3330 = vunpack.c.l.b16 %v3089
        %v3331 = vunpack.c.l.b16 %v3099
        %v3332 = vunpack.c.l.b16 %v3113
        %v3333 = vunpack.c.l.b16 %v3123
        %v3334 = vunpack.c.l.b16 %v3137
        %v3335 = vunpack.c.l.b16 %v3147
        %v3336 = vunpack.c.l.b16 %v3161
        %v3337 = vunpack.c.l.b16 %v3171
        %v3338 = vunpack.c.l.b16 %v3185
        %v3339 = vunpack.c.l.b16 %v3195
        %v3340 = vunpack.c.l.b16 %v3209
        %v3341 = vunpack.c.l.b16 %v3219
        %v3342 = vunpack.c.l.b16 %v3233
        %v3343 = vunpack.c.l.b16 %v3243
        %v3344 = vunpack.c.l.b16 %v3257
        %v3345 = vunpack.c.l.b16 %v3267
        %v3346 = vunpack.c.l.b16 %v3281
        %v3347 = vunpack.c.l.b16 %v3291
        %v3348 = vunpack.c.l.b16 %v3305
        %v3349 = vunpack.c.l.b16 %v3315
        %v3350 = vpack.c.b16 %v3319, %v3318
        %v3351 = vpack.c.b16 %v3321, %v3320
        %v3352 = vpack.c.b16 %v3323, %v3322
        %v3353 = vpack.c.b16 %v3325, %v3324
        %v3354 = vpack.c.b16 %v3327, %v3326
        %v3355 = vpack.c.b16 %v3329, %v3328
        %v3356 = vpack.c.b16 %v3331, %v3330
        %v3357 = vpack.c.b16 %v3333, %v3332
        %v3358 = vpack.c.b16 %v3335, %v3334
        %v3359 = vpack.c.b16 %v3337, %v3336
        %v3360 = vpack.c.b16 %v3339, %v3338
        %v3361 = vpack.c.b16 %v3341, %v3340
        %v3362 = vpack.c.b16 %v3343, %v3342
        %v3363 = vpack.c.b16 %v3345, %v3344
        %v3364 = vpack.c.b16 %v3347, %v3346
        %v3365 = vpack.c.b16 %v3349, %v3348
        %v3367 = vsel %vm1563, %v3350, 0
        %v3370 = vsel %vm1563, %v3351, 0
        %v3373 = vsel %vm1563, %v3352, 0
        %v3376 = vsel %vm1563, %v3353, 0
        %v3379 = vsel %vm1563, %v3354, 0
        %v3382 = vsel %vm1563, %v3355, 0
        %v3385 = vsel %vm1563, %v3356, 0
        %v3388 = vsel %vm1563, %v3357, 0
        %v3391 = vsel %vm1563, %v3358, 0
        %v3394 = vsel %vm1563, %v3359, 0
        %v3397 = vsel %vm1563, %v3360, 0
        %v3400 = vsel %vm1563, %v3361, 0
        %v3403 = vsel %vm1563, %v3362, 0
        %v3406 = vsel %vm1563, %v3363, 0
        %v3409 = vsel %vm1563, %v3364, 0
        %v3412 = vsel %vm1563, %v3365, 0
        %v3415 = vsel %vm1612, %v3317, 0
        %3417 = vmatprep.subr.bf16.mxu0 0
        %3418 = vmatpush1.bf16.msra.mxu0 %v3415
        %3419 = vmatprep.subr.bf16.mxu0 0
        %3420 = vmatpush1.bf16.msra.mxu0 0
        %3421 = vmatprep.subr.bf16.mxu0 0
        %3422 = vmatpush1.bf16.msra.mxu0 0
        %3423 = vmatprep.subr.bf16.mxu0 0
        %3424 = vmatpush1.bf16.msra.mxu0 0
        %3425 = vmatprep.subr.bf16.mxu0 0
        %3426 = vmatpush1.bf16.msra.mxu0 0
        %3427 = vmatprep.subr.bf16.mxu0 0
        %3428 = vmatpush1.bf16.msra.mxu0 0
        %3429 = vmatprep.subr.bf16.mxu0 0
        %3430 = vmatpush1.bf16.msra.mxu0 0
        %3431 = vmatprep.subr.bf16.mxu0 0
        %3432 = vmatpush1.bf16.msra.mxu0 0
        %3433 = vmatprep.subr.bf16.mxu0 0
        %3434 = vmatpush1.bf16.msra.mxu0 0
        %3435 = vmatprep.subr.bf16.mxu0 0
        %3436 = vmatpush1.bf16.msra.mxu0 0
        %3437 = vmatprep.subr.bf16.mxu0 0
        %3438 = vmatpush1.bf16.msra.mxu0 0
        %3439 = vmatprep.subr.bf16.mxu0 0
        %3440 = vmatpush1.bf16.msra.mxu0 0
        %3441 = vmatprep.subr.bf16.mxu0 0
        %3442 = vmatpush1.bf16.msra.mxu0 0
        %3443 = vmatprep.subr.bf16.mxu0 0
        %3444 = vmatpush1.bf16.msra.mxu0 0
        %3445 = vmatprep.subr.bf16.mxu0 0
        %3446 = vmatpush1.bf16.msra.mxu0 0
        %3447 = vmatprep.subr.bf16.mxu0 0
        %3448 = vmatpush1.bf16.msra.mxu0 0
        %3449 = vmatprep.mubr.bf16.mxu0 0
        %3450 = vmatmul.mubr.bf16.gmra.mrb[0].mxu0 %v3367
        %v3451 = vpop.f32.mrb[0].mxu0
        %v3452 = vadd.f32 0.0, %v3451
        %v3453 = vpop.f32.mrb[0].mxu0
        %v3454 = vpop.f32.mrb[0].mxu0
        %v3455 = vadd.f32 0.0, %v3454
        %v3456 = vpop.f32.mrb[0].mxu0
        %3457 = vmatprep.mubr.bf16.mxu0 0
        %3458 = vmatmul.mubr.bf16.gmra.mrb[0].mxu0 %v3370
        %v3459 = vpop.f32.mrb[0].mxu0
        %v3460 = vadd.f32 0.0, %v3459
        %v3461 = vpop.f32.mrb[0].mxu0
        %v3462 = vpop.f32.mrb[0].mxu0
        %v3463 = vadd.f32 0.0, %v3462
        %v3464 = vpop.f32.mrb[0].mxu0
        %3465 = vmatprep.mubr.bf16.mxu0 0
        %3466 = vmatmul.mubr.bf16.gmra.mrb[0].mxu0 %v3373
        %v3467 = vpop.f32.mrb[0].mxu0
        %v3468 = vadd.f32 0.0, %v3467
        %v3469 = vpop.f32.mrb[0].mxu0
        %v3470 = vpop.f32.mrb[0].mxu0
        %v3471 = vadd.f32 0.0, %v3470
        %v3472 = vpop.f32.mrb[0].mxu0
        %3473 = vmatprep.mubr.bf16.mxu0 0
        %3474 = vmatmul.mubr.bf16.gmra.mrb[0].mxu0 %v3376
        %v3475 = vpop.f32.mrb[0].mxu0
        %v3476 = vadd.f32 0.0, %v3475
        %v3477 = vpop.f32.mrb[0].mxu0
        %v3478 = vpop.f32.mrb[0].mxu0
        %v3479 = vadd.f32 0.0, %v3478
        %v3480 = vpop.f32.mrb[0].mxu0
        %3481 = vmatprep.mubr.bf16.mxu0 0
        %3482 = vmatmul.mubr.bf16.gmra.mrb[0].mxu0 %v3379
        %v3483 = vpop.f32.mrb[0].mxu0
        %v3484 = vadd.f32 0.0, %v3483
        %v3485 = vpop.f32.mrb[0].mxu0
        %v3486 = vpop.f32.mrb[0].mxu0
        %v3487 = vadd.f32 0.0, %v3486
        %v3488 = vpop.f32.mrb[0].mxu0
        %3489 = vmatprep.mubr.bf16.mxu0 0
        %3490 = vmatmul.mubr.bf16.gmra.mrb[0].mxu0 %v3382
        %v3491 = vpop.f32.mrb[0].mxu0
        %v3492 = vadd.f32 0.0, %v3491
        %v3493 = vpop.f32.mrb[0].mxu0
        %v3494 = vpop.f32.mrb[0].mxu0
        %v3495 = vadd.f32 0.0, %v3494
        %v3496 = vpop.f32.mrb[0].mxu0
        %3497 = vmatprep.mubr.bf16.mxu0 0
        %3498 = vmatmul.mubr.bf16.gmra.mrb[0].mxu0 %v3385
        %v3499 = vpop.f32.mrb[0].mxu0
        %v3500 = vadd.f32 0.0, %v3499
        %v3501 = vpop.f32.mrb[0].mxu0
        %v3502 = vpop.f32.mrb[0].mxu0
        %v3503 = vadd.f32 0.0, %v3502
        %v3504 = vpop.f32.mrb[0].mxu0
        %3505 = vmatprep.mubr.bf16.mxu0 0
        %3506 = vmatmul.mubr.bf16.gmra.mrb[0].mxu0 %v3388
        %v3507 = vpop.f32.mrb[0].mxu0
        %v3508 = vadd.f32 0.0, %v3507
        %v3509 = vpop.f32.mrb[0].mxu0
        %v3510 = vpop.f32.mrb[0].mxu0
        %v3511 = vadd.f32 0.0, %v3510
        %v3512 = vpop.f32.mrb[0].mxu0
        %3513 = vmatprep.mubr.bf16.mxu0 0
        %3514 = vmatmul.mubr.bf16.gmra.mrb[0].mxu0 %v3391
        %v3515 = vpop.f32.mrb[0].mxu0
        %v3516 = vadd.f32 0.0, %v3515
        %v3517 = vpop.f32.mrb[0].mxu0
        %v3518 = vpop.f32.mrb[0].mxu0
        %v3519 = vadd.f32 0.0, %v3518
        %v3520 = vpop.f32.mrb[0].mxu0
        %3521 = vmatprep.mubr.bf16.mxu0 0
        %3522 = vmatmul.mubr.bf16.gmra.mrb[0].mxu0 %v3394
        %v3523 = vpop.f32.mrb[0].mxu0
        %v3524 = vadd.f32 0.0, %v3523
        %v3525 = vpop.f32.mrb[0].mxu0
        %v3526 = vpop.f32.mrb[0].mxu0
        %v3527 = vadd.f32 0.0, %v3526
        %v3528 = vpop.f32.mrb[0].mxu0
        %3529 = vmatprep.mubr.bf16.mxu0 0
        %3530 = vmatmul.mubr.bf16.gmra.mrb[0].mxu0 %v3397
        %v3531 = vpop.f32.mrb[0].mxu0
        %v3532 = vadd.f32 0.0, %v3531
        %v3533 = vpop.f32.mrb[0].mxu0
        %v3534 = vpop.f32.mrb[0].mxu0
        %v3535 = vadd.f32 0.0, %v3534
        %v3536 = vpop.f32.mrb[0].mxu0
        %3537 = vmatprep.mubr.bf16.mxu0 0
        %3538 = vmatmul.mubr.bf16.gmra.mrb[0].mxu0 %v3400
        %v3539 = vpop.f32.mrb[0].mxu0
        %v3540 = vadd.f32 0.0, %v3539
        %v3541 = vpop.f32.mrb[0].mxu0
        %v3542 = vpop.f32.mrb[0].mxu0
        %v3543 = vadd.f32 0.0, %v3542
        %v3544 = vpop.f32.mrb[0].mxu0
        %3545 = vmatprep.mubr.bf16.mxu0 0
        %3546 = vmatmul.mubr.bf16.gmra.mrb[0].mxu0 %v3403
        %v3547 = vpop.f32.mrb[0].mxu0
        %v3548 = vadd.f32 0.0, %v3547
        %v3549 = vpop.f32.mrb[0].mxu0
        %v3550 = vpop.f32.mrb[0].mxu0
        %v3551 = vadd.f32 0.0, %v3550
        %v3552 = vpop.f32.mrb[0].mxu0
        %3553 = vmatprep.mubr.bf16.mxu0 0
        %3554 = vmatmul.mubr.bf16.gmra.mrb[0].mxu0 %v3406
        %v3555 = vpop.f32.mrb[0].mxu0
        %v3556 = vadd.f32 0.0, %v3555
        %v3557 = vpop.f32.mrb[0].mxu0
        %v3558 = vpop.f32.mrb[0].mxu0
        %v3559 = vadd.f32 0.0, %v3558
        %v3560 = vpop.f32.mrb[0].mxu0
        %3561 = vmatprep.mubr.bf16.mxu0 0
        %3562 = vmatmul.mubr.bf16.gmra.mrb[0].mxu0 %v3409
        %v3563 = vpop.f32.mrb[0].mxu0
        %v3564 = vadd.f32 0.0, %v3563
        %v3565 = vpop.f32.mrb[0].mxu0
        %v3566 = vpop.f32.mrb[0].mxu0
        %v3567 = vadd.f32 0.0, %v3566
        %v3568 = vpop.f32.mrb[0].mxu0
        %3569 = vmatprep.mubr.bf16.mxu0 0
        %3570 = vmatmul.mubr.bf16.gmra.mrb[0].mxu0 %v3412
        %v3571 = vpop.f32.mrb[0].mxu0
        %v3572 = vadd.f32 0.0, %v3571
        %v3573 = vpop.f32.mrb[0].mxu0
        %v3574 = vpop.f32.mrb[0].mxu0
        %v3575 = vadd.f32 0.0, %v3574
        %v3576 = vpop.f32.mrb[0].mxu0
        %3577 = vdwg.mxu0
        %v3578 = vadd.f32 %v2852, %v3452
        %v3579 = vadd.f32 %v2853, %v3455
        %v3580 = vadd.f32 %v2854, %v3460
        %v3581 = vadd.f32 %v2855, %v3463
        %v3582 = vadd.f32 %v2856, %v3468
        %v3583 = vadd.f32 %v2857, %v3471
        %v3584 = vadd.f32 %v2858, %v3476
        %v3585 = vadd.f32 %v2859, %v3479
        %v3586 = vadd.f32 %v2860, %v3484
        %v3587 = vadd.f32 %v2861, %v3487
        %v3588 = vadd.f32 %v2862, %v3492
        %v3589 = vadd.f32 %v2863, %v3495
        %v3590 = vadd.f32 %v2864, %v3500
        %v3591 = vadd.f32 %v2865, %v3503
        %v3592 = vadd.f32 %v2866, %v3508
        %v3593 = vadd.f32 %v2867, %v3511
        %v3594 = vadd.f32 %v2868, %v3516
        %v3595 = vadd.f32 %v2869, %v3519
        %v3596 = vadd.f32 %v2870, %v3524
        %v3597 = vadd.f32 %v2871, %v3527
        %v3598 = vadd.f32 %v2872, %v3532
        %v3599 = vadd.f32 %v2873, %v3535
        %v3600 = vadd.f32 %v2874, %v3540
        %v3601 = vadd.f32 %v2875, %v3543
        %v3602 = vadd.f32 %v2876, %v3548
        %v3603 = vadd.f32 %v2877, %v3551
        %v3604 = vadd.f32 %v2878, %v3556
        %v3605 = vadd.f32 %v2879, %v3559
        %v3606 = vadd.f32 %v2880, %v3564
        %v3607 = vadd.f32 %v2881, %v3567
        %v3608 = vadd.f32 %v2882, %v3572
        %v3609 = vadd.f32 %v2883, %v3575
        %v3610 = vld [vmem:[%s307] sm:$0xe]
        %v3611 = vld [vmem:[%s307 + $0xc] sm:$0xe]
        %v3612 = vld [vmem:[%s307 + $0x18] sm:$0xe]
        %v3613 = vld [vmem:[%s307 + $0x24] sm:$0xe]
        %v3614 = vld [vmem:[%s307 + $0x30] sm:$0xe]
        %v3615 = vld [vmem:[%s307 + $0x3c] sm:$0xe]
        %v3616 = vld [vmem:[%s307 + $0x48] sm:$0xe]
        %v3617 = vld [vmem:[%s307 + $0x54] sm:$0xe]
        %v3618 = vld [vmem:[%s307 + $0x60] sm:$0xe]
        %v3619 = vld [vmem:[%s307 + $0x6c] sm:$0xe]
        %v3620 = vld [vmem:[%s307 + $0x78] sm:$0xe]
        %v3621 = vld [vmem:[%s307 + $0x84] sm:$0xe]
        %v3622 = vld [vmem:[%s307 + $0x90] sm:$0xe]
        %v3623 = vld [vmem:[%s307 + $0x9c] sm:$0xe]
        %v3624 = vld [vmem:[%s307 + $0xa8] sm:$0xe]
        %v3625 = vld [vmem:[%s307 + $0xb4] sm:$0xe]
        %v3674 = vrot.slane %v3610, 5
        %v3675 = vrot.slane %v3674, 4
        %v3676 = vrot.slane %v2885, 5
        %v3677 = vsel %vm2119, %v3675, %v3676
        %v3678 = vrot.slane %v3676, 4
        %v3679 = vrot.slane %v2886, 5
        %v3680 = vsel %vm2119, %v3678, %v3679
        %v3681 = vrot.slane %v3611, 5
        %v3682 = vrot.slane %v3681, 4
        %v3683 = vrot.slane %v2888, 5
        %v3684 = vsel %vm2119, %v3682, %v3683
        %v3685 = vrot.slane %v3683, 4
        %v3686 = vrot.slane %v2889, 5
        %v3687 = vsel %vm2119, %v3685, %v3686
        %v3688 = vrot.slane %v3612, 5
        %v3689 = vrot.slane %v3688, 4
        %v3690 = vrot.slane %v2891, 5
        %v3691 = vsel %vm2119, %v3689, %v3690
        %v3692 = vrot.slane %v3690, 4
        %v3693 = vrot.slane %v2892, 5
        %v3694 = vsel %vm2119, %v3692, %v3693
        %v3695 = vrot.slane %v3613, 5
        %v3696 = vrot.slane %v3695, 4
        %v3697 = vrot.slane %v2894, 5
        %v3698 = vsel %vm2119, %v3696, %v3697
        %v3699 = vrot.slane %v3697, 4
        %v3700 = vrot.slane %v2895, 5
        %v3701 = vsel %vm2119, %v3699, %v3700
        %v3702 = vrot.slane %v3614, 5
        %v3703 = vrot.slane %v3702, 4
        %v3704 = vrot.slane %v2897, 5
        %v3705 = vsel %vm2119, %v3703, %v3704
        %v3706 = vrot.slane %v3704, 4
        %v3707 = vrot.slane %v2898, 5
        %v3708 = vsel %vm2119, %v3706, %v3707
        %v3709 = vrot.slane %v3615, 5
        %v3710 = vrot.slane %v3709, 4
        %v3711 = vrot.slane %v2900, 5
        %v3712 = vsel %vm2119, %v3710, %v3711
        %v3713 = vrot.slane %v3711, 4
        %v3714 = vrot.slane %v2901, 5
        %v3715 = vsel %vm2119, %v3713, %v3714
        %v3716 = vrot.slane %v3616, 5
        %v3717 = vrot.slane %v3716, 4
        %v3718 = vrot.slane %v2903, 5
        %v3719 = vsel %vm2119, %v3717, %v3718
        %v3720 = vrot.slane %v3718, 4
        %v3721 = vrot.slane %v2904, 5
        %v3722 = vsel %vm2119, %v3720, %v3721
        %v3723 = vrot.slane %v3617, 5
        %v3724 = vrot.slane %v3723, 4
        %v3725 = vrot.slane %v2906, 5
        %v3726 = vsel %vm2119, %v3724, %v3725
        %v3727 = vrot.slane %v3725, 4
        %v3728 = vrot.slane %v2907, 5
        %v3729 = vsel %vm2119, %v3727, %v3728
        %v3730 = vrot.slane %v3618, 5
        %v3731 = vrot.slane %v3730, 4
        %v3732 = vrot.slane %v2909, 5
        %v3733 = vsel %vm2119, %v3731, %v3732
        %v3734 = vrot.slane %v3732, 4
        %v3735 = vrot.slane %v2910, 5
        %v3736 = vsel %vm2119, %v3734, %v3735
        %v3737 = vrot.slane %v3619, 5
        %v3738 = vrot.slane %v3737, 4
        %v3739 = vrot.slane %v2912, 5
        %v3740 = vsel %vm2119, %v3738, %v3739
        %v3741 = vrot.slane %v3739, 4
        %v3742 = vrot.slane %v2913, 5
        %v3743 = vsel %vm2119, %v3741, %v3742
        %v3744 = vrot.slane %v3620, 5
        %v3745 = vrot.slane %v3744, 4
        %v3746 = vrot.slane %v2915, 5
        %v3747 = vsel %vm2119, %v3745, %v3746
        %v3748 = vrot.slane %v3746, 4
        %v3749 = vrot.slane %v2916, 5
        %v3750 = vsel %vm2119, %v3748, %v3749
        %v3751 = vrot.slane %v3621, 5
        %v3752 = vrot.slane %v3751, 4
        %v3753 = vrot.slane %v2918, 5
        %v3754 = vsel %vm2119, %v3752, %v3753
        %v3755 = vrot.slane %v3753, 4
        %v3756 = vrot.slane %v2919, 5
        %v3757 = vsel %vm2119, %v3755, %v3756
        %v3758 = vrot.slane %v3622, 5
        %v3759 = vrot.slane %v3758, 4
        %v3760 = vrot.slane %v2921, 5
        %v3761 = vsel %vm2119, %v3759, %v3760
        %v3762 = vrot.slane %v3760, 4
        %v3763 = vrot.slane %v2922, 5
        %v3764 = vsel %vm2119, %v3762, %v3763
        %v3765 = vrot.slane %v3623, 5
        %v3766 = vrot.slane %v3765, 4
        %v3767 = vrot.slane %v2924, 5
        %v3768 = vsel %vm2119, %v3766, %v3767
        %v3769 = vrot.slane %v3767, 4
        %v3770 = vrot.slane %v2925, 5
        %v3771 = vsel %vm2119, %v3769, %v3770
        %v3772 = vrot.slane %v3624, 5
        %v3773 = vrot.slane %v3772, 4
        %v3774 = vrot.slane %v2927, 5
        %v3775 = vsel %vm2119, %v3773, %v3774
        %v3776 = vrot.slane %v3774, 4
        %v3777 = vrot.slane %v2928, 5
        %v3778 = vsel %vm2119, %v3776, %v3777
        %v3779 = vrot.slane %v3625, 5
        %v3780 = vrot.slane %v3779, 4
        %v3781 = vrot.slane %v2930, 5
        %v3782 = vsel %vm2119, %v3780, %v3781
        %v3783 = vrot.slane %v3781, 4
        %v3784 = vrot.slane %v2931, 5
        %v3785 = vsel %vm2119, %v3783, %v3784
        %s3786 = scalar_lea.vmem [#allocation7], 10
        %v3787 = vld [vmem:[%s3786] sm:$0x3]
        %v3788 = vunpack.c.l.b16 %v3677
        %v3789 = vunpack.c.l.b16 %v3680
        %v3790 = vunpack.c.l.b16 %v3684
        %v3791 = vunpack.c.l.b16 %v3687
        %v3792 = vunpack.c.l.b16 %v3691
        %v3793 = vunpack.c.l.b16 %v3694
        %v3794 = vunpack.c.l.b16 %v3698
        %v3795 = vunpack.c.l.b16 %v3701
        %v3796 = vunpack.c.l.b16 %v3705
        %v3797 = vunpack.c.l.b16 %v3708
        %v3798 = vunpack.c.l.b16 %v3712
        %v3799 = vunpack.c.l.b16 %v3715
        %v3800 = vunpack.c.l.b16 %v3719
        %v3801 = vunpack.c.l.b16 %v3722
        %v3802 = vunpack.c.l.b16 %v3726
        %v3803 = vunpack.c.l.b16 %v3729
        %v3804 = vunpack.c.l.b16 %v3733
        %v3805 = vunpack.c.l.b16 %v3736
        %v3806 = vunpack.c.l.b16 %v3740
        %v3807 = vunpack.c.l.b16 %v3743
        %v3808 = vunpack.c.l.b16 %v3747
        %v3809 = vunpack.c.l.b16 %v3750
        %v3810 = vunpack.c.l.b16 %v3754
        %v3811 = vunpack.c.l.b16 %v3757
        %v3812 = vunpack.c.l.b16 %v3761
        %v3813 = vunpack.c.l.b16 %v3764
        %v3814 = vunpack.c.l.b16 %v3768
        %v3815 = vunpack.c.l.b16 %v3771
        %v3816 = vunpack.c.l.b16 %v3775
        %v3817 = vunpack.c.l.b16 %v3778
        %v3818 = vunpack.c.l.b16 %v3782
        %v3819 = vunpack.c.l.b16 %v3785
        %v3820 = vpack.c.b16 %v3789, %v3788
        %v3821 = vpack.c.b16 %v3791, %v3790
        %v3822 = vpack.c.b16 %v3793, %v3792
        %v3823 = vpack.c.b16 %v3795, %v3794
        %v3824 = vpack.c.b16 %v3797, %v3796
        %v3825 = vpack.c.b16 %v3799, %v3798
        %v3826 = vpack.c.b16 %v3801, %v3800
        %v3827 = vpack.c.b16 %v3803, %v3802
        %v3828 = vpack.c.b16 %v3805, %v3804
        %v3829 = vpack.c.b16 %v3807, %v3806
        %v3830 = vpack.c.b16 %v3809, %v3808
        %v3831 = vpack.c.b16 %v3811, %v3810
        %v3832 = vpack.c.b16 %v3813, %v3812
        %v3833 = vpack.c.b16 %v3815, %v3814
        %v3834 = vpack.c.b16 %v3817, %v3816
        %v3835 = vpack.c.b16 %v3819, %v3818
        %v3837 = vsel %vm1563, %v3820, 0
        %v3840 = vsel %vm1563, %v3821, 0
        %v3843 = vsel %vm1563, %v3822, 0
        %v3846 = vsel %vm1563, %v3823, 0
        %v3849 = vsel %vm1563, %v3824, 0
        %v3852 = vsel %vm1563, %v3825, 0
        %v3855 = vsel %vm1563, %v3826, 0
        %v3858 = vsel %vm1563, %v3827, 0
        %v3861 = vsel %vm1563, %v3828, 0
        %v3864 = vsel %vm1563, %v3829, 0
        %v3867 = vsel %vm1563, %v3830, 0
        %v3870 = vsel %vm1563, %v3831, 0
        %v3873 = vsel %vm1563, %v3832, 0
        %v3876 = vsel %vm1563, %v3833, 0
        %v3879 = vsel %vm1563, %v3834, 0
        %v3882 = vsel %vm1563, %v3835, 0
        %v3885 = vsel %vm1612, %v3787, 0
        %3887 = vmatprep.subr.bf16.mxu0 0
        %3888 = vmatpush1.bf16.msra.mxu0 %v3885
        %3889 = vmatprep.subr.bf16.mxu0 0
        %3890 = vmatpush1.bf16.msra.mxu0 0
        %3891 = vmatprep.subr.bf16.mxu0 0
        %3892 = vmatpush1.bf16.msra.mxu0 0
        %3893 = vmatprep.subr.bf16.mxu0 0
        %3894 = vmatpush1.bf16.msra.mxu0 0
        %3895 = vmatprep.subr.bf16.mxu0 0
        %3896 = vmatpush1.bf16.msra.mxu0 0
        %3897 = vmatprep.subr.bf16.mxu0 0
        %3898 = vmatpush1.bf16.msra.mxu0 0
        %3899 = vmatprep.subr.bf16.mxu0 0
        %3900 = vmatpush1.bf16.msra.mxu0 0
        %3901 = vmatprep.subr.bf16.mxu0 0
        %3902 = vmatpush1.bf16.msra.mxu0 0
        %3903 = vmatprep.subr.bf16.mxu0 0
        %3904 = vmatpush1.bf16.msra.mxu0 0
        %3905 = vmatprep.subr.bf16.mxu0 0
        %3906 = vmatpush1.bf16.msra.mxu0 0
        %3907 = vmatprep.subr.bf16.mxu0 0
        %3908 = vmatpush1.bf16.msra.mxu0 0
        %3909 = vmatprep.subr.bf16.mxu0 0
        %3910 = vmatpush1.bf16.msra.mxu0 0
        %3911 = vmatprep.subr.bf16.mxu0 0
        %3912 = vmatpush1.bf16.msra.mxu0 0
        %3913 = vmatprep.subr.bf16.mxu0 0
        %3914 = vmatpush1.bf16.msra.mxu0 0
        %3915 = vmatprep.subr.bf16.mxu0 0
        %3916 = vmatpush1.bf16.msra.mxu0 0
        %3917 = vmatprep.subr.bf16.mxu0 0
        %3918 = vmatpush1.bf16.msra.mxu0 0
        %3919 = vmatprep.mubr.bf16.mxu0 0
        %3920 = vmatmul.mubr.bf16.gmra.mrb[0].mxu0 %v3837
        %v3921 = vpop.f32.mrb[0].mxu0
        %v3922 = vadd.f32 0.0, %v3921
        %v3923 = vpop.f32.mrb[0].mxu0
        %v3924 = vpop.f32.mrb[0].mxu0
        %v3925 = vadd.f32 0.0, %v3924
        %v3926 = vpop.f32.mrb[0].mxu0
        %3927 = vmatprep.mubr.bf16.mxu0 0
        %3928 = vmatmul.mubr.bf16.gmra.mrb[0].mxu0 %v3840
        %v3929 = vpop.f32.mrb[0].mxu0
        %v3930 = vadd.f32 0.0, %v3929
        %v3931 = vpop.f32.mrb[0].mxu0
        %v3932 = vpop.f32.mrb[0].mxu0
        %v3933 = vadd.f32 0.0, %v3932
        %v3934 = vpop.f32.mrb[0].mxu0
        %3935 = vmatprep.mubr.bf16.mxu0 0
        %3936 = vmatmul.mubr.bf16.gmra.mrb[0].mxu0 %v3843
        %v3937 = vpop.f32.mrb[0].mxu0
        %v3938 = vadd.f32 0.0, %v3937
        %v3939 = vpop.f32.mrb[0].mxu0
        %v3940 = vpop.f32.mrb[0].mxu0
        %v3941 = vadd.f32 0.0, %v3940
        %v3942 = vpop.f32.mrb[0].mxu0
        %3943 = vmatprep.mubr.bf16.mxu0 0
        %3944 = vmatmul.mubr.bf16.gmra.mrb[0].mxu0 %v3846
        %v3945 = vpop.f32.mrb[0].mxu0
        %v3946 = vadd.f32 0.0, %v3945
        %v3947 = vpop.f32.mrb[0].mxu0
        %v3948 = vpop.f32.mrb[0].mxu0
        %v3949 = vadd.f32 0.0, %v3948
        %v3950 = vpop.f32.mrb[0].mxu0
        %3951 = vmatprep.mubr.bf16.mxu0 0
        %3952 = vmatmul.mubr.bf16.gmra.mrb[0].mxu0 %v3849
        %v3953 = vpop.f32.mrb[0].mxu0
        %v3954 = vadd.f32 0.0, %v3953
        %v3955 = vpop.f32.mrb[0].mxu0
        %v3956 = vpop.f32.mrb[0].mxu0
        %v3957 = vadd.f32 0.0, %v3956
        %v3958 = vpop.f32.mrb[0].mxu0
        %3959 = vmatprep.mubr.bf16.mxu0 0
        %3960 = vmatmul.mubr.bf16.gmra.mrb[0].mxu0 %v3852
        %v3961 = vpop.f32.mrb[0].mxu0
        %v3962 = vadd.f32 0.0, %v3961
        %v3963 = vpop.f32.mrb[0].mxu0
        %v3964 = vpop.f32.mrb[0].mxu0
        %v3965 = vadd.f32 0.0, %v3964
        %v3966 = vpop.f32.mrb[0].mxu0
        %3967 = vmatprep.mubr.bf16.mxu0 0
        %3968 = vmatmul.mubr.bf16.gmra.mrb[0].mxu0 %v3855
        %v3969 = vpop.f32.mrb[0].mxu0
        %v3970 = vadd.f32 0.0, %v3969
        %v3971 = vpop.f32.mrb[0].mxu0
        %v3972 = vpop.f32.mrb[0].mxu0
        %v3973 = vadd.f32 0.0, %v3972
        %v3974 = vpop.f32.mrb[0].mxu0
        %3975 = vmatprep.mubr.bf16.mxu0 0
        %3976 = vmatmul.mubr.bf16.gmra.mrb[0].mxu0 %v3858
        %v3977 = vpop.f32.mrb[0].mxu0
        %v3978 = vadd.f32 0.0, %v3977
        %v3979 = vpop.f32.mrb[0].mxu0
        %v3980 = vpop.f32.mrb[0].mxu0
        %v3981 = vadd.f32 0.0, %v3980
        %v3982 = vpop.f32.mrb[0].mxu0
        %3983 = vmatprep.mubr.bf16.mxu0 0
        %3984 = vmatmul.mubr.bf16.gmra.mrb[0].mxu0 %v3861
        %v3985 = vpop.f32.mrb[0].mxu0
        %v3986 = vadd.f32 0.0, %v3985
        %v3987 = vpop.f32.mrb[0].mxu0
        %v3988 = vpop.f32.mrb[0].mxu0
        %v3989 = vadd.f32 0.0, %v3988
        %v3990 = vpop.f32.mrb[0].mxu0
        %3991 = vmatprep.mubr.bf16.mxu0 0
        %3992 = vmatmul.mubr.bf16.gmra.mrb[0].mxu0 %v3864
        %v3993 = vpop.f32.mrb[0].mxu0
        %v3994 = vadd.f32 0.0, %v3993
        %v3995 = vpop.f32.mrb[0].mxu0
        %v3996 = vpop.f32.mrb[0].mxu0
        %v3997 = vadd.f32 0.0, %v3996
        %v3998 = vpop.f32.mrb[0].mxu0
        %3999 = vmatprep.mubr.bf16.mxu0 0
        %4000 = vmatmul.mubr.bf16.gmra.mrb[0].mxu0 %v3867
        %v4001 = vpop.f32.mrb[0].mxu0
        %v4002 = vadd.f32 0.0, %v4001
        %v4003 = vpop.f32.mrb[0].mxu0
        %v4004 = vpop.f32.mrb[0].mxu0
        %v4005 = vadd.f32 0.0, %v4004
        %v4006 = vpop.f32.mrb[0].mxu0
        %4007 = vmatprep.mubr.bf16.mxu0 0
        %4008 = vmatmul.mubr.bf16.gmra.mrb[0].mxu0 %v3870
        %v4009 = vpop.f32.mrb[0].mxu0
        %v4010 = vadd.f32 0.0, %v4009
        %v4011 = vpop.f32.mrb[0].mxu0
        %v4012 = vpop.f32.mrb[0].mxu0
        %v4013 = vadd.f32 0.0, %v4012
        %v4014 = vpop.f32.mrb[0].mxu0
        %4015 = vmatprep.mubr.bf16.mxu0 0
        %4016 = vmatmul.mubr.bf16.gmra.mrb[0].mxu0 %v3873
        %v4017 = vpop.f32.mrb[0].mxu0
        %v4018 = vadd.f32 0.0, %v4017
        %v4019 = vpop.f32.mrb[0].mxu0
        %v4020 = vpop.f32.mrb[0].mxu0
        %v4021 = vadd.f32 0.0, %v4020
        %v4022 = vpop.f32.mrb[0].mxu0
        %4023 = vmatprep.mubr.bf16.mxu0 0
        %4024 = vmatmul.mubr.bf16.gmra.mrb[0].mxu0 %v3876
        %v4025 = vpop.f32.mrb[0].mxu0
        %v4026 = vadd.f32 0.0, %v4025
        %v4027 = vpop.f32.mrb[0].mxu0
        %v4028 = vpop.f32.mrb[0].mxu0
        %v4029 = vadd.f32 0.0, %v4028
        %v4030 = vpop.f32.mrb[0].mxu0
        %4031 = vmatprep.mubr.bf16.mxu0 0
        %4032 = vmatmul.mubr.bf16.gmra.mrb[0].mxu0 %v3879
        %v4033 = vpop.f32.mrb[0].mxu0
        %v4034 = vadd.f32 0.0, %v4033
        %v4035 = vpop.f32.mrb[0].mxu0
        %v4036 = vpop.f32.mrb[0].mxu0
        %v4037 = vadd.f32 0.0, %v4036
        %v4038 = vpop.f32.mrb[0].mxu0
        %4039 = vmatprep.mubr.bf16.mxu0 0
        %4040 = vmatmul.mubr.bf16.gmra.mrb[0].mxu0 %v3882
        %v4041 = vpop.f32.mrb[0].mxu0
        %v4042 = vadd.f32 0.0, %v4041
        %v4043 = vpop.f32.mrb[0].mxu0
        %v4044 = vpop.f32.mrb[0].mxu0
        %v4045 = vadd.f32 0.0, %v4044
        %v4046 = vpop.f32.mrb[0].mxu0
        %4047 = vdwg.mxu0
        %v4048 = vadd.f32 %v3578, %v3922
        %v4049 = vadd.f32 %v3579, %v3925
        %v4050 = vadd.f32 %v3580, %v3930
        %v4051 = vadd.f32 %v3581, %v3933
        %v4052 = vadd.f32 %v3582, %v3938
        %v4053 = vadd.f32 %v3583, %v3941
        %v4054 = vadd.f32 %v3584, %v3946
        %v4055 = vadd.f32 %v3585, %v3949
        %v4056 = vadd.f32 %v3586, %v3954
        %v4057 = vadd.f32 %v3587, %v3957
        %v4058 = vadd.f32 %v3588, %v3962
        %v4059 = vadd.f32 %v3589, %v3965
        %v4060 = vadd.f32 %v3590, %v3970
        %v4061 = vadd.f32 %v3591, %v3973
        %v4062 = vadd.f32 %v3592, %v3978
        %v4063 = vadd.f32 %v3593, %v3981
        %v4064 = vadd.f32 %v3594, %v3986
        %v4065 = vadd.f32 %v3595, %v3989
        %v4066 = vadd.f32 %v3596, %v3994
        %v4067 = vadd.f32 %v3597, %v3997
        %v4068 = vadd.f32 %v3598, %v4002
        %v4069 = vadd.f32 %v3599, %v4005
        %v4070 = vadd.f32 %v3600, %v4010
        %v4071 = vadd.f32 %v3601, %v4013
        %v4072 = vadd.f32 %v3602, %v4018
        %v4073 = vadd.f32 %v3603, %v4021
        %v4074 = vadd.f32 %v3604, %v4026
        %v4075 = vadd.f32 %v3605, %v4029
        %v4076 = vadd.f32 %v3606, %v4034
        %v4077 = vadd.f32 %v3607, %v4037
        %v4078 = vadd.f32 %v3608, %v4042
        %v4079 = vadd.f32 %v3609, %v4045
        %s4080 = scalar_lea.vmem [#allocation2], 24
        %v4081 = vld [vmem:[%s4080] sm:$0xf]
        %v4082 = vld [vmem:[%s4080 + $0x4] sm:$0xf]
        %v4083 = vld [vmem:[%s4080 + $0xc] sm:$0xf]
        %v4084 = vld [vmem:[%s4080 + $0x10] sm:$0xf]
        %v4085 = vld [vmem:[%s4080 + $0x18] sm:$0xf]
        %v4086 = vld [vmem:[%s4080 + $0x1c] sm:$0xf]
        %v4087 = vld [vmem:[%s4080 + $0x24] sm:$0xf]
        %v4088 = vld [vmem:[%s4080 + $0x28] sm:$0xf]
        %v4089 = vld [vmem:[%s4080 + $0x30] sm:$0xf]
        %v4090 = vld [vmem:[%s4080 + $0x34] sm:$0xf]
        %v4091 = vld [vmem:[%s4080 + $0x3c] sm:$0xf]
        %v4092 = vld [vmem:[%s4080 + $0x40] sm:$0xf]
        %v4093 = vld [vmem:[%s4080 + $0x48] sm:$0xf]
        %v4094 = vld [vmem:[%s4080 + $0x4c] sm:$0xf]
        %v4095 = vld [vmem:[%s4080 + $0x54] sm:$0xf]
        %v4096 = vld [vmem:[%s4080 + $0x58] sm:$0xf]
        %v4097 = vld [vmem:[%s4080 + $0x60] sm:$0xf]
        %v4098 = vld [vmem:[%s4080 + $0x64] sm:$0xf]
        %v4099 = vld [vmem:[%s4080 + $0x6c] sm:$0xf]
        %v4100 = vld [vmem:[%s4080 + $0x70] sm:$0xf]
        %v4101 = vld [vmem:[%s4080 + $0x78] sm:$0xf]
        %v4102 = vld [vmem:[%s4080 + $0x7c] sm:$0xf]
        %v4103 = vld [vmem:[%s4080 + $0x84] sm:$0xf]
        %v4104 = vld [vmem:[%s4080 + $0x88] sm:$0xf]
        %v4105 = vld [vmem:[%s4080 + $0x90] sm:$0xf]
        %v4106 = vld [vmem:[%s4080 + $0x94] sm:$0xf]
        %v4107 = vld [vmem:[%s4080 + $0x9c] sm:$0xf]
        %v4108 = vld [vmem:[%s4080 + $0xa0] sm:$0xf]
        %v4109 = vld [vmem:[%s4080 + $0xa8] sm:$0xf]
        %v4110 = vld [vmem:[%s4080 + $0xac] sm:$0xf]
        %v4111 = vld [vmem:[%s4080 + $0xb4] sm:$0xf]
        %v4112 = vld [vmem:[%s4080 + $0xb8] sm:$0xf]
        %s4113 = scalar_lea.vmem [#allocation7], 12
        %v4114 = vld [vmem:[%s4113] sm:$0x3]
        %v4147 = vunpack.c.l.b16 %v4081
        %v4148 = vunpack.c.l.b16 %v4082
        %v4149 = vunpack.c.l.b16 %v4083
        %v4150 = vunpack.c.l.b16 %v4084
        %v4151 = vunpack.c.l.b16 %v4085
        %v4152 = vunpack.c.l.b16 %v4086
        %v4153 = vunpack.c.l.b16 %v4087
        %v4154 = vunpack.c.l.b16 %v4088
        %v4155 = vunpack.c.l.b16 %v4089
        %v4156 = vunpack.c.l.b16 %v4090
        %v4157 = vunpack.c.l.b16 %v4091
        %v4158 = vunpack.c.l.b16 %v4092
        %v4159 = vunpack.c.l.b16 %v4093
        %v4160 = vunpack.c.l.b16 %v4094
        %v4161 = vunpack.c.l.b16 %v4095
        %v4162 = vunpack.c.l.b16 %v4096
        %v4163 = vunpack.c.l.b16 %v4097
        %v4164 = vunpack.c.l.b16 %v4098
        %v4165 = vunpack.c.l.b16 %v4099
        %v4166 = vunpack.c.l.b16 %v4100
        %v4167 = vunpack.c.l.b16 %v4101
        %v4168 = vunpack.c.l.b16 %v4102
        %v4169 = vunpack.c.l.b16 %v4103
        %v4170 = vunpack.c.l.b16 %v4104
        %v4171 = vunpack.c.l.b16 %v4105
        %v4172 = vunpack.c.l.b16 %v4106
        %v4173 = vunpack.c.l.b16 %v4107
        %v4174 = vunpack.c.l.b16 %v4108
        %v4175 = vunpack.c.l.b16 %v4109
        %v4176 = vunpack.c.l.b16 %v4110
        %v4177 = vunpack.c.l.b16 %v4111
        %v4178 = vunpack.c.l.b16 %v4112
        %v4179 = vpack.c.b16 %v4148, %v4147
        %v4180 = vpack.c.b16 %v4150, %v4149
        %v4181 = vpack.c.b16 %v4152, %v4151
        %v4182 = vpack.c.b16 %v4154, %v4153
        %v4183 = vpack.c.b16 %v4156, %v4155
        %v4184 = vpack.c.b16 %v4158, %v4157
        %v4185 = vpack.c.b16 %v4160, %v4159
        %v4186 = vpack.c.b16 %v4162, %v4161
        %v4187 = vpack.c.b16 %v4164, %v4163
        %v4188 = vpack.c.b16 %v4166, %v4165
        %v4189 = vpack.c.b16 %v4168, %v4167
        %v4190 = vpack.c.b16 %v4170, %v4169
        %v4191 = vpack.c.b16 %v4172, %v4171
        %v4192 = vpack.c.b16 %v4174, %v4173
        %v4193 = vpack.c.b16 %v4176, %v4175
        %v4194 = vpack.c.b16 %v4178, %v4177
        %v4196 = vsel %vm1563, %v4179, 0
        %v4199 = vsel %vm1563, %v4180, 0
        %v4202 = vsel %vm1563, %v4181, 0
        %v4205 = vsel %vm1563, %v4182, 0
        %v4208 = vsel %vm1563, %v4183, 0
        %v4211 = vsel %vm1563, %v4184, 0
        %v4214 = vsel %vm1563, %v4185, 0
        %v4217 = vsel %vm1563, %v4186, 0
        %v4220 = vsel %vm1563, %v4187, 0
        %v4223 = vsel %vm1563, %v4188, 0
        %v4226 = vsel %vm1563, %v4189, 0
        %v4229 = vsel %vm1563, %v4190, 0
        %v4232 = vsel %vm1563, %v4191, 0
        %v4235 = vsel %vm1563, %v4192, 0
        %v4238 = vsel %vm1563, %v4193, 0
        %v4241 = vsel %vm1563, %v4194, 0
        %v4244 = vsel %vm1612, %v4114, 0
        %4246 = vmatprep.subr.bf16.mxu0 0
        %4247 = vmatpush1.bf16.msra.mxu0 %v4244
        %4248 = vmatprep.subr.bf16.mxu0 0
        %4249 = vmatpush1.bf16.msra.mxu0 0
        %4250 = vmatprep.subr.bf16.mxu0 0
        %4251 = vmatpush1.bf16.msra.mxu0 0
        %4252 = vmatprep.subr.bf16.mxu0 0
        %4253 = vmatpush1.bf16.msra.mxu0 0
        %4254 = vmatprep.subr.bf16.mxu0 0
        %4255 = vmatpush1.bf16.msra.mxu0 0
        %4256 = vmatprep.subr.bf16.mxu0 0
        %4257 = vmatpush1.bf16.msra.mxu0 0
        %4258 = vmatprep.subr.bf16.mxu0 0
        %4259 = vmatpush1.bf16.msra.mxu0 0
        %4260 = vmatprep.subr.bf16.mxu0 0
        %4261 = vmatpush1.bf16.msra.mxu0 0
        %4262 = vmatprep.subr.bf16.mxu0 0
        %4263 = vmatpush1.bf16.msra.mxu0 0
        %4264 = vmatprep.subr.bf16.mxu0 0
        %4265 = vmatpush1.bf16.msra.mxu0 0
        %4266 = vmatprep.subr.bf16.mxu0 0
        %4267 = vmatpush1.bf16.msra.mxu0 0
        %4268 = vmatprep.subr.bf16.mxu0 0
        %4269 = vmatpush1.bf16.msra.mxu0 0
        %4270 = vmatprep.subr.bf16.mxu0 0
        %4271 = vmatpush1.bf16.msra.mxu0 0
        %4272 = vmatprep.subr.bf16.mxu0 0
        %4273 = vmatpush1.bf16.msra.mxu0 0
        %4274 = vmatprep.subr.bf16.mxu0 0
        %4275 = vmatpush1.bf16.msra.mxu0 0
        %4276 = vmatprep.subr.bf16.mxu0 0
        %4277 = vmatpush1.bf16.msra.mxu0 0
        %4278 = vmatprep.mubr.bf16.mxu0 0
        %4279 = vmatmul.mubr.bf16.gmra.mrb[0].mxu0 %v4196
        %v4280 = vpop.f32.mrb[0].mxu0
        %v4281 = vadd.f32 0.0, %v4280
        %v4282 = vpop.f32.mrb[0].mxu0
        %v4283 = vpop.f32.mrb[0].mxu0
        %v4284 = vadd.f32 0.0, %v4283
        %v4285 = vpop.f32.mrb[0].mxu0
        %4286 = vmatprep.mubr.bf16.mxu0 0
        %4287 = vmatmul.mubr.bf16.gmra.mrb[0].mxu0 %v4199
        %v4288 = vpop.f32.mrb[0].mxu0
        %v4289 = vadd.f32 0.0, %v4288
        %v4290 = vpop.f32.mrb[0].mxu0
        %v4291 = vpop.f32.mrb[0].mxu0
        %v4292 = vadd.f32 0.0, %v4291
        %v4293 = vpop.f32.mrb[0].mxu0
        %4294 = vmatprep.mubr.bf16.mxu0 0
        %4295 = vmatmul.mubr.bf16.gmra.mrb[0].mxu0 %v4202
        %v4296 = vpop.f32.mrb[0].mxu0
        %v4297 = vadd.f32 0.0, %v4296
        %v4298 = vpop.f32.mrb[0].mxu0
        %v4299 = vpop.f32.mrb[0].mxu0
        %v4300 = vadd.f32 0.0, %v4299
        %v4301 = vpop.f32.mrb[0].mxu0
        %4302 = vmatprep.mubr.bf16.mxu0 0
        %4303 = vmatmul.mubr.bf16.gmra.mrb[0].mxu0 %v4205
        %v4304 = vpop.f32.mrb[0].mxu0
        %v4305 = vadd.f32 0.0, %v4304
        %v4306 = vpop.f32.mrb[0].mxu0
        %v4307 = vpop.f32.mrb[0].mxu0
        %v4308 = vadd.f32 0.0, %v4307
        %v4309 = vpop.f32.mrb[0].mxu0
        %4310 = vmatprep.mubr.bf16.mxu0 0
        %4311 = vmatmul.mubr.bf16.gmra.mrb[0].mxu0 %v4208
        %v4312 = vpop.f32.mrb[0].mxu0
        %v4313 = vadd.f32 0.0, %v4312
        %v4314 = vpop.f32.mrb[0].mxu0
        %v4315 = vpop.f32.mrb[0].mxu0
        %v4316 = vadd.f32 0.0, %v4315
        %v4317 = vpop.f32.mrb[0].mxu0
        %4318 = vmatprep.mubr.bf16.mxu0 0
        %4319 = vmatmul.mubr.bf16.gmra.mrb[0].mxu0 %v4211
        %v4320 = vpop.f32.mrb[0].mxu0
        %v4321 = vadd.f32 0.0, %v4320
        %v4322 = vpop.f32.mrb[0].mxu0
        %v4323 = vpop.f32.mrb[0].mxu0
        %v4324 = vadd.f32 0.0, %v4323
        %v4325 = vpop.f32.mrb[0].mxu0
        %4326 = vmatprep.mubr.bf16.mxu0 0
        %4327 = vmatmul.mubr.bf16.gmra.mrb[0].mxu0 %v4214
        %v4328 = vpop.f32.mrb[0].mxu0
        %v4329 = vadd.f32 0.0, %v4328
        %v4330 = vpop.f32.mrb[0].mxu0
        %v4331 = vpop.f32.mrb[0].mxu0
        %v4332 = vadd.f32 0.0, %v4331
        %v4333 = vpop.f32.mrb[0].mxu0
        %4334 = vmatprep.mubr.bf16.mxu0 0
        %4335 = vmatmul.mubr.bf16.gmra.mrb[0].mxu0 %v4217
        %v4336 = vpop.f32.mrb[0].mxu0
        %v4337 = vadd.f32 0.0, %v4336
        %v4338 = vpop.f32.mrb[0].mxu0
        %v4339 = vpop.f32.mrb[0].mxu0
        %v4340 = vadd.f32 0.0, %v4339
        %v4341 = vpop.f32.mrb[0].mxu0
        %4342 = vmatprep.mubr.bf16.mxu0 0
        %4343 = vmatmul.mubr.bf16.gmra.mrb[0].mxu0 %v4220
        %v4344 = vpop.f32.mrb[0].mxu0
        %v4345 = vadd.f32 0.0, %v4344
        %v4346 = vpop.f32.mrb[0].mxu0
        %v4347 = vpop.f32.mrb[0].mxu0
        %v4348 = vadd.f32 0.0, %v4347
        %v4349 = vpop.f32.mrb[0].mxu0
        %4350 = vmatprep.mubr.bf16.mxu0 0
        %4351 = vmatmul.mubr.bf16.gmra.mrb[0].mxu0 %v4223
        %v4352 = vpop.f32.mrb[0].mxu0
        %v4353 = vadd.f32 0.0, %v4352
        %v4354 = vpop.f32.mrb[0].mxu0
        %v4355 = vpop.f32.mrb[0].mxu0
        %v4356 = vadd.f32 0.0, %v4355
        %v4357 = vpop.f32.mrb[0].mxu0
        %4358 = vmatprep.mubr.bf16.mxu0 0
        %4359 = vmatmul.mubr.bf16.gmra.mrb[0].mxu0 %v4226
        %v4360 = vpop.f32.mrb[0].mxu0
        %v4361 = vadd.f32 0.0, %v4360
        %v4362 = vpop.f32.mrb[0].mxu0
        %v4363 = vpop.f32.mrb[0].mxu0
        %v4364 = vadd.f32 0.0, %v4363
        %v4365 = vpop.f32.mrb[0].mxu0
        %4366 = vmatprep.mubr.bf16.mxu0 0
        %4367 = vmatmul.mubr.bf16.gmra.mrb[0].mxu0 %v4229
        %v4368 = vpop.f32.mrb[0].mxu0
        %v4369 = vadd.f32 0.0, %v4368
        %v4370 = vpop.f32.mrb[0].mxu0
        %v4371 = vpop.f32.mrb[0].mxu0
        %v4372 = vadd.f32 0.0, %v4371
        %v4373 = vpop.f32.mrb[0].mxu0
        %4374 = vmatprep.mubr.bf16.mxu0 0
        %4375 = vmatmul.mubr.bf16.gmra.mrb[0].mxu0 %v4232
        %v4376 = vpop.f32.mrb[0].mxu0
        %v4377 = vadd.f32 0.0, %v4376
        %v4378 = vpop.f32.mrb[0].mxu0
        %v4379 = vpop.f32.mrb[0].mxu0
        %v4380 = vadd.f32 0.0, %v4379
        %v4381 = vpop.f32.mrb[0].mxu0
        %4382 = vmatprep.mubr.bf16.mxu0 0
        %4383 = vmatmul.mubr.bf16.gmra.mrb[0].mxu0 %v4235
        %v4384 = vpop.f32.mrb[0].mxu0
        %v4385 = vadd.f32 0.0, %v4384
        %v4386 = vpop.f32.mrb[0].mxu0
        %v4387 = vpop.f32.mrb[0].mxu0
        %v4388 = vadd.f32 0.0, %v4387
        %v4389 = vpop.f32.mrb[0].mxu0
        %4390 = vmatprep.mubr.bf16.mxu0 0
        %4391 = vmatmul.mubr.bf16.gmra.mrb[0].mxu0 %v4238
        %v4392 = vpop.f32.mrb[0].mxu0
        %v4393 = vadd.f32 0.0, %v4392
        %v4394 = vpop.f32.mrb[0].mxu0
        %v4395 = vpop.f32.mrb[0].mxu0
        %v4396 = vadd.f32 0.0, %v4395
        %v4397 = vpop.f32.mrb[0].mxu0
        %4398 = vmatprep.mubr.bf16.mxu0 0
        %4399 = vmatmul.mubr.bf16.gmra.mrb[0].mxu0 %v4241
        %v4400 = vpop.f32.mrb[0].mxu0
        %v4401 = vadd.f32 0.0, %v4400
        %v4402 = vpop.f32.mrb[0].mxu0
        %v4403 = vpop.f32.mrb[0].mxu0
        %v4404 = vadd.f32 0.0, %v4403
        %v4405 = vpop.f32.mrb[0].mxu0
        %4406 = vdwg.mxu0
        %v4407 = vadd.f32 %v4048, %v4281
        %v4408 = vadd.f32 %v4049, %v4284
        %v4409 = vadd.f32 %v4050, %v4289
        %v4410 = vadd.f32 %v4051, %v4292
        %v4411 = vadd.f32 %v4052, %v4297
        %v4412 = vadd.f32 %v4053, %v4300
        %v4413 = vadd.f32 %v4054, %v4305
        %v4414 = vadd.f32 %v4055, %v4308
        %v4415 = vadd.f32 %v4056, %v4313
        %v4416 = vadd.f32 %v4057, %v4316
        %v4417 = vadd.f32 %v4058, %v4321
        %v4418 = vadd.f32 %v4059, %v4324
        %v4419 = vadd.f32 %v4060, %v4329
        %v4420 = vadd.f32 %v4061, %v4332
        %v4421 = vadd.f32 %v4062, %v4337
        %v4422 = vadd.f32 %v4063, %v4340
        %v4423 = vadd.f32 %v4064, %v4345
        %v4424 = vadd.f32 %v4065, %v4348
        %v4425 = vadd.f32 %v4066, %v4353
        %v4426 = vadd.f32 %v4067, %v4356
        %v4427 = vadd.f32 %v4068, %v4361
        %v4428 = vadd.f32 %v4069, %v4364
        %v4429 = vadd.f32 %v4070, %v4369
        %v4430 = vadd.f32 %v4071, %v4372
        %v4431 = vadd.f32 %v4072, %v4377
        %v4432 = vadd.f32 %v4073, %v4380
        %v4433 = vadd.f32 %v4074, %v4385
        %v4434 = vadd.f32 %v4075, %v4388
        %v4435 = vadd.f32 %v4076, %v4393
        %v4436 = vadd.f32 %v4077, %v4396
        %v4437 = vadd.f32 %v4078, %v4401
        %v4438 = vadd.f32 %v4079, %v4404
        %v4439 = vld [vmem:[%s4080] sm:$0xf]
        %v4440 = vld [vmem:[%s4080 + $0x4] sm:$0xf]
        %v4441 = vld [vmem:[%s4080 + $0x8] sm:$0x1]
        %v4442 = vld [vmem:[%s4080 + $0xc] sm:$0xf]
        %v4443 = vld [vmem:[%s4080 + $0x10] sm:$0xf]
        %v4444 = vld [vmem:[%s4080 + $0x14] sm:$0x1]
        %v4445 = vld [vmem:[%s4080 + $0x18] sm:$0xf]
        %v4446 = vld [vmem:[%s4080 + $0x1c] sm:$0xf]
        %v4447 = vld [vmem:[%s4080 + $0x20] sm:$0x1]
        %v4448 = vld [vmem:[%s4080 + $0x24] sm:$0xf]
        %v4449 = vld [vmem:[%s4080 + $0x28] sm:$0xf]
        %v4450 = vld [vmem:[%s4080 + $0x2c] sm:$0x1]
        %v4451 = vld [vmem:[%s4080 + $0x30] sm:$0xf]
        %v4452 = vld [vmem:[%s4080 + $0x34] sm:$0xf]
        %v4453 = vld [vmem:[%s4080 + $0x38] sm:$0x1]
        %v4454 = vld [vmem:[%s4080 + $0x3c] sm:$0xf]
        %v4455 = vld [vmem:[%s4080 + $0x40] sm:$0xf]
        %v4456 = vld [vmem:[%s4080 + $0x44] sm:$0x1]
        %v4457 = vld [vmem:[%s4080 + $0x48] sm:$0xf]
        %v4458 = vld [vmem:[%s4080 + $0x4c] sm:$0xf]
        %v4459 = vld [vmem:[%s4080 + $0x50] sm:$0x1]
        %v4460 = vld [vmem:[%s4080 + $0x54] sm:$0xf]
        %v4461 = vld [vmem:[%s4080 + $0x58] sm:$0xf]
        %v4462 = vld [vmem:[%s4080 + $0x5c] sm:$0x1]
        %v4463 = vld [vmem:[%s4080 + $0x60] sm:$0xf]
        %v4464 = vld [vmem:[%s4080 + $0x64] sm:$0xf]
        %v4465 = vld [vmem:[%s4080 + $0x68] sm:$0x1]
        %v4466 = vld [vmem:[%s4080 + $0x6c] sm:$0xf]
        %v4467 = vld [vmem:[%s4080 + $0x70] sm:$0xf]
        %v4468 = vld [vmem:[%s4080 + $0x74] sm:$0x1]
        %v4469 = vld [vmem:[%s4080 + $0x78] sm:$0xf]
        %v4470 = vld [vmem:[%s4080 + $0x7c] sm:$0xf]
        %v4471 = vld [vmem:[%s4080 + $0x80] sm:$0x1]
        %v4472 = vld [vmem:[%s4080 + $0x84] sm:$0xf]
        %v4473 = vld [vmem:[%s4080 + $0x88] sm:$0xf]
        %v4474 = vld [vmem:[%s4080 + $0x8c] sm:$0x1]
        %v4475 = vld [vmem:[%s4080 + $0x90] sm:$0xf]
        %v4476 = vld [vmem:[%s4080 + $0x94] sm:$0xf]
        %v4477 = vld [vmem:[%s4080 + $0x98] sm:$0x1]
        %v4478 = vld [vmem:[%s4080 + $0x9c] sm:$0xf]
        %v4479 = vld [vmem:[%s4080 + $0xa0] sm:$0xf]
        %v4480 = vld [vmem:[%s4080 + $0xa4] sm:$0x1]
        %v4481 = vld [vmem:[%s4080 + $0xa8] sm:$0xf]
        %v4482 = vld [vmem:[%s4080 + $0xac] sm:$0xf]
        %v4483 = vld [vmem:[%s4080 + $0xb0] sm:$0x1]
        %v4484 = vld [vmem:[%s4080 + $0xb4] sm:$0xf]
        %v4485 = vld [vmem:[%s4080 + $0xb8] sm:$0xf]
        %v4486 = vld [vmem:[%s4080 + $0xbc] sm:$0x1]
        %v4488 = vshrl.u32 %v4439, 16
        %v4490 = vrot.slane %v4488, 4
        %v4491 = vshll.u32 %v4439, 16
        %v4493 = vrot.slane %v4491, 5
        %v4494 = vor.u32 %v4490, %v4493
        %v4495 = vrot.slane %v4494, 4
        %v4497 = vshll.u32 %v4440, 16
        %v4499 = vrot.slane %v4497, 5
        %v4500 = vsel %vm1128, %v4495, %v4499
        %v4501 = vshrl.u32 %v4440, 16
        %v4503 = vrot.slane %v4501, 4
        %v4504 = vor.u32 %v4503, %v4499
        %v4505 = vrot.slane %v4504, 4
        %v4507 = vshll.u32 %v4441, 16
        %v4509 = vrot.slane %v4507, 5
        %v4510 = vsel %vm1128, %v4505, %v4509
        %v4512 = vshrl.u32 %v4442, 16
        %v4514 = vrot.slane %v4512, 4
        %v4515 = vshll.u32 %v4442, 16
        %v4517 = vrot.slane %v4515, 5
        %v4518 = vor.u32 %v4514, %v4517
        %v4519 = vrot.slane %v4518, 4
        %v4521 = vshll.u32 %v4443, 16
        %v4523 = vrot.slane %v4521, 5
        %v4524 = vsel %vm1128, %v4519, %v4523
        %v4525 = vshrl.u32 %v4443, 16
        %v4527 = vrot.slane %v4525, 4
        %v4528 = vor.u32 %v4527, %v4523
        %v4529 = vrot.slane %v4528, 4
        %v4531 = vshll.u32 %v4444, 16
        %v4533 = vrot.slane %v4531, 5
        %v4534 = vsel %vm1128, %v4529, %v4533
        %v4536 = vshrl.u32 %v4445, 16
        %v4538 = vrot.slane %v4536, 4
        %v4539 = vshll.u32 %v4445, 16
        %v4541 = vrot.slane %v4539, 5
        %v4542 = vor.u32 %v4538, %v4541
        %v4543 = vrot.slane %v4542, 4
        %v4545 = vshll.u32 %v4446, 16
        %v4547 = vrot.slane %v4545, 5
        %v4548 = vsel %vm1128, %v4543, %v4547
        %v4549 = vshrl.u32 %v4446, 16
        %v4551 = vrot.slane %v4549, 4
        %v4552 = vor.u32 %v4551, %v4547
        %v4553 = vrot.slane %v4552, 4
        %v4555 = vshll.u32 %v4447, 16
        %v4557 = vrot.slane %v4555, 5
        %v4558 = vsel %vm1128, %v4553, %v4557
        %v4560 = vshrl.u32 %v4448, 16
        %v4562 = vrot.slane %v4560, 4
        %v4563 = vshll.u32 %v4448, 16
        %v4565 = vrot.slane %v4563, 5
        %v4566 = vor.u32 %v4562, %v4565
        %v4567 = vrot.slane %v4566, 4
        %v4569 = vshll.u32 %v4449, 16
        %v4571 = vrot.slane %v4569, 5
        %v4572 = vsel %vm1128, %v4567, %v4571
        %v4573 = vshrl.u32 %v4449, 16
        %v4575 = vrot.slane %v4573, 4
        %v4576 = vor.u32 %v4575, %v4571
        %v4577 = vrot.slane %v4576, 4
        %v4579 = vshll.u32 %v4450, 16
        %v4581 = vrot.slane %v4579, 5
        %v4582 = vsel %vm1128, %v4577, %v4581
        %v4584 = vshrl.u32 %v4451, 16
        %v4586 = vrot.slane %v4584, 4
        %v4587 = vshll.u32 %v4451, 16
        %v4589 = vrot.slane %v4587, 5
        %v4590 = vor.u32 %v4586, %v4589
        %v4591 = vrot.slane %v4590, 4
        %v4593 = vshll.u32 %v4452, 16
        %v4595 = vrot.slane %v4593, 5
        %v4596 = vsel %vm1128, %v4591, %v4595
        %v4597 = vshrl.u32 %v4452, 16
        %v4599 = vrot.slane %v4597, 4
        %v4600 = vor.u32 %v4599, %v4595
        %v4601 = vrot.slane %v4600, 4
        %v4603 = vshll.u32 %v4453, 16
        %v4605 = vrot.slane %v4603, 5
        %v4606 = vsel %vm1128, %v4601, %v4605
        %v4608 = vshrl.u32 %v4454, 16
        %v4610 = vrot.slane %v4608, 4
        %v4611 = vshll.u32 %v4454, 16
        %v4613 = vrot.slane %v4611, 5
        %v4614 = vor.u32 %v4610, %v4613
        %v4615 = vrot.slane %v4614, 4
        %v4617 = vshll.u32 %v4455, 16
        %v4619 = vrot.slane %v4617, 5
        %v4620 = vsel %vm1128, %v4615, %v4619
        %v4621 = vshrl.u32 %v4455, 16
        %v4623 = vrot.slane %v4621, 4
        %v4624 = vor.u32 %v4623, %v4619
        %v4625 = vrot.slane %v4624, 4
        %v4627 = vshll.u32 %v4456, 16
        %v4629 = vrot.slane %v4627, 5
        %v4630 = vsel %vm1128, %v4625, %v4629
        %v4632 = vshrl.u32 %v4457, 16
        %v4634 = vrot.slane %v4632, 4
        %v4635 = vshll.u32 %v4457, 16
        %v4637 = vrot.slane %v4635, 5
        %v4638 = vor.u32 %v4634, %v4637
        %v4639 = vrot.slane %v4638, 4
        %v4641 = vshll.u32 %v4458, 16
        %v4643 = vrot.slane %v4641, 5
        %v4644 = vsel %vm1128, %v4639, %v4643
        %v4645 = vshrl.u32 %v4458, 16
        %v4647 = vrot.slane %v4645, 4
        %v4648 = vor.u32 %v4647, %v4643
        %v4649 = vrot.slane %v4648, 4
        %v4651 = vshll.u32 %v4459, 16
        %v4653 = vrot.slane %v4651, 5
        %v4654 = vsel %vm1128, %v4649, %v4653
        %v4656 = vshrl.u32 %v4460, 16
        %v4658 = vrot.slane %v4656, 4
        %v4659 = vshll.u32 %v4460, 16
        %v4661 = vrot.slane %v4659, 5
        %v4662 = vor.u32 %v4658, %v4661
        %v4663 = vrot.slane %v4662, 4
        %v4665 = vshll.u32 %v4461, 16
        %v4667 = vrot.slane %v4665, 5
        %v4668 = vsel %vm1128, %v4663, %v4667
        %v4669 = vshrl.u32 %v4461, 16
        %v4671 = vrot.slane %v4669, 4
        %v4672 = vor.u32 %v4671, %v4667
        %v4673 = vrot.slane %v4672, 4
        %v4675 = vshll.u32 %v4462, 16
        %v4677 = vrot.slane %v4675, 5
        %v4678 = vsel %vm1128, %v4673, %v4677
        %v4680 = vshrl.u32 %v4463, 16
        %v4682 = vrot.slane %v4680, 4
        %v4683 = vshll.u32 %v4463, 16
        %v4685 = vrot.slane %v4683, 5
        %v4686 = vor.u32 %v4682, %v4685
        %v4687 = vrot.slane %v4686, 4
        %v4689 = vshll.u32 %v4464, 16
        %v4691 = vrot.slane %v4689, 5
        %v4692 = vsel %vm1128, %v4687, %v4691
        %v4693 = vshrl.u32 %v4464, 16
        %v4695 = vrot.slane %v4693, 4
        %v4696 = vor.u32 %v4695, %v4691
        %v4697 = vrot.slane %v4696, 4
        %v4699 = vshll.u32 %v4465, 16
        %v4701 = vrot.slane %v4699, 5
        %v4702 = vsel %vm1128, %v4697, %v4701
        %v4704 = vshrl.u32 %v4466, 16
        %v4706 = vrot.slane %v4704, 4
        %v4707 = vshll.u32 %v4466, 16
        %v4709 = vrot.slane %v4707, 5
        %v4710 = vor.u32 %v4706, %v4709
        %v4711 = vrot.slane %v4710, 4
        %v4713 = vshll.u32 %v4467, 16
        %v4715 = vrot.slane %v4713, 5
        %v4716 = vsel %vm1128, %v4711, %v4715
        %v4717 = vshrl.u32 %v4467, 16
        %v4719 = vrot.slane %v4717, 4
        %v4720 = vor.u32 %v4719, %v4715
        %v4721 = vrot.slane %v4720, 4
        %v4723 = vshll.u32 %v4468, 16
        %v4725 = vrot.slane %v4723, 5
        %v4726 = vsel %vm1128, %v4721, %v4725
        %v4728 = vshrl.u32 %v4469, 16
        %v4730 = vrot.slane %v4728, 4
        %v4731 = vshll.u32 %v4469, 16
        %v4733 = vrot.slane %v4731, 5
        %v4734 = vor.u32 %v4730, %v4733
        %v4735 = vrot.slane %v4734, 4
        %v4737 = vshll.u32 %v4470, 16
        %v4739 = vrot.slane %v4737, 5
        %v4740 = vsel %vm1128, %v4735, %v4739
        %v4741 = vshrl.u32 %v4470, 16
        %v4743 = vrot.slane %v4741, 4
        %v4744 = vor.u32 %v4743, %v4739
        %v4745 = vrot.slane %v4744, 4
        %v4747 = vshll.u32 %v4471, 16
        %v4749 = vrot.slane %v4747, 5
        %v4750 = vsel %vm1128, %v4745, %v4749
        %v4752 = vshrl.u32 %v4472, 16
        %v4754 = vrot.slane %v4752, 4
        %v4755 = vshll.u32 %v4472, 16
        %v4757 = vrot.slane %v4755, 5
        %v4758 = vor.u32 %v4754, %v4757
        %v4759 = vrot.slane %v4758, 4
        %v4761 = vshll.u32 %v4473, 16
        %v4763 = vrot.slane %v4761, 5
        %v4764 = vsel %vm1128, %v4759, %v4763
        %v4765 = vshrl.u32 %v4473, 16
        %v4767 = vrot.slane %v4765, 4
        %v4768 = vor.u32 %v4767, %v4763
        %v4769 = vrot.slane %v4768, 4
        %v4771 = vshll.u32 %v4474, 16
        %v4773 = vrot.slane %v4771, 5
        %v4774 = vsel %vm1128, %v4769, %v4773
        %v4776 = vshrl.u32 %v4475, 16
        %v4778 = vrot.slane %v4776, 4
        %v4779 = vshll.u32 %v4475, 16
        %v4781 = vrot.slane %v4779, 5
        %v4782 = vor.u32 %v4778, %v4781
        %v4783 = vrot.slane %v4782, 4
        %v4785 = vshll.u32 %v4476, 16
        %v4787 = vrot.slane %v4785, 5
        %v4788 = vsel %vm1128, %v4783, %v4787
        %v4789 = vshrl.u32 %v4476, 16
        %v4791 = vrot.slane %v4789, 4
        %v4792 = vor.u32 %v4791, %v4787
        %v4793 = vrot.slane %v4792, 4
        %v4795 = vshll.u32 %v4477, 16
        %v4797 = vrot.slane %v4795, 5
        %v4798 = vsel %vm1128, %v4793, %v4797
        %v4800 = vshrl.u32 %v4478, 16
        %v4802 = vrot.slane %v4800, 4
        %v4803 = vshll.u32 %v4478, 16
        %v4805 = vrot.slane %v4803, 5
        %v4806 = vor.u32 %v4802, %v4805
        %v4807 = vrot.slane %v4806, 4
        %v4809 = vshll.u32 %v4479, 16
        %v4811 = vrot.slane %v4809, 5
        %v4812 = vsel %vm1128, %v4807, %v4811
        %v4813 = vshrl.u32 %v4479, 16
        %v4815 = vrot.slane %v4813, 4
        %v4816 = vor.u32 %v4815, %v4811
        %v4817 = vrot.slane %v4816, 4
        %v4819 = vshll.u32 %v4480, 16
        %v4821 = vrot.slane %v4819, 5
        %v4822 = vsel %vm1128, %v4817, %v4821
        %v4824 = vshrl.u32 %v4481, 16
        %v4826 = vrot.slane %v4824, 4
        %v4827 = vshll.u32 %v4481, 16
        %v4829 = vrot.slane %v4827, 5
        %v4830 = vor.u32 %v4826, %v4829
        %v4831 = vrot.slane %v4830, 4
        %v4833 = vshll.u32 %v4482, 16
        %v4835 = vrot.slane %v4833, 5
        %v4836 = vsel %vm1128, %v4831, %v4835
        %v4837 = vshrl.u32 %v4482, 16
        %v4839 = vrot.slane %v4837, 4
        %v4840 = vor.u32 %v4839, %v4835
        %v4841 = vrot.slane %v4840, 4
        %v4843 = vshll.u32 %v4483, 16
        %v4845 = vrot.slane %v4843, 5
        %v4846 = vsel %vm1128, %v4841, %v4845
        %v4848 = vshrl.u32 %v4484, 16
        %v4850 = vrot.slane %v4848, 4
        %v4851 = vshll.u32 %v4484, 16
        %v4853 = vrot.slane %v4851, 5
        %v4854 = vor.u32 %v4850, %v4853
        %v4855 = vrot.slane %v4854, 4
        %v4857 = vshll.u32 %v4485, 16
        %v4859 = vrot.slane %v4857, 5
        %v4860 = vsel %vm1128, %v4855, %v4859
        %v4861 = vshrl.u32 %v4485, 16
        %v4863 = vrot.slane %v4861, 4
        %v4864 = vor.u32 %v4863, %v4859
        %v4865 = vrot.slane %v4864, 4
        %v4867 = vshll.u32 %v4486, 16
        %v4869 = vrot.slane %v4867, 5
        %v4870 = vsel %vm1128, %v4865, %v4869
        %s4871 = scalar_lea.vmem [#allocation7], 14
        %v4872 = vld [vmem:[%s4871] sm:$0x3]
        %v4873 = vunpack.c.l.b16 %v4500
        %v4874 = vunpack.c.l.b16 %v4510
        %v4875 = vunpack.c.l.b16 %v4524
        %v4876 = vunpack.c.l.b16 %v4534
        %v4877 = vunpack.c.l.b16 %v4548
        %v4878 = vunpack.c.l.b16 %v4558
        %v4879 = vunpack.c.l.b16 %v4572
        %v4880 = vunpack.c.l.b16 %v4582
        %v4881 = vunpack.c.l.b16 %v4596
        %v4882 = vunpack.c.l.b16 %v4606
        %v4883 = vunpack.c.l.b16 %v4620
        %v4884 = vunpack.c.l.b16 %v4630
        %v4885 = vunpack.c.l.b16 %v4644
        %v4886 = vunpack.c.l.b16 %v4654
        %v4887 = vunpack.c.l.b16 %v4668
        %v4888 = vunpack.c.l.b16 %v4678
        %v4889 = vunpack.c.l.b16 %v4692
        %v4890 = vunpack.c.l.b16 %v4702
        %v4891 = vunpack.c.l.b16 %v4716
        %v4892 = vunpack.c.l.b16 %v4726
        %v4893 = vunpack.c.l.b16 %v4740
        %v4894 = vunpack.c.l.b16 %v4750
        %v4895 = vunpack.c.l.b16 %v4764
        %v4896 = vunpack.c.l.b16 %v4774
        %v4897 = vunpack.c.l.b16 %v4788
        %v4898 = vunpack.c.l.b16 %v4798
        %v4899 = vunpack.c.l.b16 %v4812
        %v4900 = vunpack.c.l.b16 %v4822
        %v4901 = vunpack.c.l.b16 %v4836
        %v4902 = vunpack.c.l.b16 %v4846
        %v4903 = vunpack.c.l.b16 %v4860
        %v4904 = vunpack.c.l.b16 %v4870
        %v4905 = vpack.c.b16 %v4874, %v4873
        %v4906 = vpack.c.b16 %v4876, %v4875
        %v4907 = vpack.c.b16 %v4878, %v4877
        %v4908 = vpack.c.b16 %v4880, %v4879
        %v4909 = vpack.c.b16 %v4882, %v4881
        %v4910 = vpack.c.b16 %v4884, %v4883
        %v4911 = vpack.c.b16 %v4886, %v4885
        %v4912 = vpack.c.b16 %v4888, %v4887
        %v4913 = vpack.c.b16 %v4890, %v4889
        %v4914 = vpack.c.b16 %v4892, %v4891
        %v4915 = vpack.c.b16 %v4894, %v4893
        %v4916 = vpack.c.b16 %v4896, %v4895
        %v4917 = vpack.c.b16 %v4898, %v4897
        %v4918 = vpack.c.b16 %v4900, %v4899
        %v4919 = vpack.c.b16 %v4902, %v4901
        %v4920 = vpack.c.b16 %v4904, %v4903
        %v4922 = vsel %vm1563, %v4905, 0
        %v4925 = vsel %vm1563, %v4906, 0
        %v4928 = vsel %vm1563, %v4907, 0
        %v4931 = vsel %vm1563, %v4908, 0
        %v4934 = vsel %vm1563, %v4909, 0
        %v4937 = vsel %vm1563, %v4910, 0
        %v4940 = vsel %vm1563, %v4911, 0
        %v4943 = vsel %vm1563, %v4912, 0
        %v4946 = vsel %vm1563, %v4913, 0
        %v4949 = vsel %vm1563, %v4914, 0
        %v4952 = vsel %vm1563, %v4915, 0
        %v4955 = vsel %vm1563, %v4916, 0
        %v4958 = vsel %vm1563, %v4917, 0
        %v4961 = vsel %vm1563, %v4918, 0
        %v4964 = vsel %vm1563, %v4919, 0
        %v4967 = vsel %vm1563, %v4920, 0
        %v4970 = vsel %vm1612, %v4872, 0
        %4972 = vmatprep.subr.bf16.mxu0 0
        %4973 = vmatpush1.bf16.msra.mxu0 %v4970
        %4974 = vmatprep.subr.bf16.mxu0 0
        %4975 = vmatpush1.bf16.msra.mxu0 0
        %4976 = vmatprep.subr.bf16.mxu0 0
        %4977 = vmatpush1.bf16.msra.mxu0 0
        %4978 = vmatprep.subr.bf16.mxu0 0
        %4979 = vmatpush1.bf16.msra.mxu0 0
        %4980 = vmatprep.subr.bf16.mxu0 0
        %4981 = vmatpush1.bf16.msra.mxu0 0
        %4982 = vmatprep.subr.bf16.mxu0 0
        %4983 = vmatpush1.bf16.msra.mxu0 0
        %4984 = vmatprep.subr.bf16.mxu0 0
        %4985 = vmatpush1.bf16.msra.mxu0 0
        %4986 = vmatprep.subr.bf16.mxu0 0
        %4987 = vmatpush1.bf16.msra.mxu0 0
        %4988 = vmatprep.subr.bf16.mxu0 0
        %4989 = vmatpush1.bf16.msra.mxu0 0
        %4990 = vmatprep.subr.bf16.mxu0 0
        %4991 = vmatpush1.bf16.msra.mxu0 0
        %4992 = vmatprep.subr.bf16.mxu0 0
        %4993 = vmatpush1.bf16.msra.mxu0 0
        %4994 = vmatprep.subr.bf16.mxu0 0
        %4995 = vmatpush1.bf16.msra.mxu0 0
        %4996 = vmatprep.subr.bf16.mxu0 0
        %4997 = vmatpush1.bf16.msra.mxu0 0
        %4998 = vmatprep.subr.bf16.mxu0 0
        %4999 = vmatpush1.bf16.msra.mxu0 0
        %5000 = vmatprep.subr.bf16.mxu0 0
        %5001 = vmatpush1.bf16.msra.mxu0 0
        %5002 = vmatprep.subr.bf16.mxu0 0
        %5003 = vmatpush1.bf16.msra.mxu0 0
        %5004 = vmatprep.mubr.bf16.mxu0 0
        %5005 = vmatmul.mubr.bf16.gmra.mrb[0].mxu0 %v4922
        %v5006 = vpop.f32.mrb[0].mxu0
        %v5007 = vadd.f32 0.0, %v5006
        %v5008 = vpop.f32.mrb[0].mxu0
        %v5009 = vpop.f32.mrb[0].mxu0
        %v5010 = vadd.f32 0.0, %v5009
        %v5011 = vpop.f32.mrb[0].mxu0
        %5012 = vmatprep.mubr.bf16.mxu0 0
        %5013 = vmatmul.mubr.bf16.gmra.mrb[0].mxu0 %v4925
        %v5014 = vpop.f32.mrb[0].mxu0
        %v5015 = vadd.f32 0.0, %v5014
        %v5016 = vpop.f32.mrb[0].mxu0
        %v5017 = vpop.f32.mrb[0].mxu0
        %v5018 = vadd.f32 0.0, %v5017
        %v5019 = vpop.f32.mrb[0].mxu0
        %5020 = vmatprep.mubr.bf16.mxu0 0
        %5021 = vmatmul.mubr.bf16.gmra.mrb[0].mxu0 %v4928
        %v5022 = vpop.f32.mrb[0].mxu0
        %v5023 = vadd.f32 0.0, %v5022
        %v5024 = vpop.f32.mrb[0].mxu0
        %v5025 = vpop.f32.mrb[0].mxu0
        %v5026 = vadd.f32 0.0, %v5025
        %v5027 = vpop.f32.mrb[0].mxu0
        %5028 = vmatprep.mubr.bf16.mxu0 0
        %5029 = vmatmul.mubr.bf16.gmra.mrb[0].mxu0 %v4931
        %v5030 = vpop.f32.mrb[0].mxu0
        %v5031 = vadd.f32 0.0, %v5030
        %v5032 = vpop.f32.mrb[0].mxu0
        %v5033 = vpop.f32.mrb[0].mxu0
        %v5034 = vadd.f32 0.0, %v5033
        %v5035 = vpop.f32.mrb[0].mxu0
        %5036 = vmatprep.mubr.bf16.mxu0 0
        %5037 = vmatmul.mubr.bf16.gmra.mrb[0].mxu0 %v4934
        %v5038 = vpop.f32.mrb[0].mxu0
        %v5039 = vadd.f32 0.0, %v5038
        %v5040 = vpop.f32.mrb[0].mxu0
        %v5041 = vpop.f32.mrb[0].mxu0
        %v5042 = vadd.f32 0.0, %v5041
        %v5043 = vpop.f32.mrb[0].mxu0
        %5044 = vmatprep.mubr.bf16.mxu0 0
        %5045 = vmatmul.mubr.bf16.gmra.mrb[0].mxu0 %v4937
        %v5046 = vpop.f32.mrb[0].mxu0
        %v5047 = vadd.f32 0.0, %v5046
        %v5048 = vpop.f32.mrb[0].mxu0
        %v5049 = vpop.f32.mrb[0].mxu0
        %v5050 = vadd.f32 0.0, %v5049
        %v5051 = vpop.f32.mrb[0].mxu0
        %5052 = vmatprep.mubr.bf16.mxu0 0
        %5053 = vmatmul.mubr.bf16.gmra.mrb[0].mxu0 %v4940
        %v5054 = vpop.f32.mrb[0].mxu0
        %v5055 = vadd.f32 0.0, %v5054
        %v5056 = vpop.f32.mrb[0].mxu0
        %v5057 = vpop.f32.mrb[0].mxu0
        %v5058 = vadd.f32 0.0, %v5057
        %v5059 = vpop.f32.mrb[0].mxu0
        %5060 = vmatprep.mubr.bf16.mxu0 0
        %5061 = vmatmul.mubr.bf16.gmra.mrb[0].mxu0 %v4943
        %v5062 = vpop.f32.mrb[0].mxu0
        %v5063 = vadd.f32 0.0, %v5062
        %v5064 = vpop.f32.mrb[0].mxu0
        %v5065 = vpop.f32.mrb[0].mxu0
        %v5066 = vadd.f32 0.0, %v5065
        %v5067 = vpop.f32.mrb[0].mxu0
        %5068 = vmatprep.mubr.bf16.mxu0 0
        %5069 = vmatmul.mubr.bf16.gmra.mrb[0].mxu0 %v4946
        %v5070 = vpop.f32.mrb[0].mxu0
        %v5071 = vadd.f32 0.0, %v5070
        %v5072 = vpop.f32.mrb[0].mxu0
        %v5073 = vpop.f32.mrb[0].mxu0
        %v5074 = vadd.f32 0.0, %v5073
        %v5075 = vpop.f32.mrb[0].mxu0
        %5076 = vmatprep.mubr.bf16.mxu0 0
        %5077 = vmatmul.mubr.bf16.gmra.mrb[0].mxu0 %v4949
        %v5078 = vpop.f32.mrb[0].mxu0
        %v5079 = vadd.f32 0.0, %v5078
        %v5080 = vpop.f32.mrb[0].mxu0
        %v5081 = vpop.f32.mrb[0].mxu0
        %v5082 = vadd.f32 0.0, %v5081
        %v5083 = vpop.f32.mrb[0].mxu0
        %5084 = vmatprep.mubr.bf16.mxu0 0
        %5085 = vmatmul.mubr.bf16.gmra.mrb[0].mxu0 %v4952
        %v5086 = vpop.f32.mrb[0].mxu0
        %v5087 = vadd.f32 0.0, %v5086
        %v5088 = vpop.f32.mrb[0].mxu0
        %v5089 = vpop.f32.mrb[0].mxu0
        %v5090 = vadd.f32 0.0, %v5089
        %v5091 = vpop.f32.mrb[0].mxu0
        %5092 = vmatprep.mubr.bf16.mxu0 0
        %5093 = vmatmul.mubr.bf16.gmra.mrb[0].mxu0 %v4955
        %v5094 = vpop.f32.mrb[0].mxu0
        %v5095 = vadd.f32 0.0, %v5094
        %v5096 = vpop.f32.mrb[0].mxu0
        %v5097 = vpop.f32.mrb[0].mxu0
        %v5098 = vadd.f32 0.0, %v5097
        %v5099 = vpop.f32.mrb[0].mxu0
        %5100 = vmatprep.mubr.bf16.mxu0 0
        %5101 = vmatmul.mubr.bf16.gmra.mrb[0].mxu0 %v4958
        %v5102 = vpop.f32.mrb[0].mxu0
        %v5103 = vadd.f32 0.0, %v5102
        %v5104 = vpop.f32.mrb[0].mxu0
        %v5105 = vpop.f32.mrb[0].mxu0
        %v5106 = vadd.f32 0.0, %v5105
        %v5107 = vpop.f32.mrb[0].mxu0
        %5108 = vmatprep.mubr.bf16.mxu0 0
        %5109 = vmatmul.mubr.bf16.gmra.mrb[0].mxu0 %v4961
        %v5110 = vpop.f32.mrb[0].mxu0
        %v5111 = vadd.f32 0.0, %v5110
        %v5112 = vpop.f32.mrb[0].mxu0
        %v5113 = vpop.f32.mrb[0].mxu0
        %v5114 = vadd.f32 0.0, %v5113
        %v5115 = vpop.f32.mrb[0].mxu0
        %5116 = vmatprep.mubr.bf16.mxu0 0
        %5117 = vmatmul.mubr.bf16.gmra.mrb[0].mxu0 %v4964
        %v5118 = vpop.f32.mrb[0].mxu0
        %v5119 = vadd.f32 0.0, %v5118
        %v5120 = vpop.f32.mrb[0].mxu0
        %v5121 = vpop.f32.mrb[0].mxu0
        %v5122 = vadd.f32 0.0, %v5121
        %v5123 = vpop.f32.mrb[0].mxu0
        %5124 = vmatprep.mubr.bf16.mxu0 0
        %5125 = vmatmul.mubr.bf16.gmra.mrb[0].mxu0 %v4967
        %v5126 = vpop.f32.mrb[0].mxu0
        %v5127 = vadd.f32 0.0, %v5126
        %v5128 = vpop.f32.mrb[0].mxu0
        %v5129 = vpop.f32.mrb[0].mxu0
        %v5130 = vadd.f32 0.0, %v5129
        %v5131 = vpop.f32.mrb[0].mxu0
        %5132 = vdwg.mxu0
        %v5133 = vadd.f32 %v4407, %v5007
        %v5134 = vadd.f32 %v4408, %v5010
        %v5135 = vadd.f32 %v4409, %v5015
        %v5136 = vadd.f32 %v4410, %v5018
        %v5137 = vadd.f32 %v4411, %v5023
        %v5138 = vadd.f32 %v4412, %v5026
        %v5139 = vadd.f32 %v4413, %v5031
        %v5140 = vadd.f32 %v4414, %v5034
        %v5141 = vadd.f32 %v4415, %v5039
        %v5142 = vadd.f32 %v4416, %v5042
        %v5143 = vadd.f32 %v4417, %v5047
        %v5144 = vadd.f32 %v4418, %v5050
        %v5145 = vadd.f32 %v4419, %v5055
        %v5146 = vadd.f32 %v4420, %v5058
        %v5147 = vadd.f32 %v4421, %v5063
        %v5148 = vadd.f32 %v4422, %v5066
        %v5149 = vadd.f32 %v4423, %v5071
        %v5150 = vadd.f32 %v4424, %v5074
        %v5151 = vadd.f32 %v4425, %v5079
        %v5152 = vadd.f32 %v4426, %v5082
        %v5153 = vadd.f32 %v4427, %v5087
        %v5154 = vadd.f32 %v4428, %v5090
        %v5155 = vadd.f32 %v4429, %v5095
        %v5156 = vadd.f32 %v4430, %v5098
        %v5157 = vadd.f32 %v4431, %v5103
        %v5158 = vadd.f32 %v4432, %v5106
        %v5159 = vadd.f32 %v4433, %v5111
        %v5160 = vadd.f32 %v4434, %v5114
        %v5161 = vadd.f32 %v4435, %v5119
        %v5162 = vadd.f32 %v4436, %v5122
        %v5163 = vadd.f32 %v4437, %v5127
        %v5164 = vadd.f32 %v4438, %v5130
        %v5165 = vld [vmem:[%s4080] sm:$0xe]
        %v5166 = vld [vmem:[%s4080 + $0xc] sm:$0xe]
        %v5167 = vld [vmem:[%s4080 + $0x18] sm:$0xe]
        %v5168 = vld [vmem:[%s4080 + $0x24] sm:$0xe]
        %v5169 = vld [vmem:[%s4080 + $0x30] sm:$0xe]
        %v5170 = vld [vmem:[%s4080 + $0x3c] sm:$0xe]
        %v5171 = vld [vmem:[%s4080 + $0x48] sm:$0xe]
        %v5172 = vld [vmem:[%s4080 + $0x54] sm:$0xe]
        %v5173 = vld [vmem:[%s4080 + $0x60] sm:$0xe]
        %v5174 = vld [vmem:[%s4080 + $0x6c] sm:$0xe]
        %v5175 = vld [vmem:[%s4080 + $0x78] sm:$0xe]
        %v5176 = vld [vmem:[%s4080 + $0x84] sm:$0xe]
        %v5177 = vld [vmem:[%s4080 + $0x90] sm:$0xe]
        %v5178 = vld [vmem:[%s4080 + $0x9c] sm:$0xe]
        %v5179 = vld [vmem:[%s4080 + $0xa8] sm:$0xe]
        %v5180 = vld [vmem:[%s4080 + $0xb4] sm:$0xe]
        %v5229 = vrot.slane %v5165, 5
        %v5230 = vrot.slane %v5229, 4
        %v5231 = vrot.slane %v4440, 5
        %v5232 = vsel %vm2119, %v5230, %v5231
        %v5233 = vrot.slane %v5231, 4
        %v5234 = vrot.slane %v4441, 5
        %v5235 = vsel %vm2119, %v5233, %v5234
        %v5236 = vrot.slane %v5166, 5
        %v5237 = vrot.slane %v5236, 4
        %v5238 = vrot.slane %v4443, 5
        %v5239 = vsel %vm2119, %v5237, %v5238
        %v5240 = vrot.slane %v5238, 4
        %v5241 = vrot.slane %v4444, 5
        %v5242 = vsel %vm2119, %v5240, %v5241
        %v5243 = vrot.slane %v5167, 5
        %v5244 = vrot.slane %v5243, 4
        %v5245 = vrot.slane %v4446, 5
        %v5246 = vsel %vm2119, %v5244, %v5245
        %v5247 = vrot.slane %v5245, 4
        %v5248 = vrot.slane %v4447, 5
        %v5249 = vsel %vm2119, %v5247, %v5248
        %v5250 = vrot.slane %v5168, 5
        %v5251 = vrot.slane %v5250, 4
        %v5252 = vrot.slane %v4449, 5
        %v5253 = vsel %vm2119, %v5251, %v5252
        %v5254 = vrot.slane %v5252, 4
        %v5255 = vrot.slane %v4450, 5
        %v5256 = vsel %vm2119, %v5254, %v5255
        %v5257 = vrot.slane %v5169, 5
        %v5258 = vrot.slane %v5257, 4
        %v5259 = vrot.slane %v4452, 5
        %v5260 = vsel %vm2119, %v5258, %v5259
        %v5261 = vrot.slane %v5259, 4
        %v5262 = vrot.slane %v4453, 5
        %v5263 = vsel %vm2119, %v5261, %v5262
        %v5264 = vrot.slane %v5170, 5
        %v5265 = vrot.slane %v5264, 4
        %v5266 = vrot.slane %v4455, 5
        %v5267 = vsel %vm2119, %v5265, %v5266
        %v5268 = vrot.slane %v5266, 4
        %v5269 = vrot.slane %v4456, 5
        %v5270 = vsel %vm2119, %v5268, %v5269
        %v5271 = vrot.slane %v5171, 5
        %v5272 = vrot.slane %v5271, 4
        %v5273 = vrot.slane %v4458, 5
        %v5274 = vsel %vm2119, %v5272, %v5273
        %v5275 = vrot.slane %v5273, 4
        %v5276 = vrot.slane %v4459, 5
        %v5277 = vsel %vm2119, %v5275, %v5276
        %v5278 = vrot.slane %v5172, 5
        %v5279 = vrot.slane %v5278, 4
        %v5280 = vrot.slane %v4461, 5
        %v5281 = vsel %vm2119, %v5279, %v5280
        %v5282 = vrot.slane %v5280, 4
        %v5283 = vrot.slane %v4462, 5
        %v5284 = vsel %vm2119, %v5282, %v5283
        %v5285 = vrot.slane %v5173, 5
        %v5286 = vrot.slane %v5285, 4
        %v5287 = vrot.slane %v4464, 5
        %v5288 = vsel %vm2119, %v5286, %v5287
        %v5289 = vrot.slane %v5287, 4
        %v5290 = vrot.slane %v4465, 5
        %v5291 = vsel %vm2119, %v5289, %v5290
        %v5292 = vrot.slane %v5174, 5
        %v5293 = vrot.slane %v5292, 4
        %v5294 = vrot.slane %v4467, 5
        %v5295 = vsel %vm2119, %v5293, %v5294
        %v5296 = vrot.slane %v5294, 4
        %v5297 = vrot.slane %v4468, 5
        %v5298 = vsel %vm2119, %v5296, %v5297
        %v5299 = vrot.slane %v5175, 5
        %v5300 = vrot.slane %v5299, 4
        %v5301 = vrot.slane %v4470, 5
        %v5302 = vsel %vm2119, %v5300, %v5301
        %v5303 = vrot.slane %v5301, 4
        %v5304 = vrot.slane %v4471, 5
        %v5305 = vsel %vm2119, %v5303, %v5304
        %v5306 = vrot.slane %v5176, 5
        %v5307 = vrot.slane %v5306, 4
        %v5308 = vrot.slane %v4473, 5
        %v5309 = vsel %vm2119, %v5307, %v5308
        %v5310 = vrot.slane %v5308, 4
        %v5311 = vrot.slane %v4474, 5
        %v5312 = vsel %vm2119, %v5310, %v5311
        %v5313 = vrot.slane %v5177, 5
        %v5314 = vrot.slane %v5313, 4
        %v5315 = vrot.slane %v4476, 5
        %v5316 = vsel %vm2119, %v5314, %v5315
        %v5317 = vrot.slane %v5315, 4
        %v5318 = vrot.slane %v4477, 5
        %v5319 = vsel %vm2119, %v5317, %v5318
        %v5320 = vrot.slane %v5178, 5
        %v5321 = vrot.slane %v5320, 4
        %v5322 = vrot.slane %v4479, 5
        %v5323 = vsel %vm2119, %v5321, %v5322
        %v5324 = vrot.slane %v5322, 4
        %v5325 = vrot.slane %v4480, 5
        %v5326 = vsel %vm2119, %v5324, %v5325
        %v5327 = vrot.slane %v5179, 5
        %v5328 = vrot.slane %v5327, 4
        %v5329 = vrot.slane %v4482, 5
        %v5330 = vsel %vm2119, %v5328, %v5329
        %v5331 = vrot.slane %v5329, 4
        %v5332 = vrot.slane %v4483, 5
        %v5333 = vsel %vm2119, %v5331, %v5332
        %v5334 = vrot.slane %v5180, 5
        %v5335 = vrot.slane %v5334, 4
        %v5336 = vrot.slane %v4485, 5
        %v5337 = vsel %vm2119, %v5335, %v5336
        %v5338 = vrot.slane %v5336, 4
        %v5339 = vrot.slane %v4486, 5
        %v5340 = vsel %vm2119, %v5338, %v5339
        %s5341 = scalar_lea.vmem [#allocation7], 16
        %v5342 = vld [vmem:[%s5341] sm:$0x3]
        %v5343 = vunpack.c.l.b16 %v5232
        %v5344 = vunpack.c.l.b16 %v5235
        %v5345 = vunpack.c.l.b16 %v5239
        %v5346 = vunpack.c.l.b16 %v5242
        %v5347 = vunpack.c.l.b16 %v5246
        %v5348 = vunpack.c.l.b16 %v5249
        %v5349 = vunpack.c.l.b16 %v5253
        %v5350 = vunpack.c.l.b16 %v5256
        %v5351 = vunpack.c.l.b16 %v5260
        %v5352 = vunpack.c.l.b16 %v5263
        %v5353 = vunpack.c.l.b16 %v5267
        %v5354 = vunpack.c.l.b16 %v5270
        %v5355 = vunpack.c.l.b16 %v5274
        %v5356 = vunpack.c.l.b16 %v5277
        %v5357 = vunpack.c.l.b16 %v5281
        %v5358 = vunpack.c.l.b16 %v5284
        %v5359 = vunpack.c.l.b16 %v5288
        %v5360 = vunpack.c.l.b16 %v5291
        %v5361 = vunpack.c.l.b16 %v5295
        %v5362 = vunpack.c.l.b16 %v5298
        %v5363 = vunpack.c.l.b16 %v5302
        %v5364 = vunpack.c.l.b16 %v5305
        %v5365 = vunpack.c.l.b16 %v5309
        %v5366 = vunpack.c.l.b16 %v5312
        %v5367 = vunpack.c.l.b16 %v5316
        %v5368 = vunpack.c.l.b16 %v5319
        %v5369 = vunpack.c.l.b16 %v5323
        %v5370 = vunpack.c.l.b16 %v5326
        %v5371 = vunpack.c.l.b16 %v5330
        %v5372 = vunpack.c.l.b16 %v5333
        %v5373 = vunpack.c.l.b16 %v5337
        %v5374 = vunpack.c.l.b16 %v5340
        %v5375 = vpack.c.b16 %v5344, %v5343
        %v5376 = vpack.c.b16 %v5346, %v5345
        %v5377 = vpack.c.b16 %v5348, %v5347
        %v5378 = vpack.c.b16 %v5350, %v5349
        %v5379 = vpack.c.b16 %v5352, %v5351
        %v5380 = vpack.c.b16 %v5354, %v5353
        %v5381 = vpack.c.b16 %v5356, %v5355
        %v5382 = vpack.c.b16 %v5358, %v5357
        %v5383 = vpack.c.b16 %v5360, %v5359
        %v5384 = vpack.c.b16 %v5362, %v5361
        %v5385 = vpack.c.b16 %v5364, %v5363
        %v5386 = vpack.c.b16 %v5366, %v5365
        %v5387 = vpack.c.b16 %v5368, %v5367
        %v5388 = vpack.c.b16 %v5370, %v5369
        %v5389 = vpack.c.b16 %v5372, %v5371
        %v5390 = vpack.c.b16 %v5374, %v5373
        %v5392 = vsel %vm1563, %v5375, 0
        %v5395 = vsel %vm1563, %v5376, 0
        %v5398 = vsel %vm1563, %v5377, 0
        %v5401 = vsel %vm1563, %v5378, 0
        %v5404 = vsel %vm1563, %v5379, 0
        %v5407 = vsel %vm1563, %v5380, 0
        %v5410 = vsel %vm1563, %v5381, 0
        %v5413 = vsel %vm1563, %v5382, 0
        %v5416 = vsel %vm1563, %v5383, 0
        %v5419 = vsel %vm1563, %v5384, 0
        %v5422 = vsel %vm1563, %v5385, 0
        %v5425 = vsel %vm1563, %v5386, 0
        %v5428 = vsel %vm1563, %v5387, 0
        %v5431 = vsel %vm1563, %v5388, 0
        %v5434 = vsel %vm1563, %v5389, 0
        %v5437 = vsel %vm1563, %v5390, 0
        %v5440 = vsel %vm1612, %v5342, 0
        %5442 = vmatprep.subr.bf16.mxu0 0
        %5443 = vmatpush1.bf16.msra.mxu0 %v5440
        %5444 = vmatprep.subr.bf16.mxu0 0
        %5445 = vmatpush1.bf16.msra.mxu0 0
        %5446 = vmatprep.subr.bf16.mxu0 0
        %5447 = vmatpush1.bf16.msra.mxu0 0
        %5448 = vmatprep.subr.bf16.mxu0 0
        %5449 = vmatpush1.bf16.msra.mxu0 0
        %5450 = vmatprep.subr.bf16.mxu0 0
        %5451 = vmatpush1.bf16.msra.mxu0 0
        %5452 = vmatprep.subr.bf16.mxu0 0
        %5453 = vmatpush1.bf16.msra.mxu0 0
        %5454 = vmatprep.subr.bf16.mxu0 0
        %5455 = vmatpush1.bf16.msra.mxu0 0
        %5456 = vmatprep.subr.bf16.mxu0 0
        %5457 = vmatpush1.bf16.msra.mxu0 0
        %5458 = vmatprep.subr.bf16.mxu0 0
        %5459 = vmatpush1.bf16.msra.mxu0 0
        %5460 = vmatprep.subr.bf16.mxu0 0
        %5461 = vmatpush1.bf16.msra.mxu0 0
        %5462 = vmatprep.subr.bf16.mxu0 0
        %5463 = vmatpush1.bf16.msra.mxu0 0
        %5464 = vmatprep.subr.bf16.mxu0 0
        %5465 = vmatpush1.bf16.msra.mxu0 0
        %5466 = vmatprep.subr.bf16.mxu0 0
        %5467 = vmatpush1.bf16.msra.mxu0 0
        %5468 = vmatprep.subr.bf16.mxu0 0
        %5469 = vmatpush1.bf16.msra.mxu0 0
        %5470 = vmatprep.subr.bf16.mxu0 0
        %5471 = vmatpush1.bf16.msra.mxu0 0
        %5472 = vmatprep.subr.bf16.mxu0 0
        %5473 = vmatpush1.bf16.msra.mxu0 0
        %5474 = vmatprep.mubr.bf16.mxu0 0
        %5475 = vmatmul.mubr.bf16.gmra.mrb[0].mxu0 %v5392
        %v5476 = vpop.f32.mrb[0].mxu0
        %v5477 = vadd.f32 0.0, %v5476
        %v5478 = vpop.f32.mrb[0].mxu0
        %v5479 = vpop.f32.mrb[0].mxu0
        %v5480 = vadd.f32 0.0, %v5479
        %v5481 = vpop.f32.mrb[0].mxu0
        %5482 = vmatprep.mubr.bf16.mxu0 0
        %5483 = vmatmul.mubr.bf16.gmra.mrb[0].mxu0 %v5395
        %v5484 = vpop.f32.mrb[0].mxu0
        %v5485 = vadd.f32 0.0, %v5484
        %v5486 = vpop.f32.mrb[0].mxu0
        %v5487 = vpop.f32.mrb[0].mxu0
        %v5488 = vadd.f32 0.0, %v5487
        %v5489 = vpop.f32.mrb[0].mxu0
        %5490 = vmatprep.mubr.bf16.mxu0 0
        %5491 = vmatmul.mubr.bf16.gmra.mrb[0].mxu0 %v5398
        %v5492 = vpop.f32.mrb[0].mxu0
        %v5493 = vadd.f32 0.0, %v5492
        %v5494 = vpop.f32.mrb[0].mxu0
        %v5495 = vpop.f32.mrb[0].mxu0
        %v5496 = vadd.f32 0.0, %v5495
        %v5497 = vpop.f32.mrb[0].mxu0
        %5498 = vmatprep.mubr.bf16.mxu0 0
        %5499 = vmatmul.mubr.bf16.gmra.mrb[0].mxu0 %v5401
        %v5500 = vpop.f32.mrb[0].mxu0
        %v5501 = vadd.f32 0.0, %v5500
        %v5502 = vpop.f32.mrb[0].mxu0
        %v5503 = vpop.f32.mrb[0].mxu0
        %v5504 = vadd.f32 0.0, %v5503
        %v5505 = vpop.f32.mrb[0].mxu0
        %5506 = vmatprep.mubr.bf16.mxu0 0
        %5507 = vmatmul.mubr.bf16.gmra.mrb[0].mxu0 %v5404
        %v5508 = vpop.f32.mrb[0].mxu0
        %v5509 = vadd.f32 0.0, %v5508
        %v5510 = vpop.f32.mrb[0].mxu0
        %v5511 = vpop.f32.mrb[0].mxu0
        %v5512 = vadd.f32 0.0, %v5511
        %v5513 = vpop.f32.mrb[0].mxu0
        %5514 = vmatprep.mubr.bf16.mxu0 0
        %5515 = vmatmul.mubr.bf16.gmra.mrb[0].mxu0 %v5407
        %v5516 = vpop.f32.mrb[0].mxu0
        %v5517 = vadd.f32 0.0, %v5516
        %v5518 = vpop.f32.mrb[0].mxu0
        %v5519 = vpop.f32.mrb[0].mxu0
        %v5520 = vadd.f32 0.0, %v5519
        %v5521 = vpop.f32.mrb[0].mxu0
        %5522 = vmatprep.mubr.bf16.mxu0 0
        %5523 = vmatmul.mubr.bf16.gmra.mrb[0].mxu0 %v5410
        %v5524 = vpop.f32.mrb[0].mxu0
        %v5525 = vadd.f32 0.0, %v5524
        %v5526 = vpop.f32.mrb[0].mxu0
        %v5527 = vpop.f32.mrb[0].mxu0
        %v5528 = vadd.f32 0.0, %v5527
        %v5529 = vpop.f32.mrb[0].mxu0
        %5530 = vmatprep.mubr.bf16.mxu0 0
        %5531 = vmatmul.mubr.bf16.gmra.mrb[0].mxu0 %v5413
        %v5532 = vpop.f32.mrb[0].mxu0
        %v5533 = vadd.f32 0.0, %v5532
        %v5534 = vpop.f32.mrb[0].mxu0
        %v5535 = vpop.f32.mrb[0].mxu0
        %v5536 = vadd.f32 0.0, %v5535
        %v5537 = vpop.f32.mrb[0].mxu0
        %5538 = vmatprep.mubr.bf16.mxu0 0
        %5539 = vmatmul.mubr.bf16.gmra.mrb[0].mxu0 %v5416
        %v5540 = vpop.f32.mrb[0].mxu0
        %v5541 = vadd.f32 0.0, %v5540
        %v5542 = vpop.f32.mrb[0].mxu0
        %v5543 = vpop.f32.mrb[0].mxu0
        %v5544 = vadd.f32 0.0, %v5543
        %v5545 = vpop.f32.mrb[0].mxu0
        %5546 = vmatprep.mubr.bf16.mxu0 0
        %5547 = vmatmul.mubr.bf16.gmra.mrb[0].mxu0 %v5419
        %v5548 = vpop.f32.mrb[0].mxu0
        %v5549 = vadd.f32 0.0, %v5548
        %v5550 = vpop.f32.mrb[0].mxu0
        %v5551 = vpop.f32.mrb[0].mxu0
        %v5552 = vadd.f32 0.0, %v5551
        %v5553 = vpop.f32.mrb[0].mxu0
        %5554 = vmatprep.mubr.bf16.mxu0 0
        %5555 = vmatmul.mubr.bf16.gmra.mrb[0].mxu0 %v5422
        %v5556 = vpop.f32.mrb[0].mxu0
        %v5557 = vadd.f32 0.0, %v5556
        %v5558 = vpop.f32.mrb[0].mxu0
        %v5559 = vpop.f32.mrb[0].mxu0
        %v5560 = vadd.f32 0.0, %v5559
        %v5561 = vpop.f32.mrb[0].mxu0
        %5562 = vmatprep.mubr.bf16.mxu0 0
        %5563 = vmatmul.mubr.bf16.gmra.mrb[0].mxu0 %v5425
        %v5564 = vpop.f32.mrb[0].mxu0
        %v5565 = vadd.f32 0.0, %v5564
        %v5566 = vpop.f32.mrb[0].mxu0
        %v5567 = vpop.f32.mrb[0].mxu0
        %v5568 = vadd.f32 0.0, %v5567
        %v5569 = vpop.f32.mrb[0].mxu0
        %5570 = vmatprep.mubr.bf16.mxu0 0
        %5571 = vmatmul.mubr.bf16.gmra.mrb[0].mxu0 %v5428
        %v5572 = vpop.f32.mrb[0].mxu0
        %v5573 = vadd.f32 0.0, %v5572
        %v5574 = vpop.f32.mrb[0].mxu0
        %v5575 = vpop.f32.mrb[0].mxu0
        %v5576 = vadd.f32 0.0, %v5575
        %v5577 = vpop.f32.mrb[0].mxu0
        %5578 = vmatprep.mubr.bf16.mxu0 0
        %5579 = vmatmul.mubr.bf16.gmra.mrb[0].mxu0 %v5431
        %v5580 = vpop.f32.mrb[0].mxu0
        %v5581 = vadd.f32 0.0, %v5580
        %v5582 = vpop.f32.mrb[0].mxu0
        %v5583 = vpop.f32.mrb[0].mxu0
        %v5584 = vadd.f32 0.0, %v5583
        %v5585 = vpop.f32.mrb[0].mxu0
        %5586 = vmatprep.mubr.bf16.mxu0 0
        %5587 = vmatmul.mubr.bf16.gmra.mrb[0].mxu0 %v5434
        %v5588 = vpop.f32.mrb[0].mxu0
        %v5589 = vadd.f32 0.0, %v5588
        %v5590 = vpop.f32.mrb[0].mxu0
        %v5591 = vpop.f32.mrb[0].mxu0
        %v5592 = vadd.f32 0.0, %v5591
        %v5593 = vpop.f32.mrb[0].mxu0
        %5594 = vmatprep.mubr.bf16.mxu0 0
        %5595 = vmatmul.mubr.bf16.gmra.mrb[0].mxu0 %v5437
        %v5596 = vpop.f32.mrb[0].mxu0
        %v5597 = vadd.f32 0.0, %v5596
        %v5598 = vpop.f32.mrb[0].mxu0
        %v5599 = vpop.f32.mrb[0].mxu0
        %v5600 = vadd.f32 0.0, %v5599
        %v5601 = vpop.f32.mrb[0].mxu0
        %5602 = vdwg.mxu0
        %v5603 = vadd.f32 %v5133, %v5477
        %v5604 = vadd.f32 %v5134, %v5480
        %v5605 = vadd.f32 %v5135, %v5485
        %v5606 = vadd.f32 %v5136, %v5488
        %v5607 = vadd.f32 %v5137, %v5493
        %v5608 = vadd.f32 %v5138, %v5496
        %v5609 = vadd.f32 %v5139, %v5501
        %v5610 = vadd.f32 %v5140, %v5504
        %v5611 = vadd.f32 %v5141, %v5509
        %v5612 = vadd.f32 %v5142, %v5512
        %v5613 = vadd.f32 %v5143, %v5517
        %v5614 = vadd.f32 %v5144, %v5520
        %v5615 = vadd.f32 %v5145, %v5525
        %v5616 = vadd.f32 %v5146, %v5528
        %v5617 = vadd.f32 %v5147, %v5533
        %v5618 = vadd.f32 %v5148, %v5536
        %v5619 = vadd.f32 %v5149, %v5541
        %v5620 = vadd.f32 %v5150, %v5544
        %v5621 = vadd.f32 %v5151, %v5549
        %v5622 = vadd.f32 %v5152, %v5552
        %v5623 = vadd.f32 %v5153, %v5557
        %v5624 = vadd.f32 %v5154, %v5560
        %v5625 = vadd.f32 %v5155, %v5565
        %v5626 = vadd.f32 %v5156, %v5568
        %v5627 = vadd.f32 %v5157, %v5573
        %v5628 = vadd.f32 %v5158, %v5576
        %v5629 = vadd.f32 %v5159, %v5581
        %v5630 = vadd.f32 %v5160, %v5584
        %v5631 = vadd.f32 %v5161, %v5589
        %v5632 = vadd.f32 %v5162, %v5592
        %v5633 = vadd.f32 %v5163, %v5597
        %v5634 = vadd.f32 %v5164, %v5600
        %v5635 = vld [vmem:[#allocation9] sm:$0x1]
        %v5637 = vlaneseq
        %v5638 = vshrl.u32 %v5637, 7
        %v5639 = vsub.s32 0, %v5638
        %v5640 = vrot.slane %v5635, %v5639
        %v5642 = vadd.f32 %v5603, %v5640
        %v5643 = vadd.f32 %v5604, %v5640
        %v5644 = vadd.f32 %v5605, %v5640
        %v5645 = vadd.f32 %v5606, %v5640
        %v5646 = vadd.f32 %v5607, %v5640
        %v5647 = vadd.f32 %v5608, %v5640
        %v5648 = vadd.f32 %v5609, %v5640
        %v5649 = vadd.f32 %v5610, %v5640
        %v5650 = vadd.f32 %v5611, %v5640
        %v5651 = vadd.f32 %v5612, %v5640
        %v5652 = vadd.f32 %v5613, %v5640
        %v5653 = vadd.f32 %v5614, %v5640
        %v5654 = vadd.f32 %v5615, %v5640
        %v5655 = vadd.f32 %v5616, %v5640
        %v5656 = vadd.f32 %v5617, %v5640
        %v5657 = vadd.f32 %v5618, %v5640
        %v5658 = vadd.f32 %v5619, %v5640
        %v5659 = vadd.f32 %v5620, %v5640
        %v5660 = vadd.f32 %v5621, %v5640
        %v5661 = vadd.f32 %v5622, %v5640
        %v5662 = vadd.f32 %v5623, %v5640
        %v5663 = vadd.f32 %v5624, %v5640
        %v5664 = vadd.f32 %v5625, %v5640
        %v5665 = vadd.f32 %v5626, %v5640
        %v5666 = vadd.f32 %v5627, %v5640
        %v5667 = vadd.f32 %v5628, %v5640
        %v5668 = vadd.f32 %v5629, %v5640
        %v5669 = vadd.f32 %v5630, %v5640
        %v5670 = vadd.f32 %v5631, %v5640
        %v5671 = vadd.f32 %v5632, %v5640
        %v5672 = vadd.f32 %v5633, %v5640
        %v5673 = vadd.f32 %v5634, %v5640
        %v5674 = vmax.f32 %v5642, 0.0
        %v5675 = vmax.f32 %v5643, 0.0
        %v5676 = vmax.f32 %v5644, 0.0
        %v5677 = vmax.f32 %v5645, 0.0
        %v5678 = vmax.f32 %v5646, 0.0
        %v5679 = vmax.f32 %v5647, 0.0
        %v5680 = vmax.f32 %v5648, 0.0
        %v5681 = vmax.f32 %v5649, 0.0
        %v5682 = vmax.f32 %v5650, 0.0
        %v5683 = vmax.f32 %v5651, 0.0
        %v5684 = vmax.f32 %v5652, 0.0
        %v5685 = vmax.f32 %v5653, 0.0
        %v5686 = vmax.f32 %v5654, 0.0
        %v5687 = vmax.f32 %v5655, 0.0
        %v5688 = vmax.f32 %v5656, 0.0
        %v5689 = vmax.f32 %v5657, 0.0
        %v5690 = vmax.f32 %v5658, 0.0
        %v5691 = vmax.f32 %v5659, 0.0
        %v5692 = vmax.f32 %v5660, 0.0
        %v5693 = vmax.f32 %v5661, 0.0
        %v5694 = vmax.f32 %v5662, 0.0
        %v5695 = vmax.f32 %v5663, 0.0
        %v5696 = vmax.f32 %v5664, 0.0
        %v5697 = vmax.f32 %v5665, 0.0
        %v5698 = vmax.f32 %v5666, 0.0
        %v5699 = vmax.f32 %v5667, 0.0
        %v5700 = vmax.f32 %v5668, 0.0
        %v5701 = vmax.f32 %v5669, 0.0
        %v5702 = vmax.f32 %v5670, 0.0
        %v5703 = vmax.f32 %v5671, 0.0
        %v5704 = vmax.f32 %v5672, 0.0
        %v5705 = vmax.f32 %v5673, 0.0
        %v5706 = vpack.c.bf16 %v5675, %v5674
        %v5707 = vpack.c.bf16 %v5677, %v5676
        %v5708 = vpack.c.bf16 %v5679, %v5678
        %v5709 = vpack.c.bf16 %v5681, %v5680
        %v5710 = vpack.c.bf16 %v5683, %v5682
        %v5711 = vpack.c.bf16 %v5685, %v5684
        %v5712 = vpack.c.bf16 %v5687, %v5686
        %v5713 = vpack.c.bf16 %v5689, %v5688
        %v5714 = vpack.c.bf16 %v5691, %v5690
        %v5715 = vpack.c.bf16 %v5693, %v5692
        %v5716 = vpack.c.bf16 %v5695, %v5694
        %v5717 = vpack.c.bf16 %v5697, %v5696
        %v5718 = vpack.c.bf16 %v5699, %v5698
        %v5719 = vpack.c.bf16 %v5701, %v5700
        %v5720 = vpack.c.bf16 %v5703, %v5702
        %v5721 = vpack.c.bf16 %v5705, %v5704
        %v5738 = vunpack.c.l.b16 %v5706
        %v5739 = vunpack.c.h.b16 %v5706
        %v5740 = vunpack.c.l.b16 %v5707
        %v5741 = vunpack.c.h.b16 %v5707
        %v5742 = vunpack.c.l.b16 %v5708
        %v5743 = vunpack.c.h.b16 %v5708
        %v5744 = vunpack.c.l.b16 %v5709
        %v5745 = vunpack.c.h.b16 %v5709
        %v5746 = vunpack.c.l.b16 %v5710
        %v5747 = vunpack.c.h.b16 %v5710
        %v5748 = vunpack.c.l.b16 %v5711
        %v5749 = vunpack.c.h.b16 %v5711
        %v5750 = vunpack.c.l.b16 %v5712
        %v5751 = vunpack.c.h.b16 %v5712
        %v5752 = vunpack.c.l.b16 %v5713
        %v5753 = vunpack.c.h.b16 %v5713
        %v5754 = vunpack.c.l.b16 %v5714
        %v5755 = vunpack.c.h.b16 %v5714
        %v5756 = vunpack.c.l.b16 %v5715
        %v5757 = vunpack.c.h.b16 %v5715
        %v5758 = vunpack.c.l.b16 %v5716
        %v5759 = vunpack.c.h.b16 %v5716
        %v5760 = vunpack.c.l.b16 %v5717
        %v5761 = vunpack.c.h.b16 %v5717
        %v5762 = vunpack.c.l.b16 %v5718
        %v5763 = vunpack.c.h.b16 %v5718
        %v5764 = vunpack.c.l.b16 %v5719
        %v5765 = vunpack.c.h.b16 %v5719
        %v5766 = vunpack.c.l.b16 %v5720
        %v5767 = vunpack.c.h.b16 %v5720
        %v5768 = vunpack.c.l.b16 %v5721
        %v5769 = vunpack.c.h.b16 %v5721
        %v5770 = vpack.c.b16 %v5738, %v5738
        %v5771 = vpack.c.b16 %v5739, %v5739
        %v5772 = vpack.c.b16 %v5740, %v5740
        %v5773 = vpack.c.b16 %v5741, %v5741
        %v5774 = vpack.c.b16 %v5742, %v5742
        %v5775 = vpack.c.b16 %v5743, %v5743
        %v5776 = vpack.c.b16 %v5744, %v5744
        %v5777 = vpack.c.b16 %v5745, %v5745
        %v5778 = vpack.c.b16 %v5746, %v5746
        %v5779 = vpack.c.b16 %v5747, %v5747
        %v5780 = vpack.c.b16 %v5748, %v5748
        %v5781 = vpack.c.b16 %v5749, %v5749
        %v5782 = vpack.c.b16 %v5750, %v5750
        %v5783 = vpack.c.b16 %v5751, %v5751
        %v5784 = vpack.c.b16 %v5752, %v5752
        %v5785 = vpack.c.b16 %v5753, %v5753
        %v5786 = vpack.c.b16 %v5754, %v5754
        %v5787 = vpack.c.b16 %v5755, %v5755
        %v5788 = vpack.c.b16 %v5756, %v5756
        %v5789 = vpack.c.b16 %v5757, %v5757
        %v5790 = vpack.c.b16 %v5758, %v5758
        %v5791 = vpack.c.b16 %v5759, %v5759
        %v5792 = vpack.c.b16 %v5760, %v5760
        %v5793 = vpack.c.b16 %v5761, %v5761
        %v5794 = vpack.c.b16 %v5762, %v5762
        %v5795 = vpack.c.b16 %v5763, %v5763
        %v5796 = vpack.c.b16 %v5764, %v5764
        %v5797 = vpack.c.b16 %v5765, %v5765
        %v5798 = vpack.c.b16 %v5766, %v5766
        %v5799 = vpack.c.b16 %v5767, %v5767
        %v5800 = vpack.c.b16 %v5768, %v5768
        %v5801 = vpack.c.b16 %v5769, %v5769
        %v5803 = vshrl.u32 %v5770, 16
        %v5805 = vrot.slane %v5803, 7
        %v5806 = vshll.u32 %v5770, 16
        %v5808 = vor.u32 %v5805, %v5806
        %v5809 = vrot.slane %v5805, 4
        %v5811 = vshrl.u32 %v5771, 16
        %v5813 = vrot.slane %v5811, 7
        %v5814 = vshll.u32 %v5771, 16
        %v5816 = vor.u32 %v5813, %v5814
        %v5817 = vsel %vm642, %v5809, %v5816
        %v5818 = vrot.slane %v5813, 4
        %v5820 = vshrl.u32 %v5772, 16
        %v5822 = vrot.slane %v5820, 7
        %v5823 = vshll.u32 %v5772, 16
        %v5825 = vor.u32 %v5822, %v5823
        %v5826 = vrot.slane %v5822, 4
        %v5828 = vshrl.u32 %v5773, 16
        %v5830 = vrot.slane %v5828, 7
        %v5831 = vshll.u32 %v5773, 16
        %v5833 = vor.u32 %v5830, %v5831
        %v5834 = vsel %vm642, %v5826, %v5833
        %v5835 = vrot.slane %v5830, 4
        %v5837 = vshrl.u32 %v5774, 16
        %v5839 = vrot.slane %v5837, 7
        %v5840 = vshll.u32 %v5774, 16
        %v5842 = vor.u32 %v5839, %v5840
        %v5843 = vrot.slane %v5839, 4
        %v5845 = vshrl.u32 %v5775, 16
        %v5847 = vrot.slane %v5845, 7
        %v5848 = vshll.u32 %v5775, 16
        %v5850 = vor.u32 %v5847, %v5848
        %v5851 = vsel %vm642, %v5843, %v5850
        %v5852 = vrot.slane %v5847, 4
        %v5854 = vshrl.u32 %v5776, 16
        %v5856 = vrot.slane %v5854, 7
        %v5857 = vshll.u32 %v5776, 16
        %v5859 = vor.u32 %v5856, %v5857
        %v5860 = vrot.slane %v5856, 4
        %v5862 = vshrl.u32 %v5777, 16
        %v5864 = vrot.slane %v5862, 7
        %v5865 = vshll.u32 %v5777, 16
        %v5867 = vor.u32 %v5864, %v5865
        %v5868 = vsel %vm642, %v5860, %v5867
        %v5869 = vrot.slane %v5864, 4
        %v5871 = vshrl.u32 %v5778, 16
        %v5873 = vrot.slane %v5871, 7
        %v5874 = vshll.u32 %v5778, 16
        %v5876 = vor.u32 %v5873, %v5874
        %v5877 = vrot.slane %v5873, 4
        %v5879 = vshrl.u32 %v5779, 16
        %v5881 = vrot.slane %v5879, 7
        %v5882 = vshll.u32 %v5779, 16
        %v5884 = vor.u32 %v5881, %v5882
        %v5885 = vsel %vm642, %v5877, %v5884
        %v5886 = vrot.slane %v5881, 4
        %v5888 = vshrl.u32 %v5780, 16
        %v5890 = vrot.slane %v5888, 7
        %v5891 = vshll.u32 %v5780, 16
        %v5893 = vor.u32 %v5890, %v5891
        %v5894 = vrot.slane %v5890, 4
        %v5896 = vshrl.u32 %v5781, 16
        %v5898 = vrot.slane %v5896, 7
        %v5899 = vshll.u32 %v5781, 16
        %v5901 = vor.u32 %v5898, %v5899
        %v5902 = vsel %vm642, %v5894, %v5901
        %v5903 = vrot.slane %v5898, 4
        %v5905 = vshrl.u32 %v5782, 16
        %v5907 = vrot.slane %v5905, 7
        %v5908 = vshll.u32 %v5782, 16
        %v5910 = vor.u32 %v5907, %v5908
        %v5911 = vrot.slane %v5907, 4
        %v5913 = vshrl.u32 %v5783, 16
        %v5915 = vrot.slane %v5913, 7
        %v5916 = vshll.u32 %v5783, 16
        %v5918 = vor.u32 %v5915, %v5916
        %v5919 = vsel %vm642, %v5911, %v5918
        %v5920 = vrot.slane %v5915, 4
        %v5922 = vshrl.u32 %v5784, 16
        %v5924 = vrot.slane %v5922, 7
        %v5925 = vshll.u32 %v5784, 16
        %v5927 = vor.u32 %v5924, %v5925
        %v5928 = vrot.slane %v5924, 4
        %v5930 = vshrl.u32 %v5785, 16
        %v5932 = vrot.slane %v5930, 7
        %v5933 = vshll.u32 %v5785, 16
        %v5935 = vor.u32 %v5932, %v5933
        %v5936 = vsel %vm642, %v5928, %v5935
        %v5937 = vrot.slane %v5932, 4
        %v5939 = vshrl.u32 %v5786, 16
        %v5941 = vrot.slane %v5939, 7
        %v5942 = vshll.u32 %v5786, 16
        %v5944 = vor.u32 %v5941, %v5942
        %v5945 = vrot.slane %v5941, 4
        %v5947 = vshrl.u32 %v5787, 16
        %v5949 = vrot.slane %v5947, 7
        %v5950 = vshll.u32 %v5787, 16
        %v5952 = vor.u32 %v5949, %v5950
        %v5953 = vsel %vm642, %v5945, %v5952
        %v5954 = vrot.slane %v5949, 4
        %v5956 = vshrl.u32 %v5788, 16
        %v5958 = vrot.slane %v5956, 7
        %v5959 = vshll.u32 %v5788, 16
        %v5961 = vor.u32 %v5958, %v5959
        %v5962 = vrot.slane %v5958, 4
        %v5964 = vshrl.u32 %v5789, 16
        %v5966 = vrot.slane %v5964, 7
        %v5967 = vshll.u32 %v5789, 16
        %v5969 = vor.u32 %v5966, %v5967
        %v5970 = vsel %vm642, %v5962, %v5969
        %v5971 = vrot.slane %v5966, 4
        %v5973 = vshrl.u32 %v5790, 16
        %v5975 = vrot.slane %v5973, 7
        %v5976 = vshll.u32 %v5790, 16
        %v5978 = vor.u32 %v5975, %v5976
        %v5979 = vrot.slane %v5975, 4
        %v5981 = vshrl.u32 %v5791, 16
        %v5983 = vrot.slane %v5981, 7
        %v5984 = vshll.u32 %v5791, 16
        %v5986 = vor.u32 %v5983, %v5984
        %v5987 = vsel %vm642, %v5979, %v5986
        %v5988 = vrot.slane %v5983, 4
        %v5990 = vshrl.u32 %v5792, 16
        %v5992 = vrot.slane %v5990, 7
        %v5993 = vshll.u32 %v5792, 16
        %v5995 = vor.u32 %v5992, %v5993
        %v5996 = vrot.slane %v5992, 4
        %v5998 = vshrl.u32 %v5793, 16
        %v6000 = vrot.slane %v5998, 7
        %v6001 = vshll.u32 %v5793, 16
        %v6003 = vor.u32 %v6000, %v6001
        %v6004 = vsel %vm642, %v5996, %v6003
        %v6005 = vrot.slane %v6000, 4
        %v6007 = vshrl.u32 %v5794, 16
        %v6009 = vrot.slane %v6007, 7
        %v6010 = vshll.u32 %v5794, 16
        %v6012 = vor.u32 %v6009, %v6010
        %v6013 = vrot.slane %v6009, 4
        %v6015 = vshrl.u32 %v5795, 16
        %v6017 = vrot.slane %v6015, 7
        %v6018 = vshll.u32 %v5795, 16
        %v6020 = vor.u32 %v6017, %v6018
        %v6021 = vsel %vm642, %v6013, %v6020
        %v6022 = vrot.slane %v6017, 4
        %v6024 = vshrl.u32 %v5796, 16
        %v6026 = vrot.slane %v6024, 7
        %v6027 = vshll.u32 %v5796, 16
        %v6029 = vor.u32 %v6026, %v6027
        %v6030 = vrot.slane %v6026, 4
        %v6032 = vshrl.u32 %v5797, 16
        %v6034 = vrot.slane %v6032, 7
        %v6035 = vshll.u32 %v5797, 16
        %v6037 = vor.u32 %v6034, %v6035
        %v6038 = vsel %vm642, %v6030, %v6037
        %v6039 = vrot.slane %v6034, 4
        %v6041 = vshrl.u32 %v5798, 16
        %v6043 = vrot.slane %v6041, 7
        %v6044 = vshll.u32 %v5798, 16
        %v6046 = vor.u32 %v6043, %v6044
        %v6047 = vrot.slane %v6043, 4
        %v6049 = vshrl.u32 %v5799, 16
        %v6051 = vrot.slane %v6049, 7
        %v6052 = vshll.u32 %v5799, 16
        %v6054 = vor.u32 %v6051, %v6052
        %v6055 = vsel %vm642, %v6047, %v6054
        %v6056 = vrot.slane %v6051, 4
        %v6058 = vshrl.u32 %v5800, 16
        %v6060 = vrot.slane %v6058, 7
        %v6061 = vshll.u32 %v5800, 16
        %v6063 = vor.u32 %v6060, %v6061
        %v6064 = vrot.slane %v6060, 4
        %v6066 = vshrl.u32 %v5801, 16
        %v6068 = vrot.slane %v6066, 7
        %v6069 = vshll.u32 %v5801, 16
        %v6071 = vor.u32 %v6068, %v6069
        %v6072 = vsel %vm642, %v6064, %v6071
        %v6073 = vrot.slane %v6068, 4
        %v6122 = vld [vmem:[%s416] sm:$0xf]
        %v6123 = vsel %vm964, %v5808, %v6122
        %6124 = vst [vmem:[%s416] sm:$0xf] %v6123
        %6125 = vst.msk [vmem:[%s416 + $0x4] sm:$0xf] %vm298, %v5817
        %v6126 = vld [vmem:[%s416 + $0x8] sm:$0x1]
        %v6127 = vsel %vm310, %v5818, %v6126
        %6128 = vst [vmem:[%s416 + $0x8] sm:$0x1] %v6127
        %v6129 = vld [vmem:[%s416 + $0xc] sm:$0xf]
        %v6130 = vsel %vm964, %v5825, %v6129
        %6131 = vst [vmem:[%s416 + $0xc] sm:$0xf] %v6130
        %6132 = vst.msk [vmem:[%s416 + $0x10] sm:$0xf] %vm298, %v5834
        %v6133 = vld [vmem:[%s416 + $0x14] sm:$0x1]
        %v6134 = vsel %vm310, %v5835, %v6133
        %6135 = vst [vmem:[%s416 + $0x14] sm:$0x1] %v6134
        %v6136 = vld [vmem:[%s416 + $0x18] sm:$0xf]
        %v6137 = vsel %vm964, %v5842, %v6136
        %6138 = vst [vmem:[%s416 + $0x18] sm:$0xf] %v6137
        %6139 = vst.msk [vmem:[%s416 + $0x1c] sm:$0xf] %vm298, %v5851
        %v6140 = vld [vmem:[%s416 + $0x20] sm:$0x1]
        %v6141 = vsel %vm310, %v5852, %v6140
        %6142 = vst [vmem:[%s416 + $0x20] sm:$0x1] %v6141
        %v6143 = vld [vmem:[%s416 + $0x24] sm:$0xf]
        %v6144 = vsel %vm964, %v5859, %v6143
        %6145 = vst [vmem:[%s416 + $0x24] sm:$0xf] %v6144
        %6146 = vst.msk [vmem:[%s416 + $0x28] sm:$0xf] %vm298, %v5868
        %v6147 = vld [vmem:[%s416 + $0x2c] sm:$0x1]
        %v6148 = vsel %vm310, %v5869, %v6147
        %6149 = vst [vmem:[%s416 + $0x2c] sm:$0x1] %v6148
        %v6150 = vld [vmem:[%s416 + $0x30] sm:$0xf]
        %v6151 = vsel %vm964, %v5876, %v6150
        %6152 = vst [vmem:[%s416 + $0x30] sm:$0xf] %v6151
        %6153 = vst.msk [vmem:[%s416 + $0x34] sm:$0xf] %vm298, %v5885
        %v6154 = vld [vmem:[%s416 + $0x38] sm:$0x1]
        %v6155 = vsel %vm310, %v5886, %v6154
        %6156 = vst [vmem:[%s416 + $0x38] sm:$0x1] %v6155
        %v6157 = vld [vmem:[%s416 + $0x3c] sm:$0xf]
        %v6158 = vsel %vm964, %v5893, %v6157
        %6159 = vst [vmem:[%s416 + $0x3c] sm:$0xf] %v6158
        %6160 = vst.msk [vmem:[%s416 + $0x40] sm:$0xf] %vm298, %v5902
        %v6161 = vld [vmem:[%s416 + $0x44] sm:$0x1]
        %v6162 = vsel %vm310, %v5903, %v6161
        %6163 = vst [vmem:[%s416 + $0x44] sm:$0x1] %v6162
        %v6164 = vld [vmem:[%s416 + $0x48] sm:$0xf]
        %v6165 = vsel %vm964, %v5910, %v6164
        %6166 = vst [vmem:[%s416 + $0x48] sm:$0xf] %v6165
        %6167 = vst.msk [vmem:[%s416 + $0x4c] sm:$0xf] %vm298, %v5919
        %v6168 = vld [vmem:[%s416 + $0x50] sm:$0x1]
        %v6169 = vsel %vm310, %v5920, %v6168
        %6170 = vst [vmem:[%s416 + $0x50] sm:$0x1] %v6169
        %v6171 = vld [vmem:[%s416 + $0x54] sm:$0xf]
        %v6172 = vsel %vm964, %v5927, %v6171
        %6173 = vst [vmem:[%s416 + $0x54] sm:$0xf] %v6172
        %6174 = vst.msk [vmem:[%s416 + $0x58] sm:$0xf] %vm298, %v5936
        %v6175 = vld [vmem:[%s416 + $0x5c] sm:$0x1]
        %v6176 = vsel %vm310, %v5937, %v6175
        %6177 = vst [vmem:[%s416 + $0x5c] sm:$0x1] %v6176
        %v6178 = vld [vmem:[%s416 + $0x60] sm:$0xf]
        %v6179 = vsel %vm964, %v5944, %v6178
        %6180 = vst [vmem:[%s416 + $0x60] sm:$0xf] %v6179
        %6181 = vst.msk [vmem:[%s416 + $0x64] sm:$0xf] %vm298, %v5953
        %v6182 = vld [vmem:[%s416 + $0x68] sm:$0x1]
        %v6183 = vsel %vm310, %v5954, %v6182
        %6184 = vst [vmem:[%s416 + $0x68] sm:$0x1] %v6183
        %v6185 = vld [vmem:[%s416 + $0x6c] sm:$0xf]
        %v6186 = vsel %vm964, %v5961, %v6185
        %6187 = vst [vmem:[%s416 + $0x6c] sm:$0xf] %v6186
        %6188 = vst.msk [vmem:[%s416 + $0x70] sm:$0xf] %vm298, %v5970
        %v6189 = vld [vmem:[%s416 + $0x74] sm:$0x1]
        %v6190 = vsel %vm310, %v5971, %v6189
        %6191 = vst [vmem:[%s416 + $0x74] sm:$0x1] %v6190
        %v6192 = vld [vmem:[%s416 + $0x78] sm:$0xf]
        %v6193 = vsel %vm964, %v5978, %v6192
        %6194 = vst [vmem:[%s416 + $0x78] sm:$0xf] %v6193
        %6195 = vst.msk [vmem:[%s416 + $0x7c] sm:$0xf] %vm298, %v5987
        %v6196 = vld [vmem:[%s416 + $0x80] sm:$0x1]
        %v6197 = vsel %vm310, %v5988, %v6196
        %6198 = vst [vmem:[%s416 + $0x80] sm:$0x1] %v6197
        %v6199 = vld [vmem:[%s416 + $0x84] sm:$0xf]
        %v6200 = vsel %vm964, %v5995, %v6199
        %6201 = vst [vmem:[%s416 + $0x84] sm:$0xf] %v6200
        %6202 = vst.msk [vmem:[%s416 + $0x88] sm:$0xf] %vm298, %v6004
        %v6203 = vld [vmem:[%s416 + $0x8c] sm:$0x1]
        %v6204 = vsel %vm310, %v6005, %v6203
        %6205 = vst [vmem:[%s416 + $0x8c] sm:$0x1] %v6204
        %v6206 = vld [vmem:[%s416 + $0x90] sm:$0xf]
        %v6207 = vsel %vm964, %v6012, %v6206
        %6208 = vst [vmem:[%s416 + $0x90] sm:$0xf] %v6207
        %6209 = vst.msk [vmem:[%s416 + $0x94] sm:$0xf] %vm298, %v6021
        %v6210 = vld [vmem:[%s416 + $0x98] sm:$0x1]
        %v6211 = vsel %vm310, %v6022, %v6210
        %6212 = vst [vmem:[%s416 + $0x98] sm:$0x1] %v6211
        %v6213 = vld [vmem:[%s416 + $0x9c] sm:$0xf]
        %v6214 = vsel %vm964, %v6029, %v6213
        %6215 = vst [vmem:[%s416 + $0x9c] sm:$0xf] %v6214
        %6216 = vst.msk [vmem:[%s416 + $0xa0] sm:$0xf] %vm298, %v6038
        %v6217 = vld [vmem:[%s416 + $0xa4] sm:$0x1]
        %v6218 = vsel %vm310, %v6039, %v6217
        %6219 = vst [vmem:[%s416 + $0xa4] sm:$0x1] %v6218
        %v6220 = vld [vmem:[%s416 + $0xa8] sm:$0xf]
        %v6221 = vsel %vm964, %v6046, %v6220
        %6222 = vst [vmem:[%s416 + $0xa8] sm:$0xf] %v6221
        %6223 = vst.msk [vmem:[%s416 + $0xac] sm:$0xf] %vm298, %v6055
        %v6224 = vld [vmem:[%s416 + $0xb0] sm:$0x1]
        %v6225 = vsel %vm310, %v6056, %v6224
        %6226 = vst [vmem:[%s416 + $0xb0] sm:$0x1] %v6225
        %v6227 = vld [vmem:[%s416 + $0xb4] sm:$0xf]
        %v6228 = vsel %vm964, %v6063, %v6227
        %6229 = vst [vmem:[%s416 + $0xb4] sm:$0xf] %v6228
        %6230 = vst.msk [vmem:[%s416 + $0xb8] sm:$0xf] %vm298, %v6072
        %v6231 = vld [vmem:[%s416 + $0xbc] sm:$0x1]
        %v6232 = vsel %vm310, %v6073, %v6231
        %6233 = vst [vmem:[%s416 + $0xbc] sm:$0x1] %v6232
        %v6234 = vld [vmem:[#allocation3] sm:$0xf]
        %v6235 = vld [vmem:[#allocation3 + $0x4] sm:$0xf]
        %v6236 = vld [vmem:[#allocation3 + $0xc] sm:$0xf]
        %v6237 = vld [vmem:[#allocation3 + $0x10] sm:$0xf]
        %v6238 = vld [vmem:[#allocation3 + $0x18] sm:$0xf]
        %v6239 = vld [vmem:[#allocation3 + $0x1c] sm:$0xf]
        %v6240 = vld [vmem:[#allocation3 + $0x24] sm:$0xf]
        %v6241 = vld [vmem:[#allocation3 + $0x28] sm:$0xf]
        %v6242 = vld [vmem:[#allocation3 + $0x30] sm:$0xf]
        %v6243 = vld [vmem:[#allocation3 + $0x34] sm:$0xf]
        %v6244 = vld [vmem:[#allocation3 + $0x3c] sm:$0xf]
        %v6245 = vld [vmem:[#allocation3 + $0x40] sm:$0xf]
        %v6246 = vld [vmem:[#allocation3 + $0x48] sm:$0xf]
        %v6247 = vld [vmem:[#allocation3 + $0x4c] sm:$0xf]
        %v6248 = vld [vmem:[#allocation3 + $0x54] sm:$0xf]
        %v6249 = vld [vmem:[#allocation3 + $0x58] sm:$0xf]
        %v6250 = vld [vmem:[#allocation3 + $0x60] sm:$0xf]
        %v6251 = vld [vmem:[#allocation3 + $0x64] sm:$0xf]
        %v6252 = vld [vmem:[#allocation3 + $0x6c] sm:$0xf]
        %v6253 = vld [vmem:[#allocation3 + $0x70] sm:$0xf]
        %v6254 = vld [vmem:[#allocation3 + $0x78] sm:$0xf]
        %v6255 = vld [vmem:[#allocation3 + $0x7c] sm:$0xf]
        %v6256 = vld [vmem:[#allocation3 + $0x84] sm:$0xf]
        %v6257 = vld [vmem:[#allocation3 + $0x88] sm:$0xf]
        %v6258 = vld [vmem:[#allocation3 + $0x90] sm:$0xf]
        %v6259 = vld [vmem:[#allocation3 + $0x94] sm:$0xf]
        %v6260 = vld [vmem:[#allocation3 + $0x9c] sm:$0xf]
        %v6261 = vld [vmem:[#allocation3 + $0xa0] sm:$0xf]
        %v6262 = vld [vmem:[#allocation3 + $0xa8] sm:$0xf]
        %v6263 = vld [vmem:[#allocation3 + $0xac] sm:$0xf]
        %v6264 = vld [vmem:[#allocation3 + $0xb4] sm:$0xf]
        %v6265 = vld [vmem:[#allocation3 + $0xb8] sm:$0xf]
        %v6266 = vld [vmem:[#allocation10] sm:$0x3]
        %v6267 = vld [vmem:[#allocation3 + $0x8] sm:$0x1]
        %v6268 = vld [vmem:[#allocation3 + $0x14] sm:$0x1]
        %v6269 = vld [vmem:[#allocation3 + $0x20] sm:$0x1]
        %v6270 = vld [vmem:[#allocation3 + $0x2c] sm:$0x1]
        %v6271 = vld [vmem:[#allocation3 + $0x38] sm:$0x1]
        %v6272 = vld [vmem:[#allocation3 + $0x44] sm:$0x1]
        %v6273 = vld [vmem:[#allocation3 + $0x50] sm:$0x1]
        %v6274 = vld [vmem:[#allocation3 + $0x5c] sm:$0x1]
        %v6275 = vld [vmem:[#allocation3 + $0x68] sm:$0x1]
        %v6276 = vld [vmem:[#allocation3 + $0x74] sm:$0x1]
        %v6277 = vld [vmem:[#allocation3 + $0x80] sm:$0x1]
        %v6278 = vld [vmem:[#allocation3 + $0x8c] sm:$0x1]
        %v6279 = vld [vmem:[#allocation3 + $0x98] sm:$0x1]
        %v6280 = vld [vmem:[#allocation3 + $0xa4] sm:$0x1]
        %v6281 = vld [vmem:[#allocation3 + $0xb0] sm:$0x1]
        %v6282 = vld [vmem:[#allocation3 + $0xbc] sm:$0x1]
        %v6284 = vshrl.u32 %v6234, 16
        %v6286 = vrot.slane %v6284, 4
        %v6287 = vshll.u32 %v6234, 16
        %v6289 = vrot.slane %v6287, 5
        %v6290 = vor.u32 %v6286, %v6289
        %v6291 = vrot.slane %v6290, 4
        %v6293 = vshll.u32 %v6235, 16
        %v6295 = vrot.slane %v6293, 5
        %v6296 = vsel %vm1128, %v6291, %v6295
        %v6297 = vshrl.u32 %v6235, 16
        %v6299 = vrot.slane %v6297, 4
        %v6300 = vor.u32 %v6299, %v6295
        %v6301 = vrot.slane %v6300, 4
        %v6303 = vshll.u32 %v6267, 16
        %v6305 = vrot.slane %v6303, 5
        %v6306 = vsel %vm1128, %v6301, %v6305
        %v6308 = vshrl.u32 %v6236, 16
        %v6310 = vrot.slane %v6308, 4
        %v6311 = vshll.u32 %v6236, 16
        %v6313 = vrot.slane %v6311, 5
        %v6314 = vor.u32 %v6310, %v6313
        %v6315 = vrot.slane %v6314, 4
        %v6317 = vshll.u32 %v6237, 16
        %v6319 = vrot.slane %v6317, 5
        %v6320 = vsel %vm1128, %v6315, %v6319
        %v6321 = vshrl.u32 %v6237, 16
        %v6323 = vrot.slane %v6321, 4
        %v6324 = vor.u32 %v6323, %v6319
        %v6325 = vrot.slane %v6324, 4
        %v6327 = vshll.u32 %v6268, 16
        %v6329 = vrot.slane %v6327, 5
        %v6330 = vsel %vm1128, %v6325, %v6329
        %v6332 = vshrl.u32 %v6238, 16
        %v6334 = vrot.slane %v6332, 4
        %v6335 = vshll.u32 %v6238, 16
        %v6337 = vrot.slane %v6335, 5
        %v6338 = vor.u32 %v6334, %v6337
        %v6339 = vrot.slane %v6338, 4
        %v6341 = vshll.u32 %v6239, 16
        %v6343 = vrot.slane %v6341, 5
        %v6344 = vsel %vm1128, %v6339, %v6343
        %v6345 = vshrl.u32 %v6239, 16
        %v6347 = vrot.slane %v6345, 4
        %v6348 = vor.u32 %v6347, %v6343
        %v6349 = vrot.slane %v6348, 4
        %v6351 = vshll.u32 %v6269, 16
        %v6353 = vrot.slane %v6351, 5
        %v6354 = vsel %vm1128, %v6349, %v6353
        %v6356 = vshrl.u32 %v6240, 16
        %v6358 = vrot.slane %v6356, 4
        %v6359 = vshll.u32 %v6240, 16
        %v6361 = vrot.slane %v6359, 5
        %v6362 = vor.u32 %v6358, %v6361
        %v6363 = vrot.slane %v6362, 4
        %v6365 = vshll.u32 %v6241, 16
        %v6367 = vrot.slane %v6365, 5
        %v6368 = vsel %vm1128, %v6363, %v6367
        %v6369 = vshrl.u32 %v6241, 16
        %v6371 = vrot.slane %v6369, 4
        %v6372 = vor.u32 %v6371, %v6367
        %v6373 = vrot.slane %v6372, 4
        %v6375 = vshll.u32 %v6270, 16
        %v6377 = vrot.slane %v6375, 5
        %v6378 = vsel %vm1128, %v6373, %v6377
        %v6380 = vshrl.u32 %v6242, 16
        %v6382 = vrot.slane %v6380, 4
        %v6383 = vshll.u32 %v6242, 16
        %v6385 = vrot.slane %v6383, 5
        %v6386 = vor.u32 %v6382, %v6385
        %v6387 = vrot.slane %v6386, 4
        %v6389 = vshll.u32 %v6243, 16
        %v6391 = vrot.slane %v6389, 5
        %v6392 = vsel %vm1128, %v6387, %v6391
        %v6393 = vshrl.u32 %v6243, 16
        %v6395 = vrot.slane %v6393, 4
        %v6396 = vor.u32 %v6395, %v6391
        %v6397 = vrot.slane %v6396, 4
        %v6399 = vshll.u32 %v6271, 16
        %v6401 = vrot.slane %v6399, 5
        %v6402 = vsel %vm1128, %v6397, %v6401
        %v6404 = vshrl.u32 %v6244, 16
        %v6406 = vrot.slane %v6404, 4
        %v6407 = vshll.u32 %v6244, 16
        %v6409 = vrot.slane %v6407, 5
        %v6410 = vor.u32 %v6406, %v6409
        %v6411 = vrot.slane %v6410, 4
        %v6413 = vshll.u32 %v6245, 16
        %v6415 = vrot.slane %v6413, 5
        %v6416 = vsel %vm1128, %v6411, %v6415
        %v6417 = vshrl.u32 %v6245, 16
        %v6419 = vrot.slane %v6417, 4
        %v6420 = vor.u32 %v6419, %v6415
        %v6421 = vrot.slane %v6420, 4
        %v6423 = vshll.u32 %v6272, 16
        %v6425 = vrot.slane %v6423, 5
        %v6426 = vsel %vm1128, %v6421, %v6425
        %v6428 = vshrl.u32 %v6246, 16
        %v6430 = vrot.slane %v6428, 4
        %v6431 = vshll.u32 %v6246, 16
        %v6433 = vrot.slane %v6431, 5
        %v6434 = vor.u32 %v6430, %v6433
        %v6435 = vrot.slane %v6434, 4
        %v6437 = vshll.u32 %v6247, 16
        %v6439 = vrot.slane %v6437, 5
        %v6440 = vsel %vm1128, %v6435, %v6439
        %v6441 = vshrl.u32 %v6247, 16
        %v6443 = vrot.slane %v6441, 4
        %v6444 = vor.u32 %v6443, %v6439
        %v6445 = vrot.slane %v6444, 4
        %v6447 = vshll.u32 %v6273, 16
        %v6449 = vrot.slane %v6447, 5
        %v6450 = vsel %vm1128, %v6445, %v6449
        %v6452 = vshrl.u32 %v6248, 16
        %v6454 = vrot.slane %v6452, 4
        %v6455 = vshll.u32 %v6248, 16
        %v6457 = vrot.slane %v6455, 5
        %v6458 = vor.u32 %v6454, %v6457
        %v6459 = vrot.slane %v6458, 4
        %v6461 = vshll.u32 %v6249, 16
        %v6463 = vrot.slane %v6461, 5
        %v6464 = vsel %vm1128, %v6459, %v6463
        %v6465 = vshrl.u32 %v6249, 16
        %v6467 = vrot.slane %v6465, 4
        %v6468 = vor.u32 %v6467, %v6463
        %v6469 = vrot.slane %v6468, 4
        %v6471 = vshll.u32 %v6274, 16
        %v6473 = vrot.slane %v6471, 5
        %v6474 = vsel %vm1128, %v6469, %v6473
        %v6476 = vshrl.u32 %v6250, 16
        %v6478 = vrot.slane %v6476, 4
        %v6479 = vshll.u32 %v6250, 16
        %v6481 = vrot.slane %v6479, 5
        %v6482 = vor.u32 %v6478, %v6481
        %v6483 = vrot.slane %v6482, 4
        %v6485 = vshll.u32 %v6251, 16
        %v6487 = vrot.slane %v6485, 5
        %v6488 = vsel %vm1128, %v6483, %v6487
        %v6489 = vshrl.u32 %v6251, 16
        %v6491 = vrot.slane %v6489, 4
        %v6492 = vor.u32 %v6491, %v6487
        %v6493 = vrot.slane %v6492, 4
        %v6495 = vshll.u32 %v6275, 16
        %v6497 = vrot.slane %v6495, 5
        %v6498 = vsel %vm1128, %v6493, %v6497
        %v6500 = vshrl.u32 %v6252, 16
        %v6502 = vrot.slane %v6500, 4
        %v6503 = vshll.u32 %v6252, 16
        %v6505 = vrot.slane %v6503, 5
        %v6506 = vor.u32 %v6502, %v6505
        %v6507 = vrot.slane %v6506, 4
        %v6509 = vshll.u32 %v6253, 16
        %v6511 = vrot.slane %v6509, 5
        %v6512 = vsel %vm1128, %v6507, %v6511
        %v6513 = vshrl.u32 %v6253, 16
        %v6515 = vrot.slane %v6513, 4
        %v6516 = vor.u32 %v6515, %v6511
        %v6517 = vrot.slane %v6516, 4
        %v6519 = vshll.u32 %v6276, 16
        %v6521 = vrot.slane %v6519, 5
        %v6522 = vsel %vm1128, %v6517, %v6521
        %v6524 = vshrl.u32 %v6254, 16
        %v6526 = vrot.slane %v6524, 4
        %v6527 = vshll.u32 %v6254, 16
        %v6529 = vrot.slane %v6527, 5
        %v6530 = vor.u32 %v6526, %v6529
        %v6531 = vrot.slane %v6530, 4
        %v6533 = vshll.u32 %v6255, 16
        %v6535 = vrot.slane %v6533, 5
        %v6536 = vsel %vm1128, %v6531, %v6535
        %v6537 = vshrl.u32 %v6255, 16
        %v6539 = vrot.slane %v6537, 4
        %v6540 = vor.u32 %v6539, %v6535
        %v6541 = vrot.slane %v6540, 4
        %v6543 = vshll.u32 %v6277, 16
        %v6545 = vrot.slane %v6543, 5
        %v6546 = vsel %vm1128, %v6541, %v6545
        %v6548 = vshrl.u32 %v6256, 16
        %v6550 = vrot.slane %v6548, 4
        %v6551 = vshll.u32 %v6256, 16
        %v6553 = vrot.slane %v6551, 5
        %v6554 = vor.u32 %v6550, %v6553
        %v6555 = vrot.slane %v6554, 4
        %v6557 = vshll.u32 %v6257, 16
        %v6559 = vrot.slane %v6557, 5
        %v6560 = vsel %vm1128, %v6555, %v6559
        %v6561 = vshrl.u32 %v6257, 16
        %v6563 = vrot.slane %v6561, 4
        %v6564 = vor.u32 %v6563, %v6559
        %v6565 = vrot.slane %v6564, 4
        %v6567 = vshll.u32 %v6278, 16
        %v6569 = vrot.slane %v6567, 5
        %v6570 = vsel %vm1128, %v6565, %v6569
        %v6572 = vshrl.u32 %v6258, 16
        %v6574 = vrot.slane %v6572, 4
        %v6575 = vshll.u32 %v6258, 16
        %v6577 = vrot.slane %v6575, 5
        %v6578 = vor.u32 %v6574, %v6577
        %v6579 = vrot.slane %v6578, 4
        %v6581 = vshll.u32 %v6259, 16
        %v6583 = vrot.slane %v6581, 5
        %v6584 = vsel %vm1128, %v6579, %v6583
        %v6585 = vshrl.u32 %v6259, 16
        %v6587 = vrot.slane %v6585, 4
        %v6588 = vor.u32 %v6587, %v6583
        %v6589 = vrot.slane %v6588, 4
        %v6591 = vshll.u32 %v6279, 16
        %v6593 = vrot.slane %v6591, 5
        %v6594 = vsel %vm1128, %v6589, %v6593
        %v6596 = vshrl.u32 %v6260, 16
        %v6598 = vrot.slane %v6596, 4
        %v6599 = vshll.u32 %v6260, 16
        %v6601 = vrot.slane %v6599, 5
        %v6602 = vor.u32 %v6598, %v6601
        %v6603 = vrot.slane %v6602, 4
        %v6605 = vshll.u32 %v6261, 16
        %v6607 = vrot.slane %v6605, 5
        %v6608 = vsel %vm1128, %v6603, %v6607
        %v6609 = vshrl.u32 %v6261, 16
        %v6611 = vrot.slane %v6609, 4
        %v6612 = vor.u32 %v6611, %v6607
        %v6613 = vrot.slane %v6612, 4
        %v6615 = vshll.u32 %v6280, 16
        %v6617 = vrot.slane %v6615, 5
        %v6618 = vsel %vm1128, %v6613, %v6617
        %v6620 = vshrl.u32 %v6262, 16
        %v6622 = vrot.slane %v6620, 4
        %v6623 = vshll.u32 %v6262, 16
        %v6625 = vrot.slane %v6623, 5
        %v6626 = vor.u32 %v6622, %v6625
        %v6627 = vrot.slane %v6626, 4
        %v6629 = vshll.u32 %v6263, 16
        %v6631 = vrot.slane %v6629, 5
        %v6632 = vsel %vm1128, %v6627, %v6631
        %v6633 = vshrl.u32 %v6263, 16
        %v6635 = vrot.slane %v6633, 4
        %v6636 = vor.u32 %v6635, %v6631
        %v6637 = vrot.slane %v6636, 4
        %v6639 = vshll.u32 %v6281, 16
        %v6641 = vrot.slane %v6639, 5
        %v6642 = vsel %vm1128, %v6637, %v6641
        %v6644 = vshrl.u32 %v6264, 16
        %v6646 = vrot.slane %v6644, 4
        %v6647 = vshll.u32 %v6264, 16
        %v6649 = vrot.slane %v6647, 5
        %v6650 = vor.u32 %v6646, %v6649
        %v6651 = vrot.slane %v6650, 4
        %v6653 = vshll.u32 %v6265, 16
        %v6655 = vrot.slane %v6653, 5
        %v6656 = vsel %vm1128, %v6651, %v6655
        %v6657 = vshrl.u32 %v6265, 16
        %v6659 = vrot.slane %v6657, 4
        %v6660 = vor.u32 %v6659, %v6655
        %v6661 = vrot.slane %v6660, 4
        %v6663 = vshll.u32 %v6282, 16
        %v6665 = vrot.slane %v6663, 5
        %v6666 = vsel %vm1128, %v6661, %v6665
        %s6667 = scalar_lea.vmem [#allocation10], 2
        %v6668 = vld [vmem:[%s6667] sm:$0x3]
        %v6669 = vunpack.c.l.b16 %v6296
        %v6670 = vunpack.c.l.b16 %v6306
        %v6671 = vunpack.c.l.b16 %v6320
        %v6672 = vunpack.c.l.b16 %v6330
        %v6673 = vunpack.c.l.b16 %v6344
        %v6674 = vunpack.c.l.b16 %v6354
        %v6675 = vunpack.c.l.b16 %v6368
        %v6676 = vunpack.c.l.b16 %v6378
        %v6677 = vunpack.c.l.b16 %v6392
        %v6678 = vunpack.c.l.b16 %v6402
        %v6679 = vunpack.c.l.b16 %v6416
        %v6680 = vunpack.c.l.b16 %v6426
        %v6681 = vunpack.c.l.b16 %v6440
        %v6682 = vunpack.c.l.b16 %v6450
        %v6683 = vunpack.c.l.b16 %v6464
        %v6684 = vunpack.c.l.b16 %v6474
        %v6685 = vunpack.c.l.b16 %v6488
        %v6686 = vunpack.c.l.b16 %v6498
        %v6687 = vunpack.c.l.b16 %v6512
        %v6688 = vunpack.c.l.b16 %v6522
        %v6689 = vunpack.c.l.b16 %v6536
        %v6690 = vunpack.c.l.b16 %v6546
        %v6691 = vunpack.c.l.b16 %v6560
        %v6692 = vunpack.c.l.b16 %v6570
        %v6693 = vunpack.c.l.b16 %v6584
        %v6694 = vunpack.c.l.b16 %v6594
        %v6695 = vunpack.c.l.b16 %v6608
        %v6696 = vunpack.c.l.b16 %v6618
        %v6697 = vunpack.c.l.b16 %v6632
        %v6698 = vunpack.c.l.b16 %v6642
        %v6699 = vunpack.c.l.b16 %v6656
        %v6700 = vunpack.c.l.b16 %v6666
        %v6701 = vpack.c.b16 %v6670, %v6669
        %v6702 = vpack.c.b16 %v6672, %v6671
        %v6703 = vpack.c.b16 %v6674, %v6673
        %v6704 = vpack.c.b16 %v6676, %v6675
        %v6705 = vpack.c.b16 %v6678, %v6677
        %v6706 = vpack.c.b16 %v6680, %v6679
        %v6707 = vpack.c.b16 %v6682, %v6681
        %v6708 = vpack.c.b16 %v6684, %v6683
        %v6709 = vpack.c.b16 %v6686, %v6685
        %v6710 = vpack.c.b16 %v6688, %v6687
        %v6711 = vpack.c.b16 %v6690, %v6689
        %v6712 = vpack.c.b16 %v6692, %v6691
        %v6713 = vpack.c.b16 %v6694, %v6693
        %v6714 = vpack.c.b16 %v6696, %v6695
        %v6715 = vpack.c.b16 %v6698, %v6697
        %v6716 = vpack.c.b16 %v6700, %v6699
        %v6718 = vsel %vm1563, %v6701, 0
        %v6721 = vsel %vm1563, %v6702, 0
        %v6724 = vsel %vm1563, %v6703, 0
        %v6727 = vsel %vm1563, %v6704, 0
        %v6730 = vsel %vm1563, %v6705, 0
        %v6733 = vsel %vm1563, %v6706, 0
        %v6736 = vsel %vm1563, %v6707, 0
        %v6739 = vsel %vm1563, %v6708, 0
        %v6742 = vsel %vm1563, %v6709, 0
        %v6745 = vsel %vm1563, %v6710, 0
        %v6748 = vsel %vm1563, %v6711, 0
        %v6751 = vsel %vm1563, %v6712, 0
        %v6754 = vsel %vm1563, %v6713, 0
        %v6757 = vsel %vm1563, %v6714, 0
        %v6760 = vsel %vm1563, %v6715, 0
        %v6763 = vsel %vm1563, %v6716, 0
        %v6766 = vsel %vm1612, %v6668, 0
        %6768 = vmatprep.subr.bf16.mxu0 0
        %6769 = vmatpush1.bf16.msra.mxu0 %v6766
        %6770 = vmatprep.subr.bf16.mxu0 0
        %6771 = vmatpush1.bf16.msra.mxu0 0
        %6772 = vmatprep.subr.bf16.mxu0 0
        %6773 = vmatpush1.bf16.msra.mxu0 0
        %6774 = vmatprep.subr.bf16.mxu0 0
        %6775 = vmatpush1.bf16.msra.mxu0 0
        %6776 = vmatprep.subr.bf16.mxu0 0
        %6777 = vmatpush1.bf16.msra.mxu0 0
        %6778 = vmatprep.subr.bf16.mxu0 0
        %6779 = vmatpush1.bf16.msra.mxu0 0
        %6780 = vmatprep.subr.bf16.mxu0 0
        %6781 = vmatpush1.bf16.msra.mxu0 0
        %6782 = vmatprep.subr.bf16.mxu0 0
        %6783 = vmatpush1.bf16.msra.mxu0 0
        %6784 = vmatprep.subr.bf16.mxu0 0
        %6785 = vmatpush1.bf16.msra.mxu0 0
        %6786 = vmatprep.subr.bf16.mxu0 0
        %6787 = vmatpush1.bf16.msra.mxu0 0
        %6788 = vmatprep.subr.bf16.mxu0 0
        %6789 = vmatpush1.bf16.msra.mxu0 0
        %6790 = vmatprep.subr.bf16.mxu0 0
        %6791 = vmatpush1.bf16.msra.mxu0 0
        %6792 = vmatprep.subr.bf16.mxu0 0
        %6793 = vmatpush1.bf16.msra.mxu0 0
        %6794 = vmatprep.subr.bf16.mxu0 0
        %6795 = vmatpush1.bf16.msra.mxu0 0
        %6796 = vmatprep.subr.bf16.mxu0 0
        %6797 = vmatpush1.bf16.msra.mxu0 0
        %6798 = vmatprep.subr.bf16.mxu0 0
        %6799 = vmatpush1.bf16.msra.mxu0 0
        %6800 = vmatprep.mubr.bf16.mxu0 0
        %6801 = vmatmul.mubr.bf16.gmra.mrb[0].mxu0 %v6718
        %v6802 = vpop.f32.mrb[0].mxu0
        %v6803 = vadd.f32 0.0, %v6802
        %v6804 = vpop.f32.mrb[0].mxu0
        %v6805 = vpop.f32.mrb[0].mxu0
        %v6806 = vadd.f32 0.0, %v6805
        %v6807 = vpop.f32.mrb[0].mxu0
        %6808 = vmatprep.mubr.bf16.mxu0 0
        %6809 = vmatmul.mubr.bf16.gmra.mrb[0].mxu0 %v6721
        %v6810 = vpop.f32.mrb[0].mxu0
        %v6811 = vadd.f32 0.0, %v6810
        %v6812 = vpop.f32.mrb[0].mxu0
        %v6813 = vpop.f32.mrb[0].mxu0
        %v6814 = vadd.f32 0.0, %v6813
        %v6815 = vpop.f32.mrb[0].mxu0
        %6816 = vmatprep.mubr.bf16.mxu0 0
        %6817 = vmatmul.mubr.bf16.gmra.mrb[0].mxu0 %v6724
        %v6818 = vpop.f32.mrb[0].mxu0
        %v6819 = vadd.f32 0.0, %v6818
        %v6820 = vpop.f32.mrb[0].mxu0
        %v6821 = vpop.f32.mrb[0].mxu0
        %v6822 = vadd.f32 0.0, %v6821
        %v6823 = vpop.f32.mrb[0].mxu0
        %6824 = vmatprep.mubr.bf16.mxu0 0
        %6825 = vmatmul.mubr.bf16.gmra.mrb[0].mxu0 %v6727
        %v6826 = vpop.f32.mrb[0].mxu0
        %v6827 = vadd.f32 0.0, %v6826
        %v6828 = vpop.f32.mrb[0].mxu0
        %v6829 = vpop.f32.mrb[0].mxu0
        %v6830 = vadd.f32 0.0, %v6829
        %v6831 = vpop.f32.mrb[0].mxu0
        %6832 = vmatprep.mubr.bf16.mxu0 0
        %6833 = vmatmul.mubr.bf16.gmra.mrb[0].mxu0 %v6730
        %v6834 = vpop.f32.mrb[0].mxu0
        %v6835 = vadd.f32 0.0, %v6834
        %v6836 = vpop.f32.mrb[0].mxu0
        %v6837 = vpop.f32.mrb[0].mxu0
        %v6838 = vadd.f32 0.0, %v6837
        %v6839 = vpop.f32.mrb[0].mxu0
        %6840 = vmatprep.mubr.bf16.mxu0 0
        %6841 = vmatmul.mubr.bf16.gmra.mrb[0].mxu0 %v6733
        %v6842 = vpop.f32.mrb[0].mxu0
        %v6843 = vadd.f32 0.0, %v6842
        %v6844 = vpop.f32.mrb[0].mxu0
        %v6845 = vpop.f32.mrb[0].mxu0
        %v6846 = vadd.f32 0.0, %v6845
        %v6847 = vpop.f32.mrb[0].mxu0
        %6848 = vmatprep.mubr.bf16.mxu0 0
        %6849 = vmatmul.mubr.bf16.gmra.mrb[0].mxu0 %v6736
        %v6850 = vpop.f32.mrb[0].mxu0
        %v6851 = vadd.f32 0.0, %v6850
        %v6852 = vpop.f32.mrb[0].mxu0
        %v6853 = vpop.f32.mrb[0].mxu0
        %v6854 = vadd.f32 0.0, %v6853
        %v6855 = vpop.f32.mrb[0].mxu0
        %6856 = vmatprep.mubr.bf16.mxu0 0
        %6857 = vmatmul.mubr.bf16.gmra.mrb[0].mxu0 %v6739
        %v6858 = vpop.f32.mrb[0].mxu0
        %v6859 = vadd.f32 0.0, %v6858
        %v6860 = vpop.f32.mrb[0].mxu0
        %v6861 = vpop.f32.mrb[0].mxu0
        %v6862 = vadd.f32 0.0, %v6861
        %v6863 = vpop.f32.mrb[0].mxu0
        %6864 = vmatprep.mubr.bf16.mxu0 0
        %6865 = vmatmul.mubr.bf16.gmra.mrb[0].mxu0 %v6742
        %v6866 = vpop.f32.mrb[0].mxu0
        %v6867 = vadd.f32 0.0, %v6866
        %v6868 = vpop.f32.mrb[0].mxu0
        %v6869 = vpop.f32.mrb[0].mxu0
        %v6870 = vadd.f32 0.0, %v6869
        %v6871 = vpop.f32.mrb[0].mxu0
        %6872 = vmatprep.mubr.bf16.mxu0 0
        %6873 = vmatmul.mubr.bf16.gmra.mrb[0].mxu0 %v6745
        %v6874 = vpop.f32.mrb[0].mxu0
        %v6875 = vadd.f32 0.0, %v6874
        %v6876 = vpop.f32.mrb[0].mxu0
        %v6877 = vpop.f32.mrb[0].mxu0
        %v6878 = vadd.f32 0.0, %v6877
        %v6879 = vpop.f32.mrb[0].mxu0
        %6880 = vmatprep.mubr.bf16.mxu0 0
        %6881 = vmatmul.mubr.bf16.gmra.mrb[0].mxu0 %v6748
        %v6882 = vpop.f32.mrb[0].mxu0
        %v6883 = vadd.f32 0.0, %v6882
        %v6884 = vpop.f32.mrb[0].mxu0
        %v6885 = vpop.f32.mrb[0].mxu0
        %v6886 = vadd.f32 0.0, %v6885
        %v6887 = vpop.f32.mrb[0].mxu0
        %6888 = vmatprep.mubr.bf16.mxu0 0
        %6889 = vmatmul.mubr.bf16.gmra.mrb[0].mxu0 %v6751
        %v6890 = vpop.f32.mrb[0].mxu0
        %v6891 = vadd.f32 0.0, %v6890
        %v6892 = vpop.f32.mrb[0].mxu0
        %v6893 = vpop.f32.mrb[0].mxu0
        %v6894 = vadd.f32 0.0, %v6893
        %v6895 = vpop.f32.mrb[0].mxu0
        %6896 = vmatprep.mubr.bf16.mxu0 0
        %6897 = vmatmul.mubr.bf16.gmra.mrb[0].mxu0 %v6754
        %v6898 = vpop.f32.mrb[0].mxu0
        %v6899 = vadd.f32 0.0, %v6898
        %v6900 = vpop.f32.mrb[0].mxu0
        %v6901 = vpop.f32.mrb[0].mxu0
        %v6902 = vadd.f32 0.0, %v6901
        %v6903 = vpop.f32.mrb[0].mxu0
        %6904 = vmatprep.mubr.bf16.mxu0 0
        %6905 = vmatmul.mubr.bf16.gmra.mrb[0].mxu0 %v6757
        %v6906 = vpop.f32.mrb[0].mxu0
        %v6907 = vadd.f32 0.0, %v6906
        %v6908 = vpop.f32.mrb[0].mxu0
        %v6909 = vpop.f32.mrb[0].mxu0
        %v6910 = vadd.f32 0.0, %v6909
        %v6911 = vpop.f32.mrb[0].mxu0
        %6912 = vmatprep.mubr.bf16.mxu0 0
        %6913 = vmatmul.mubr.bf16.gmra.mrb[0].mxu0 %v6760
        %v6914 = vpop.f32.mrb[0].mxu0
        %v6915 = vadd.f32 0.0, %v6914
        %v6916 = vpop.f32.mrb[0].mxu0
        %v6917 = vpop.f32.mrb[0].mxu0
        %v6918 = vadd.f32 0.0, %v6917
        %v6919 = vpop.f32.mrb[0].mxu0
        %6920 = vmatprep.mubr.bf16.mxu0 0
        %6921 = vmatmul.mubr.bf16.gmra.mrb[0].mxu0 %v6763
        %v6922 = vpop.f32.mrb[0].mxu0
        %v6923 = vadd.f32 0.0, %v6922
        %v6924 = vpop.f32.mrb[0].mxu0
        %v6925 = vpop.f32.mrb[0].mxu0
        %v6926 = vadd.f32 0.0, %v6925
        %v6927 = vpop.f32.mrb[0].mxu0
        %6928 = vdwg.mxu0
        %v6961 = vunpack.c.l.b16 %v6234
        %v6962 = vunpack.c.l.b16 %v6235
        %v6963 = vunpack.c.l.b16 %v6236
        %v6964 = vunpack.c.l.b16 %v6237
        %v6965 = vunpack.c.l.b16 %v6238
        %v6966 = vunpack.c.l.b16 %v6239
        %v6967 = vunpack.c.l.b16 %v6240
        %v6968 = vunpack.c.l.b16 %v6241
        %v6969 = vunpack.c.l.b16 %v6242
        %v6970 = vunpack.c.l.b16 %v6243
        %v6971 = vunpack.c.l.b16 %v6244
        %v6972 = vunpack.c.l.b16 %v6245
        %v6973 = vunpack.c.l.b16 %v6246
        %v6974 = vunpack.c.l.b16 %v6247
        %v6975 = vunpack.c.l.b16 %v6248
        %v6976 = vunpack.c.l.b16 %v6249
        %v6977 = vunpack.c.l.b16 %v6250
        %v6978 = vunpack.c.l.b16 %v6251
        %v6979 = vunpack.c.l.b16 %v6252
        %v6980 = vunpack.c.l.b16 %v6253
        %v6981 = vunpack.c.l.b16 %v6254
        %v6982 = vunpack.c.l.b16 %v6255
        %v6983 = vunpack.c.l.b16 %v6256
        %v6984 = vunpack.c.l.b16 %v6257
        %v6985 = vunpack.c.l.b16 %v6258
        %v6986 = vunpack.c.l.b16 %v6259
        %v6987 = vunpack.c.l.b16 %v6260
        %v6988 = vunpack.c.l.b16 %v6261
        %v6989 = vunpack.c.l.b16 %v6262
        %v6990 = vunpack.c.l.b16 %v6263
        %v6991 = vunpack.c.l.b16 %v6264
        %v6992 = vunpack.c.l.b16 %v6265
        %v6993 = vpack.c.b16 %v6962, %v6961
        %v6994 = vpack.c.b16 %v6964, %v6963
        %v6995 = vpack.c.b16 %v6966, %v6965
        %v6996 = vpack.c.b16 %v6968, %v6967
        %v6997 = vpack.c.b16 %v6970, %v6969
        %v6998 = vpack.c.b16 %v6972, %v6971
        %v6999 = vpack.c.b16 %v6974, %v6973
        %v7000 = vpack.c.b16 %v6976, %v6975
        %v7001 = vpack.c.b16 %v6978, %v6977
        %v7002 = vpack.c.b16 %v6980, %v6979
        %v7003 = vpack.c.b16 %v6982, %v6981
        %v7004 = vpack.c.b16 %v6984, %v6983
        %v7005 = vpack.c.b16 %v6986, %v6985
        %v7006 = vpack.c.b16 %v6988, %v6987
        %v7007 = vpack.c.b16 %v6990, %v6989
        %v7008 = vpack.c.b16 %v6992, %v6991
        %v7010 = vsel %vm1563, %v6993, 0
        %v7013 = vsel %vm1563, %v6994, 0
        %v7016 = vsel %vm1563, %v6995, 0
        %v7019 = vsel %vm1563, %v6996, 0
        %v7022 = vsel %vm1563, %v6997, 0
        %v7025 = vsel %vm1563, %v6998, 0
        %v7028 = vsel %vm1563, %v6999, 0
        %v7031 = vsel %vm1563, %v7000, 0
        %v7034 = vsel %vm1563, %v7001, 0
        %v7037 = vsel %vm1563, %v7002, 0
        %v7040 = vsel %vm1563, %v7003, 0
        %v7043 = vsel %vm1563, %v7004, 0
        %v7046 = vsel %vm1563, %v7005, 0
        %v7049 = vsel %vm1563, %v7006, 0
        %v7052 = vsel %vm1563, %v7007, 0
        %v7055 = vsel %vm1563, %v7008, 0
        %v7058 = vsel %vm1612, %v6266, 0
        %7060 = vmatprep.subr.bf16.mxu0 0
        %7061 = vmatpush1.bf16.msra.mxu0 %v7058
        %7062 = vmatprep.subr.bf16.mxu0 0
        %7063 = vmatpush1.bf16.msra.mxu0 0
        %7064 = vmatprep.subr.bf16.mxu0 0
        %7065 = vmatpush1.bf16.msra.mxu0 0
        %7066 = vmatprep.subr.bf16.mxu0 0
        %7067 = vmatpush1.bf16.msra.mxu0 0
        %7068 = vmatprep.subr.bf16.mxu0 0
        %7069 = vmatpush1.bf16.msra.mxu0 0
        %7070 = vmatprep.subr.bf16.mxu0 0
        %7071 = vmatpush1.bf16.msra.mxu0 0
        %7072 = vmatprep.subr.bf16.mxu0 0
        %7073 = vmatpush1.bf16.msra.mxu0 0
        %7074 = vmatprep.subr.bf16.mxu0 0
        %7075 = vmatpush1.bf16.msra.mxu0 0
        %7076 = vmatprep.subr.bf16.mxu0 0
        %7077 = vmatpush1.bf16.msra.mxu0 0
        %7078 = vmatprep.subr.bf16.mxu0 0
        %7079 = vmatpush1.bf16.msra.mxu0 0
        %7080 = vmatprep.subr.bf16.mxu0 0
        %7081 = vmatpush1.bf16.msra.mxu0 0
        %7082 = vmatprep.subr.bf16.mxu0 0
        %7083 = vmatpush1.bf16.msra.mxu0 0
        %7084 = vmatprep.subr.bf16.mxu0 0
        %7085 = vmatpush1.bf16.msra.mxu0 0
        %7086 = vmatprep.subr.bf16.mxu0 0
        %7087 = vmatpush1.bf16.msra.mxu0 0
        %7088 = vmatprep.subr.bf16.mxu0 0
        %7089 = vmatpush1.bf16.msra.mxu0 0
        %7090 = vmatprep.subr.bf16.mxu0 0
        %7091 = vmatpush1.bf16.msra.mxu0 0
        %7092 = vmatprep.mubr.bf16.mxu0 0
        %7093 = vmatmul.mubr.bf16.gmra.mrb[0].mxu0 %v7010
        %v7094 = vpop.f32.mrb[0].mxu0
        %v7095 = vadd.f32 %v6803, %v7094
        %v7096 = vpop.f32.mrb[0].mxu0
        %v7097 = vpop.f32.mrb[0].mxu0
        %v7098 = vadd.f32 %v6806, %v7097
        %v7099 = vpop.f32.mrb[0].mxu0
        %7100 = vmatprep.mubr.bf16.mxu0 0
        %7101 = vmatmul.mubr.bf16.gmra.mrb[0].mxu0 %v7013
        %v7102 = vpop.f32.mrb[0].mxu0
        %v7103 = vadd.f32 %v6811, %v7102
        %v7104 = vpop.f32.mrb[0].mxu0
        %v7105 = vpop.f32.mrb[0].mxu0
        %v7106 = vadd.f32 %v6814, %v7105
        %v7107 = vpop.f32.mrb[0].mxu0
        %7108 = vmatprep.mubr.bf16.mxu0 0
        %7109 = vmatmul.mubr.bf16.gmra.mrb[0].mxu0 %v7016
        %v7110 = vpop.f32.mrb[0].mxu0
        %v7111 = vadd.f32 %v6819, %v7110
        %v7112 = vpop.f32.mrb[0].mxu0
        %v7113 = vpop.f32.mrb[0].mxu0
        %v7114 = vadd.f32 %v6822, %v7113
        %v7115 = vpop.f32.mrb[0].mxu0
        %7116 = vmatprep.mubr.bf16.mxu0 0
        %7117 = vmatmul.mubr.bf16.gmra.mrb[0].mxu0 %v7019
        %v7118 = vpop.f32.mrb[0].mxu0
        %v7119 = vadd.f32 %v6827, %v7118
        %v7120 = vpop.f32.mrb[0].mxu0
        %v7121 = vpop.f32.mrb[0].mxu0
        %v7122 = vadd.f32 %v6830, %v7121
        %v7123 = vpop.f32.mrb[0].mxu0
        %7124 = vmatprep.mubr.bf16.mxu0 0
        %7125 = vmatmul.mubr.bf16.gmra.mrb[0].mxu0 %v7022
        %v7126 = vpop.f32.mrb[0].mxu0
        %v7127 = vadd.f32 %v6835, %v7126
        %v7128 = vpop.f32.mrb[0].mxu0
        %v7129 = vpop.f32.mrb[0].mxu0
        %v7130 = vadd.f32 %v6838, %v7129
        %v7131 = vpop.f32.mrb[0].mxu0
        %7132 = vmatprep.mubr.bf16.mxu0 0
        %7133 = vmatmul.mubr.bf16.gmra.mrb[0].mxu0 %v7025
        %v7134 = vpop.f32.mrb[0].mxu0
        %v7135 = vadd.f32 %v6843, %v7134
        %v7136 = vpop.f32.mrb[0].mxu0
        %v7137 = vpop.f32.mrb[0].mxu0
        %v7138 = vadd.f32 %v6846, %v7137
        %v7139 = vpop.f32.mrb[0].mxu0
        %7140 = vmatprep.mubr.bf16.mxu0 0
        %7141 = vmatmul.mubr.bf16.gmra.mrb[0].mxu0 %v7028
        %v7142 = vpop.f32.mrb[0].mxu0
        %v7143 = vadd.f32 %v6851, %v7142
        %v7144 = vpop.f32.mrb[0].mxu0
        %v7145 = vpop.f32.mrb[0].mxu0
        %v7146 = vadd.f32 %v6854, %v7145
        %v7147 = vpop.f32.mrb[0].mxu0
        %7148 = vmatprep.mubr.bf16.mxu0 0
        %7149 = vmatmul.mubr.bf16.gmra.mrb[0].mxu0 %v7031
        %v7150 = vpop.f32.mrb[0].mxu0
        %v7151 = vadd.f32 %v6859, %v7150
        %v7152 = vpop.f32.mrb[0].mxu0
        %v7153 = vpop.f32.mrb[0].mxu0
        %v7154 = vadd.f32 %v6862, %v7153
        %v7155 = vpop.f32.mrb[0].mxu0
        %7156 = vmatprep.mubr.bf16.mxu0 0
        %7157 = vmatmul.mubr.bf16.gmra.mrb[0].mxu0 %v7034
        %v7158 = vpop.f32.mrb[0].mxu0
        %v7159 = vadd.f32 %v6867, %v7158
        %v7160 = vpop.f32.mrb[0].mxu0
        %v7161 = vpop.f32.mrb[0].mxu0
        %v7162 = vadd.f32 %v6870, %v7161
        %v7163 = vpop.f32.mrb[0].mxu0
        %7164 = vmatprep.mubr.bf16.mxu0 0
        %7165 = vmatmul.mubr.bf16.gmra.mrb[0].mxu0 %v7037
        %v7166 = vpop.f32.mrb[0].mxu0
        %v7167 = vadd.f32 %v6875, %v7166
        %v7168 = vpop.f32.mrb[0].mxu0
        %v7169 = vpop.f32.mrb[0].mxu0
        %v7170 = vadd.f32 %v6878, %v7169
        %v7171 = vpop.f32.mrb[0].mxu0
        %7172 = vmatprep.mubr.bf16.mxu0 0
        %7173 = vmatmul.mubr.bf16.gmra.mrb[0].mxu0 %v7040
        %v7174 = vpop.f32.mrb[0].mxu0
        %v7175 = vadd.f32 %v6883, %v7174
        %v7176 = vpop.f32.mrb[0].mxu0
        %v7177 = vpop.f32.mrb[0].mxu0
        %v7178 = vadd.f32 %v6886, %v7177
        %v7179 = vpop.f32.mrb[0].mxu0
        %7180 = vmatprep.mubr.bf16.mxu0 0
        %7181 = vmatmul.mubr.bf16.gmra.mrb[0].mxu0 %v7043
        %v7182 = vpop.f32.mrb[0].mxu0
        %v7183 = vadd.f32 %v6891, %v7182
        %v7184 = vpop.f32.mrb[0].mxu0
        %v7185 = vpop.f32.mrb[0].mxu0
        %v7186 = vadd.f32 %v6894, %v7185
        %v7187 = vpop.f32.mrb[0].mxu0
        %7188 = vmatprep.mubr.bf16.mxu0 0
        %7189 = vmatmul.mubr.bf16.gmra.mrb[0].mxu0 %v7046
        %v7190 = vpop.f32.mrb[0].mxu0
        %v7191 = vadd.f32 %v6899, %v7190
        %v7192 = vpop.f32.mrb[0].mxu0
        %v7193 = vpop.f32.mrb[0].mxu0
        %v7194 = vadd.f32 %v6902, %v7193
        %v7195 = vpop.f32.mrb[0].mxu0
        %7196 = vmatprep.mubr.bf16.mxu0 0
        %7197 = vmatmul.mubr.bf16.gmra.mrb[0].mxu0 %v7049
        %v7198 = vpop.f32.mrb[0].mxu0
        %v7199 = vadd.f32 %v6907, %v7198
        %v7200 = vpop.f32.mrb[0].mxu0
        %v7201 = vpop.f32.mrb[0].mxu0
        %v7202 = vadd.f32 %v6910, %v7201
        %v7203 = vpop.f32.mrb[0].mxu0
        %7204 = vmatprep.mubr.bf16.mxu0 0
        %7205 = vmatmul.mubr.bf16.gmra.mrb[0].mxu0 %v7052
        %v7206 = vpop.f32.mrb[0].mxu0
        %v7207 = vadd.f32 %v6915, %v7206
        %v7208 = vpop.f32.mrb[0].mxu0
        %v7209 = vpop.f32.mrb[0].mxu0
        %v7210 = vadd.f32 %v6918, %v7209
        %v7211 = vpop.f32.mrb[0].mxu0
        %7212 = vmatprep.mubr.bf16.mxu0 0
        %7213 = vmatmul.mubr.bf16.gmra.mrb[0].mxu0 %v7055
        %v7214 = vpop.f32.mrb[0].mxu0
        %v7215 = vadd.f32 %v6923, %v7214
        %v7216 = vpop.f32.mrb[0].mxu0
        %v7217 = vpop.f32.mrb[0].mxu0
        %v7218 = vadd.f32 %v6926, %v7217
        %v7219 = vpop.f32.mrb[0].mxu0
        %7220 = vdwg.mxu0
        %v7221 = vld [vmem:[#allocation3] sm:$0xe]
        %v7222 = vld [vmem:[#allocation3 + $0xc] sm:$0xe]
        %v7223 = vld [vmem:[#allocation3 + $0x18] sm:$0xe]
        %v7224 = vld [vmem:[#allocation3 + $0x24] sm:$0xe]
        %v7225 = vld [vmem:[#allocation3 + $0x30] sm:$0xe]
        %v7226 = vld [vmem:[#allocation3 + $0x3c] sm:$0xe]
        %v7227 = vld [vmem:[#allocation3 + $0x48] sm:$0xe]
        %v7228 = vld [vmem:[#allocation3 + $0x54] sm:$0xe]
        %v7229 = vld [vmem:[#allocation3 + $0x60] sm:$0xe]
        %v7230 = vld [vmem:[#allocation3 + $0x6c] sm:$0xe]
        %v7231 = vld [vmem:[#allocation3 + $0x78] sm:$0xe]
        %v7232 = vld [vmem:[#allocation3 + $0x84] sm:$0xe]
        %v7233 = vld [vmem:[#allocation3 + $0x90] sm:$0xe]
        %v7234 = vld [vmem:[#allocation3 + $0x9c] sm:$0xe]
        %v7235 = vld [vmem:[#allocation3 + $0xa8] sm:$0xe]
        %v7236 = vld [vmem:[#allocation3 + $0xb4] sm:$0xe]
        %v7269 = vrot.slane %v7221, 5
        %v7270 = vrot.slane %v7269, 4
        %v7271 = vrot.slane %v6235, 5
        %v7272 = vsel %vm2119, %v7270, %v7271
        %v7273 = vrot.slane %v7271, 4
        %v7274 = vrot.slane %v6267, 5
        %v7275 = vsel %vm2119, %v7273, %v7274
        %v7276 = vrot.slane %v7222, 5
        %v7277 = vrot.slane %v7276, 4
        %v7278 = vrot.slane %v6237, 5
        %v7279 = vsel %vm2119, %v7277, %v7278
        %v7280 = vrot.slane %v7278, 4
        %v7281 = vrot.slane %v6268, 5
        %v7282 = vsel %vm2119, %v7280, %v7281
        %v7283 = vrot.slane %v7223, 5
        %v7284 = vrot.slane %v7283, 4
        %v7285 = vrot.slane %v6239, 5
        %v7286 = vsel %vm2119, %v7284, %v7285
        %v7287 = vrot.slane %v7285, 4
        %v7288 = vrot.slane %v6269, 5
        %v7289 = vsel %vm2119, %v7287, %v7288
        %v7290 = vrot.slane %v7224, 5
        %v7291 = vrot.slane %v7290, 4
        %v7292 = vrot.slane %v6241, 5
        %v7293 = vsel %vm2119, %v7291, %v7292
        %v7294 = vrot.slane %v7292, 4
        %v7295 = vrot.slane %v6270, 5
        %v7296 = vsel %vm2119, %v7294, %v7295
        %v7297 = vrot.slane %v7225, 5
        %v7298 = vrot.slane %v7297, 4
        %v7299 = vrot.slane %v6243, 5
        %v7300 = vsel %vm2119, %v7298, %v7299
        %v7301 = vrot.slane %v7299, 4
        %v7302 = vrot.slane %v6271, 5
        %v7303 = vsel %vm2119, %v7301, %v7302
        %v7304 = vrot.slane %v7226, 5
        %v7305 = vrot.slane %v7304, 4
        %v7306 = vrot.slane %v6245, 5
        %v7307 = vsel %vm2119, %v7305, %v7306
        %v7308 = vrot.slane %v7306, 4
        %v7309 = vrot.slane %v6272, 5
        %v7310 = vsel %vm2119, %v7308, %v7309
        %v7311 = vrot.slane %v7227, 5
        %v7312 = vrot.slane %v7311, 4
        %v7313 = vrot.slane %v6247, 5
        %v7314 = vsel %vm2119, %v7312, %v7313
        %v7315 = vrot.slane %v7313, 4
        %v7316 = vrot.slane %v6273, 5
        %v7317 = vsel %vm2119, %v7315, %v7316
        %v7318 = vrot.slane %v7228, 5
        %v7319 = vrot.slane %v7318, 4
        %v7320 = vrot.slane %v6249, 5
        %v7321 = vsel %vm2119, %v7319, %v7320
        %v7322 = vrot.slane %v7320, 4
        %v7323 = vrot.slane %v6274, 5
        %v7324 = vsel %vm2119, %v7322, %v7323
        %v7325 = vrot.slane %v7229, 5
        %v7326 = vrot.slane %v7325, 4
        %v7327 = vrot.slane %v6251, 5
        %v7328 = vsel %vm2119, %v7326, %v7327
        %v7329 = vrot.slane %v7327, 4
        %v7330 = vrot.slane %v6275, 5
        %v7331 = vsel %vm2119, %v7329, %v7330
        %v7332 = vrot.slane %v7230, 5
        %v7333 = vrot.slane %v7332, 4
        %v7334 = vrot.slane %v6253, 5
        %v7335 = vsel %vm2119, %v7333, %v7334
        %v7336 = vrot.slane %v7334, 4
        %v7337 = vrot.slane %v6276, 5
        %v7338 = vsel %vm2119, %v7336, %v7337
        %v7339 = vrot.slane %v7231, 5
        %v7340 = vrot.slane %v7339, 4
        %v7341 = vrot.slane %v6255, 5
        %v7342 = vsel %vm2119, %v7340, %v7341
        %v7343 = vrot.slane %v7341, 4
        %v7344 = vrot.slane %v6277, 5
        %v7345 = vsel %vm2119, %v7343, %v7344
        %v7346 = vrot.slane %v7232, 5
        %v7347 = vrot.slane %v7346, 4
        %v7348 = vrot.slane %v6257, 5
        %v7349 = vsel %vm2119, %v7347, %v7348
        %v7350 = vrot.slane %v7348, 4
        %v7351 = vrot.slane %v6278, 5
        %v7352 = vsel %vm2119, %v7350, %v7351
        %v7353 = vrot.slane %v7233, 5
        %v7354 = vrot.slane %v7353, 4
        %v7355 = vrot.slane %v6259, 5
        %v7356 = vsel %vm2119, %v7354, %v7355
        %v7357 = vrot.slane %v7355, 4
        %v7358 = vrot.slane %v6279, 5
        %v7359 = vsel %vm2119, %v7357, %v7358
        %v7360 = vrot.slane %v7234, 5
        %v7361 = vrot.slane %v7360, 4
        %v7362 = vrot.slane %v6261, 5
        %v7363 = vsel %vm2119, %v7361, %v7362
        %v7364 = vrot.slane %v7362, 4
        %v7365 = vrot.slane %v6280, 5
        %v7366 = vsel %vm2119, %v7364, %v7365
        %v7367 = vrot.slane %v7235, 5
        %v7368 = vrot.slane %v7367, 4
        %v7369 = vrot.slane %v6263, 5
        %v7370 = vsel %vm2119, %v7368, %v7369
        %v7371 = vrot.slane %v7369, 4
        %v7372 = vrot.slane %v6281, 5
        %v7373 = vsel %vm2119, %v7371, %v7372
        %v7374 = vrot.slane %v7236, 5
        %v7375 = vrot.slane %v7374, 4
        %v7376 = vrot.slane %v6265, 5
        %v7377 = vsel %vm2119, %v7375, %v7376
        %v7378 = vrot.slane %v7376, 4
        %v7379 = vrot.slane %v6282, 5
        %v7380 = vsel %vm2119, %v7378, %v7379
        %s7381 = scalar_lea.vmem [#allocation10], 4
        %v7382 = vld [vmem:[%s7381] sm:$0x3]
        %v7383 = vunpack.c.l.b16 %v7272
        %v7384 = vunpack.c.l.b16 %v7275
        %v7385 = vunpack.c.l.b16 %v7279
        %v7386 = vunpack.c.l.b16 %v7282
        %v7387 = vunpack.c.l.b16 %v7286
        %v7388 = vunpack.c.l.b16 %v7289
        %v7389 = vunpack.c.l.b16 %v7293
        %v7390 = vunpack.c.l.b16 %v7296
        %v7391 = vunpack.c.l.b16 %v7300
        %v7392 = vunpack.c.l.b16 %v7303
        %v7393 = vunpack.c.l.b16 %v7307
        %v7394 = vunpack.c.l.b16 %v7310
        %v7395 = vunpack.c.l.b16 %v7314
        %v7396 = vunpack.c.l.b16 %v7317
        %v7397 = vunpack.c.l.b16 %v7321
        %v7398 = vunpack.c.l.b16 %v7324
        %v7399 = vunpack.c.l.b16 %v7328
        %v7400 = vunpack.c.l.b16 %v7331
        %v7401 = vunpack.c.l.b16 %v7335
        %v7402 = vunpack.c.l.b16 %v7338
        %v7403 = vunpack.c.l.b16 %v7342
        %v7404 = vunpack.c.l.b16 %v7345
        %v7405 = vunpack.c.l.b16 %v7349
        %v7406 = vunpack.c.l.b16 %v7352
        %v7407 = vunpack.c.l.b16 %v7356
        %v7408 = vunpack.c.l.b16 %v7359
        %v7409 = vunpack.c.l.b16 %v7363
        %v7410 = vunpack.c.l.b16 %v7366
        %v7411 = vunpack.c.l.b16 %v7370
        %v7412 = vunpack.c.l.b16 %v7373
        %v7413 = vunpack.c.l.b16 %v7377
        %v7414 = vunpack.c.l.b16 %v7380
        %v7415 = vpack.c.b16 %v7384, %v7383
        %v7416 = vpack.c.b16 %v7386, %v7385
        %v7417 = vpack.c.b16 %v7388, %v7387
        %v7418 = vpack.c.b16 %v7390, %v7389
        %v7419 = vpack.c.b16 %v7392, %v7391
        %v7420 = vpack.c.b16 %v7394, %v7393
        %v7421 = vpack.c.b16 %v7396, %v7395
        %v7422 = vpack.c.b16 %v7398, %v7397
        %v7423 = vpack.c.b16 %v7400, %v7399
        %v7424 = vpack.c.b16 %v7402, %v7401
        %v7425 = vpack.c.b16 %v7404, %v7403
        %v7426 = vpack.c.b16 %v7406, %v7405
        %v7427 = vpack.c.b16 %v7408, %v7407
        %v7428 = vpack.c.b16 %v7410, %v7409
        %v7429 = vpack.c.b16 %v7412, %v7411
        %v7430 = vpack.c.b16 %v7414, %v7413
        %v7432 = vsel %vm1563, %v7415, 0
        %v7435 = vsel %vm1563, %v7416, 0
        %v7438 = vsel %vm1563, %v7417, 0
        %v7441 = vsel %vm1563, %v7418, 0
        %v7444 = vsel %vm1563, %v7419, 0
        %v7447 = vsel %vm1563, %v7420, 0
        %v7450 = vsel %vm1563, %v7421, 0
        %v7453 = vsel %vm1563, %v7422, 0
        %v7456 = vsel %vm1563, %v7423, 0
        %v7459 = vsel %vm1563, %v7424, 0
        %v7462 = vsel %vm1563, %v7425, 0
        %v7465 = vsel %vm1563, %v7426, 0
        %v7468 = vsel %vm1563, %v7427, 0
        %v7471 = vsel %vm1563, %v7428, 0
        %v7474 = vsel %vm1563, %v7429, 0
        %v7477 = vsel %vm1563, %v7430, 0
        %v7480 = vsel %vm1612, %v7382, 0
        %7482 = vmatprep.subr.bf16.mxu0 0
        %7483 = vmatpush1.bf16.msra.mxu0 %v7480
        %7484 = vmatprep.subr.bf16.mxu0 0
        %7485 = vmatpush1.bf16.msra.mxu0 0
        %7486 = vmatprep.subr.bf16.mxu0 0
        %7487 = vmatpush1.bf16.msra.mxu0 0
        %7488 = vmatprep.subr.bf16.mxu0 0
        %7489 = vmatpush1.bf16.msra.mxu0 0
        %7490 = vmatprep.subr.bf16.mxu0 0
        %7491 = vmatpush1.bf16.msra.mxu0 0
        %7492 = vmatprep.subr.bf16.mxu0 0
        %7493 = vmatpush1.bf16.msra.mxu0 0
        %7494 = vmatprep.subr.bf16.mxu0 0
        %7495 = vmatpush1.bf16.msra.mxu0 0
        %7496 = vmatprep.subr.bf16.mxu0 0
        %7497 = vmatpush1.bf16.msra.mxu0 0
        %7498 = vmatprep.subr.bf16.mxu0 0
        %7499 = vmatpush1.bf16.msra.mxu0 0
        %7500 = vmatprep.subr.bf16.mxu0 0
        %7501 = vmatpush1.bf16.msra.mxu0 0
        %7502 = vmatprep.subr.bf16.mxu0 0
        %7503 = vmatpush1.bf16.msra.mxu0 0
        %7504 = vmatprep.subr.bf16.mxu0 0
        %7505 = vmatpush1.bf16.msra.mxu0 0
        %7506 = vmatprep.subr.bf16.mxu0 0
        %7507 = vmatpush1.bf16.msra.mxu0 0
        %7508 = vmatprep.subr.bf16.mxu0 0
        %7509 = vmatpush1.bf16.msra.mxu0 0
        %7510 = vmatprep.subr.bf16.mxu0 0
        %7511 = vmatpush1.bf16.msra.mxu0 0
        %7512 = vmatprep.subr.bf16.mxu0 0
        %7513 = vmatpush1.bf16.msra.mxu0 0
        %7514 = vmatprep.mubr.bf16.mxu0 0
        %7515 = vmatmul.mubr.bf16.gmra.mrb[0].mxu0 %v7432
        %v7516 = vpop.f32.mrb[0].mxu0
        %v7517 = vadd.f32 0.0, %v7516
        %v7518 = vpop.f32.mrb[0].mxu0
        %v7519 = vpop.f32.mrb[0].mxu0
        %v7520 = vadd.f32 0.0, %v7519
        %v7521 = vpop.f32.mrb[0].mxu0
        %7522 = vmatprep.mubr.bf16.mxu0 0
        %7523 = vmatmul.mubr.bf16.gmra.mrb[0].mxu0 %v7435
        %v7524 = vpop.f32.mrb[0].mxu0
        %v7525 = vadd.f32 0.0, %v7524
        %v7526 = vpop.f32.mrb[0].mxu0
        %v7527 = vpop.f32.mrb[0].mxu0
        %v7528 = vadd.f32 0.0, %v7527
        %v7529 = vpop.f32.mrb[0].mxu0
        %7530 = vmatprep.mubr.bf16.mxu0 0
        %7531 = vmatmul.mubr.bf16.gmra.mrb[0].mxu0 %v7438
        %v7532 = vpop.f32.mrb[0].mxu0
        %v7533 = vadd.f32 0.0, %v7532
        %v7534 = vpop.f32.mrb[0].mxu0
        %v7535 = vpop.f32.mrb[0].mxu0
        %v7536 = vadd.f32 0.0, %v7535
        %v7537 = vpop.f32.mrb[0].mxu0
        %7538 = vmatprep.mubr.bf16.mxu0 0
        %7539 = vmatmul.mubr.bf16.gmra.mrb[0].mxu0 %v7441
        %v7540 = vpop.f32.mrb[0].mxu0
        %v7541 = vadd.f32 0.0, %v7540
        %v7542 = vpop.f32.mrb[0].mxu0
        %v7543 = vpop.f32.mrb[0].mxu0
        %v7544 = vadd.f32 0.0, %v7543
        %v7545 = vpop.f32.mrb[0].mxu0
        %7546 = vmatprep.mubr.bf16.mxu0 0
        %7547 = vmatmul.mubr.bf16.gmra.mrb[0].mxu0 %v7444
        %v7548 = vpop.f32.mrb[0].mxu0
        %v7549 = vadd.f32 0.0, %v7548
        %v7550 = vpop.f32.mrb[0].mxu0
        %v7551 = vpop.f32.mrb[0].mxu0
        %v7552 = vadd.f32 0.0, %v7551
        %v7553 = vpop.f32.mrb[0].mxu0
        %7554 = vmatprep.mubr.bf16.mxu0 0
        %7555 = vmatmul.mubr.bf16.gmra.mrb[0].mxu0 %v7447
        %v7556 = vpop.f32.mrb[0].mxu0
        %v7557 = vadd.f32 0.0, %v7556
        %v7558 = vpop.f32.mrb[0].mxu0
        %v7559 = vpop.f32.mrb[0].mxu0
        %v7560 = vadd.f32 0.0, %v7559
        %v7561 = vpop.f32.mrb[0].mxu0
        %7562 = vmatprep.mubr.bf16.mxu0 0
        %7563 = vmatmul.mubr.bf16.gmra.mrb[0].mxu0 %v7450
        %v7564 = vpop.f32.mrb[0].mxu0
        %v7565 = vadd.f32 0.0, %v7564
        %v7566 = vpop.f32.mrb[0].mxu0
        %v7567 = vpop.f32.mrb[0].mxu0
        %v7568 = vadd.f32 0.0, %v7567
        %v7569 = vpop.f32.mrb[0].mxu0
        %7570 = vmatprep.mubr.bf16.mxu0 0
        %7571 = vmatmul.mubr.bf16.gmra.mrb[0].mxu0 %v7453
        %v7572 = vpop.f32.mrb[0].mxu0
        %v7573 = vadd.f32 0.0, %v7572
        %v7574 = vpop.f32.mrb[0].mxu0
        %v7575 = vpop.f32.mrb[0].mxu0
        %v7576 = vadd.f32 0.0, %v7575
        %v7577 = vpop.f32.mrb[0].mxu0
        %7578 = vmatprep.mubr.bf16.mxu0 0
        %7579 = vmatmul.mubr.bf16.gmra.mrb[0].mxu0 %v7456
        %v7580 = vpop.f32.mrb[0].mxu0
        %v7581 = vadd.f32 0.0, %v7580
        %v7582 = vpop.f32.mrb[0].mxu0
        %v7583 = vpop.f32.mrb[0].mxu0
        %v7584 = vadd.f32 0.0, %v7583
        %v7585 = vpop.f32.mrb[0].mxu0
        %7586 = vmatprep.mubr.bf16.mxu0 0
        %7587 = vmatmul.mubr.bf16.gmra.mrb[0].mxu0 %v7459
        %v7588 = vpop.f32.mrb[0].mxu0
        %v7589 = vadd.f32 0.0, %v7588
        %v7590 = vpop.f32.mrb[0].mxu0
        %v7591 = vpop.f32.mrb[0].mxu0
        %v7592 = vadd.f32 0.0, %v7591
        %v7593 = vpop.f32.mrb[0].mxu0
        %7594 = vmatprep.mubr.bf16.mxu0 0
        %7595 = vmatmul.mubr.bf16.gmra.mrb[0].mxu0 %v7462
        %v7596 = vpop.f32.mrb[0].mxu0
        %v7597 = vadd.f32 0.0, %v7596
        %v7598 = vpop.f32.mrb[0].mxu0
        %v7599 = vpop.f32.mrb[0].mxu0
        %v7600 = vadd.f32 0.0, %v7599
        %v7601 = vpop.f32.mrb[0].mxu0
        %7602 = vmatprep.mubr.bf16.mxu0 0
        %7603 = vmatmul.mubr.bf16.gmra.mrb[0].mxu0 %v7465
        %v7604 = vpop.f32.mrb[0].mxu0
        %v7605 = vadd.f32 0.0, %v7604
        %v7606 = vpop.f32.mrb[0].mxu0
        %v7607 = vpop.f32.mrb[0].mxu0
        %v7608 = vadd.f32 0.0, %v7607
        %v7609 = vpop.f32.mrb[0].mxu0
        %7610 = vmatprep.mubr.bf16.mxu0 0
        %7611 = vmatmul.mubr.bf16.gmra.mrb[0].mxu0 %v7468
        %v7612 = vpop.f32.mrb[0].mxu0
        %v7613 = vadd.f32 0.0, %v7612
        %v7614 = vpop.f32.mrb[0].mxu0
        %v7615 = vpop.f32.mrb[0].mxu0
        %v7616 = vadd.f32 0.0, %v7615
        %v7617 = vpop.f32.mrb[0].mxu0
        %7618 = vmatprep.mubr.bf16.mxu0 0
        %7619 = vmatmul.mubr.bf16.gmra.mrb[0].mxu0 %v7471
        %v7620 = vpop.f32.mrb[0].mxu0
        %v7621 = vadd.f32 0.0, %v7620
        %v7622 = vpop.f32.mrb[0].mxu0
        %v7623 = vpop.f32.mrb[0].mxu0
        %v7624 = vadd.f32 0.0, %v7623
        %v7625 = vpop.f32.mrb[0].mxu0
        %7626 = vmatprep.mubr.bf16.mxu0 0
        %7627 = vmatmul.mubr.bf16.gmra.mrb[0].mxu0 %v7474
        %v7628 = vpop.f32.mrb[0].mxu0
        %v7629 = vadd.f32 0.0, %v7628
        %v7630 = vpop.f32.mrb[0].mxu0
        %v7631 = vpop.f32.mrb[0].mxu0
        %v7632 = vadd.f32 0.0, %v7631
        %v7633 = vpop.f32.mrb[0].mxu0
        %7634 = vmatprep.mubr.bf16.mxu0 0
        %7635 = vmatmul.mubr.bf16.gmra.mrb[0].mxu0 %v7477
        %v7636 = vpop.f32.mrb[0].mxu0
        %v7637 = vadd.f32 0.0, %v7636
        %v7638 = vpop.f32.mrb[0].mxu0
        %v7639 = vpop.f32.mrb[0].mxu0
        %v7640 = vadd.f32 0.0, %v7639
        %v7641 = vpop.f32.mrb[0].mxu0
        %7642 = vdwg.mxu0
        %v7643 = vadd.f32 %v7095, %v7517
        %v7644 = vadd.f32 %v7098, %v7520
        %v7645 = vadd.f32 %v7103, %v7525
        %v7646 = vadd.f32 %v7106, %v7528
        %v7647 = vadd.f32 %v7111, %v7533
        %v7648 = vadd.f32 %v7114, %v7536
        %v7649 = vadd.f32 %v7119, %v7541
        %v7650 = vadd.f32 %v7122, %v7544
        %v7651 = vadd.f32 %v7127, %v7549
        %v7652 = vadd.f32 %v7130, %v7552
        %v7653 = vadd.f32 %v7135, %v7557
        %v7654 = vadd.f32 %v7138, %v7560
        %v7655 = vadd.f32 %v7143, %v7565
        %v7656 = vadd.f32 %v7146, %v7568
        %v7657 = vadd.f32 %v7151, %v7573
        %v7658 = vadd.f32 %v7154, %v7576
        %v7659 = vadd.f32 %v7159, %v7581
        %v7660 = vadd.f32 %v7162, %v7584
        %v7661 = vadd.f32 %v7167, %v7589
        %v7662 = vadd.f32 %v7170, %v7592
        %v7663 = vadd.f32 %v7175, %v7597
        %v7664 = vadd.f32 %v7178, %v7600
        %v7665 = vadd.f32 %v7183, %v7605
        %v7666 = vadd.f32 %v7186, %v7608
        %v7667 = vadd.f32 %v7191, %v7613
        %v7668 = vadd.f32 %v7194, %v7616
        %v7669 = vadd.f32 %v7199, %v7621
        %v7670 = vadd.f32 %v7202, %v7624
        %v7671 = vadd.f32 %v7207, %v7629
        %v7672 = vadd.f32 %v7210, %v7632
        %v7673 = vadd.f32 %v7215, %v7637
        %v7674 = vadd.f32 %v7218, %v7640
        %v7675 = vld [vmem:[%s416] sm:$0xf]
        %v7676 = vld [vmem:[%s416 + $0x4] sm:$0xf]
        %v7677 = vld [vmem:[%s416 + $0xc] sm:$0xf]
        %v7678 = vld [vmem:[%s416 + $0x10] sm:$0xf]
        %v7679 = vld [vmem:[%s416 + $0x18] sm:$0xf]
        %v7680 = vld [vmem:[%s416 + $0x1c] sm:$0xf]
        %v7681 = vld [vmem:[%s416 + $0x24] sm:$0xf]
        %v7682 = vld [vmem:[%s416 + $0x28] sm:$0xf]
        %v7683 = vld [vmem:[%s416 + $0x30] sm:$0xf]
        %v7684 = vld [vmem:[%s416 + $0x34] sm:$0xf]
        %v7685 = vld [vmem:[%s416 + $0x3c] sm:$0xf]
        %v7686 = vld [vmem:[%s416 + $0x40] sm:$0xf]
        %v7687 = vld [vmem:[%s416 + $0x48] sm:$0xf]
        %v7688 = vld [vmem:[%s416 + $0x4c] sm:$0xf]
        %v7689 = vld [vmem:[%s416 + $0x54] sm:$0xf]
        %v7690 = vld [vmem:[%s416 + $0x58] sm:$0xf]
        %v7691 = vld [vmem:[%s416 + $0x60] sm:$0xf]
        %v7692 = vld [vmem:[%s416 + $0x64] sm:$0xf]
        %v7693 = vld [vmem:[%s416 + $0x6c] sm:$0xf]
        %v7694 = vld [vmem:[%s416 + $0x70] sm:$0xf]
        %v7695 = vld [vmem:[%s416 + $0x78] sm:$0xf]
        %v7696 = vld [vmem:[%s416 + $0x7c] sm:$0xf]
        %v7697 = vld [vmem:[%s416 + $0x84] sm:$0xf]
        %v7698 = vld [vmem:[%s416 + $0x88] sm:$0xf]
        %v7699 = vld [vmem:[%s416 + $0x90] sm:$0xf]
        %v7700 = vld [vmem:[%s416 + $0x94] sm:$0xf]
        %v7701 = vld [vmem:[%s416 + $0x9c] sm:$0xf]
        %v7702 = vld [vmem:[%s416 + $0xa0] sm:$0xf]
        %v7703 = vld [vmem:[%s416 + $0xa8] sm:$0xf]
        %v7704 = vld [vmem:[%s416 + $0xac] sm:$0xf]
        %v7705 = vld [vmem:[%s416 + $0xb4] sm:$0xf]
        %v7706 = vld [vmem:[%s416 + $0xb8] sm:$0xf]
        %s7707 = scalar_lea.vmem [#allocation10], 6
        %v7708 = vld [vmem:[%s7707] sm:$0x3]
        %v7741 = vunpack.c.l.b16 %v7675
        %v7742 = vunpack.c.l.b16 %v7676
        %v7743 = vunpack.c.l.b16 %v7677
        %v7744 = vunpack.c.l.b16 %v7678
        %v7745 = vunpack.c.l.b16 %v7679
        %v7746 = vunpack.c.l.b16 %v7680
        %v7747 = vunpack.c.l.b16 %v7681
        %v7748 = vunpack.c.l.b16 %v7682
        %v7749 = vunpack.c.l.b16 %v7683
        %v7750 = vunpack.c.l.b16 %v7684
        %v7751 = vunpack.c.l.b16 %v7685
        %v7752 = vunpack.c.l.b16 %v7686
        %v7753 = vunpack.c.l.b16 %v7687
        %v7754 = vunpack.c.l.b16 %v7688
        %v7755 = vunpack.c.l.b16 %v7689
        %v7756 = vunpack.c.l.b16 %v7690
        %v7757 = vunpack.c.l.b16 %v7691
        %v7758 = vunpack.c.l.b16 %v7692
        %v7759 = vunpack.c.l.b16 %v7693
        %v7760 = vunpack.c.l.b16 %v7694
        %v7761 = vunpack.c.l.b16 %v7695
        %v7762 = vunpack.c.l.b16 %v7696
        %v7763 = vunpack.c.l.b16 %v7697
        %v7764 = vunpack.c.l.b16 %v7698
        %v7765 = vunpack.c.l.b16 %v7699
        %v7766 = vunpack.c.l.b16 %v7700
        %v7767 = vunpack.c.l.b16 %v7701
        %v7768 = vunpack.c.l.b16 %v7702
        %v7769 = vunpack.c.l.b16 %v7703
        %v7770 = vunpack.c.l.b16 %v7704
        %v7771 = vunpack.c.l.b16 %v7705
        %v7772 = vunpack.c.l.b16 %v7706
        %v7773 = vpack.c.b16 %v7742, %v7741
        %v7774 = vpack.c.b16 %v7744, %v7743
        %v7775 = vpack.c.b16 %v7746, %v7745
        %v7776 = vpack.c.b16 %v7748, %v7747
        %v7777 = vpack.c.b16 %v7750, %v7749
        %v7778 = vpack.c.b16 %v7752, %v7751
        %v7779 = vpack.c.b16 %v7754, %v7753
        %v7780 = vpack.c.b16 %v7756, %v7755
        %v7781 = vpack.c.b16 %v7758, %v7757
        %v7782 = vpack.c.b16 %v7760, %v7759
        %v7783 = vpack.c.b16 %v7762, %v7761
        %v7784 = vpack.c.b16 %v7764, %v7763
        %v7785 = vpack.c.b16 %v7766, %v7765
        %v7786 = vpack.c.b16 %v7768, %v7767
        %v7787 = vpack.c.b16 %v7770, %v7769
        %v7788 = vpack.c.b16 %v7772, %v7771
        %v7790 = vsel %vm1563, %v7773, 0
        %v7793 = vsel %vm1563, %v7774, 0
        %v7796 = vsel %vm1563, %v7775, 0
        %v7799 = vsel %vm1563, %v7776, 0
        %v7802 = vsel %vm1563, %v7777, 0
        %v7805 = vsel %vm1563, %v7778, 0
        %v7808 = vsel %vm1563, %v7779, 0
        %v7811 = vsel %vm1563, %v7780, 0
        %v7814 = vsel %vm1563, %v7781, 0
        %v7817 = vsel %vm1563, %v7782, 0
        %v7820 = vsel %vm1563, %v7783, 0
        %v7823 = vsel %vm1563, %v7784, 0
        %v7826 = vsel %vm1563, %v7785, 0
        %v7829 = vsel %vm1563, %v7786, 0
        %v7832 = vsel %vm1563, %v7787, 0
        %v7835 = vsel %vm1563, %v7788, 0
        %v7838 = vsel %vm1612, %v7708, 0
        %7840 = vmatprep.subr.bf16.mxu0 0
        %7841 = vmatpush1.bf16.msra.mxu0 %v7838
        %7842 = vmatprep.subr.bf16.mxu0 0
        %7843 = vmatpush1.bf16.msra.mxu0 0
        %7844 = vmatprep.subr.bf16.mxu0 0
        %7845 = vmatpush1.bf16.msra.mxu0 0
        %7846 = vmatprep.subr.bf16.mxu0 0
        %7847 = vmatpush1.bf16.msra.mxu0 0
        %7848 = vmatprep.subr.bf16.mxu0 0
        %7849 = vmatpush1.bf16.msra.mxu0 0
        %7850 = vmatprep.subr.bf16.mxu0 0
        %7851 = vmatpush1.bf16.msra.mxu0 0
        %7852 = vmatprep.subr.bf16.mxu0 0
        %7853 = vmatpush1.bf16.msra.mxu0 0
        %7854 = vmatprep.subr.bf16.mxu0 0
        %7855 = vmatpush1.bf16.msra.mxu0 0
        %7856 = vmatprep.subr.bf16.mxu0 0
        %7857 = vmatpush1.bf16.msra.mxu0 0
        %7858 = vmatprep.subr.bf16.mxu0 0
        %7859 = vmatpush1.bf16.msra.mxu0 0
        %7860 = vmatprep.subr.bf16.mxu0 0
        %7861 = vmatpush1.bf16.msra.mxu0 0
        %7862 = vmatprep.subr.bf16.mxu0 0
        %7863 = vmatpush1.bf16.msra.mxu0 0
        %7864 = vmatprep.subr.bf16.mxu0 0
        %7865 = vmatpush1.bf16.msra.mxu0 0
        %7866 = vmatprep.subr.bf16.mxu0 0
        %7867 = vmatpush1.bf16.msra.mxu0 0
        %7868 = vmatprep.subr.bf16.mxu0 0
        %7869 = vmatpush1.bf16.msra.mxu0 0
        %7870 = vmatprep.subr.bf16.mxu0 0
        %7871 = vmatpush1.bf16.msra.mxu0 0
        %7872 = vmatprep.mubr.bf16.mxu0 0
        %7873 = vmatmul.mubr.bf16.gmra.mrb[0].mxu0 %v7790
        %v7874 = vpop.f32.mrb[0].mxu0
        %v7875 = vadd.f32 0.0, %v7874
        %v7876 = vpop.f32.mrb[0].mxu0
        %v7877 = vpop.f32.mrb[0].mxu0
        %v7878 = vadd.f32 0.0, %v7877
        %v7879 = vpop.f32.mrb[0].mxu0
        %7880 = vmatprep.mubr.bf16.mxu0 0
        %7881 = vmatmul.mubr.bf16.gmra.mrb[0].mxu0 %v7793
        %v7882 = vpop.f32.mrb[0].mxu0
        %v7883 = vadd.f32 0.0, %v7882
        %v7884 = vpop.f32.mrb[0].mxu0
        %v7885 = vpop.f32.mrb[0].mxu0
        %v7886 = vadd.f32 0.0, %v7885
        %v7887 = vpop.f32.mrb[0].mxu0
        %7888 = vmatprep.mubr.bf16.mxu0 0
        %7889 = vmatmul.mubr.bf16.gmra.mrb[0].mxu0 %v7796
        %v7890 = vpop.f32.mrb[0].mxu0
        %v7891 = vadd.f32 0.0, %v7890
        %v7892 = vpop.f32.mrb[0].mxu0
        %v7893 = vpop.f32.mrb[0].mxu0
        %v7894 = vadd.f32 0.0, %v7893
        %v7895 = vpop.f32.mrb[0].mxu0
        %7896 = vmatprep.mubr.bf16.mxu0 0
        %7897 = vmatmul.mubr.bf16.gmra.mrb[0].mxu0 %v7799
        %v7898 = vpop.f32.mrb[0].mxu0
        %v7899 = vadd.f32 0.0, %v7898
        %v7900 = vpop.f32.mrb[0].mxu0
        %v7901 = vpop.f32.mrb[0].mxu0
        %v7902 = vadd.f32 0.0, %v7901
        %v7903 = vpop.f32.mrb[0].mxu0
        %7904 = vmatprep.mubr.bf16.mxu0 0
        %7905 = vmatmul.mubr.bf16.gmra.mrb[0].mxu0 %v7802
        %v7906 = vpop.f32.mrb[0].mxu0
        %v7907 = vadd.f32 0.0, %v7906
        %v7908 = vpop.f32.mrb[0].mxu0
        %v7909 = vpop.f32.mrb[0].mxu0
        %v7910 = vadd.f32 0.0, %v7909
        %v7911 = vpop.f32.mrb[0].mxu0
        %7912 = vmatprep.mubr.bf16.mxu0 0
        %7913 = vmatmul.mubr.bf16.gmra.mrb[0].mxu0 %v7805
        %v7914 = vpop.f32.mrb[0].mxu0
        %v7915 = vadd.f32 0.0, %v7914
        %v7916 = vpop.f32.mrb[0].mxu0
        %v7917 = vpop.f32.mrb[0].mxu0
        %v7918 = vadd.f32 0.0, %v7917
        %v7919 = vpop.f32.mrb[0].mxu0
        %7920 = vmatprep.mubr.bf16.mxu0 0
        %7921 = vmatmul.mubr.bf16.gmra.mrb[0].mxu0 %v7808
        %v7922 = vpop.f32.mrb[0].mxu0
        %v7923 = vadd.f32 0.0, %v7922
        %v7924 = vpop.f32.mrb[0].mxu0
        %v7925 = vpop.f32.mrb[0].mxu0
        %v7926 = vadd.f32 0.0, %v7925
        %v7927 = vpop.f32.mrb[0].mxu0
        %7928 = vmatprep.mubr.bf16.mxu0 0
        %7929 = vmatmul.mubr.bf16.gmra.mrb[0].mxu0 %v7811
        %v7930 = vpop.f32.mrb[0].mxu0
        %v7931 = vadd.f32 0.0, %v7930
        %v7932 = vpop.f32.mrb[0].mxu0
        %v7933 = vpop.f32.mrb[0].mxu0
        %v7934 = vadd.f32 0.0, %v7933
        %v7935 = vpop.f32.mrb[0].mxu0
        %7936 = vmatprep.mubr.bf16.mxu0 0
        %7937 = vmatmul.mubr.bf16.gmra.mrb[0].mxu0 %v7814
        %v7938 = vpop.f32.mrb[0].mxu0
        %v7939 = vadd.f32 0.0, %v7938
        %v7940 = vpop.f32.mrb[0].mxu0
        %v7941 = vpop.f32.mrb[0].mxu0
        %v7942 = vadd.f32 0.0, %v7941
        %v7943 = vpop.f32.mrb[0].mxu0
        %7944 = vmatprep.mubr.bf16.mxu0 0
        %7945 = vmatmul.mubr.bf16.gmra.mrb[0].mxu0 %v7817
        %v7946 = vpop.f32.mrb[0].mxu0
        %v7947 = vadd.f32 0.0, %v7946
        %v7948 = vpop.f32.mrb[0].mxu0
        %v7949 = vpop.f32.mrb[0].mxu0
        %v7950 = vadd.f32 0.0, %v7949
        %v7951 = vpop.f32.mrb[0].mxu0
        %7952 = vmatprep.mubr.bf16.mxu0 0
        %7953 = vmatmul.mubr.bf16.gmra.mrb[0].mxu0 %v7820
        %v7954 = vpop.f32.mrb[0].mxu0
        %v7955 = vadd.f32 0.0, %v7954
        %v7956 = vpop.f32.mrb[0].mxu0
        %v7957 = vpop.f32.mrb[0].mxu0
        %v7958 = vadd.f32 0.0, %v7957
        %v7959 = vpop.f32.mrb[0].mxu0
        %7960 = vmatprep.mubr.bf16.mxu0 0
        %7961 = vmatmul.mubr.bf16.gmra.mrb[0].mxu0 %v7823
        %v7962 = vpop.f32.mrb[0].mxu0
        %v7963 = vadd.f32 0.0, %v7962
        %v7964 = vpop.f32.mrb[0].mxu0
        %v7965 = vpop.f32.mrb[0].mxu0
        %v7966 = vadd.f32 0.0, %v7965
        %v7967 = vpop.f32.mrb[0].mxu0
        %7968 = vmatprep.mubr.bf16.mxu0 0
        %7969 = vmatmul.mubr.bf16.gmra.mrb[0].mxu0 %v7826
        %v7970 = vpop.f32.mrb[0].mxu0
        %v7971 = vadd.f32 0.0, %v7970
        %v7972 = vpop.f32.mrb[0].mxu0
        %v7973 = vpop.f32.mrb[0].mxu0
        %v7974 = vadd.f32 0.0, %v7973
        %v7975 = vpop.f32.mrb[0].mxu0
        %7976 = vmatprep.mubr.bf16.mxu0 0
        %7977 = vmatmul.mubr.bf16.gmra.mrb[0].mxu0 %v7829
        %v7978 = vpop.f32.mrb[0].mxu0
        %v7979 = vadd.f32 0.0, %v7978
        %v7980 = vpop.f32.mrb[0].mxu0
        %v7981 = vpop.f32.mrb[0].mxu0
        %v7982 = vadd.f32 0.0, %v7981
        %v7983 = vpop.f32.mrb[0].mxu0
        %7984 = vmatprep.mubr.bf16.mxu0 0
        %7985 = vmatmul.mubr.bf16.gmra.mrb[0].mxu0 %v7832
        %v7986 = vpop.f32.mrb[0].mxu0
        %v7987 = vadd.f32 0.0, %v7986
        %v7988 = vpop.f32.mrb[0].mxu0
        %v7989 = vpop.f32.mrb[0].mxu0
        %v7990 = vadd.f32 0.0, %v7989
        %v7991 = vpop.f32.mrb[0].mxu0
        %7992 = vmatprep.mubr.bf16.mxu0 0
        %7993 = vmatmul.mubr.bf16.gmra.mrb[0].mxu0 %v7835
        %v7994 = vpop.f32.mrb[0].mxu0
        %v7995 = vadd.f32 0.0, %v7994
        %v7996 = vpop.f32.mrb[0].mxu0
        %v7997 = vpop.f32.mrb[0].mxu0
        %v7998 = vadd.f32 0.0, %v7997
        %v7999 = vpop.f32.mrb[0].mxu0
        %8000 = vdwg.mxu0
        %v8001 = vadd.f32 %v7643, %v7875
        %v8002 = vadd.f32 %v7644, %v7878
        %v8003 = vadd.f32 %v7645, %v7883
        %v8004 = vadd.f32 %v7646, %v7886
        %v8005 = vadd.f32 %v7647, %v7891
        %v8006 = vadd.f32 %v7648, %v7894
        %v8007 = vadd.f32 %v7649, %v7899
        %v8008 = vadd.f32 %v7650, %v7902
        %v8009 = vadd.f32 %v7651, %v7907
        %v8010 = vadd.f32 %v7652, %v7910
        %v8011 = vadd.f32 %v7653, %v7915
        %v8012 = vadd.f32 %v7654, %v7918
        %v8013 = vadd.f32 %v7655, %v7923
        %v8014 = vadd.f32 %v7656, %v7926
        %v8015 = vadd.f32 %v7657, %v7931
        %v8016 = vadd.f32 %v7658, %v7934
        %v8017 = vadd.f32 %v7659, %v7939
        %v8018 = vadd.f32 %v7660, %v7942
        %v8019 = vadd.f32 %v7661, %v7947
        %v8020 = vadd.f32 %v7662, %v7950
        %v8021 = vadd.f32 %v7663, %v7955
        %v8022 = vadd.f32 %v7664, %v7958
        %v8023 = vadd.f32 %v7665, %v7963
        %v8024 = vadd.f32 %v7666, %v7966
        %v8025 = vadd.f32 %v7667, %v7971
        %v8026 = vadd.f32 %v7668, %v7974
        %v8027 = vadd.f32 %v7669, %v7979
        %v8028 = vadd.f32 %v7670, %v7982
        %v8029 = vadd.f32 %v7671, %v7987
        %v8030 = vadd.f32 %v7672, %v7990
        %v8031 = vadd.f32 %v7673, %v7995
        %v8032 = vadd.f32 %v7674, %v7998
        %v8033 = vld [vmem:[%s416] sm:$0xf]
        %v8034 = vld [vmem:[%s416 + $0x4] sm:$0xf]
        %v8035 = vld [vmem:[%s416 + $0x8] sm:$0x1]
        %v8036 = vld [vmem:[%s416 + $0xc] sm:$0xf]
        %v8037 = vld [vmem:[%s416 + $0x10] sm:$0xf]
        %v8038 = vld [vmem:[%s416 + $0x14] sm:$0x1]
        %v8039 = vld [vmem:[%s416 + $0x18] sm:$0xf]
        %v8040 = vld [vmem:[%s416 + $0x1c] sm:$0xf]
        %v8041 = vld [vmem:[%s416 + $0x20] sm:$0x1]
        %v8042 = vld [vmem:[%s416 + $0x24] sm:$0xf]
        %v8043 = vld [vmem:[%s416 + $0x28] sm:$0xf]
        %v8044 = vld [vmem:[%s416 + $0x2c] sm:$0x1]
        %v8045 = vld [vmem:[%s416 + $0x30] sm:$0xf]
        %v8046 = vld [vmem:[%s416 + $0x34] sm:$0xf]
        %v8047 = vld [vmem:[%s416 + $0x38] sm:$0x1]
        %v8048 = vld [vmem:[%s416 + $0x3c] sm:$0xf]
        %v8049 = vld [vmem:[%s416 + $0x40] sm:$0xf]
        %v8050 = vld [vmem:[%s416 + $0x44] sm:$0x1]
        %v8051 = vld [vmem:[%s416 + $0x48] sm:$0xf]
        %v8052 = vld [vmem:[%s416 + $0x4c] sm:$0xf]
        %v8053 = vld [vmem:[%s416 + $0x50] sm:$0x1]
        %v8054 = vld [vmem:[%s416 + $0x54] sm:$0xf]
        %v8055 = vld [vmem:[%s416 + $0x58] sm:$0xf]
        %v8056 = vld [vmem:[%s416 + $0x5c] sm:$0x1]
        %v8057 = vld [vmem:[%s416 + $0x60] sm:$0xf]
        %v8058 = vld [vmem:[%s416 + $0x64] sm:$0xf]
        %v8059 = vld [vmem:[%s416 + $0x68] sm:$0x1]
        %v8060 = vld [vmem:[%s416 + $0x6c] sm:$0xf]
        %v8061 = vld [vmem:[%s416 + $0x70] sm:$0xf]
        %v8062 = vld [vmem:[%s416 + $0x74] sm:$0x1]
        %v8063 = vld [vmem:[%s416 + $0x78] sm:$0xf]
        %v8064 = vld [vmem:[%s416 + $0x7c] sm:$0xf]
        %v8065 = vld [vmem:[%s416 + $0x80] sm:$0x1]
        %v8066 = vld [vmem:[%s416 + $0x84] sm:$0xf]
        %v8067 = vld [vmem:[%s416 + $0x88] sm:$0xf]
        %v8068 = vld [vmem:[%s416 + $0x8c] sm:$0x1]
        %v8069 = vld [vmem:[%s416 + $0x90] sm:$0xf]
        %v8070 = vld [vmem:[%s416 + $0x94] sm:$0xf]
        %v8071 = vld [vmem:[%s416 + $0x98] sm:$0x1]
        %v8072 = vld [vmem:[%s416 + $0x9c] sm:$0xf]
        %v8073 = vld [vmem:[%s416 + $0xa0] sm:$0xf]
        %v8074 = vld [vmem:[%s416 + $0xa4] sm:$0x1]
        %v8075 = vld [vmem:[%s416 + $0xa8] sm:$0xf]
        %v8076 = vld [vmem:[%s416 + $0xac] sm:$0xf]
        %v8077 = vld [vmem:[%s416 + $0xb0] sm:$0x1]
        %v8078 = vld [vmem:[%s416 + $0xb4] sm:$0xf]
        %v8079 = vld [vmem:[%s416 + $0xb8] sm:$0xf]
        %v8080 = vld [vmem:[%s416 + $0xbc] sm:$0x1]
        %v8082 = vshrl.u32 %v8033, 16
        %v8084 = vrot.slane %v8082, 4
        %v8085 = vshll.u32 %v8033, 16
        %v8087 = vrot.slane %v8085, 5
        %v8088 = vor.u32 %v8084, %v8087
        %v8089 = vrot.slane %v8088, 4
        %v8091 = vshll.u32 %v8034, 16
        %v8093 = vrot.slane %v8091, 5
        %v8094 = vsel %vm1128, %v8089, %v8093
        %v8095 = vshrl.u32 %v8034, 16
        %v8097 = vrot.slane %v8095, 4
        %v8098 = vor.u32 %v8097, %v8093
        %v8099 = vrot.slane %v8098, 4
        %v8101 = vshll.u32 %v8035, 16
        %v8103 = vrot.slane %v8101, 5
        %v8104 = vsel %vm1128, %v8099, %v8103
        %v8106 = vshrl.u32 %v8036, 16
        %v8108 = vrot.slane %v8106, 4
        %v8109 = vshll.u32 %v8036, 16
        %v8111 = vrot.slane %v8109, 5
        %v8112 = vor.u32 %v8108, %v8111
        %v8113 = vrot.slane %v8112, 4
        %v8115 = vshll.u32 %v8037, 16
        %v8117 = vrot.slane %v8115, 5
        %v8118 = vsel %vm1128, %v8113, %v8117
        %v8119 = vshrl.u32 %v8037, 16
        %v8121 = vrot.slane %v8119, 4
        %v8122 = vor.u32 %v8121, %v8117
        %v8123 = vrot.slane %v8122, 4
        %v8125 = vshll.u32 %v8038, 16
        %v8127 = vrot.slane %v8125, 5
        %v8128 = vsel %vm1128, %v8123, %v8127
        %v8130 = vshrl.u32 %v8039, 16
        %v8132 = vrot.slane %v8130, 4
        %v8133 = vshll.u32 %v8039, 16
        %v8135 = vrot.slane %v8133, 5
        %v8136 = vor.u32 %v8132, %v8135
        %v8137 = vrot.slane %v8136, 4
        %v8139 = vshll.u32 %v8040, 16
        %v8141 = vrot.slane %v8139, 5
        %v8142 = vsel %vm1128, %v8137, %v8141
        %v8143 = vshrl.u32 %v8040, 16
        %v8145 = vrot.slane %v8143, 4
        %v8146 = vor.u32 %v8145, %v8141
        %v8147 = vrot.slane %v8146, 4
        %v8149 = vshll.u32 %v8041, 16
        %v8151 = vrot.slane %v8149, 5
        %v8152 = vsel %vm1128, %v8147, %v8151
        %v8154 = vshrl.u32 %v8042, 16
        %v8156 = vrot.slane %v8154, 4
        %v8157 = vshll.u32 %v8042, 16
        %v8159 = vrot.slane %v8157, 5
        %v8160 = vor.u32 %v8156, %v8159
        %v8161 = vrot.slane %v8160, 4
        %v8163 = vshll.u32 %v8043, 16
        %v8165 = vrot.slane %v8163, 5
        %v8166 = vsel %vm1128, %v8161, %v8165
        %v8167 = vshrl.u32 %v8043, 16
        %v8169 = vrot.slane %v8167, 4
        %v8170 = vor.u32 %v8169, %v8165
        %v8171 = vrot.slane %v8170, 4
        %v8173 = vshll.u32 %v8044, 16
        %v8175 = vrot.slane %v8173, 5
        %v8176 = vsel %vm1128, %v8171, %v8175
        %v8178 = vshrl.u32 %v8045, 16
        %v8180 = vrot.slane %v8178, 4
        %v8181 = vshll.u32 %v8045, 16
        %v8183 = vrot.slane %v8181, 5
        %v8184 = vor.u32 %v8180, %v8183
        %v8185 = vrot.slane %v8184, 4
        %v8187 = vshll.u32 %v8046, 16
        %v8189 = vrot.slane %v8187, 5
        %v8190 = vsel %vm1128, %v8185, %v8189
        %v8191 = vshrl.u32 %v8046, 16
        %v8193 = vrot.slane %v8191, 4
        %v8194 = vor.u32 %v8193, %v8189
        %v8195 = vrot.slane %v8194, 4
        %v8197 = vshll.u32 %v8047, 16
        %v8199 = vrot.slane %v8197, 5
        %v8200 = vsel %vm1128, %v8195, %v8199
        %v8202 = vshrl.u32 %v8048, 16
        %v8204 = vrot.slane %v8202, 4
        %v8205 = vshll.u32 %v8048, 16
        %v8207 = vrot.slane %v8205, 5
        %v8208 = vor.u32 %v8204, %v8207
        %v8209 = vrot.slane %v8208, 4
        %v8211 = vshll.u32 %v8049, 16
        %v8213 = vrot.slane %v8211, 5
        %v8214 = vsel %vm1128, %v8209, %v8213
        %v8215 = vshrl.u32 %v8049, 16
        %v8217 = vrot.slane %v8215, 4
        %v8218 = vor.u32 %v8217, %v8213
        %v8219 = vrot.slane %v8218, 4
        %v8221 = vshll.u32 %v8050, 16
        %v8223 = vrot.slane %v8221, 5
        %v8224 = vsel %vm1128, %v8219, %v8223
        %v8226 = vshrl.u32 %v8051, 16
        %v8228 = vrot.slane %v8226, 4
        %v8229 = vshll.u32 %v8051, 16
        %v8231 = vrot.slane %v8229, 5
        %v8232 = vor.u32 %v8228, %v8231
        %v8233 = vrot.slane %v8232, 4
        %v8235 = vshll.u32 %v8052, 16
        %v8237 = vrot.slane %v8235, 5
        %v8238 = vsel %vm1128, %v8233, %v8237
        %v8239 = vshrl.u32 %v8052, 16
        %v8241 = vrot.slane %v8239, 4
        %v8242 = vor.u32 %v8241, %v8237
        %v8243 = vrot.slane %v8242, 4
        %v8245 = vshll.u32 %v8053, 16
        %v8247 = vrot.slane %v8245, 5
        %v8248 = vsel %vm1128, %v8243, %v8247
        %v8250 = vshrl.u32 %v8054, 16
        %v8252 = vrot.slane %v8250, 4
        %v8253 = vshll.u32 %v8054, 16
        %v8255 = vrot.slane %v8253, 5
        %v8256 = vor.u32 %v8252, %v8255
        %v8257 = vrot.slane %v8256, 4
        %v8259 = vshll.u32 %v8055, 16
        %v8261 = vrot.slane %v8259, 5
        %v8262 = vsel %vm1128, %v8257, %v8261
        %v8263 = vshrl.u32 %v8055, 16
        %v8265 = vrot.slane %v8263, 4
        %v8266 = vor.u32 %v8265, %v8261
        %v8267 = vrot.slane %v8266, 4
        %v8269 = vshll.u32 %v8056, 16
        %v8271 = vrot.slane %v8269, 5
        %v8272 = vsel %vm1128, %v8267, %v8271
        %v8274 = vshrl.u32 %v8057, 16
        %v8276 = vrot.slane %v8274, 4
        %v8277 = vshll.u32 %v8057, 16
        %v8279 = vrot.slane %v8277, 5
        %v8280 = vor.u32 %v8276, %v8279
        %v8281 = vrot.slane %v8280, 4
        %v8283 = vshll.u32 %v8058, 16
        %v8285 = vrot.slane %v8283, 5
        %v8286 = vsel %vm1128, %v8281, %v8285
        %v8287 = vshrl.u32 %v8058, 16
        %v8289 = vrot.slane %v8287, 4
        %v8290 = vor.u32 %v8289, %v8285
        %v8291 = vrot.slane %v8290, 4
        %v8293 = vshll.u32 %v8059, 16
        %v8295 = vrot.slane %v8293, 5
        %v8296 = vsel %vm1128, %v8291, %v8295
        %v8298 = vshrl.u32 %v8060, 16
        %v8300 = vrot.slane %v8298, 4
        %v8301 = vshll.u32 %v8060, 16
        %v8303 = vrot.slane %v8301, 5
        %v8304 = vor.u32 %v8300, %v8303
        %v8305 = vrot.slane %v8304, 4
        %v8307 = vshll.u32 %v8061, 16
        %v8309 = vrot.slane %v8307, 5
        %v8310 = vsel %vm1128, %v8305, %v8309
        %v8311 = vshrl.u32 %v8061, 16
        %v8313 = vrot.slane %v8311, 4
        %v8314 = vor.u32 %v8313, %v8309
        %v8315 = vrot.slane %v8314, 4
        %v8317 = vshll.u32 %v8062, 16
        %v8319 = vrot.slane %v8317, 5
        %v8320 = vsel %vm1128, %v8315, %v8319
        %v8322 = vshrl.u32 %v8063, 16
        %v8324 = vrot.slane %v8322, 4
        %v8325 = vshll.u32 %v8063, 16
        %v8327 = vrot.slane %v8325, 5
        %v8328 = vor.u32 %v8324, %v8327
        %v8329 = vrot.slane %v8328, 4
        %v8331 = vshll.u32 %v8064, 16
        %v8333 = vrot.slane %v8331, 5
        %v8334 = vsel %vm1128, %v8329, %v8333
        %v8335 = vshrl.u32 %v8064, 16
        %v8337 = vrot.slane %v8335, 4
        %v8338 = vor.u32 %v8337, %v8333
        %v8339 = vrot.slane %v8338, 4
        %v8341 = vshll.u32 %v8065, 16
        %v8343 = vrot.slane %v8341, 5
        %v8344 = vsel %vm1128, %v8339, %v8343
        %v8346 = vshrl.u32 %v8066, 16
        %v8348 = vrot.slane %v8346, 4
        %v8349 = vshll.u32 %v8066, 16
        %v8351 = vrot.slane %v8349, 5
        %v8352 = vor.u32 %v8348, %v8351
        %v8353 = vrot.slane %v8352, 4
        %v8355 = vshll.u32 %v8067, 16
        %v8357 = vrot.slane %v8355, 5
        %v8358 = vsel %vm1128, %v8353, %v8357
        %v8359 = vshrl.u32 %v8067, 16
        %v8361 = vrot.slane %v8359, 4
        %v8362 = vor.u32 %v8361, %v8357
        %v8363 = vrot.slane %v8362, 4
        %v8365 = vshll.u32 %v8068, 16
        %v8367 = vrot.slane %v8365, 5
        %v8368 = vsel %vm1128, %v8363, %v8367
        %v8370 = vshrl.u32 %v8069, 16
        %v8372 = vrot.slane %v8370, 4
        %v8373 = vshll.u32 %v8069, 16
        %v8375 = vrot.slane %v8373, 5
        %v8376 = vor.u32 %v8372, %v8375
        %v8377 = vrot.slane %v8376, 4
        %v8379 = vshll.u32 %v8070, 16
        %v8381 = vrot.slane %v8379, 5
        %v8382 = vsel %vm1128, %v8377, %v8381
        %v8383 = vshrl.u32 %v8070, 16
        %v8385 = vrot.slane %v8383, 4
        %v8386 = vor.u32 %v8385, %v8381
        %v8387 = vrot.slane %v8386, 4
        %v8389 = vshll.u32 %v8071, 16
        %v8391 = vrot.slane %v8389, 5
        %v8392 = vsel %vm1128, %v8387, %v8391
        %v8394 = vshrl.u32 %v8072, 16
        %v8396 = vrot.slane %v8394, 4
        %v8397 = vshll.u32 %v8072, 16
        %v8399 = vrot.slane %v8397, 5
        %v8400 = vor.u32 %v8396, %v8399
        %v8401 = vrot.slane %v8400, 4
        %v8403 = vshll.u32 %v8073, 16
        %v8405 = vrot.slane %v8403, 5
        %v8406 = vsel %vm1128, %v8401, %v8405
        %v8407 = vshrl.u32 %v8073, 16
        %v8409 = vrot.slane %v8407, 4
        %v8410 = vor.u32 %v8409, %v8405
        %v8411 = vrot.slane %v8410, 4
        %v8413 = vshll.u32 %v8074, 16
        %v8415 = vrot.slane %v8413, 5
        %v8416 = vsel %vm1128, %v8411, %v8415
        %v8418 = vshrl.u32 %v8075, 16
        %v8420 = vrot.slane %v8418, 4
        %v8421 = vshll.u32 %v8075, 16
        %v8423 = vrot.slane %v8421, 5
        %v8424 = vor.u32 %v8420, %v8423
        %v8425 = vrot.slane %v8424, 4
        %v8427 = vshll.u32 %v8076, 16
        %v8429 = vrot.slane %v8427, 5
        %v8430 = vsel %vm1128, %v8425, %v8429
        %v8431 = vshrl.u32 %v8076, 16
        %v8433 = vrot.slane %v8431, 4
        %v8434 = vor.u32 %v8433, %v8429
        %v8435 = vrot.slane %v8434, 4
        %v8437 = vshll.u32 %v8077, 16
        %v8439 = vrot.slane %v8437, 5
        %v8440 = vsel %vm1128, %v8435, %v8439
        %v8442 = vshrl.u32 %v8078, 16
        %v8444 = vrot.slane %v8442, 4
        %v8445 = vshll.u32 %v8078, 16
        %v8447 = vrot.slane %v8445, 5
        %v8448 = vor.u32 %v8444, %v8447
        %v8449 = vrot.slane %v8448, 4
        %v8451 = vshll.u32 %v8079, 16
        %v8453 = vrot.slane %v8451, 5
        %v8454 = vsel %vm1128, %v8449, %v8453
        %v8455 = vshrl.u32 %v8079, 16
        %v8457 = vrot.slane %v8455, 4
        %v8458 = vor.u32 %v8457, %v8453
        %v8459 = vrot.slane %v8458, 4
        %v8461 = vshll.u32 %v8080, 16
        %v8463 = vrot.slane %v8461, 5
        %v8464 = vsel %vm1128, %v8459, %v8463
        %s8465 = scalar_lea.vmem [#allocation10], 8
        %v8466 = vld [vmem:[%s8465] sm:$0x3]
        %v8467 = vunpack.c.l.b16 %v8094
        %v8468 = vunpack.c.l.b16 %v8104
        %v8469 = vunpack.c.l.b16 %v8118
        %v8470 = vunpack.c.l.b16 %v8128
        %v8471 = vunpack.c.l.b16 %v8142
        %v8472 = vunpack.c.l.b16 %v8152
        %v8473 = vunpack.c.l.b16 %v8166
        %v8474 = vunpack.c.l.b16 %v8176
        %v8475 = vunpack.c.l.b16 %v8190
        %v8476 = vunpack.c.l.b16 %v8200
        %v8477 = vunpack.c.l.b16 %v8214
        %v8478 = vunpack.c.l.b16 %v8224
        %v8479 = vunpack.c.l.b16 %v8238
        %v8480 = vunpack.c.l.b16 %v8248
        %v8481 = vunpack.c.l.b16 %v8262
        %v8482 = vunpack.c.l.b16 %v8272
        %v8483 = vunpack.c.l.b16 %v8286
        %v8484 = vunpack.c.l.b16 %v8296
        %v8485 = vunpack.c.l.b16 %v8310
        %v8486 = vunpack.c.l.b16 %v8320
        %v8487 = vunpack.c.l.b16 %v8334
        %v8488 = vunpack.c.l.b16 %v8344
        %v8489 = vunpack.c.l.b16 %v8358
        %v8490 = vunpack.c.l.b16 %v8368
        %v8491 = vunpack.c.l.b16 %v8382
        %v8492 = vunpack.c.l.b16 %v8392
        %v8493 = vunpack.c.l.b16 %v8406
        %v8494 = vunpack.c.l.b16 %v8416
        %v8495 = vunpack.c.l.b16 %v8430
        %v8496 = vunpack.c.l.b16 %v8440
        %v8497 = vunpack.c.l.b16 %v8454
        %v8498 = vunpack.c.l.b16 %v8464
        %v8499 = vpack.c.b16 %v8468, %v8467
        %v8500 = vpack.c.b16 %v8470, %v8469
        %v8501 = vpack.c.b16 %v8472, %v8471
        %v8502 = vpack.c.b16 %v8474, %v8473
        %v8503 = vpack.c.b16 %v8476, %v8475
        %v8504 = vpack.c.b16 %v8478, %v8477
        %v8505 = vpack.c.b16 %v8480, %v8479
        %v8506 = vpack.c.b16 %v8482, %v8481
        %v8507 = vpack.c.b16 %v8484, %v8483
        %v8508 = vpack.c.b16 %v8486, %v8485
        %v8509 = vpack.c.b16 %v8488, %v8487
        %v8510 = vpack.c.b16 %v8490, %v8489
        %v8511 = vpack.c.b16 %v8492, %v8491
        %v8512 = vpack.c.b16 %v8494, %v8493
        %v8513 = vpack.c.b16 %v8496, %v8495
        %v8514 = vpack.c.b16 %v8498, %v8497
        %v8516 = vsel %vm1563, %v8499, 0
        %v8519 = vsel %vm1563, %v8500, 0
        %v8522 = vsel %vm1563, %v8501, 0
        %v8525 = vsel %vm1563, %v8502, 0
        %v8528 = vsel %vm1563, %v8503, 0
        %v8531 = vsel %vm1563, %v8504, 0
        %v8534 = vsel %vm1563, %v8505, 0
        %v8537 = vsel %vm1563, %v8506, 0
        %v8540 = vsel %vm1563, %v8507, 0
        %v8543 = vsel %vm1563, %v8508, 0
        %v8546 = vsel %vm1563, %v8509, 0
        %v8549 = vsel %vm1563, %v8510, 0
        %v8552 = vsel %vm1563, %v8511, 0
        %v8555 = vsel %vm1563, %v8512, 0
        %v8558 = vsel %vm1563, %v8513, 0
        %v8561 = vsel %vm1563, %v8514, 0
        %v8564 = vsel %vm1612, %v8466, 0
        %8566 = vmatprep.subr.bf16.mxu0 0
        %8567 = vmatpush1.bf16.msra.mxu0 %v8564
        %8568 = vmatprep.subr.bf16.mxu0 0
        %8569 = vmatpush1.bf16.msra.mxu0 0
        %8570 = vmatprep.subr.bf16.mxu0 0
        %8571 = vmatpush1.bf16.msra.mxu0 0
        %8572 = vmatprep.subr.bf16.mxu0 0
        %8573 = vmatpush1.bf16.msra.mxu0 0
        %8574 = vmatprep.subr.bf16.mxu0 0
        %8575 = vmatpush1.bf16.msra.mxu0 0
        %8576 = vmatprep.subr.bf16.mxu0 0
        %8577 = vmatpush1.bf16.msra.mxu0 0
        %8578 = vmatprep.subr.bf16.mxu0 0
        %8579 = vmatpush1.bf16.msra.mxu0 0
        %8580 = vmatprep.subr.bf16.mxu0 0
        %8581 = vmatpush1.bf16.msra.mxu0 0
        %8582 = vmatprep.subr.bf16.mxu0 0
        %8583 = vmatpush1.bf16.msra.mxu0 0
        %8584 = vmatprep.subr.bf16.mxu0 0
        %8585 = vmatpush1.bf16.msra.mxu0 0
        %8586 = vmatprep.subr.bf16.mxu0 0
        %8587 = vmatpush1.bf16.msra.mxu0 0
        %8588 = vmatprep.subr.bf16.mxu0 0
        %8589 = vmatpush1.bf16.msra.mxu0 0
        %8590 = vmatprep.subr.bf16.mxu0 0
        %8591 = vmatpush1.bf16.msra.mxu0 0
        %8592 = vmatprep.subr.bf16.mxu0 0
        %8593 = vmatpush1.bf16.msra.mxu0 0
        %8594 = vmatprep.subr.bf16.mxu0 0
        %8595 = vmatpush1.bf16.msra.mxu0 0
        %8596 = vmatprep.subr.bf16.mxu0 0
        %8597 = vmatpush1.bf16.msra.mxu0 0
        %8598 = vmatprep.mubr.bf16.mxu0 0
        %8599 = vmatmul.mubr.bf16.gmra.mrb[0].mxu0 %v8516
        %v8600 = vpop.f32.mrb[0].mxu0
        %v8601 = vadd.f32 0.0, %v8600
        %v8602 = vpop.f32.mrb[0].mxu0
        %v8603 = vpop.f32.mrb[0].mxu0
        %v8604 = vadd.f32 0.0, %v8603
        %v8605 = vpop.f32.mrb[0].mxu0
        %8606 = vmatprep.mubr.bf16.mxu0 0
        %8607 = vmatmul.mubr.bf16.gmra.mrb[0].mxu0 %v8519
        %v8608 = vpop.f32.mrb[0].mxu0
        %v8609 = vadd.f32 0.0, %v8608
        %v8610 = vpop.f32.mrb[0].mxu0
        %v8611 = vpop.f32.mrb[0].mxu0
        %v8612 = vadd.f32 0.0, %v8611
        %v8613 = vpop.f32.mrb[0].mxu0
        %8614 = vmatprep.mubr.bf16.mxu0 0
        %8615 = vmatmul.mubr.bf16.gmra.mrb[0].mxu0 %v8522
        %v8616 = vpop.f32.mrb[0].mxu0
        %v8617 = vadd.f32 0.0, %v8616
        %v8618 = vpop.f32.mrb[0].mxu0
        %v8619 = vpop.f32.mrb[0].mxu0
        %v8620 = vadd.f32 0.0, %v8619
        %v8621 = vpop.f32.mrb[0].mxu0
        %8622 = vmatprep.mubr.bf16.mxu0 0
        %8623 = vmatmul.mubr.bf16.gmra.mrb[0].mxu0 %v8525
        %v8624 = vpop.f32.mrb[0].mxu0
        %v8625 = vadd.f32 0.0, %v8624
        %v8626 = vpop.f32.mrb[0].mxu0
        %v8627 = vpop.f32.mrb[0].mxu0
        %v8628 = vadd.f32 0.0, %v8627
        %v8629 = vpop.f32.mrb[0].mxu0
        %8630 = vmatprep.mubr.bf16.mxu0 0
        %8631 = vmatmul.mubr.bf16.gmra.mrb[0].mxu0 %v8528
        %v8632 = vpop.f32.mrb[0].mxu0
        %v8633 = vadd.f32 0.0, %v8632
        %v8634 = vpop.f32.mrb[0].mxu0
        %v8635 = vpop.f32.mrb[0].mxu0
        %v8636 = vadd.f32 0.0, %v8635
        %v8637 = vpop.f32.mrb[0].mxu0
        %8638 = vmatprep.mubr.bf16.mxu0 0
        %8639 = vmatmul.mubr.bf16.gmra.mrb[0].mxu0 %v8531
        %v8640 = vpop.f32.mrb[0].mxu0
        %v8641 = vadd.f32 0.0, %v8640
        %v8642 = vpop.f32.mrb[0].mxu0
        %v8643 = vpop.f32.mrb[0].mxu0
        %v8644 = vadd.f32 0.0, %v8643
        %v8645 = vpop.f32.mrb[0].mxu0
        %8646 = vmatprep.mubr.bf16.mxu0 0
        %8647 = vmatmul.mubr.bf16.gmra.mrb[0].mxu0 %v8534
        %v8648 = vpop.f32.mrb[0].mxu0
        %v8649 = vadd.f32 0.0, %v8648
        %v8650 = vpop.f32.mrb[0].mxu0
        %v8651 = vpop.f32.mrb[0].mxu0
        %v8652 = vadd.f32 0.0, %v8651
        %v8653 = vpop.f32.mrb[0].mxu0
        %8654 = vmatprep.mubr.bf16.mxu0 0
        %8655 = vmatmul.mubr.bf16.gmra.mrb[0].mxu0 %v8537
        %v8656 = vpop.f32.mrb[0].mxu0
        %v8657 = vadd.f32 0.0, %v8656
        %v8658 = vpop.f32.mrb[0].mxu0
        %v8659 = vpop.f32.mrb[0].mxu0
        %v8660 = vadd.f32 0.0, %v8659
        %v8661 = vpop.f32.mrb[0].mxu0
        %8662 = vmatprep.mubr.bf16.mxu0 0
        %8663 = vmatmul.mubr.bf16.gmra.mrb[0].mxu0 %v8540
        %v8664 = vpop.f32.mrb[0].mxu0
        %v8665 = vadd.f32 0.0, %v8664
        %v8666 = vpop.f32.mrb[0].mxu0
        %v8667 = vpop.f32.mrb[0].mxu0
        %v8668 = vadd.f32 0.0, %v8667
        %v8669 = vpop.f32.mrb[0].mxu0
        %8670 = vmatprep.mubr.bf16.mxu0 0
        %8671 = vmatmul.mubr.bf16.gmra.mrb[0].mxu0 %v8543
        %v8672 = vpop.f32.mrb[0].mxu0
        %v8673 = vadd.f32 0.0, %v8672
        %v8674 = vpop.f32.mrb[0].mxu0
        %v8675 = vpop.f32.mrb[0].mxu0
        %v8676 = vadd.f32 0.0, %v8675
        %v8677 = vpop.f32.mrb[0].mxu0
        %8678 = vmatprep.mubr.bf16.mxu0 0
        %8679 = vmatmul.mubr.bf16.gmra.mrb[0].mxu0 %v8546
        %v8680 = vpop.f32.mrb[0].mxu0
        %v8681 = vadd.f32 0.0, %v8680
        %v8682 = vpop.f32.mrb[0].mxu0
        %v8683 = vpop.f32.mrb[0].mxu0
        %v8684 = vadd.f32 0.0, %v8683
        %v8685 = vpop.f32.mrb[0].mxu0
        %8686 = vmatprep.mubr.bf16.mxu0 0
        %8687 = vmatmul.mubr.bf16.gmra.mrb[0].mxu0 %v8549
        %v8688 = vpop.f32.mrb[0].mxu0
        %v8689 = vadd.f32 0.0, %v8688
        %v8690 = vpop.f32.mrb[0].mxu0
        %v8691 = vpop.f32.mrb[0].mxu0
        %v8692 = vadd.f32 0.0, %v8691
        %v8693 = vpop.f32.mrb[0].mxu0
        %8694 = vmatprep.mubr.bf16.mxu0 0
        %8695 = vmatmul.mubr.bf16.gmra.mrb[0].mxu0 %v8552
        %v8696 = vpop.f32.mrb[0].mxu0
        %v8697 = vadd.f32 0.0, %v8696
        %v8698 = vpop.f32.mrb[0].mxu0
        %v8699 = vpop.f32.mrb[0].mxu0
        %v8700 = vadd.f32 0.0, %v8699
        %v8701 = vpop.f32.mrb[0].mxu0
        %8702 = vmatprep.mubr.bf16.mxu0 0
        %8703 = vmatmul.mubr.bf16.gmra.mrb[0].mxu0 %v8555
        %v8704 = vpop.f32.mrb[0].mxu0
        %v8705 = vadd.f32 0.0, %v8704
        %v8706 = vpop.f32.mrb[0].mxu0
        %v8707 = vpop.f32.mrb[0].mxu0
        %v8708 = vadd.f32 0.0, %v8707
        %v8709 = vpop.f32.mrb[0].mxu0
        %8710 = vmatprep.mubr.bf16.mxu0 0
        %8711 = vmatmul.mubr.bf16.gmra.mrb[0].mxu0 %v8558
        %v8712 = vpop.f32.mrb[0].mxu0
        %v8713 = vadd.f32 0.0, %v8712
        %v8714 = vpop.f32.mrb[0].mxu0
        %v8715 = vpop.f32.mrb[0].mxu0
        %v8716 = vadd.f32 0.0, %v8715
        %v8717 = vpop.f32.mrb[0].mxu0
        %8718 = vmatprep.mubr.bf16.mxu0 0
        %8719 = vmatmul.mubr.bf16.gmra.mrb[0].mxu0 %v8561
        %v8720 = vpop.f32.mrb[0].mxu0
        %v8721 = vadd.f32 0.0, %v8720
        %v8722 = vpop.f32.mrb[0].mxu0
        %v8723 = vpop.f32.mrb[0].mxu0
        %v8724 = vadd.f32 0.0, %v8723
        %v8725 = vpop.f32.mrb[0].mxu0
        %8726 = vdwg.mxu0
        %v8727 = vadd.f32 %v8001, %v8601
        %v8728 = vadd.f32 %v8002, %v8604
        %v8729 = vadd.f32 %v8003, %v8609
        %v8730 = vadd.f32 %v8004, %v8612
        %v8731 = vadd.f32 %v8005, %v8617
        %v8732 = vadd.f32 %v8006, %v8620
        %v8733 = vadd.f32 %v8007, %v8625
        %v8734 = vadd.f32 %v8008, %v8628
        %v8735 = vadd.f32 %v8009, %v8633
        %v8736 = vadd.f32 %v8010, %v8636
        %v8737 = vadd.f32 %v8011, %v8641
        %v8738 = vadd.f32 %v8012, %v8644
        %v8739 = vadd.f32 %v8013, %v8649
        %v8740 = vadd.f32 %v8014, %v8652
        %v8741 = vadd.f32 %v8015, %v8657
        %v8742 = vadd.f32 %v8016, %v8660
        %v8743 = vadd.f32 %v8017, %v8665
        %v8744 = vadd.f32 %v8018, %v8668
        %v8745 = vadd.f32 %v8019, %v8673
        %v8746 = vadd.f32 %v8020, %v8676
        %v8747 = vadd.f32 %v8021, %v8681
        %v8748 = vadd.f32 %v8022, %v8684
        %v8749 = vadd.f32 %v8023, %v8689
        %v8750 = vadd.f32 %v8024, %v8692
        %v8751 = vadd.f32 %v8025, %v8697
        %v8752 = vadd.f32 %v8026, %v8700
        %v8753 = vadd.f32 %v8027, %v8705
        %v8754 = vadd.f32 %v8028, %v8708
        %v8755 = vadd.f32 %v8029, %v8713
        %v8756 = vadd.f32 %v8030, %v8716
        %v8757 = vadd.f32 %v8031, %v8721
        %v8758 = vadd.f32 %v8032, %v8724
        %v8759 = vld [vmem:[%s416] sm:$0xe]
        %v8760 = vld [vmem:[%s416 + $0xc] sm:$0xe]
        %v8761 = vld [vmem:[%s416 + $0x18] sm:$0xe]
        %v8762 = vld [vmem:[%s416 + $0x24] sm:$0xe]
        %v8763 = vld [vmem:[%s416 + $0x30] sm:$0xe]
        %v8764 = vld [vmem:[%s416 + $0x3c] sm:$0xe]
        %v8765 = vld [vmem:[%s416 + $0x48] sm:$0xe]
        %v8766 = vld [vmem:[%s416 + $0x54] sm:$0xe]
        %v8767 = vld [vmem:[%s416 + $0x60] sm:$0xe]
        %v8768 = vld [vmem:[%s416 + $0x6c] sm:$0xe]
        %v8769 = vld [vmem:[%s416 + $0x78] sm:$0xe]
        %v8770 = vld [vmem:[%s416 + $0x84] sm:$0xe]
        %v8771 = vld [vmem:[%s416 + $0x90] sm:$0xe]
        %v8772 = vld [vmem:[%s416 + $0x9c] sm:$0xe]
        %v8773 = vld [vmem:[%s416 + $0xa8] sm:$0xe]
        %v8774 = vld [vmem:[%s416 + $0xb4] sm:$0xe]
        %v8823 = vrot.slane %v8759, 5
        %v8824 = vrot.slane %v8823, 4
        %v8825 = vrot.slane %v8034, 5
        %v8826 = vsel %vm2119, %v8824, %v8825
        %v8827 = vrot.slane %v8825, 4
        %v8828 = vrot.slane %v8035, 5
        %v8829 = vsel %vm2119, %v8827, %v8828
        %v8830 = vrot.slane %v8760, 5
        %v8831 = vrot.slane %v8830, 4
        %v8832 = vrot.slane %v8037, 5
        %v8833 = vsel %vm2119, %v8831, %v8832
        %v8834 = vrot.slane %v8832, 4
        %v8835 = vrot.slane %v8038, 5
        %v8836 = vsel %vm2119, %v8834, %v8835
        %v8837 = vrot.slane %v8761, 5
        %v8838 = vrot.slane %v8837, 4
        %v8839 = vrot.slane %v8040, 5
        %v8840 = vsel %vm2119, %v8838, %v8839
        %v8841 = vrot.slane %v8839, 4
        %v8842 = vrot.slane %v8041, 5
        %v8843 = vsel %vm2119, %v8841, %v8842
        %v8844 = vrot.slane %v8762, 5
        %v8845 = vrot.slane %v8844, 4
        %v8846 = vrot.slane %v8043, 5
        %v8847 = vsel %vm2119, %v8845, %v8846
        %v8848 = vrot.slane %v8846, 4
        %v8849 = vrot.slane %v8044, 5
        %v8850 = vsel %vm2119, %v8848, %v8849
        %v8851 = vrot.slane %v8763, 5
        %v8852 = vrot.slane %v8851, 4
        %v8853 = vrot.slane %v8046, 5
        %v8854 = vsel %vm2119, %v8852, %v8853
        %v8855 = vrot.slane %v8853, 4
        %v8856 = vrot.slane %v8047, 5
        %v8857 = vsel %vm2119, %v8855, %v8856
        %v8858 = vrot.slane %v8764, 5
        %v8859 = vrot.slane %v8858, 4
        %v8860 = vrot.slane %v8049, 5
        %v8861 = vsel %vm2119, %v8859, %v8860
        %v8862 = vrot.slane %v8860, 4
        %v8863 = vrot.slane %v8050, 5
        %v8864 = vsel %vm2119, %v8862, %v8863
        %v8865 = vrot.slane %v8765, 5
        %v8866 = vrot.slane %v8865, 4
        %v8867 = vrot.slane %v8052, 5
        %v8868 = vsel %vm2119, %v8866, %v8867
        %v8869 = vrot.slane %v8867, 4
        %v8870 = vrot.slane %v8053, 5
        %v8871 = vsel %vm2119, %v8869, %v8870
        %v8872 = vrot.slane %v8766, 5
        %v8873 = vrot.slane %v8872, 4
        %v8874 = vrot.slane %v8055, 5
        %v8875 = vsel %vm2119, %v8873, %v8874
        %v8876 = vrot.slane %v8874, 4
        %v8877 = vrot.slane %v8056, 5
        %v8878 = vsel %vm2119, %v8876, %v8877
        %v8879 = vrot.slane %v8767, 5
        %v8880 = vrot.slane %v8879, 4
        %v8881 = vrot.slane %v8058, 5
        %v8882 = vsel %vm2119, %v8880, %v8881
        %v8883 = vrot.slane %v8881, 4
        %v8884 = vrot.slane %v8059, 5
        %v8885 = vsel %vm2119, %v8883, %v8884
        %v8886 = vrot.slane %v8768, 5
        %v8887 = vrot.slane %v8886, 4
        %v8888 = vrot.slane %v8061, 5
        %v8889 = vsel %vm2119, %v8887, %v8888
        %v8890 = vrot.slane %v8888, 4
        %v8891 = vrot.slane %v8062, 5
        %v8892 = vsel %vm2119, %v8890, %v8891
        %v8893 = vrot.slane %v8769, 5
        %v8894 = vrot.slane %v8893, 4
        %v8895 = vrot.slane %v8064, 5
        %v8896 = vsel %vm2119, %v8894, %v8895
        %v8897 = vrot.slane %v8895, 4
        %v8898 = vrot.slane %v8065, 5
        %v8899 = vsel %vm2119, %v8897, %v8898
        %v8900 = vrot.slane %v8770, 5
        %v8901 = vrot.slane %v8900, 4
        %v8902 = vrot.slane %v8067, 5
        %v8903 = vsel %vm2119, %v8901, %v8902
        %v8904 = vrot.slane %v8902, 4
        %v8905 = vrot.slane %v8068, 5
        %v8906 = vsel %vm2119, %v8904, %v8905
        %v8907 = vrot.slane %v8771, 5
        %v8908 = vrot.slane %v8907, 4
        %v8909 = vrot.slane %v8070, 5
        %v8910 = vsel %vm2119, %v8908, %v8909
        %v8911 = vrot.slane %v8909, 4
        %v8912 = vrot.slane %v8071, 5
        %v8913 = vsel %vm2119, %v8911, %v8912
        %v8914 = vrot.slane %v8772, 5
        %v8915 = vrot.slane %v8914, 4
        %v8916 = vrot.slane %v8073, 5
        %v8917 = vsel %vm2119, %v8915, %v8916
        %v8918 = vrot.slane %v8916, 4
        %v8919 = vrot.slane %v8074, 5
        %v8920 = vsel %vm2119, %v8918, %v8919
        %v8921 = vrot.slane %v8773, 5
        %v8922 = vrot.slane %v8921, 4
        %v8923 = vrot.slane %v8076, 5
        %v8924 = vsel %vm2119, %v8922, %v8923
        %v8925 = vrot.slane %v8923, 4
        %v8926 = vrot.slane %v8077, 5
        %v8927 = vsel %vm2119, %v8925, %v8926
        %v8928 = vrot.slane %v8774, 5
        %v8929 = vrot.slane %v8928, 4
        %v8930 = vrot.slane %v8079, 5
        %v8931 = vsel %vm2119, %v8929, %v8930
        %v8932 = vrot.slane %v8930, 4
        %v8933 = vrot.slane %v8080, 5
        %v8934 = vsel %vm2119, %v8932, %v8933
        %s8935 = scalar_lea.vmem [#allocation10], 10
        %v8936 = vld [vmem:[%s8935] sm:$0x3]
        %v8937 = vunpack.c.l.b16 %v8826
        %v8938 = vunpack.c.l.b16 %v8829
        %v8939 = vunpack.c.l.b16 %v8833
        %v8940 = vunpack.c.l.b16 %v8836
        %v8941 = vunpack.c.l.b16 %v8840
        %v8942 = vunpack.c.l.b16 %v8843
        %v8943 = vunpack.c.l.b16 %v8847
        %v8944 = vunpack.c.l.b16 %v8850
        %v8945 = vunpack.c.l.b16 %v8854
        %v8946 = vunpack.c.l.b16 %v8857
        %v8947 = vunpack.c.l.b16 %v8861
        %v8948 = vunpack.c.l.b16 %v8864
        %v8949 = vunpack.c.l.b16 %v8868
        %v8950 = vunpack.c.l.b16 %v8871
        %v8951 = vunpack.c.l.b16 %v8875
        %v8952 = vunpack.c.l.b16 %v8878
        %v8953 = vunpack.c.l.b16 %v8882
        %v8954 = vunpack.c.l.b16 %v8885
        %v8955 = vunpack.c.l.b16 %v8889
        %v8956 = vunpack.c.l.b16 %v8892
        %v8957 = vunpack.c.l.b16 %v8896
        %v8958 = vunpack.c.l.b16 %v8899
        %v8959 = vunpack.c.l.b16 %v8903
        %v8960 = vunpack.c.l.b16 %v8906
        %v8961 = vunpack.c.l.b16 %v8910
        %v8962 = vunpack.c.l.b16 %v8913
        %v8963 = vunpack.c.l.b16 %v8917
        %v8964 = vunpack.c.l.b16 %v8920
        %v8965 = vunpack.c.l.b16 %v8924
        %v8966 = vunpack.c.l.b16 %v8927
        %v8967 = vunpack.c.l.b16 %v8931
        %v8968 = vunpack.c.l.b16 %v8934
        %v8969 = vpack.c.b16 %v8938, %v8937
        %v8970 = vpack.c.b16 %v8940, %v8939
        %v8971 = vpack.c.b16 %v8942, %v8941
        %v8972 = vpack.c.b16 %v8944, %v8943
        %v8973 = vpack.c.b16 %v8946, %v8945
        %v8974 = vpack.c.b16 %v8948, %v8947
        %v8975 = vpack.c.b16 %v8950, %v8949
        %v8976 = vpack.c.b16 %v8952, %v8951
        %v8977 = vpack.c.b16 %v8954, %v8953
        %v8978 = vpack.c.b16 %v8956, %v8955
        %v8979 = vpack.c.b16 %v8958, %v8957
        %v8980 = vpack.c.b16 %v8960, %v8959
        %v8981 = vpack.c.b16 %v8962, %v8961
        %v8982 = vpack.c.b16 %v8964, %v8963
        %v8983 = vpack.c.b16 %v8966, %v8965
        %v8984 = vpack.c.b16 %v8968, %v8967
        %v8986 = vsel %vm1563, %v8969, 0
        %v8989 = vsel %vm1563, %v8970, 0
        %v8992 = vsel %vm1563, %v8971, 0
        %v8995 = vsel %vm1563, %v8972, 0
        %v8998 = vsel %vm1563, %v8973, 0
        %v9001 = vsel %vm1563, %v8974, 0
        %v9004 = vsel %vm1563, %v8975, 0
        %v9007 = vsel %vm1563, %v8976, 0
        %v9010 = vsel %vm1563, %v8977, 0
        %v9013 = vsel %vm1563, %v8978, 0
        %v9016 = vsel %vm1563, %v8979, 0
        %v9019 = vsel %vm1563, %v8980, 0
        %v9022 = vsel %vm1563, %v8981, 0
        %v9025 = vsel %vm1563, %v8982, 0
        %v9028 = vsel %vm1563, %v8983, 0
        %v9031 = vsel %vm1563, %v8984, 0
        %v9034 = vsel %vm1612, %v8936, 0
        %9036 = vmatprep.subr.bf16.mxu0 0
        %9037 = vmatpush1.bf16.msra.mxu0 %v9034
        %9038 = vmatprep.subr.bf16.mxu0 0
        %9039 = vmatpush1.bf16.msra.mxu0 0
        %9040 = vmatprep.subr.bf16.mxu0 0
        %9041 = vmatpush1.bf16.msra.mxu0 0
        %9042 = vmatprep.subr.bf16.mxu0 0
        %9043 = vmatpush1.bf16.msra.mxu0 0
        %9044 = vmatprep.subr.bf16.mxu0 0
        %9045 = vmatpush1.bf16.msra.mxu0 0
        %9046 = vmatprep.subr.bf16.mxu0 0
        %9047 = vmatpush1.bf16.msra.mxu0 0
        %9048 = vmatprep.subr.bf16.mxu0 0
        %9049 = vmatpush1.bf16.msra.mxu0 0
        %9050 = vmatprep.subr.bf16.mxu0 0
        %9051 = vmatpush1.bf16.msra.mxu0 0
        %9052 = vmatprep.subr.bf16.mxu0 0
        %9053 = vmatpush1.bf16.msra.mxu0 0
        %9054 = vmatprep.subr.bf16.mxu0 0
        %9055 = vmatpush1.bf16.msra.mxu0 0
        %9056 = vmatprep.subr.bf16.mxu0 0
        %9057 = vmatpush1.bf16.msra.mxu0 0
        %9058 = vmatprep.subr.bf16.mxu0 0
        %9059 = vmatpush1.bf16.msra.mxu0 0
        %9060 = vmatprep.subr.bf16.mxu0 0
        %9061 = vmatpush1.bf16.msra.mxu0 0
        %9062 = vmatprep.subr.bf16.mxu0 0
        %9063 = vmatpush1.bf16.msra.mxu0 0
        %9064 = vmatprep.subr.bf16.mxu0 0
        %9065 = vmatpush1.bf16.msra.mxu0 0
        %9066 = vmatprep.subr.bf16.mxu0 0
        %9067 = vmatpush1.bf16.msra.mxu0 0
        %9068 = vmatprep.mubr.bf16.mxu0 0
        %9069 = vmatmul.mubr.bf16.gmra.mrb[0].mxu0 %v8986
        %v9070 = vpop.f32.mrb[0].mxu0
        %v9071 = vadd.f32 0.0, %v9070
        %v9072 = vpop.f32.mrb[0].mxu0
        %v9073 = vpop.f32.mrb[0].mxu0
        %v9074 = vadd.f32 0.0, %v9073
        %v9075 = vpop.f32.mrb[0].mxu0
        %9076 = vmatprep.mubr.bf16.mxu0 0
        %9077 = vmatmul.mubr.bf16.gmra.mrb[0].mxu0 %v8989
        %v9078 = vpop.f32.mrb[0].mxu0
        %v9079 = vadd.f32 0.0, %v9078
        %v9080 = vpop.f32.mrb[0].mxu0
        %v9081 = vpop.f32.mrb[0].mxu0
        %v9082 = vadd.f32 0.0, %v9081
        %v9083 = vpop.f32.mrb[0].mxu0
        %9084 = vmatprep.mubr.bf16.mxu0 0
        %9085 = vmatmul.mubr.bf16.gmra.mrb[0].mxu0 %v8992
        %v9086 = vpop.f32.mrb[0].mxu0
        %v9087 = vadd.f32 0.0, %v9086
        %v9088 = vpop.f32.mrb[0].mxu0
        %v9089 = vpop.f32.mrb[0].mxu0
        %v9090 = vadd.f32 0.0, %v9089
        %v9091 = vpop.f32.mrb[0].mxu0
        %9092 = vmatprep.mubr.bf16.mxu0 0
        %9093 = vmatmul.mubr.bf16.gmra.mrb[0].mxu0 %v8995
        %v9094 = vpop.f32.mrb[0].mxu0
        %v9095 = vadd.f32 0.0, %v9094
        %v9096 = vpop.f32.mrb[0].mxu0
        %v9097 = vpop.f32.mrb[0].mxu0
        %v9098 = vadd.f32 0.0, %v9097
        %v9099 = vpop.f32.mrb[0].mxu0
        %9100 = vmatprep.mubr.bf16.mxu0 0
        %9101 = vmatmul.mubr.bf16.gmra.mrb[0].mxu0 %v8998
        %v9102 = vpop.f32.mrb[0].mxu0
        %v9103 = vadd.f32 0.0, %v9102
        %v9104 = vpop.f32.mrb[0].mxu0
        %v9105 = vpop.f32.mrb[0].mxu0
        %v9106 = vadd.f32 0.0, %v9105
        %v9107 = vpop.f32.mrb[0].mxu0
        %9108 = vmatprep.mubr.bf16.mxu0 0
        %9109 = vmatmul.mubr.bf16.gmra.mrb[0].mxu0 %v9001
        %v9110 = vpop.f32.mrb[0].mxu0
        %v9111 = vadd.f32 0.0, %v9110
        %v9112 = vpop.f32.mrb[0].mxu0
        %v9113 = vpop.f32.mrb[0].mxu0
        %v9114 = vadd.f32 0.0, %v9113
        %v9115 = vpop.f32.mrb[0].mxu0
        %9116 = vmatprep.mubr.bf16.mxu0 0
        %9117 = vmatmul.mubr.bf16.gmra.mrb[0].mxu0 %v9004
        %v9118 = vpop.f32.mrb[0].mxu0
        %v9119 = vadd.f32 0.0, %v9118
        %v9120 = vpop.f32.mrb[0].mxu0
        %v9121 = vpop.f32.mrb[0].mxu0
        %v9122 = vadd.f32 0.0, %v9121
        %v9123 = vpop.f32.mrb[0].mxu0
        %9124 = vmatprep.mubr.bf16.mxu0 0
        %9125 = vmatmul.mubr.bf16.gmra.mrb[0].mxu0 %v9007
        %v9126 = vpop.f32.mrb[0].mxu0
        %v9127 = vadd.f32 0.0, %v9126
        %v9128 = vpop.f32.mrb[0].mxu0
        %v9129 = vpop.f32.mrb[0].mxu0
        %v9130 = vadd.f32 0.0, %v9129
        %v9131 = vpop.f32.mrb[0].mxu0
        %9132 = vmatprep.mubr.bf16.mxu0 0
        %9133 = vmatmul.mubr.bf16.gmra.mrb[0].mxu0 %v9010
        %v9134 = vpop.f32.mrb[0].mxu0
        %v9135 = vadd.f32 0.0, %v9134
        %v9136 = vpop.f32.mrb[0].mxu0
        %v9137 = vpop.f32.mrb[0].mxu0
        %v9138 = vadd.f32 0.0, %v9137
        %v9139 = vpop.f32.mrb[0].mxu0
        %9140 = vmatprep.mubr.bf16.mxu0 0
        %9141 = vmatmul.mubr.bf16.gmra.mrb[0].mxu0 %v9013
        %v9142 = vpop.f32.mrb[0].mxu0
        %v9143 = vadd.f32 0.0, %v9142
        %v9144 = vpop.f32.mrb[0].mxu0
        %v9145 = vpop.f32.mrb[0].mxu0
        %v9146 = vadd.f32 0.0, %v9145
        %v9147 = vpop.f32.mrb[0].mxu0
        %9148 = vmatprep.mubr.bf16.mxu0 0
        %9149 = vmatmul.mubr.bf16.gmra.mrb[0].mxu0 %v9016
        %v9150 = vpop.f32.mrb[0].mxu0
        %v9151 = vadd.f32 0.0, %v9150
        %v9152 = vpop.f32.mrb[0].mxu0
        %v9153 = vpop.f32.mrb[0].mxu0
        %v9154 = vadd.f32 0.0, %v9153
        %v9155 = vpop.f32.mrb[0].mxu0
        %9156 = vmatprep.mubr.bf16.mxu0 0
        %9157 = vmatmul.mubr.bf16.gmra.mrb[0].mxu0 %v9019
        %v9158 = vpop.f32.mrb[0].mxu0
        %v9159 = vadd.f32 0.0, %v9158
        %v9160 = vpop.f32.mrb[0].mxu0
        %v9161 = vpop.f32.mrb[0].mxu0
        %v9162 = vadd.f32 0.0, %v9161
        %v9163 = vpop.f32.mrb[0].mxu0
        %9164 = vmatprep.mubr.bf16.mxu0 0
        %9165 = vmatmul.mubr.bf16.gmra.mrb[0].mxu0 %v9022
        %v9166 = vpop.f32.mrb[0].mxu0
        %v9167 = vadd.f32 0.0, %v9166
        %v9168 = vpop.f32.mrb[0].mxu0
        %v9169 = vpop.f32.mrb[0].mxu0
        %v9170 = vadd.f32 0.0, %v9169
        %v9171 = vpop.f32.mrb[0].mxu0
        %9172 = vmatprep.mubr.bf16.mxu0 0
        %9173 = vmatmul.mubr.bf16.gmra.mrb[0].mxu0 %v9025
        %v9174 = vpop.f32.mrb[0].mxu0
        %v9175 = vadd.f32 0.0, %v9174
        %v9176 = vpop.f32.mrb[0].mxu0
        %v9177 = vpop.f32.mrb[0].mxu0
        %v9178 = vadd.f32 0.0, %v9177
        %v9179 = vpop.f32.mrb[0].mxu0
        %9180 = vmatprep.mubr.bf16.mxu0 0
        %9181 = vmatmul.mubr.bf16.gmra.mrb[0].mxu0 %v9028
        %v9182 = vpop.f32.mrb[0].mxu0
        %v9183 = vadd.f32 0.0, %v9182
        %v9184 = vpop.f32.mrb[0].mxu0
        %v9185 = vpop.f32.mrb[0].mxu0
        %v9186 = vadd.f32 0.0, %v9185
        %v9187 = vpop.f32.mrb[0].mxu0
        %9188 = vmatprep.mubr.bf16.mxu0 0
        %9189 = vmatmul.mubr.bf16.gmra.mrb[0].mxu0 %v9031
        %v9190 = vpop.f32.mrb[0].mxu0
        %v9191 = vadd.f32 0.0, %v9190
        %v9192 = vpop.f32.mrb[0].mxu0
        %v9193 = vpop.f32.mrb[0].mxu0
        %v9194 = vadd.f32 0.0, %v9193
        %v9195 = vpop.f32.mrb[0].mxu0
        %9196 = vdwg.mxu0
        %v9197 = vadd.f32 %v8727, %v9071
        %v9198 = vadd.f32 %v8728, %v9074
        %v9199 = vadd.f32 %v8729, %v9079
        %v9200 = vadd.f32 %v8730, %v9082
        %v9201 = vadd.f32 %v8731, %v9087
        %v9202 = vadd.f32 %v8732, %v9090
        %v9203 = vadd.f32 %v8733, %v9095
        %v9204 = vadd.f32 %v8734, %v9098
        %v9205 = vadd.f32 %v8735, %v9103
        %v9206 = vadd.f32 %v8736, %v9106
        %v9207 = vadd.f32 %v8737, %v9111
        %v9208 = vadd.f32 %v8738, %v9114
        %v9209 = vadd.f32 %v8739, %v9119
        %v9210 = vadd.f32 %v8740, %v9122
        %v9211 = vadd.f32 %v8741, %v9127
        %v9212 = vadd.f32 %v8742, %v9130
        %v9213 = vadd.f32 %v8743, %v9135
        %v9214 = vadd.f32 %v8744, %v9138
        %v9215 = vadd.f32 %v8745, %v9143
        %v9216 = vadd.f32 %v8746, %v9146
        %v9217 = vadd.f32 %v8747, %v9151
        %v9218 = vadd.f32 %v8748, %v9154
        %v9219 = vadd.f32 %v8749, %v9159
        %v9220 = vadd.f32 %v8750, %v9162
        %v9221 = vadd.f32 %v8751, %v9167
        %v9222 = vadd.f32 %v8752, %v9170
        %v9223 = vadd.f32 %v8753, %v9175
        %v9224 = vadd.f32 %v8754, %v9178
        %v9225 = vadd.f32 %v8755, %v9183
        %v9226 = vadd.f32 %v8756, %v9186
        %v9227 = vadd.f32 %v8757, %v9191
        %v9228 = vadd.f32 %v8758, %v9194
        %s9229 = scalar_lea.vmem [#allocation3], 24
        %v9230 = vld [vmem:[%s9229] sm:$0xf]
        %v9231 = vld [vmem:[%s9229 + $0x4] sm:$0xf]
        %v9232 = vld [vmem:[%s9229 + $0xc] sm:$0xf]
        %v9233 = vld [vmem:[%s9229 + $0x10] sm:$0xf]
        %v9234 = vld [vmem:[%s9229 + $0x18] sm:$0xf]
        %v9235 = vld [vmem:[%s9229 + $0x1c] sm:$0xf]
        %v9236 = vld [vmem:[%s9229 + $0x24] sm:$0xf]
        %v9237 = vld [vmem:[%s9229 + $0x28] sm:$0xf]
        %v9238 = vld [vmem:[%s9229 + $0x30] sm:$0xf]
        %v9239 = vld [vmem:[%s9229 + $0x34] sm:$0xf]
        %v9240 = vld [vmem:[%s9229 + $0x3c] sm:$0xf]
        %v9241 = vld [vmem:[%s9229 + $0x40] sm:$0xf]
        %v9242 = vld [vmem:[%s9229 + $0x48] sm:$0xf]
        %v9243 = vld [vmem:[%s9229 + $0x4c] sm:$0xf]
        %v9244 = vld [vmem:[%s9229 + $0x54] sm:$0xf]
        %v9245 = vld [vmem:[%s9229 + $0x58] sm:$0xf]
        %v9246 = vld [vmem:[%s9229 + $0x60] sm:$0xf]
        %v9247 = vld [vmem:[%s9229 + $0x64] sm:$0xf]
        %v9248 = vld [vmem:[%s9229 + $0x6c] sm:$0xf]
        %v9249 = vld [vmem:[%s9229 + $0x70] sm:$0xf]
        %v9250 = vld [vmem:[%s9229 + $0x78] sm:$0xf]
        %v9251 = vld [vmem:[%s9229 + $0x7c] sm:$0xf]
        %v9252 = vld [vmem:[%s9229 + $0x84] sm:$0xf]
        %v9253 = vld [vmem:[%s9229 + $0x88] sm:$0xf]
        %v9254 = vld [vmem:[%s9229 + $0x90] sm:$0xf]
        %v9255 = vld [vmem:[%s9229 + $0x94] sm:$0xf]
        %v9256 = vld [vmem:[%s9229 + $0x9c] sm:$0xf]
        %v9257 = vld [vmem:[%s9229 + $0xa0] sm:$0xf]
        %v9258 = vld [vmem:[%s9229 + $0xa8] sm:$0xf]
        %v9259 = vld [vmem:[%s9229 + $0xac] sm:$0xf]
        %v9260 = vld [vmem:[%s9229 + $0xb4] sm:$0xf]
        %v9261 = vld [vmem:[%s9229 + $0xb8] sm:$0xf]
        %s9262 = scalar_lea.vmem [#allocation10], 12
        %v9263 = vld [vmem:[%s9262] sm:$0x3]
        %v9296 = vunpack.c.l.b16 %v9230
        %v9297 = vunpack.c.l.b16 %v9231
        %v9298 = vunpack.c.l.b16 %v9232
        %v9299 = vunpack.c.l.b16 %v9233
        %v9300 = vunpack.c.l.b16 %v9234
        %v9301 = vunpack.c.l.b16 %v9235
        %v9302 = vunpack.c.l.b16 %v9236
        %v9303 = vunpack.c.l.b16 %v9237
        %v9304 = vunpack.c.l.b16 %v9238
        %v9305 = vunpack.c.l.b16 %v9239
        %v9306 = vunpack.c.l.b16 %v9240
        %v9307 = vunpack.c.l.b16 %v9241
        %v9308 = vunpack.c.l.b16 %v9242
        %v9309 = vunpack.c.l.b16 %v9243
        %v9310 = vunpack.c.l.b16 %v9244
        %v9311 = vunpack.c.l.b16 %v9245
        %v9312 = vunpack.c.l.b16 %v9246
        %v9313 = vunpack.c.l.b16 %v9247
        %v9314 = vunpack.c.l.b16 %v9248
        %v9315 = vunpack.c.l.b16 %v9249
        %v9316 = vunpack.c.l.b16 %v9250
        %v9317 = vunpack.c.l.b16 %v9251
        %v9318 = vunpack.c.l.b16 %v9252
        %v9319 = vunpack.c.l.b16 %v9253
        %v9320 = vunpack.c.l.b16 %v9254
        %v9321 = vunpack.c.l.b16 %v9255
        %v9322 = vunpack.c.l.b16 %v9256
        %v9323 = vunpack.c.l.b16 %v9257
        %v9324 = vunpack.c.l.b16 %v9258
        %v9325 = vunpack.c.l.b16 %v9259
        %v9326 = vunpack.c.l.b16 %v9260
        %v9327 = vunpack.c.l.b16 %v9261
        %v9328 = vpack.c.b16 %v9297, %v9296
        %v9329 = vpack.c.b16 %v9299, %v9298
        %v9330 = vpack.c.b16 %v9301, %v9300
        %v9331 = vpack.c.b16 %v9303, %v9302
        %v9332 = vpack.c.b16 %v9305, %v9304
        %v9333 = vpack.c.b16 %v9307, %v9306
        %v9334 = vpack.c.b16 %v9309, %v9308
        %v9335 = vpack.c.b16 %v9311, %v9310
        %v9336 = vpack.c.b16 %v9313, %v9312
        %v9337 = vpack.c.b16 %v9315, %v9314
        %v9338 = vpack.c.b16 %v9317, %v9316
        %v9339 = vpack.c.b16 %v9319, %v9318
        %v9340 = vpack.c.b16 %v9321, %v9320
        %v9341 = vpack.c.b16 %v9323, %v9322
        %v9342 = vpack.c.b16 %v9325, %v9324
        %v9343 = vpack.c.b16 %v9327, %v9326
        %v9345 = vsel %vm1563, %v9328, 0
        %v9348 = vsel %vm1563, %v9329, 0
        %v9351 = vsel %vm1563, %v9330, 0
        %v9354 = vsel %vm1563, %v9331, 0
        %v9357 = vsel %vm1563, %v9332, 0
        %v9360 = vsel %vm1563, %v9333, 0
        %v9363 = vsel %vm1563, %v9334, 0
        %v9366 = vsel %vm1563, %v9335, 0
        %v9369 = vsel %vm1563, %v9336, 0
        %v9372 = vsel %vm1563, %v9337, 0
        %v9375 = vsel %vm1563, %v9338, 0
        %v9378 = vsel %vm1563, %v9339, 0
        %v9381 = vsel %vm1563, %v9340, 0
        %v9384 = vsel %vm1563, %v9341, 0
        %v9387 = vsel %vm1563, %v9342, 0
        %v9390 = vsel %vm1563, %v9343, 0
        %v9393 = vsel %vm1612, %v9263, 0
        %9395 = vmatprep.subr.bf16.mxu0 0
        %9396 = vmatpush1.bf16.msra.mxu0 %v9393
        %9397 = vmatprep.subr.bf16.mxu0 0
        %9398 = vmatpush1.bf16.msra.mxu0 0
        %9399 = vmatprep.subr.bf16.mxu0 0
        %9400 = vmatpush1.bf16.msra.mxu0 0
        %9401 = vmatprep.subr.bf16.mxu0 0
        %9402 = vmatpush1.bf16.msra.mxu0 0
        %9403 = vmatprep.subr.bf16.mxu0 0
        %9404 = vmatpush1.bf16.msra.mxu0 0
        %9405 = vmatprep.subr.bf16.mxu0 0
        %9406 = vmatpush1.bf16.msra.mxu0 0
        %9407 = vmatprep.subr.bf16.mxu0 0
        %9408 = vmatpush1.bf16.msra.mxu0 0
        %9409 = vmatprep.subr.bf16.mxu0 0
        %9410 = vmatpush1.bf16.msra.mxu0 0
        %9411 = vmatprep.subr.bf16.mxu0 0
        %9412 = vmatpush1.bf16.msra.mxu0 0
        %9413 = vmatprep.subr.bf16.mxu0 0
        %9414 = vmatpush1.bf16.msra.mxu0 0
        %9415 = vmatprep.subr.bf16.mxu0 0
        %9416 = vmatpush1.bf16.msra.mxu0 0
        %9417 = vmatprep.subr.bf16.mxu0 0
        %9418 = vmatpush1.bf16.msra.mxu0 0
        %9419 = vmatprep.subr.bf16.mxu0 0
        %9420 = vmatpush1.bf16.msra.mxu0 0
        %9421 = vmatprep.subr.bf16.mxu0 0
        %9422 = vmatpush1.bf16.msra.mxu0 0
        %9423 = vmatprep.subr.bf16.mxu0 0
        %9424 = vmatpush1.bf16.msra.mxu0 0
        %9425 = vmatprep.subr.bf16.mxu0 0
        %9426 = vmatpush1.bf16.msra.mxu0 0
        %9427 = vmatprep.mubr.bf16.mxu0 0
        %9428 = vmatmul.mubr.bf16.gmra.mrb[0].mxu0 %v9345
        %v9429 = vpop.f32.mrb[0].mxu0
        %v9430 = vadd.f32 0.0, %v9429
        %v9431 = vpop.f32.mrb[0].mxu0
        %v9432 = vpop.f32.mrb[0].mxu0
        %v9433 = vadd.f32 0.0, %v9432
        %v9434 = vpop.f32.mrb[0].mxu0
        %9435 = vmatprep.mubr.bf16.mxu0 0
        %9436 = vmatmul.mubr.bf16.gmra.mrb[0].mxu0 %v9348
        %v9437 = vpop.f32.mrb[0].mxu0
        %v9438 = vadd.f32 0.0, %v9437
        %v9439 = vpop.f32.mrb[0].mxu0
        %v9440 = vpop.f32.mrb[0].mxu0
        %v9441 = vadd.f32 0.0, %v9440
        %v9442 = vpop.f32.mrb[0].mxu0
        %9443 = vmatprep.mubr.bf16.mxu0 0
        %9444 = vmatmul.mubr.bf16.gmra.mrb[0].mxu0 %v9351
        %v9445 = vpop.f32.mrb[0].mxu0
        %v9446 = vadd.f32 0.0, %v9445
        %v9447 = vpop.f32.mrb[0].mxu0
        %v9448 = vpop.f32.mrb[0].mxu0
        %v9449 = vadd.f32 0.0, %v9448
        %v9450 = vpop.f32.mrb[0].mxu0
        %9451 = vmatprep.mubr.bf16.mxu0 0
        %9452 = vmatmul.mubr.bf16.gmra.mrb[0].mxu0 %v9354
        %v9453 = vpop.f32.mrb[0].mxu0
        %v9454 = vadd.f32 0.0, %v9453
        %v9455 = vpop.f32.mrb[0].mxu0
        %v9456 = vpop.f32.mrb[0].mxu0
        %v9457 = vadd.f32 0.0, %v9456
        %v9458 = vpop.f32.mrb[0].mxu0
        %9459 = vmatprep.mubr.bf16.mxu0 0
        %9460 = vmatmul.mubr.bf16.gmra.mrb[0].mxu0 %v9357
        %v9461 = vpop.f32.mrb[0].mxu0
        %v9462 = vadd.f32 0.0, %v9461
        %v9463 = vpop.f32.mrb[0].mxu0
        %v9464 = vpop.f32.mrb[0].mxu0
        %v9465 = vadd.f32 0.0, %v9464
        %v9466 = vpop.f32.mrb[0].mxu0
        %9467 = vmatprep.mubr.bf16.mxu0 0
        %9468 = vmatmul.mubr.bf16.gmra.mrb[0].mxu0 %v9360
        %v9469 = vpop.f32.mrb[0].mxu0
        %v9470 = vadd.f32 0.0, %v9469
        %v9471 = vpop.f32.mrb[0].mxu0
        %v9472 = vpop.f32.mrb[0].mxu0
        %v9473 = vadd.f32 0.0, %v9472
        %v9474 = vpop.f32.mrb[0].mxu0
        %9475 = vmatprep.mubr.bf16.mxu0 0
        %9476 = vmatmul.mubr.bf16.gmra.mrb[0].mxu0 %v9363
        %v9477 = vpop.f32.mrb[0].mxu0
        %v9478 = vadd.f32 0.0, %v9477
        %v9479 = vpop.f32.mrb[0].mxu0
        %v9480 = vpop.f32.mrb[0].mxu0
        %v9481 = vadd.f32 0.0, %v9480
        %v9482 = vpop.f32.mrb[0].mxu0
        %9483 = vmatprep.mubr.bf16.mxu0 0
        %9484 = vmatmul.mubr.bf16.gmra.mrb[0].mxu0 %v9366
        %v9485 = vpop.f32.mrb[0].mxu0
        %v9486 = vadd.f32 0.0, %v9485
        %v9487 = vpop.f32.mrb[0].mxu0
        %v9488 = vpop.f32.mrb[0].mxu0
        %v9489 = vadd.f32 0.0, %v9488
        %v9490 = vpop.f32.mrb[0].mxu0
        %9491 = vmatprep.mubr.bf16.mxu0 0
        %9492 = vmatmul.mubr.bf16.gmra.mrb[0].mxu0 %v9369
        %v9493 = vpop.f32.mrb[0].mxu0
        %v9494 = vadd.f32 0.0, %v9493
        %v9495 = vpop.f32.mrb[0].mxu0
        %v9496 = vpop.f32.mrb[0].mxu0
        %v9497 = vadd.f32 0.0, %v9496
        %v9498 = vpop.f32.mrb[0].mxu0
        %9499 = vmatprep.mubr.bf16.mxu0 0
        %9500 = vmatmul.mubr.bf16.gmra.mrb[0].mxu0 %v9372
        %v9501 = vpop.f32.mrb[0].mxu0
        %v9502 = vadd.f32 0.0, %v9501
        %v9503 = vpop.f32.mrb[0].mxu0
        %v9504 = vpop.f32.mrb[0].mxu0
        %v9505 = vadd.f32 0.0, %v9504
        %v9506 = vpop.f32.mrb[0].mxu0
        %9507 = vmatprep.mubr.bf16.mxu0 0
        %9508 = vmatmul.mubr.bf16.gmra.mrb[0].mxu0 %v9375
        %v9509 = vpop.f32.mrb[0].mxu0
        %v9510 = vadd.f32 0.0, %v9509
        %v9511 = vpop.f32.mrb[0].mxu0
        %v9512 = vpop.f32.mrb[0].mxu0
        %v9513 = vadd.f32 0.0, %v9512
        %v9514 = vpop.f32.mrb[0].mxu0
        %9515 = vmatprep.mubr.bf16.mxu0 0
        %9516 = vmatmul.mubr.bf16.gmra.mrb[0].mxu0 %v9378
        %v9517 = vpop.f32.mrb[0].mxu0
        %v9518 = vadd.f32 0.0, %v9517
        %v9519 = vpop.f32.mrb[0].mxu0
        %v9520 = vpop.f32.mrb[0].mxu0
        %v9521 = vadd.f32 0.0, %v9520
        %v9522 = vpop.f32.mrb[0].mxu0
        %9523 = vmatprep.mubr.bf16.mxu0 0
        %9524 = vmatmul.mubr.bf16.gmra.mrb[0].mxu0 %v9381
        %v9525 = vpop.f32.mrb[0].mxu0
        %v9526 = vadd.f32 0.0, %v9525
        %v9527 = vpop.f32.mrb[0].mxu0
        %v9528 = vpop.f32.mrb[0].mxu0
        %v9529 = vadd.f32 0.0, %v9528
        %v9530 = vpop.f32.mrb[0].mxu0
        %9531 = vmatprep.mubr.bf16.mxu0 0
        %9532 = vmatmul.mubr.bf16.gmra.mrb[0].mxu0 %v9384
        %v9533 = vpop.f32.mrb[0].mxu0
        %v9534 = vadd.f32 0.0, %v9533
        %v9535 = vpop.f32.mrb[0].mxu0
        %v9536 = vpop.f32.mrb[0].mxu0
        %v9537 = vadd.f32 0.0, %v9536
        %v9538 = vpop.f32.mrb[0].mxu0
        %9539 = vmatprep.mubr.bf16.mxu0 0
        %9540 = vmatmul.mubr.bf16.gmra.mrb[0].mxu0 %v9387
        %v9541 = vpop.f32.mrb[0].mxu0
        %v9542 = vadd.f32 0.0, %v9541
        %v9543 = vpop.f32.mrb[0].mxu0
        %v9544 = vpop.f32.mrb[0].mxu0
        %v9545 = vadd.f32 0.0, %v9544
        %v9546 = vpop.f32.mrb[0].mxu0
        %9547 = vmatprep.mubr.bf16.mxu0 0
        %9548 = vmatmul.mubr.bf16.gmra.mrb[0].mxu0 %v9390
        %v9549 = vpop.f32.mrb[0].mxu0
        %v9550 = vadd.f32 0.0, %v9549
        %v9551 = vpop.f32.mrb[0].mxu0
        %v9552 = vpop.f32.mrb[0].mxu0
        %v9553 = vadd.f32 0.0, %v9552
        %v9554 = vpop.f32.mrb[0].mxu0
        %9555 = vdwg.mxu0
        %v9556 = vadd.f32 %v9197, %v9430
        %v9557 = vadd.f32 %v9198, %v9433
        %v9558 = vadd.f32 %v9199, %v9438
        %v9559 = vadd.f32 %v9200, %v9441
        %v9560 = vadd.f32 %v9201, %v9446
        %v9561 = vadd.f32 %v9202, %v9449
        %v9562 = vadd.f32 %v9203, %v9454
        %v9563 = vadd.f32 %v9204, %v9457
        %v9564 = vadd.f32 %v9205, %v9462
        %v9565 = vadd.f32 %v9206, %v9465
        %v9566 = vadd.f32 %v9207, %v9470
        %v9567 = vadd.f32 %v9208, %v9473
        %v9568 = vadd.f32 %v9209, %v9478
        %v9569 = vadd.f32 %v9210, %v9481
        %v9570 = vadd.f32 %v9211, %v9486
        %v9571 = vadd.f32 %v9212, %v9489
        %v9572 = vadd.f32 %v9213, %v9494
        %v9573 = vadd.f32 %v9214, %v9497
        %v9574 = vadd.f32 %v9215, %v9502
        %v9575 = vadd.f32 %v9216, %v9505
        %v9576 = vadd.f32 %v9217, %v9510
        %v9577 = vadd.f32 %v9218, %v9513
        %v9578 = vadd.f32 %v9219, %v9518
        %v9579 = vadd.f32 %v9220, %v9521
        %v9580 = vadd.f32 %v9221, %v9526
        %v9581 = vadd.f32 %v9222, %v9529
        %v9582 = vadd.f32 %v9223, %v9534
        %v9583 = vadd.f32 %v9224, %v9537
        %v9584 = vadd.f32 %v9225, %v9542
        %v9585 = vadd.f32 %v9226, %v9545
        %v9586 = vadd.f32 %v9227, %v9550
        %v9587 = vadd.f32 %v9228, %v9553
        %v9588 = vld [vmem:[%s9229] sm:$0xf]
        %v9589 = vld [vmem:[%s9229 + $0x4] sm:$0xf]
        %v9590 = vld [vmem:[%s9229 + $0x8] sm:$0x1]
        %v9591 = vld [vmem:[%s9229 + $0xc] sm:$0xf]
        %v9592 = vld [vmem:[%s9229 + $0x10] sm:$0xf]
        %v9593 = vld [vmem:[%s9229 + $0x14] sm:$0x1]
        %v9594 = vld [vmem:[%s9229 + $0x18] sm:$0xf]
        %v9595 = vld [vmem:[%s9229 + $0x1c] sm:$0xf]
        %v9596 = vld [vmem:[%s9229 + $0x20] sm:$0x1]
        %v9597 = vld [vmem:[%s9229 + $0x24] sm:$0xf]
        %v9598 = vld [vmem:[%s9229 + $0x28] sm:$0xf]
        %v9599 = vld [vmem:[%s9229 + $0x2c] sm:$0x1]
        %v9600 = vld [vmem:[%s9229 + $0x30] sm:$0xf]
        %v9601 = vld [vmem:[%s9229 + $0x34] sm:$0xf]
        %v9602 = vld [vmem:[%s9229 + $0x38] sm:$0x1]
        %v9603 = vld [vmem:[%s9229 + $0x3c] sm:$0xf]
        %v9604 = vld [vmem:[%s9229 + $0x40] sm:$0xf]
        %v9605 = vld [vmem:[%s9229 + $0x44] sm:$0x1]
        %v9606 = vld [vmem:[%s9229 + $0x48] sm:$0xf]
        %v9607 = vld [vmem:[%s9229 + $0x4c] sm:$0xf]
        %v9608 = vld [vmem:[%s9229 + $0x50] sm:$0x1]
        %v9609 = vld [vmem:[%s9229 + $0x54] sm:$0xf]
        %v9610 = vld [vmem:[%s9229 + $0x58] sm:$0xf]
        %v9611 = vld [vmem:[%s9229 + $0x5c] sm:$0x1]
        %v9612 = vld [vmem:[%s9229 + $0x60] sm:$0xf]
        %v9613 = vld [vmem:[%s9229 + $0x64] sm:$0xf]
        %v9614 = vld [vmem:[%s9229 + $0x68] sm:$0x1]
        %v9615 = vld [vmem:[%s9229 + $0x6c] sm:$0xf]
        %v9616 = vld [vmem:[%s9229 + $0x70] sm:$0xf]
        %v9617 = vld [vmem:[%s9229 + $0x74] sm:$0x1]
        %v9618 = vld [vmem:[%s9229 + $0x78] sm:$0xf]
        %v9619 = vld [vmem:[%s9229 + $0x7c] sm:$0xf]
        %v9620 = vld [vmem:[%s9229 + $0x80] sm:$0x1]
        %v9621 = vld [vmem:[%s9229 + $0x84] sm:$0xf]
        %v9622 = vld [vmem:[%s9229 + $0x88] sm:$0xf]
        %v9623 = vld [vmem:[%s9229 + $0x8c] sm:$0x1]
        %v9624 = vld [vmem:[%s9229 + $0x90] sm:$0xf]
        %v9625 = vld [vmem:[%s9229 + $0x94] sm:$0xf]
        %v9626 = vld [vmem:[%s9229 + $0x98] sm:$0x1]
        %v9627 = vld [vmem:[%s9229 + $0x9c] sm:$0xf]
        %v9628 = vld [vmem:[%s9229 + $0xa0] sm:$0xf]
        %v9629 = vld [vmem:[%s9229 + $0xa4] sm:$0x1]
        %v9630 = vld [vmem:[%s9229 + $0xa8] sm:$0xf]
        %v9631 = vld [vmem:[%s9229 + $0xac] sm:$0xf]
        %v9632 = vld [vmem:[%s9229 + $0xb0] sm:$0x1]
        %v9633 = vld [vmem:[%s9229 + $0xb4] sm:$0xf]
        %v9634 = vld [vmem:[%s9229 + $0xb8] sm:$0xf]
        %v9635 = vld [vmem:[%s9229 + $0xbc] sm:$0x1]
        %v9637 = vshrl.u32 %v9588, 16
        %v9639 = vrot.slane %v9637, 4
        %v9640 = vshll.u32 %v9588, 16
        %v9642 = vrot.slane %v9640, 5
        %v9643 = vor.u32 %v9639, %v9642
        %v9644 = vrot.slane %v9643, 4
        %v9646 = vshll.u32 %v9589, 16
        %v9648 = vrot.slane %v9646, 5
        %v9649 = vsel %vm1128, %v9644, %v9648
        %v9650 = vshrl.u32 %v9589, 16
        %v9652 = vrot.slane %v9650, 4
        %v9653 = vor.u32 %v9652, %v9648
        %v9654 = vrot.slane %v9653, 4
        %v9656 = vshll.u32 %v9590, 16
        %v9658 = vrot.slane %v9656, 5
        %v9659 = vsel %vm1128, %v9654, %v9658
        %v9661 = vshrl.u32 %v9591, 16
        %v9663 = vrot.slane %v9661, 4
        %v9664 = vshll.u32 %v9591, 16
        %v9666 = vrot.slane %v9664, 5
        %v9667 = vor.u32 %v9663, %v9666
        %v9668 = vrot.slane %v9667, 4
        %v9670 = vshll.u32 %v9592, 16
        %v9672 = vrot.slane %v9670, 5
        %v9673 = vsel %vm1128, %v9668, %v9672
        %v9674 = vshrl.u32 %v9592, 16
        %v9676 = vrot.slane %v9674, 4
        %v9677 = vor.u32 %v9676, %v9672
        %v9678 = vrot.slane %v9677, 4
        %v9680 = vshll.u32 %v9593, 16
        %v9682 = vrot.slane %v9680, 5
        %v9683 = vsel %vm1128, %v9678, %v9682
        %v9685 = vshrl.u32 %v9594, 16
        %v9687 = vrot.slane %v9685, 4
        %v9688 = vshll.u32 %v9594, 16
        %v9690 = vrot.slane %v9688, 5
        %v9691 = vor.u32 %v9687, %v9690
        %v9692 = vrot.slane %v9691, 4
        %v9694 = vshll.u32 %v9595, 16
        %v9696 = vrot.slane %v9694, 5
        %v9697 = vsel %vm1128, %v9692, %v9696
        %v9698 = vshrl.u32 %v9595, 16
        %v9700 = vrot.slane %v9698, 4
        %v9701 = vor.u32 %v9700, %v9696
        %v9702 = vrot.slane %v9701, 4
        %v9704 = vshll.u32 %v9596, 16
        %v9706 = vrot.slane %v9704, 5
        %v9707 = vsel %vm1128, %v9702, %v9706
        %v9709 = vshrl.u32 %v9597, 16
        %v9711 = vrot.slane %v9709, 4
        %v9712 = vshll.u32 %v9597, 16
        %v9714 = vrot.slane %v9712, 5
        %v9715 = vor.u32 %v9711, %v9714
        %v9716 = vrot.slane %v9715, 4
        %v9718 = vshll.u32 %v9598, 16
        %v9720 = vrot.slane %v9718, 5
        %v9721 = vsel %vm1128, %v9716, %v9720
        %v9722 = vshrl.u32 %v9598, 16
        %v9724 = vrot.slane %v9722, 4
        %v9725 = vor.u32 %v9724, %v9720
        %v9726 = vrot.slane %v9725, 4
        %v9728 = vshll.u32 %v9599, 16
        %v9730 = vrot.slane %v9728, 5
        %v9731 = vsel %vm1128, %v9726, %v9730
        %v9733 = vshrl.u32 %v9600, 16
        %v9735 = vrot.slane %v9733, 4
        %v9736 = vshll.u32 %v9600, 16
        %v9738 = vrot.slane %v9736, 5
        %v9739 = vor.u32 %v9735, %v9738
        %v9740 = vrot.slane %v9739, 4
        %v9742 = vshll.u32 %v9601, 16
        %v9744 = vrot.slane %v9742, 5
        %v9745 = vsel %vm1128, %v9740, %v9744
        %v9746 = vshrl.u32 %v9601, 16
        %v9748 = vrot.slane %v9746, 4
        %v9749 = vor.u32 %v9748, %v9744
        %v9750 = vrot.slane %v9749, 4
        %v9752 = vshll.u32 %v9602, 16
        %v9754 = vrot.slane %v9752, 5
        %v9755 = vsel %vm1128, %v9750, %v9754
        %v9757 = vshrl.u32 %v9603, 16
        %v9759 = vrot.slane %v9757, 4
        %v9760 = vshll.u32 %v9603, 16
        %v9762 = vrot.slane %v9760, 5
        %v9763 = vor.u32 %v9759, %v9762
        %v9764 = vrot.slane %v9763, 4
        %v9766 = vshll.u32 %v9604, 16
        %v9768 = vrot.slane %v9766, 5
        %v9769 = vsel %vm1128, %v9764, %v9768
        %v9770 = vshrl.u32 %v9604, 16
        %v9772 = vrot.slane %v9770, 4
        %v9773 = vor.u32 %v9772, %v9768
        %v9774 = vrot.slane %v9773, 4
        %v9776 = vshll.u32 %v9605, 16
        %v9778 = vrot.slane %v9776, 5
        %v9779 = vsel %vm1128, %v9774, %v9778
        %v9781 = vshrl.u32 %v9606, 16
        %v9783 = vrot.slane %v9781, 4
        %v9784 = vshll.u32 %v9606, 16
        %v9786 = vrot.slane %v9784, 5
        %v9787 = vor.u32 %v9783, %v9786
        %v9788 = vrot.slane %v9787, 4
        %v9790 = vshll.u32 %v9607, 16
        %v9792 = vrot.slane %v9790, 5
        %v9793 = vsel %vm1128, %v9788, %v9792
        %v9794 = vshrl.u32 %v9607, 16
        %v9796 = vrot.slane %v9794, 4
        %v9797 = vor.u32 %v9796, %v9792
        %v9798 = vrot.slane %v9797, 4
        %v9800 = vshll.u32 %v9608, 16
        %v9802 = vrot.slane %v9800, 5
        %v9803 = vsel %vm1128, %v9798, %v9802
        %v9805 = vshrl.u32 %v9609, 16
        %v9807 = vrot.slane %v9805, 4
        %v9808 = vshll.u32 %v9609, 16
        %v9810 = vrot.slane %v9808, 5
        %v9811 = vor.u32 %v9807, %v9810
        %v9812 = vrot.slane %v9811, 4
        %v9814 = vshll.u32 %v9610, 16
        %v9816 = vrot.slane %v9814, 5
        %v9817 = vsel %vm1128, %v9812, %v9816
        %v9818 = vshrl.u32 %v9610, 16
        %v9820 = vrot.slane %v9818, 4
        %v9821 = vor.u32 %v9820, %v9816
        %v9822 = vrot.slane %v9821, 4
        %v9824 = vshll.u32 %v9611, 16
        %v9826 = vrot.slane %v9824, 5
        %v9827 = vsel %vm1128, %v9822, %v9826
        %v9829 = vshrl.u32 %v9612, 16
        %v9831 = vrot.slane %v9829, 4
        %v9832 = vshll.u32 %v9612, 16
        %v9834 = vrot.slane %v9832, 5
        %v9835 = vor.u32 %v9831, %v9834
        %v9836 = vrot.slane %v9835, 4
        %v9838 = vshll.u32 %v9613, 16
        %v9840 = vrot.slane %v9838, 5
        %v9841 = vsel %vm1128, %v9836, %v9840
        %v9842 = vshrl.u32 %v9613, 16
        %v9844 = vrot.slane %v9842, 4
        %v9845 = vor.u32 %v9844, %v9840
        %v9846 = vrot.slane %v9845, 4
        %v9848 = vshll.u32 %v9614, 16
        %v9850 = vrot.slane %v9848, 5
        %v9851 = vsel %vm1128, %v9846, %v9850
        %v9853 = vshrl.u32 %v9615, 16
        %v9855 = vrot.slane %v9853, 4
        %v9856 = vshll.u32 %v9615, 16
        %v9858 = vrot.slane %v9856, 5
        %v9859 = vor.u32 %v9855, %v9858
        %v9860 = vrot.slane %v9859, 4
        %v9862 = vshll.u32 %v9616, 16
        %v9864 = vrot.slane %v9862, 5
        %v9865 = vsel %vm1128, %v9860, %v9864
        %v9866 = vshrl.u32 %v9616, 16
        %v9868 = vrot.slane %v9866, 4
        %v9869 = vor.u32 %v9868, %v9864
        %v9870 = vrot.slane %v9869, 4
        %v9872 = vshll.u32 %v9617, 16
        %v9874 = vrot.slane %v9872, 5
        %v9875 = vsel %vm1128, %v9870, %v9874
        %v9877 = vshrl.u32 %v9618, 16
        %v9879 = vrot.slane %v9877, 4
        %v9880 = vshll.u32 %v9618, 16
        %v9882 = vrot.slane %v9880, 5
        %v9883 = vor.u32 %v9879, %v9882
        %v9884 = vrot.slane %v9883, 4
        %v9886 = vshll.u32 %v9619, 16
        %v9888 = vrot.slane %v9886, 5
        %v9889 = vsel %vm1128, %v9884, %v9888
        %v9890 = vshrl.u32 %v9619, 16
        %v9892 = vrot.slane %v9890, 4
        %v9893 = vor.u32 %v9892, %v9888
        %v9894 = vrot.slane %v9893, 4
        %v9896 = vshll.u32 %v9620, 16
        %v9898 = vrot.slane %v9896, 5
        %v9899 = vsel %vm1128, %v9894, %v9898
        %v9901 = vshrl.u32 %v9621, 16
        %v9903 = vrot.slane %v9901, 4
        %v9904 = vshll.u32 %v9621, 16
        %v9906 = vrot.slane %v9904, 5
        %v9907 = vor.u32 %v9903, %v9906
        %v9908 = vrot.slane %v9907, 4
        %v9910 = vshll.u32 %v9622, 16
        %v9912 = vrot.slane %v9910, 5
        %v9913 = vsel %vm1128, %v9908, %v9912
        %v9914 = vshrl.u32 %v9622, 16
        %v9916 = vrot.slane %v9914, 4
        %v9917 = vor.u32 %v9916, %v9912
        %v9918 = vrot.slane %v9917, 4
        %v9920 = vshll.u32 %v9623, 16
        %v9922 = vrot.slane %v9920, 5
        %v9923 = vsel %vm1128, %v9918, %v9922
        %v9925 = vshrl.u32 %v9624, 16
        %v9927 = vrot.slane %v9925, 4
        %v9928 = vshll.u32 %v9624, 16
        %v9930 = vrot.slane %v9928, 5
        %v9931 = vor.u32 %v9927, %v9930
        %v9932 = vrot.slane %v9931, 4
        %v9934 = vshll.u32 %v9625, 16
        %v9936 = vrot.slane %v9934, 5
        %v9937 = vsel %vm1128, %v9932, %v9936
        %v9938 = vshrl.u32 %v9625, 16
        %v9940 = vrot.slane %v9938, 4
        %v9941 = vor.u32 %v9940, %v9936
        %v9942 = vrot.slane %v9941, 4
        %v9944 = vshll.u32 %v9626, 16
        %v9946 = vrot.slane %v9944, 5
        %v9947 = vsel %vm1128, %v9942, %v9946
        %v9949 = vshrl.u32 %v9627, 16
        %v9951 = vrot.slane %v9949, 4
        %v9952 = vshll.u32 %v9627, 16
        %v9954 = vrot.slane %v9952, 5
        %v9955 = vor.u32 %v9951, %v9954
        %v9956 = vrot.slane %v9955, 4
        %v9958 = vshll.u32 %v9628, 16
        %v9960 = vrot.slane %v9958, 5
        %v9961 = vsel %vm1128, %v9956, %v9960
        %v9962 = vshrl.u32 %v9628, 16
        %v9964 = vrot.slane %v9962, 4
        %v9965 = vor.u32 %v9964, %v9960
        %v9966 = vrot.slane %v9965, 4
        %v9968 = vshll.u32 %v9629, 16
        %v9970 = vrot.slane %v9968, 5
        %v9971 = vsel %vm1128, %v9966, %v9970
        %v9973 = vshrl.u32 %v9630, 16
        %v9975 = vrot.slane %v9973, 4
        %v9976 = vshll.u32 %v9630, 16
        %v9978 = vrot.slane %v9976, 5
        %v9979 = vor.u32 %v9975, %v9978
        %v9980 = vrot.slane %v9979, 4
        %v9982 = vshll.u32 %v9631, 16
        %v9984 = vrot.slane %v9982, 5
        %v9985 = vsel %vm1128, %v9980, %v9984
        %v9986 = vshrl.u32 %v9631, 16
        %v9988 = vrot.slane %v9986, 4
        %v9989 = vor.u32 %v9988, %v9984
        %v9990 = vrot.slane %v9989, 4
        %v9992 = vshll.u32 %v9632, 16
        %v9994 = vrot.slane %v9992, 5
        %v9995 = vsel %vm1128, %v9990, %v9994
        %v9997 = vshrl.u32 %v9633, 16
        %v9999 = vrot.slane %v9997, 4
        %v10000 = vshll.u32 %v9633, 16
        %v10002 = vrot.slane %v10000, 5
        %v10003 = vor.u32 %v9999, %v10002
        %v10004 = vrot.slane %v10003, 4
        %v10006 = vshll.u32 %v9634, 16
        %v10008 = vrot.slane %v10006, 5
        %v10009 = vsel %vm1128, %v10004, %v10008
        %v10010 = vshrl.u32 %v9634, 16
        %v10012 = vrot.slane %v10010, 4
        %v10013 = vor.u32 %v10012, %v10008
        %v10014 = vrot.slane %v10013, 4
        %v10016 = vshll.u32 %v9635, 16
        %v10018 = vrot.slane %v10016, 5
        %v10019 = vsel %vm1128, %v10014, %v10018
        %s10020 = scalar_lea.vmem [#allocation10], 14
        %v10021 = vld [vmem:[%s10020] sm:$0x3]
        %v10022 = vunpack.c.l.b16 %v9649
        %v10023 = vunpack.c.l.b16 %v9659
        %v10024 = vunpack.c.l.b16 %v9673
        %v10025 = vunpack.c.l.b16 %v9683
        %v10026 = vunpack.c.l.b16 %v9697
        %v10027 = vunpack.c.l.b16 %v9707
        %v10028 = vunpack.c.l.b16 %v9721
        %v10029 = vunpack.c.l.b16 %v9731
        %v10030 = vunpack.c.l.b16 %v9745
        %v10031 = vunpack.c.l.b16 %v9755
        %v10032 = vunpack.c.l.b16 %v9769
        %v10033 = vunpack.c.l.b16 %v9779
        %v10034 = vunpack.c.l.b16 %v9793
        %v10035 = vunpack.c.l.b16 %v9803
        %v10036 = vunpack.c.l.b16 %v9817
        %v10037 = vunpack.c.l.b16 %v9827
        %v10038 = vunpack.c.l.b16 %v9841
        %v10039 = vunpack.c.l.b16 %v9851
        %v10040 = vunpack.c.l.b16 %v9865
        %v10041 = vunpack.c.l.b16 %v9875
        %v10042 = vunpack.c.l.b16 %v9889
        %v10043 = vunpack.c.l.b16 %v9899
        %v10044 = vunpack.c.l.b16 %v9913
        %v10045 = vunpack.c.l.b16 %v9923
        %v10046 = vunpack.c.l.b16 %v9937
        %v10047 = vunpack.c.l.b16 %v9947
        %v10048 = vunpack.c.l.b16 %v9961
        %v10049 = vunpack.c.l.b16 %v9971
        %v10050 = vunpack.c.l.b16 %v9985
        %v10051 = vunpack.c.l.b16 %v9995
        %v10052 = vunpack.c.l.b16 %v10009
        %v10053 = vunpack.c.l.b16 %v10019
        %v10054 = vpack.c.b16 %v10023, %v10022
        %v10055 = vpack.c.b16 %v10025, %v10024
        %v10056 = vpack.c.b16 %v10027, %v10026
        %v10057 = vpack.c.b16 %v10029, %v10028
        %v10058 = vpack.c.b16 %v10031, %v10030
        %v10059 = vpack.c.b16 %v10033, %v10032
        %v10060 = vpack.c.b16 %v10035, %v10034
        %v10061 = vpack.c.b16 %v10037, %v10036
        %v10062 = vpack.c.b16 %v10039, %v10038
        %v10063 = vpack.c.b16 %v10041, %v10040
        %v10064 = vpack.c.b16 %v10043, %v10042
        %v10065 = vpack.c.b16 %v10045, %v10044
        %v10066 = vpack.c.b16 %v10047, %v10046
        %v10067 = vpack.c.b16 %v10049, %v10048
        %v10068 = vpack.c.b16 %v10051, %v10050
        %v10069 = vpack.c.b16 %v10053, %v10052
        %v10071 = vsel %vm1563, %v10054, 0
        %v10074 = vsel %vm1563, %v10055, 0
        %v10077 = vsel %vm1563, %v10056, 0
        %v10080 = vsel %vm1563, %v10057, 0
        %v10083 = vsel %vm1563, %v10058, 0
        %v10086 = vsel %vm1563, %v10059, 0
        %v10089 = vsel %vm1563, %v10060, 0
        %v10092 = vsel %vm1563, %v10061, 0
        %v10095 = vsel %vm1563, %v10062, 0
        %v10098 = vsel %vm1563, %v10063, 0
        %v10101 = vsel %vm1563, %v10064, 0
        %v10104 = vsel %vm1563, %v10065, 0
        %v10107 = vsel %vm1563, %v10066, 0
        %v10110 = vsel %vm1563, %v10067, 0
        %v10113 = vsel %vm1563, %v10068, 0
        %v10116 = vsel %vm1563, %v10069, 0
        %v10119 = vsel %vm1612, %v10021, 0
        %10121 = vmatprep.subr.bf16.mxu0 0
        %10122 = vmatpush1.bf16.msra.mxu0 %v10119
        %10123 = vmatprep.subr.bf16.mxu0 0
        %10124 = vmatpush1.bf16.msra.mxu0 0
        %10125 = vmatprep.subr.bf16.mxu0 0
        %10126 = vmatpush1.bf16.msra.mxu0 0
        %10127 = vmatprep.subr.bf16.mxu0 0
        %10128 = vmatpush1.bf16.msra.mxu0 0
        %10129 = vmatprep.subr.bf16.mxu0 0
        %10130 = vmatpush1.bf16.msra.mxu0 0
        %10131 = vmatprep.subr.bf16.mxu0 0
        %10132 = vmatpush1.bf16.msra.mxu0 0
        %10133 = vmatprep.subr.bf16.mxu0 0
        %10134 = vmatpush1.bf16.msra.mxu0 0
        %10135 = vmatprep.subr.bf16.mxu0 0
        %10136 = vmatpush1.bf16.msra.mxu0 0
        %10137 = vmatprep.subr.bf16.mxu0 0
        %10138 = vmatpush1.bf16.msra.mxu0 0
        %10139 = vmatprep.subr.bf16.mxu0 0
        %10140 = vmatpush1.bf16.msra.mxu0 0
        %10141 = vmatprep.subr.bf16.mxu0 0
        %10142 = vmatpush1.bf16.msra.mxu0 0
        %10143 = vmatprep.subr.bf16.mxu0 0
        %10144 = vmatpush1.bf16.msra.mxu0 0
        %10145 = vmatprep.subr.bf16.mxu0 0
        %10146 = vmatpush1.bf16.msra.mxu0 0
        %10147 = vmatprep.subr.bf16.mxu0 0
        %10148 = vmatpush1.bf16.msra.mxu0 0
        %10149 = vmatprep.subr.bf16.mxu0 0
        %10150 = vmatpush1.bf16.msra.mxu0 0
        %10151 = vmatprep.subr.bf16.mxu0 0
        %10152 = vmatpush1.bf16.msra.mxu0 0
        %10153 = vmatprep.mubr.bf16.mxu0 0
        %10154 = vmatmul.mubr.bf16.gmra.mrb[0].mxu0 %v10071
        %v10155 = vpop.f32.mrb[0].mxu0
        %v10156 = vadd.f32 0.0, %v10155
        %v10157 = vpop.f32.mrb[0].mxu0
        %v10158 = vpop.f32.mrb[0].mxu0
        %v10159 = vadd.f32 0.0, %v10158
        %v10160 = vpop.f32.mrb[0].mxu0
        %10161 = vmatprep.mubr.bf16.mxu0 0
        %10162 = vmatmul.mubr.bf16.gmra.mrb[0].mxu0 %v10074
        %v10163 = vpop.f32.mrb[0].mxu0
        %v10164 = vadd.f32 0.0, %v10163
        %v10165 = vpop.f32.mrb[0].mxu0
        %v10166 = vpop.f32.mrb[0].mxu0
        %v10167 = vadd.f32 0.0, %v10166
        %v10168 = vpop.f32.mrb[0].mxu0
        %10169 = vmatprep.mubr.bf16.mxu0 0
        %10170 = vmatmul.mubr.bf16.gmra.mrb[0].mxu0 %v10077
        %v10171 = vpop.f32.mrb[0].mxu0
        %v10172 = vadd.f32 0.0, %v10171
        %v10173 = vpop.f32.mrb[0].mxu0
        %v10174 = vpop.f32.mrb[0].mxu0
        %v10175 = vadd.f32 0.0, %v10174
        %v10176 = vpop.f32.mrb[0].mxu0
        %10177 = vmatprep.mubr.bf16.mxu0 0
        %10178 = vmatmul.mubr.bf16.gmra.mrb[0].mxu0 %v10080
        %v10179 = vpop.f32.mrb[0].mxu0
        %v10180 = vadd.f32 0.0, %v10179
        %v10181 = vpop.f32.mrb[0].mxu0
        %v10182 = vpop.f32.mrb[0].mxu0
        %v10183 = vadd.f32 0.0, %v10182
        %v10184 = vpop.f32.mrb[0].mxu0
        %10185 = vmatprep.mubr.bf16.mxu0 0
        %10186 = vmatmul.mubr.bf16.gmra.mrb[0].mxu0 %v10083
        %v10187 = vpop.f32.mrb[0].mxu0
        %v10188 = vadd.f32 0.0, %v10187
        %v10189 = vpop.f32.mrb[0].mxu0
        %v10190 = vpop.f32.mrb[0].mxu0
        %v10191 = vadd.f32 0.0, %v10190
        %v10192 = vpop.f32.mrb[0].mxu0
        %10193 = vmatprep.mubr.bf16.mxu0 0
        %10194 = vmatmul.mubr.bf16.gmra.mrb[0].mxu0 %v10086
        %v10195 = vpop.f32.mrb[0].mxu0
        %v10196 = vadd.f32 0.0, %v10195
        %v10197 = vpop.f32.mrb[0].mxu0
        %v10198 = vpop.f32.mrb[0].mxu0
        %v10199 = vadd.f32 0.0, %v10198
        %v10200 = vpop.f32.mrb[0].mxu0
        %10201 = vmatprep.mubr.bf16.mxu0 0
        %10202 = vmatmul.mubr.bf16.gmra.mrb[0].mxu0 %v10089
        %v10203 = vpop.f32.mrb[0].mxu0
        %v10204 = vadd.f32 0.0, %v10203
        %v10205 = vpop.f32.mrb[0].mxu0
        %v10206 = vpop.f32.mrb[0].mxu0
        %v10207 = vadd.f32 0.0, %v10206
        %v10208 = vpop.f32.mrb[0].mxu0
        %10209 = vmatprep.mubr.bf16.mxu0 0
        %10210 = vmatmul.mubr.bf16.gmra.mrb[0].mxu0 %v10092
        %v10211 = vpop.f32.mrb[0].mxu0
        %v10212 = vadd.f32 0.0, %v10211
        %v10213 = vpop.f32.mrb[0].mxu0
        %v10214 = vpop.f32.mrb[0].mxu0
        %v10215 = vadd.f32 0.0, %v10214
        %v10216 = vpop.f32.mrb[0].mxu0
        %10217 = vmatprep.mubr.bf16.mxu0 0
        %10218 = vmatmul.mubr.bf16.gmra.mrb[0].mxu0 %v10095
        %v10219 = vpop.f32.mrb[0].mxu0
        %v10220 = vadd.f32 0.0, %v10219
        %v10221 = vpop.f32.mrb[0].mxu0
        %v10222 = vpop.f32.mrb[0].mxu0
        %v10223 = vadd.f32 0.0, %v10222
        %v10224 = vpop.f32.mrb[0].mxu0
        %10225 = vmatprep.mubr.bf16.mxu0 0
        %10226 = vmatmul.mubr.bf16.gmra.mrb[0].mxu0 %v10098
        %v10227 = vpop.f32.mrb[0].mxu0
        %v10228 = vadd.f32 0.0, %v10227
        %v10229 = vpop.f32.mrb[0].mxu0
        %v10230 = vpop.f32.mrb[0].mxu0
        %v10231 = vadd.f32 0.0, %v10230
        %v10232 = vpop.f32.mrb[0].mxu0
        %10233 = vmatprep.mubr.bf16.mxu0 0
        %10234 = vmatmul.mubr.bf16.gmra.mrb[0].mxu0 %v10101
        %v10235 = vpop.f32.mrb[0].mxu0
        %v10236 = vadd.f32 0.0, %v10235
        %v10237 = vpop.f32.mrb[0].mxu0
        %v10238 = vpop.f32.mrb[0].mxu0
        %v10239 = vadd.f32 0.0, %v10238
        %v10240 = vpop.f32.mrb[0].mxu0
        %10241 = vmatprep.mubr.bf16.mxu0 0
        %10242 = vmatmul.mubr.bf16.gmra.mrb[0].mxu0 %v10104
        %v10243 = vpop.f32.mrb[0].mxu0
        %v10244 = vadd.f32 0.0, %v10243
        %v10245 = vpop.f32.mrb[0].mxu0
        %v10246 = vpop.f32.mrb[0].mxu0
        %v10247 = vadd.f32 0.0, %v10246
        %v10248 = vpop.f32.mrb[0].mxu0
        %10249 = vmatprep.mubr.bf16.mxu0 0
        %10250 = vmatmul.mubr.bf16.gmra.mrb[0].mxu0 %v10107
        %v10251 = vpop.f32.mrb[0].mxu0
        %v10252 = vadd.f32 0.0, %v10251
        %v10253 = vpop.f32.mrb[0].mxu0
        %v10254 = vpop.f32.mrb[0].mxu0
        %v10255 = vadd.f32 0.0, %v10254
        %v10256 = vpop.f32.mrb[0].mxu0
        %10257 = vmatprep.mubr.bf16.mxu0 0
        %10258 = vmatmul.mubr.bf16.gmra.mrb[0].mxu0 %v10110
        %v10259 = vpop.f32.mrb[0].mxu0
        %v10260 = vadd.f32 0.0, %v10259
        %v10261 = vpop.f32.mrb[0].mxu0
        %v10262 = vpop.f32.mrb[0].mxu0
        %v10263 = vadd.f32 0.0, %v10262
        %v10264 = vpop.f32.mrb[0].mxu0
        %10265 = vmatprep.mubr.bf16.mxu0 0
        %10266 = vmatmul.mubr.bf16.gmra.mrb[0].mxu0 %v10113
        %v10267 = vpop.f32.mrb[0].mxu0
        %v10268 = vadd.f32 0.0, %v10267
        %v10269 = vpop.f32.mrb[0].mxu0
        %v10270 = vpop.f32.mrb[0].mxu0
        %v10271 = vadd.f32 0.0, %v10270
        %v10272 = vpop.f32.mrb[0].mxu0
        %10273 = vmatprep.mubr.bf16.mxu0 0
        %10274 = vmatmul.mubr.bf16.gmra.mrb[0].mxu0 %v10116
        %v10275 = vpop.f32.mrb[0].mxu0
        %v10276 = vadd.f32 0.0, %v10275
        %v10277 = vpop.f32.mrb[0].mxu0
        %v10278 = vpop.f32.mrb[0].mxu0
        %v10279 = vadd.f32 0.0, %v10278
        %v10280 = vpop.f32.mrb[0].mxu0
        %10281 = vdwg.mxu0
        %v10282 = vadd.f32 %v9556, %v10156
        %v10283 = vadd.f32 %v9557, %v10159
        %v10284 = vadd.f32 %v9558, %v10164
        %v10285 = vadd.f32 %v9559, %v10167
        %v10286 = vadd.f32 %v9560, %v10172
        %v10287 = vadd.f32 %v9561, %v10175
        %v10288 = vadd.f32 %v9562, %v10180
        %v10289 = vadd.f32 %v9563, %v10183
        %v10290 = vadd.f32 %v9564, %v10188
        %v10291 = vadd.f32 %v9565, %v10191
        %v10292 = vadd.f32 %v9566, %v10196
        %v10293 = vadd.f32 %v9567, %v10199
        %v10294 = vadd.f32 %v9568, %v10204
        %v10295 = vadd.f32 %v9569, %v10207
        %v10296 = vadd.f32 %v9570, %v10212
        %v10297 = vadd.f32 %v9571, %v10215
        %v10298 = vadd.f32 %v9572, %v10220
        %v10299 = vadd.f32 %v9573, %v10223
        %v10300 = vadd.f32 %v9574, %v10228
        %v10301 = vadd.f32 %v9575, %v10231
        %v10302 = vadd.f32 %v9576, %v10236
        %v10303 = vadd.f32 %v9577, %v10239
        %v10304 = vadd.f32 %v9578, %v10244
        %v10305 = vadd.f32 %v9579, %v10247
        %v10306 = vadd.f32 %v9580, %v10252
        %v10307 = vadd.f32 %v9581, %v10255
        %v10308 = vadd.f32 %v9582, %v10260
        %v10309 = vadd.f32 %v9583, %v10263
        %v10310 = vadd.f32 %v9584, %v10268
        %v10311 = vadd.f32 %v9585, %v10271
        %v10312 = vadd.f32 %v9586, %v10276
        %v10313 = vadd.f32 %v9587, %v10279
        %v10314 = vld [vmem:[%s9229] sm:$0xe]
        %v10315 = vld [vmem:[%s9229 + $0xc] sm:$0xe]
        %v10316 = vld [vmem:[%s9229 + $0x18] sm:$0xe]
        %v10317 = vld [vmem:[%s9229 + $0x24] sm:$0xe]
        %v10318 = vld [vmem:[%s9229 + $0x30] sm:$0xe]
        %v10319 = vld [vmem:[%s9229 + $0x3c] sm:$0xe]
        %v10320 = vld [vmem:[%s9229 + $0x48] sm:$0xe]
        %v10321 = vld [vmem:[%s9229 + $0x54] sm:$0xe]
        %v10322 = vld [vmem:[%s9229 + $0x60] sm:$0xe]
        %v10323 = vld [vmem:[%s9229 + $0x6c] sm:$0xe]
        %v10324 = vld [vmem:[%s9229 + $0x78] sm:$0xe]
        %v10325 = vld [vmem:[%s9229 + $0x84] sm:$0xe]
        %v10326 = vld [vmem:[%s9229 + $0x90] sm:$0xe]
        %v10327 = vld [vmem:[%s9229 + $0x9c] sm:$0xe]
        %v10328 = vld [vmem:[%s9229 + $0xa8] sm:$0xe]
        %v10329 = vld [vmem:[%s9229 + $0xb4] sm:$0xe]
        %v10378 = vrot.slane %v10314, 5
        %v10379 = vrot.slane %v10378, 4
        %v10380 = vrot.slane %v9589, 5
        %v10381 = vsel %vm2119, %v10379, %v10380
        %v10382 = vrot.slane %v10380, 4
        %v10383 = vrot.slane %v9590, 5
        %v10384 = vsel %vm2119, %v10382, %v10383
        %v10385 = vrot.slane %v10315, 5
        %v10386 = vrot.slane %v10385, 4
        %v10387 = vrot.slane %v9592, 5
        %v10388 = vsel %vm2119, %v10386, %v10387
        %v10389 = vrot.slane %v10387, 4
        %v10390 = vrot.slane %v9593, 5
        %v10391 = vsel %vm2119, %v10389, %v10390
        %v10392 = vrot.slane %v10316, 5
        %v10393 = vrot.slane %v10392, 4
        %v10394 = vrot.slane %v9595, 5
        %v10395 = vsel %vm2119, %v10393, %v10394
        %v10396 = vrot.slane %v10394, 4
        %v10397 = vrot.slane %v9596, 5
        %v10398 = vsel %vm2119, %v10396, %v10397
        %v10399 = vrot.slane %v10317, 5
        %v10400 = vrot.slane %v10399, 4
        %v10401 = vrot.slane %v9598, 5
        %v10402 = vsel %vm2119, %v10400, %v10401
        %v10403 = vrot.slane %v10401, 4
        %v10404 = vrot.slane %v9599, 5
        %v10405 = vsel %vm2119, %v10403, %v10404
        %v10406 = vrot.slane %v10318, 5
        %v10407 = vrot.slane %v10406, 4
        %v10408 = vrot.slane %v9601, 5
        %v10409 = vsel %vm2119, %v10407, %v10408
        %v10410 = vrot.slane %v10408, 4
        %v10411 = vrot.slane %v9602, 5
        %v10412 = vsel %vm2119, %v10410, %v10411
        %v10413 = vrot.slane %v10319, 5
        %v10414 = vrot.slane %v10413, 4
        %v10415 = vrot.slane %v9604, 5
        %v10416 = vsel %vm2119, %v10414, %v10415
        %v10417 = vrot.slane %v10415, 4
        %v10418 = vrot.slane %v9605, 5
        %v10419 = vsel %vm2119, %v10417, %v10418
        %v10420 = vrot.slane %v10320, 5
        %v10421 = vrot.slane %v10420, 4
        %v10422 = vrot.slane %v9607, 5
        %v10423 = vsel %vm2119, %v10421, %v10422
        %v10424 = vrot.slane %v10422, 4
        %v10425 = vrot.slane %v9608, 5
        %v10426 = vsel %vm2119, %v10424, %v10425
        %v10427 = vrot.slane %v10321, 5
        %v10428 = vrot.slane %v10427, 4
        %v10429 = vrot.slane %v9610, 5
        %v10430 = vsel %vm2119, %v10428, %v10429
        %v10431 = vrot.slane %v10429, 4
        %v10432 = vrot.slane %v9611, 5
        %v10433 = vsel %vm2119, %v10431, %v10432
        %v10434 = vrot.slane %v10322, 5
        %v10435 = vrot.slane %v10434, 4
        %v10436 = vrot.slane %v9613, 5
        %v10437 = vsel %vm2119, %v10435, %v10436
        %v10438 = vrot.slane %v10436, 4
        %v10439 = vrot.slane %v9614, 5
        %v10440 = vsel %vm2119, %v10438, %v10439
        %v10441 = vrot.slane %v10323, 5
        %v10442 = vrot.slane %v10441, 4
        %v10443 = vrot.slane %v9616, 5
        %v10444 = vsel %vm2119, %v10442, %v10443
        %v10445 = vrot.slane %v10443, 4
        %v10446 = vrot.slane %v9617, 5
        %v10447 = vsel %vm2119, %v10445, %v10446
        %v10448 = vrot.slane %v10324, 5
        %v10449 = vrot.slane %v10448, 4
        %v10450 = vrot.slane %v9619, 5
        %v10451 = vsel %vm2119, %v10449, %v10450
        %v10452 = vrot.slane %v10450, 4
        %v10453 = vrot.slane %v9620, 5
        %v10454 = vsel %vm2119, %v10452, %v10453
        %v10455 = vrot.slane %v10325, 5
        %v10456 = vrot.slane %v10455, 4
        %v10457 = vrot.slane %v9622, 5
        %v10458 = vsel %vm2119, %v10456, %v10457
        %v10459 = vrot.slane %v10457, 4
        %v10460 = vrot.slane %v9623, 5
        %v10461 = vsel %vm2119, %v10459, %v10460
        %v10462 = vrot.slane %v10326, 5
        %v10463 = vrot.slane %v10462, 4
        %v10464 = vrot.slane %v9625, 5
        %v10465 = vsel %vm2119, %v10463, %v10464
        %v10466 = vrot.slane %v10464, 4
        %v10467 = vrot.slane %v9626, 5
        %v10468 = vsel %vm2119, %v10466, %v10467
        %v10469 = vrot.slane %v10327, 5
        %v10470 = vrot.slane %v10469, 4
        %v10471 = vrot.slane %v9628, 5
        %v10472 = vsel %vm2119, %v10470, %v10471
        %v10473 = vrot.slane %v10471, 4
        %v10474 = vrot.slane %v9629, 5
        %v10475 = vsel %vm2119, %v10473, %v10474
        %v10476 = vrot.slane %v10328, 5
        %v10477 = vrot.slane %v10476, 4
        %v10478 = vrot.slane %v9631, 5
        %v10479 = vsel %vm2119, %v10477, %v10478
        %v10480 = vrot.slane %v10478, 4
        %v10481 = vrot.slane %v9632, 5
        %v10482 = vsel %vm2119, %v10480, %v10481
        %v10483 = vrot.slane %v10329, 5
        %v10484 = vrot.slane %v10483, 4
        %v10485 = vrot.slane %v9634, 5
        %v10486 = vsel %vm2119, %v10484, %v10485
        %v10487 = vrot.slane %v10485, 4
        %v10488 = vrot.slane %v9635, 5
        %v10489 = vsel %vm2119, %v10487, %v10488
        %s10490 = scalar_lea.vmem [#allocation10], 16
        %v10491 = vld [vmem:[%s10490] sm:$0x3]
        %v10492 = vunpack.c.l.b16 %v10381
        %v10493 = vunpack.c.l.b16 %v10384
        %v10494 = vunpack.c.l.b16 %v10388
        %v10495 = vunpack.c.l.b16 %v10391
        %v10496 = vunpack.c.l.b16 %v10395
        %v10497 = vunpack.c.l.b16 %v10398
        %v10498 = vunpack.c.l.b16 %v10402
        %v10499 = vunpack.c.l.b16 %v10405
        %v10500 = vunpack.c.l.b16 %v10409
        %v10501 = vunpack.c.l.b16 %v10412
        %v10502 = vunpack.c.l.b16 %v10416
        %v10503 = vunpack.c.l.b16 %v10419
        %v10504 = vunpack.c.l.b16 %v10423
        %v10505 = vunpack.c.l.b16 %v10426
        %v10506 = vunpack.c.l.b16 %v10430
        %v10507 = vunpack.c.l.b16 %v10433
        %v10508 = vunpack.c.l.b16 %v10437
        %v10509 = vunpack.c.l.b16 %v10440
        %v10510 = vunpack.c.l.b16 %v10444
        %v10511 = vunpack.c.l.b16 %v10447
        %v10512 = vunpack.c.l.b16 %v10451
        %v10513 = vunpack.c.l.b16 %v10454
        %v10514 = vunpack.c.l.b16 %v10458
        %v10515 = vunpack.c.l.b16 %v10461
        %v10516 = vunpack.c.l.b16 %v10465
        %v10517 = vunpack.c.l.b16 %v10468
        %v10518 = vunpack.c.l.b16 %v10472
        %v10519 = vunpack.c.l.b16 %v10475
        %v10520 = vunpack.c.l.b16 %v10479
        %v10521 = vunpack.c.l.b16 %v10482
        %v10522 = vunpack.c.l.b16 %v10486
        %v10523 = vunpack.c.l.b16 %v10489
        %v10524 = vpack.c.b16 %v10493, %v10492
        %v10525 = vpack.c.b16 %v10495, %v10494
        %v10526 = vpack.c.b16 %v10497, %v10496
        %v10527 = vpack.c.b16 %v10499, %v10498
        %v10528 = vpack.c.b16 %v10501, %v10500
        %v10529 = vpack.c.b16 %v10503, %v10502
        %v10530 = vpack.c.b16 %v10505, %v10504
        %v10531 = vpack.c.b16 %v10507, %v10506
        %v10532 = vpack.c.b16 %v10509, %v10508
        %v10533 = vpack.c.b16 %v10511, %v10510
        %v10534 = vpack.c.b16 %v10513, %v10512
        %v10535 = vpack.c.b16 %v10515, %v10514
        %v10536 = vpack.c.b16 %v10517, %v10516
        %v10537 = vpack.c.b16 %v10519, %v10518
        %v10538 = vpack.c.b16 %v10521, %v10520
        %v10539 = vpack.c.b16 %v10523, %v10522
        %v10541 = vsel %vm1563, %v10524, 0
        %v10544 = vsel %vm1563, %v10525, 0
        %v10547 = vsel %vm1563, %v10526, 0
        %v10550 = vsel %vm1563, %v10527, 0
        %v10553 = vsel %vm1563, %v10528, 0
        %v10556 = vsel %vm1563, %v10529, 0
        %v10559 = vsel %vm1563, %v10530, 0
        %v10562 = vsel %vm1563, %v10531, 0
        %v10565 = vsel %vm1563, %v10532, 0
        %v10568 = vsel %vm1563, %v10533, 0
        %v10571 = vsel %vm1563, %v10534, 0
        %v10574 = vsel %vm1563, %v10535, 0
        %v10577 = vsel %vm1563, %v10536, 0
        %v10580 = vsel %vm1563, %v10537, 0
        %v10583 = vsel %vm1563, %v10538, 0
        %v10586 = vsel %vm1563, %v10539, 0
        %v10589 = vsel %vm1612, %v10491, 0
        %10591 = vmatprep.subr.bf16.mxu0 0
        %10592 = vmatpush1.bf16.msra.mxu0 %v10589
        %10593 = vmatprep.subr.bf16.mxu0 0
        %10594 = vmatpush1.bf16.msra.mxu0 0
        %10595 = vmatprep.subr.bf16.mxu0 0
        %10596 = vmatpush1.bf16.msra.mxu0 0
        %10597 = vmatprep.subr.bf16.mxu0 0
        %10598 = vmatpush1.bf16.msra.mxu0 0
        %10599 = vmatprep.subr.bf16.mxu0 0
        %10600 = vmatpush1.bf16.msra.mxu0 0
        %10601 = vmatprep.subr.bf16.mxu0 0
        %10602 = vmatpush1.bf16.msra.mxu0 0
        %10603 = vmatprep.subr.bf16.mxu0 0
        %10604 = vmatpush1.bf16.msra.mxu0 0
        %10605 = vmatprep.subr.bf16.mxu0 0
        %10606 = vmatpush1.bf16.msra.mxu0 0
        %10607 = vmatprep.subr.bf16.mxu0 0
        %10608 = vmatpush1.bf16.msra.mxu0 0
        %10609 = vmatprep.subr.bf16.mxu0 0
        %10610 = vmatpush1.bf16.msra.mxu0 0
        %10611 = vmatprep.subr.bf16.mxu0 0
        %10612 = vmatpush1.bf16.msra.mxu0 0
        %10613 = vmatprep.subr.bf16.mxu0 0
        %10614 = vmatpush1.bf16.msra.mxu0 0
        %10615 = vmatprep.subr.bf16.mxu0 0
        %10616 = vmatpush1.bf16.msra.mxu0 0
        %10617 = vmatprep.subr.bf16.mxu0 0
        %10618 = vmatpush1.bf16.msra.mxu0 0
        %10619 = vmatprep.subr.bf16.mxu0 0
        %10620 = vmatpush1.bf16.msra.mxu0 0
        %10621 = vmatprep.subr.bf16.mxu0 0
        %10622 = vmatpush1.bf16.msra.mxu0 0
        %10623 = vmatprep.mubr.bf16.mxu0 0
        %10624 = vmatmul.mubr.bf16.gmra.mrb[0].mxu0 %v10541
        %v10625 = vpop.f32.mrb[0].mxu0
        %v10626 = vadd.f32 0.0, %v10625
        %v10627 = vpop.f32.mrb[0].mxu0
        %v10628 = vpop.f32.mrb[0].mxu0
        %v10629 = vadd.f32 0.0, %v10628
        %v10630 = vpop.f32.mrb[0].mxu0
        %10631 = vmatprep.mubr.bf16.mxu0 0
        %10632 = vmatmul.mubr.bf16.gmra.mrb[0].mxu0 %v10544
        %v10633 = vpop.f32.mrb[0].mxu0
        %v10634 = vadd.f32 0.0, %v10633
        %v10635 = vpop.f32.mrb[0].mxu0
        %v10636 = vpop.f32.mrb[0].mxu0
        %v10637 = vadd.f32 0.0, %v10636
        %v10638 = vpop.f32.mrb[0].mxu0
        %10639 = vmatprep.mubr.bf16.mxu0 0
        %10640 = vmatmul.mubr.bf16.gmra.mrb[0].mxu0 %v10547
        %v10641 = vpop.f32.mrb[0].mxu0
        %v10642 = vadd.f32 0.0, %v10641
        %v10643 = vpop.f32.mrb[0].mxu0
        %v10644 = vpop.f32.mrb[0].mxu0
        %v10645 = vadd.f32 0.0, %v10644
        %v10646 = vpop.f32.mrb[0].mxu0
        %10647 = vmatprep.mubr.bf16.mxu0 0
        %10648 = vmatmul.mubr.bf16.gmra.mrb[0].mxu0 %v10550
        %v10649 = vpop.f32.mrb[0].mxu0
        %v10650 = vadd.f32 0.0, %v10649
        %v10651 = vpop.f32.mrb[0].mxu0
        %v10652 = vpop.f32.mrb[0].mxu0
        %v10653 = vadd.f32 0.0, %v10652
        %v10654 = vpop.f32.mrb[0].mxu0
        %10655 = vmatprep.mubr.bf16.mxu0 0
        %10656 = vmatmul.mubr.bf16.gmra.mrb[0].mxu0 %v10553
        %v10657 = vpop.f32.mrb[0].mxu0
        %v10658 = vadd.f32 0.0, %v10657
        %v10659 = vpop.f32.mrb[0].mxu0
        %v10660 = vpop.f32.mrb[0].mxu0
        %v10661 = vadd.f32 0.0, %v10660
        %v10662 = vpop.f32.mrb[0].mxu0
        %10663 = vmatprep.mubr.bf16.mxu0 0
        %10664 = vmatmul.mubr.bf16.gmra.mrb[0].mxu0 %v10556
        %v10665 = vpop.f32.mrb[0].mxu0
        %v10666 = vadd.f32 0.0, %v10665
        %v10667 = vpop.f32.mrb[0].mxu0
        %v10668 = vpop.f32.mrb[0].mxu0
        %v10669 = vadd.f32 0.0, %v10668
        %v10670 = vpop.f32.mrb[0].mxu0
        %10671 = vmatprep.mubr.bf16.mxu0 0
        %10672 = vmatmul.mubr.bf16.gmra.mrb[0].mxu0 %v10559
        %v10673 = vpop.f32.mrb[0].mxu0
        %v10674 = vadd.f32 0.0, %v10673
        %v10675 = vpop.f32.mrb[0].mxu0
        %v10676 = vpop.f32.mrb[0].mxu0
        %v10677 = vadd.f32 0.0, %v10676
        %v10678 = vpop.f32.mrb[0].mxu0
        %10679 = vmatprep.mubr.bf16.mxu0 0
        %10680 = vmatmul.mubr.bf16.gmra.mrb[0].mxu0 %v10562
        %v10681 = vpop.f32.mrb[0].mxu0
        %v10682 = vadd.f32 0.0, %v10681
        %v10683 = vpop.f32.mrb[0].mxu0
        %v10684 = vpop.f32.mrb[0].mxu0
        %v10685 = vadd.f32 0.0, %v10684
        %v10686 = vpop.f32.mrb[0].mxu0
        %10687 = vmatprep.mubr.bf16.mxu0 0
        %10688 = vmatmul.mubr.bf16.gmra.mrb[0].mxu0 %v10565
        %v10689 = vpop.f32.mrb[0].mxu0
        %v10690 = vadd.f32 0.0, %v10689
        %v10691 = vpop.f32.mrb[0].mxu0
        %v10692 = vpop.f32.mrb[0].mxu0
        %v10693 = vadd.f32 0.0, %v10692
        %v10694 = vpop.f32.mrb[0].mxu0
        %10695 = vmatprep.mubr.bf16.mxu0 0
        %10696 = vmatmul.mubr.bf16.gmra.mrb[0].mxu0 %v10568
        %v10697 = vpop.f32.mrb[0].mxu0
        %v10698 = vadd.f32 0.0, %v10697
        %v10699 = vpop.f32.mrb[0].mxu0
        %v10700 = vpop.f32.mrb[0].mxu0
        %v10701 = vadd.f32 0.0, %v10700
        %v10702 = vpop.f32.mrb[0].mxu0
        %10703 = vmatprep.mubr.bf16.mxu0 0
        %10704 = vmatmul.mubr.bf16.gmra.mrb[0].mxu0 %v10571
        %v10705 = vpop.f32.mrb[0].mxu0
        %v10706 = vadd.f32 0.0, %v10705
        %v10707 = vpop.f32.mrb[0].mxu0
        %v10708 = vpop.f32.mrb[0].mxu0
        %v10709 = vadd.f32 0.0, %v10708
        %v10710 = vpop.f32.mrb[0].mxu0
        %10711 = vmatprep.mubr.bf16.mxu0 0
        %10712 = vmatmul.mubr.bf16.gmra.mrb[0].mxu0 %v10574
        %v10713 = vpop.f32.mrb[0].mxu0
        %v10714 = vadd.f32 0.0, %v10713
        %v10715 = vpop.f32.mrb[0].mxu0
        %v10716 = vpop.f32.mrb[0].mxu0
        %v10717 = vadd.f32 0.0, %v10716
        %v10718 = vpop.f32.mrb[0].mxu0
        %10719 = vmatprep.mubr.bf16.mxu0 0
        %10720 = vmatmul.mubr.bf16.gmra.mrb[0].mxu0 %v10577
        %v10721 = vpop.f32.mrb[0].mxu0
        %v10722 = vadd.f32 0.0, %v10721
        %v10723 = vpop.f32.mrb[0].mxu0
        %v10724 = vpop.f32.mrb[0].mxu0
        %v10725 = vadd.f32 0.0, %v10724
        %v10726 = vpop.f32.mrb[0].mxu0
        %10727 = vmatprep.mubr.bf16.mxu0 0
        %10728 = vmatmul.mubr.bf16.gmra.mrb[0].mxu0 %v10580
        %v10729 = vpop.f32.mrb[0].mxu0
        %v10730 = vadd.f32 0.0, %v10729
        %v10731 = vpop.f32.mrb[0].mxu0
        %v10732 = vpop.f32.mrb[0].mxu0
        %v10733 = vadd.f32 0.0, %v10732
        %v10734 = vpop.f32.mrb[0].mxu0
        %10735 = vmatprep.mubr.bf16.mxu0 0
        %10736 = vmatmul.mubr.bf16.gmra.mrb[0].mxu0 %v10583
        %v10737 = vpop.f32.mrb[0].mxu0
        %v10738 = vadd.f32 0.0, %v10737
        %v10739 = vpop.f32.mrb[0].mxu0
        %v10740 = vpop.f32.mrb[0].mxu0
        %v10741 = vadd.f32 0.0, %v10740
        %v10742 = vpop.f32.mrb[0].mxu0
        %10743 = vmatprep.mubr.bf16.mxu0 0
        %10744 = vmatmul.mubr.bf16.gmra.mrb[0].mxu0 %v10586
        %v10745 = vpop.f32.mrb[0].mxu0
        %v10746 = vadd.f32 0.0, %v10745
        %v10747 = vpop.f32.mrb[0].mxu0
        %v10748 = vpop.f32.mrb[0].mxu0
        %v10749 = vadd.f32 0.0, %v10748
        %v10750 = vpop.f32.mrb[0].mxu0
        %10751 = vdwg.mxu0
        %v10752 = vadd.f32 %v10282, %v10626
        %v10753 = vadd.f32 %v10283, %v10629
        %v10754 = vadd.f32 %v10284, %v10634
        %v10755 = vadd.f32 %v10285, %v10637
        %v10756 = vadd.f32 %v10286, %v10642
        %v10757 = vadd.f32 %v10287, %v10645
        %v10758 = vadd.f32 %v10288, %v10650
        %v10759 = vadd.f32 %v10289, %v10653
        %v10760 = vadd.f32 %v10290, %v10658
        %v10761 = vadd.f32 %v10291, %v10661
        %v10762 = vadd.f32 %v10292, %v10666
        %v10763 = vadd.f32 %v10293, %v10669
        %v10764 = vadd.f32 %v10294, %v10674
        %v10765 = vadd.f32 %v10295, %v10677
        %v10766 = vadd.f32 %v10296, %v10682
        %v10767 = vadd.f32 %v10297, %v10685
        %v10768 = vadd.f32 %v10298, %v10690
        %v10769 = vadd.f32 %v10299, %v10693
        %v10770 = vadd.f32 %v10300, %v10698
        %v10771 = vadd.f32 %v10301, %v10701
        %v10772 = vadd.f32 %v10302, %v10706
        %v10773 = vadd.f32 %v10303, %v10709
        %v10774 = vadd.f32 %v10304, %v10714
        %v10775 = vadd.f32 %v10305, %v10717
        %v10776 = vadd.f32 %v10306, %v10722
        %v10777 = vadd.f32 %v10307, %v10725
        %v10778 = vadd.f32 %v10308, %v10730
        %v10779 = vadd.f32 %v10309, %v10733
        %v10780 = vadd.f32 %v10310, %v10738
        %v10781 = vadd.f32 %v10311, %v10741
        %v10782 = vadd.f32 %v10312, %v10746
        %v10783 = vadd.f32 %v10313, %v10749
        %v10784 = vld [vmem:[#allocation12] sm:$0x1]
        %v10786 = vlaneseq
        %v10787 = vshrl.u32 %v10786, 7
        %v10788 = vsub.s32 0, %v10787
        %v10789 = vrot.slane %v10784, %v10788
        %v10791 = vadd.f32 %v10752, %v10789
        %v10792 = vadd.f32 %v10753, %v10789
        %v10793 = vadd.f32 %v10754, %v10789
        %v10794 = vadd.f32 %v10755, %v10789
        %v10795 = vadd.f32 %v10756, %v10789
        %v10796 = vadd.f32 %v10757, %v10789
        %v10797 = vadd.f32 %v10758, %v10789
        %v10798 = vadd.f32 %v10759, %v10789
        %v10799 = vadd.f32 %v10760, %v10789
        %v10800 = vadd.f32 %v10761, %v10789
        %v10801 = vadd.f32 %v10762, %v10789
        %v10802 = vadd.f32 %v10763, %v10789
        %v10803 = vadd.f32 %v10764, %v10789
        %v10804 = vadd.f32 %v10765, %v10789
        %v10805 = vadd.f32 %v10766, %v10789
        %v10806 = vadd.f32 %v10767, %v10789
        %v10807 = vadd.f32 %v10768, %v10789
        %v10808 = vadd.f32 %v10769, %v10789
        %v10809 = vadd.f32 %v10770, %v10789
        %v10810 = vadd.f32 %v10771, %v10789
        %v10811 = vadd.f32 %v10772, %v10789
        %v10812 = vadd.f32 %v10773, %v10789
        %v10813 = vadd.f32 %v10774, %v10789
        %v10814 = vadd.f32 %v10775, %v10789
        %v10815 = vadd.f32 %v10776, %v10789
        %v10816 = vadd.f32 %v10777, %v10789
        %v10817 = vadd.f32 %v10778, %v10789
        %v10818 = vadd.f32 %v10779, %v10789
        %v10819 = vadd.f32 %v10780, %v10789
        %v10820 = vadd.f32 %v10781, %v10789
        %v10821 = vadd.f32 %v10782, %v10789
        %v10822 = vadd.f32 %v10783, %v10789
        %v10823 = vadd.f32 %v10791, %v513
        %v10824 = vadd.f32 %v10792, %v514
        %v10825 = vadd.f32 %v10793, %v515
        %v10826 = vadd.f32 %v10794, %v516
        %v10827 = vadd.f32 %v10795, %v517
        %v10828 = vadd.f32 %v10796, %v518
        %v10829 = vadd.f32 %v10797, %v519
        %v10830 = vadd.f32 %v10798, %v520
        %v10831 = vadd.f32 %v10799, %v521
        %v10832 = vadd.f32 %v10800, %v522
        %v10833 = vadd.f32 %v10801, %v523
        %v10834 = vadd.f32 %v10802, %v524
        %v10835 = vadd.f32 %v10803, %v525
        %v10836 = vadd.f32 %v10804, %v526
        %v10837 = vadd.f32 %v10805, %v527
        %v10838 = vadd.f32 %v10806, %v528
        %v10839 = vadd.f32 %v10807, %v529
        %v10840 = vadd.f32 %v10808, %v530
        %v10841 = vadd.f32 %v10809, %v531
        %v10842 = vadd.f32 %v10810, %v532
        %v10843 = vadd.f32 %v10811, %v533
        %v10844 = vadd.f32 %v10812, %v534
        %v10845 = vadd.f32 %v10813, %v535
        %v10846 = vadd.f32 %v10814, %v536
        %v10847 = vadd.f32 %v10815, %v537
        %v10848 = vadd.f32 %v10816, %v538
        %v10849 = vadd.f32 %v10817, %v539
        %v10850 = vadd.f32 %v10818, %v540
        %v10851 = vadd.f32 %v10819, %v541
        %v10852 = vadd.f32 %v10820, %v542
        %v10853 = vadd.f32 %v10821, %v543
        %v10854 = vadd.f32 %v10822, %v544
        %v10855 = vmax.f32 %v10823, 0.0
        %v10856 = vmax.f32 %v10824, 0.0
        %v10857 = vmax.f32 %v10825, 0.0
        %v10858 = vmax.f32 %v10826, 0.0
        %v10859 = vmax.f32 %v10827, 0.0
        %v10860 = vmax.f32 %v10828, 0.0
        %v10861 = vmax.f32 %v10829, 0.0
        %v10862 = vmax.f32 %v10830, 0.0
        %v10863 = vmax.f32 %v10831, 0.0
        %v10864 = vmax.f32 %v10832, 0.0
        %v10865 = vmax.f32 %v10833, 0.0
        %v10866 = vmax.f32 %v10834, 0.0
        %v10867 = vmax.f32 %v10835, 0.0
        %v10868 = vmax.f32 %v10836, 0.0
        %v10869 = vmax.f32 %v10837, 0.0
        %v10870 = vmax.f32 %v10838, 0.0
        %v10871 = vmax.f32 %v10839, 0.0
        %v10872 = vmax.f32 %v10840, 0.0
        %v10873 = vmax.f32 %v10841, 0.0
        %v10874 = vmax.f32 %v10842, 0.0
        %v10875 = vmax.f32 %v10843, 0.0
        %v10876 = vmax.f32 %v10844, 0.0
        %v10877 = vmax.f32 %v10845, 0.0
        %v10878 = vmax.f32 %v10846, 0.0
        %v10879 = vmax.f32 %v10847, 0.0
        %v10880 = vmax.f32 %v10848, 0.0
        %v10881 = vmax.f32 %v10849, 0.0
        %v10882 = vmax.f32 %v10850, 0.0
        %v10883 = vmax.f32 %v10851, 0.0
        %v10884 = vmax.f32 %v10852, 0.0
        %v10885 = vmax.f32 %v10853, 0.0
        %v10886 = vmax.f32 %v10854, 0.0
        %10887 = vst.msk [vmem:[%s296] sm:$0xff] %vm1563, %v10855
        %10888 = vst.msk [vmem:[%s296 + $0x8] sm:$0xff] %vm1563, %v10856
        %10889 = vst.msk [vmem:[%s296 + $0x10] sm:$0xff] %vm1563, %v10857
        %10890 = vst.msk [vmem:[%s296 + $0x18] sm:$0xff] %vm1563, %v10858
        %10891 = vst.msk [vmem:[%s296 + $0x20] sm:$0xff] %vm1563, %v10859
        %10892 = vst.msk [vmem:[%s296 + $0x28] sm:$0xff] %vm1563, %v10860
        %10893 = vst.msk [vmem:[%s296 + $0x30] sm:$0xff] %vm1563, %v10861
        %10894 = vst.msk [vmem:[%s296 + $0x38] sm:$0xff] %vm1563, %v10862
        %10895 = vst.msk [vmem:[%s296 + $0x40] sm:$0xff] %vm1563, %v10863
        %10896 = vst.msk [vmem:[%s296 + $0x48] sm:$0xff] %vm1563, %v10864
        %10897 = vst.msk [vmem:[%s296 + $0x50] sm:$0xff] %vm1563, %v10865
        %10898 = vst.msk [vmem:[%s296 + $0x58] sm:$0xff] %vm1563, %v10866
        %10899 = vst.msk [vmem:[%s296 + $0x60] sm:$0xff] %vm1563, %v10867
        %10900 = vst.msk [vmem:[%s296 + $0x68] sm:$0xff] %vm1563, %v10868
        %10901 = vst.msk [vmem:[%s296 + $0x70] sm:$0xff] %vm1563, %v10869
        %10902 = vst.msk [vmem:[%s296 + $0x78] sm:$0xff] %vm1563, %v10870
        %10903 = vst.msk [vmem:[%s296 + $0x80] sm:$0xff] %vm1563, %v10871
        %10904 = vst.msk [vmem:[%s296 + $0x88] sm:$0xff] %vm1563, %v10872
        %10905 = vst.msk [vmem:[%s296 + $0x90] sm:$0xff] %vm1563, %v10873
        %10906 = vst.msk [vmem:[%s296 + $0x98] sm:$0xff] %vm1563, %v10874
        %10907 = vst.msk [vmem:[%s296 + $0xa0] sm:$0xff] %vm1563, %v10875
        %10908 = vst.msk [vmem:[%s296 + $0xa8] sm:$0xff] %vm1563, %v10876
        %10909 = vst.msk [vmem:[%s296 + $0xb0] sm:$0xff] %vm1563, %v10877
        %10910 = vst.msk [vmem:[%s296 + $0xb8] sm:$0xff] %vm1563, %v10878
        %10911 = vst.msk [vmem:[%s296 + $0xc0] sm:$0xff] %vm1563, %v10879
        %10912 = vst.msk [vmem:[%s296 + $0xc8] sm:$0xff] %vm1563, %v10880
        %10913 = vst.msk [vmem:[%s296 + $0xd0] sm:$0xff] %vm1563, %v10881
        %10914 = vst.msk [vmem:[%s296 + $0xd8] sm:$0xff] %vm1563, %v10882
        %10915 = vst.msk [vmem:[%s296 + $0xe0] sm:$0xff] %vm1563, %v10883
        %10916 = vst.msk [vmem:[%s296 + $0xe8] sm:$0xff] %vm1563, %v10884
        %10917 = vst.msk [vmem:[%s296 + $0xf0] sm:$0xff] %vm1563, %v10885
        %10918 = vst.msk [vmem:[%s296 + $0xf8] sm:$0xff] %vm1563, %v10886
        %s10919 = sand.u32 %s142, 1
        %s10920 = scalar_lea.sflag [#allocation6], %s10919
        %s10921 = sand.u32 %s142, 1
        %s10922 = smul.addr %s10921, 256
        %s10923 = scalar_lea.vmem [#allocation13], %s10922
        // Predicated region
        $region61: #{basic_block_forward.1} parent=39 // pred_check
          %p10924 = pneg %p152
        $region62: #{basic_block_forward.1} parent=39 // pred_check_branch
          %10926 = sbr.rel (%p10924) target = $region64
        $region63: #{basic_block_forward.1} parent=39 // pred_region
          %s10928 = ssub.s32 4096, 4096
          %10929 = vsyncadd %s10920, %s10928
          %s10930 = smul.addr %s24, 32
          %s10931 = smul.addr %s10930, 128
          %s10932 = scalar_lea.hbm %s5, %s10931
          %s10933 = sshll.u32 %s10923, 4
          %s10934 = int_to_ptr.vmem [resolvable:$true] %s10933
          %10939 = dma.vmem_to_hbm [thread:$0]  %s10934, 4096, %s10932, %s10920, 128, 128, 8
        $region64: #{basic_block_forward.1} parent=39 // pred_fallthru
          _
      $region40: #{basic_block_forward.1} parent=5 // pred_fallthru
        _
      %p10940 = scmp.le.s32.totalorder 2, %s19
      // Predicated region
      $region65: #{basic_block_forward.1} parent=5 // pred_check
        %p10941 = pneg %p10940
      $region66: #{basic_block_forward.1} parent=5 // pred_check_branch
        %10943 = sbr.rel (%p10941) target = $region68
      $region67: #{basic_block_forward.1} parent=5 // pred_region
        %s10944 = ssub.s32 %s19, 2
        // Predicated region
        $region69: #{basic_block_forward.1} parent=67 // pred_check
          %p10945 = pneg %p158
        $region70: #{basic_block_forward.1} parent=67 // pred_check_branch
          %10947 = sbr.rel (%p10945) target = $region72
        $region71: #{basic_block_forward.1} parent=67 // pred_region
          %s10948 = sand.u32 %s143, 1
          %s10949 = scalar_lea.sflag [#allocation6], %s10948
          %s10950 = sand.u32 %s143, 1
          %s10951 = smul.addr %s10950, 256
          %s10952 = scalar_lea.vmem [#allocation13], %s10951
          %10953 = dma.done %s10949, 4096
        $region72: #{basic_block_forward.1} parent=67 // pred_fallthru
          _
      $region68: #{basic_block_forward.1} parent=5 // pred_fallthru
        _
    $region6: #{basic_block_forward.1} parent=1 // loop_footer
      %s23 = sadd.s32 1, %s19
    $region7: #{basic_block_forward.1} parent=1 // loop_footer_branch
      %18 = sbr.rel target = $region3
    $region8: #{basic_block_forward.1} parent=1 // loop_exit
      _
    %10954 = vsyncpa [#allocation5], 1
    %s10955 = scalar_lea.sflag [#allocation5], 1
    %10956 = vsyncpa %s10955, 1
    %10957 = vsyncpa [#allocation8], 1
    %10958 = vsyncpa [#allocation11], 1
    %10959 = vsyncpa [#allocation6], 1
    %s10960 = scalar_lea.sflag [#allocation6], 1
    %10961 = vsyncpa %s10960, 1

</llo_original>
